<compile_context>
chip_gen: v5e
topology: v5e:2x2
jax: 0.10.0
libtpu: 0.0.40
codegen_flags: <defaults>
</compile_context>

<pallas_src>
import functools

import jax
import jax.numpy as jnp
from jax.experimental import pallas as pl
from jax.experimental.pallas import tpu as pltpu


# ----------------------------------------------------------------------------
# Fused kernel
# ----------------------------------------------------------------------------
def _relu(v):
    return jnp.maximum(v, 0.0)


def _conv_act_pool(h, w_ref, b_ref, act, pool_k, tn):
    """conv(k=(1,3), stride 1) + activation + maxpool(1, pool_k), lane-dense.

    h:      (Ci, Win*TN) activation, columns ordered w-major (col = w*TN + n).
    w_ref:  (3, Co, Ci) weight ref (tap-major, torch (out, in) orientation).
    b_ref:  (Co, 1) bias ref.
    Returns (Co, (Wout // pool_k) * TN) in the same w-major column layout.
    """
    ci, m = h.shape
    win = m // tn
    wout = win - 2
    wp = wout // pool_k                      # exact for every layer here
    # Three tap matmuls; each RHS is a lane-aligned slice (offset k*TN), so
    # the conv is 3 MXU calls with M=Co, K=Ci, N=Wout*TN (long, lane-dense).
    # Written as a single sum-of-dots so the adds can fold into the MXU
    # accumulation path where supported (v7x MRB); elsewhere they are
    # lane-dense VPU adds.
    acc = (jnp.dot(w_ref[0], h[:, 0 * tn:(0 + wout) * tn],
                   preferred_element_type=jnp.float32)
           + jnp.dot(w_ref[1], h[:, 1 * tn:(1 + wout) * tn],
                     preferred_element_type=jnp.float32)
           + jnp.dot(w_ref[2], h[:, 2 * tn:(2 + wout) * tn],
                     preferred_element_type=jnp.float32))
    y = act(acc + b_ref[...])                # (Co, Wout*TN), lane-dense
    if pool_k == 1:
        return y
    # Max-pool along W: each pool group is pool_k adjacent TN-wide column
    # blocks -> elementwise max over lane-aligned chunks, then a lane-aligned
    # concatenate (offsets are multiples of TN, TN is a multiple of 128).
    chunks = []
    for p in range(wp):
        seg = y[:, p * pool_k * tn:(p * pool_k + 1) * tn]
        for r in range(1, pool_k):
            seg = jnp.maximum(
                seg, y[:, (p * pool_k + r) * tn:(p * pool_k + r + 1) * tn])
        chunks.append(seg)
    return jnp.concatenate(chunks, axis=1)   # (Co, Wp*TN)


def _fused_forward_kernel(x_ref,
                          c1w_ref, c1b_ref, c2w_ref, c2b_ref,
                          c3w_ref, c3b_ref, c4w_ref, c4b_ref,
                          l1a_ref, l1b_ref, l1bias_ref,
                          l2w_ref, l2bias_ref,
                          out_ref):
    tn = out_ref.shape[1]                                         # batch tile (lanes)
    x = x_ref[...]                                                # (13, 50*TN)

    h = _conv_act_pool(x, c1w_ref, c1b_ref, _relu, 2, tn)         # (20, 24*TN)
    h = _conv_act_pool(h, c2w_ref, c2b_ref, jnp.tanh, 2, tn)      # (40, 11*TN)
    x_pool = _conv_act_pool(h, c3w_ref, c3b_ref, _relu, 3, tn)    # (60,  3*TN)
    x_conv = _conv_act_pool(x_pool, c4w_ref, c4b_ref, jnp.tanh, 1, tn)  # (80, TN)

    # Head: linear1(concat(flatten(X_pool), flatten(X_conv))) -> linear2 -> softmax.
    # PyTorch's flatten order (c*3 + w) is absorbed into the l1a weight layout
    # ([w, out, in]), so no in-kernel transpose/concat is needed.
    h1 = jnp.dot(l1b_ref[...], x_conv,
                 preferred_element_type=jnp.float32) + l1bias_ref[...]     # (100, TN)
    for w in range(3):
        h1 = h1 + jnp.dot(l1a_ref[w], x_pool[:, w * tn:(w + 1) * tn],
                          preferred_element_type=jnp.float32)
    logits = jnp.dot(l2w_ref[...], h1,
                     preferred_element_type=jnp.float32) + l2bias_ref[...]  # (2, TN)

    # 2-class softmax, closed form: p1 = sigmoid(z1 - z0), p0 = 1 - p1.
    z0 = logits[0:1, :]
    z1 = logits[1:2, :]
    p1 = 1.0 / (1.0 + jnp.exp(z0 - z1))
    out_ref[...] = jnp.concatenate([1.0 - p1, p1], axis=0)        # (2, TN), lane-dense


# ----------------------------------------------------------------------------
# Wrapper
# ----------------------------------------------------------------------------
_PARAM_ORDER = ("c1_w", "c1_b", "c2_w", "c2_b", "c3_w", "c3_b", "c4_w", "c4_b",
                "l1a_w", "l1b_w", "l1_b", "l2_w", "l2_b")


def _round_up(v, m):
    return ((v + m - 1) // m) * m


def _resident_spec(arr):
    # Full-array block with a constant index map -> stays resident in VMEM
    # across all grid steps (weights are not re-fetched per batch tile).
    zeros = (0,) * arr.ndim
    return pl.BlockSpec(arr.shape, lambda i, _z=zeros: _z)


@functools.partial(jax.jit, static_argnames=("block_n",))
def forward(x, params, block_n=512):
    """x: (N, 13, 1, 50) float32 NCHW.  Returns softmax probabilities (N, 2)."""
    assert block_n % 128 == 0
    n = x.shape[0]
    # Lane-dense batch tile.  Default 512 keeps the double-buffered input
    # block + intermediates comfortably under v7x's 64 MiB VMEM; sweep
    # block_n (up to 1024-2048) for large batches, keeping n_pad // tn >= 2
    # on v7x so both TensorCores get work.
    tn = min(block_n, _round_up(n, 128))
    n_pad = _round_up(n, tn)
    tiles = n_pad // tn

    # NCHW (N, 13, 1, 50) -> lane-dense 2-D layout (C, tiles*50*TN) with
    # w-major columns: x2d[c, (i*50 + w)*TN + n] = x[i*TN + n, c, 0, w].
    xw = x[:, :, 0, :].astype(jnp.float32)                 # (N, 13, 50)
    if n_pad != n:
        xw = jnp.pad(xw, ((0, n_pad - n), (0, 0), (0, 0)))
    x2d = (xw.reshape(tiles, tn, 13, 50)
             .transpose(2, 0, 3, 1)
             .reshape(13, tiles * 50 * tn))

    weights = [params[k] for k in _PARAM_ORDER]
    out = pl.pallas_call(
        _fused_forward_kernel,
        out_shape=jax.ShapeDtypeStruct((2, n_pad), jnp.float32),
        grid=(tiles,),
        in_specs=[pl.BlockSpec((13, 50 * tn), lambda i: (0, i))]
                 + [_resident_spec(w) for w in weights],
        out_specs=pl.BlockSpec((2, tn), lambda i: (0, i)),
        compiler_params=pltpu.CompilerParams(
            dimension_semantics=("parallel",),
            vmem_limit_bytes=32 * 1024 * 1024),
    )(x2d, *weights)
    return out[:, :n].T                                     # (N, 2)


# ----------------------------------------------------------------------------
# Parameters (matches the module's init_weight: kaiming_uniform_, zero biases)
# ----------------------------------------------------------------------------
def _kaiming_uniform(key, shape, fan_in, gain):
    bound = gain * (3.0 / fan_in) ** 0.5
    return jax.random.uniform(key, shape, jnp.float32, -bound, bound)


def _conv_w_to_taps(w):
    # torch conv weight (Co, Ci, 1, 3) -> (3, Co, Ci), tap-major, (out, in).
    co, ci, _, kw = w.shape
    return jnp.transpose(w.reshape(co, ci, kw), (2, 0, 1))


def init_params(key):
    g_relu, g_tanh = 2.0 ** 0.5, 5.0 / 3.0
    ks = jax.random.split(key, 6)
    p = {}
    w = _kaiming_uniform(ks[0], (20, 13, 1, 3), 13 * 3, g_relu)
    p["c1_w"], p["c1_b"] = _conv_w_to_taps(w), jnp.zeros((20, 1), jnp.float32)
    w = _kaiming_uniform(ks[1], (40, 20, 1, 3), 20 * 3, g_tanh)
    p["c2_w"], p["c2_b"] = _conv_w_to_taps(w), jnp.zeros((40, 1), jnp.float32)
    w = _kaiming_uniform(ks[2], (60, 40, 1, 3), 40 * 3, g_relu)
    p["c3_w"], p["c3_b"] = _conv_w_to_taps(w), jnp.zeros((60, 1), jnp.float32)
    w = _kaiming_uniform(ks[3], (80, 60, 1, 3), 60 * 3, g_tanh)
    p["c4_w"], p["c4_b"] = _conv_w_to_taps(w), jnp.zeros((80, 1), jnp.float32)
    # linear1: torch weight (100, 260) acting on
    # [X_pool.flatten (idx = c*3 + w) ; X_conv.flatten (idx = c)].
    w1 = _kaiming_uniform(ks[4], (100, 260), 260, g_tanh)
    p["l1a_w"] = jnp.transpose(w1[:, :180].reshape(100, 60, 3), (2, 0, 1))  # (3, 100, 60)
    p["l1b_w"] = w1[:, 180:]                                                # (100, 80)
    p["l1_b"] = jnp.zeros((100, 1), jnp.float32)
    p["l2_w"] = _kaiming_uniform(ks[5], (2, 100), 100, g_relu)              # (2, 100)
    p["l2_b"] = jnp.zeros((2, 1), jnp.float32)
    return p


# ----------------------------------------------------------------------------
# Plain-JAX reference of CNNetwork.forward (for correctness checking)
# ----------------------------------------------------------------------------
def forward_reference(x, p):
    h = jnp.transpose(x[:, :, 0, :], (0, 2, 1))                  # (N, 50, 13) NWC

    def conv(h, w3, b, act, pool_k):
        wout = h.shape[1] - 2
        y = sum(jnp.einsum("nwc,oc->nwo", h[:, k:k + wout, :], w3[k])
                for k in range(3)) + b[:, 0]
        y = act(y)
        if pool_k > 1:
            wp = wout // pool_k
            y = y[:, :wp * pool_k, :].reshape(y.shape[0], wp, pool_k, -1).max(axis=2)
        return y

    h = conv(h, p["c1_w"], p["c1_b"], jax.nn.relu, 2)
    h = conv(h, p["c2_w"], p["c2_b"], jnp.tanh, 2)
    xp = conv(h, p["c3_w"], p["c3_b"], jax.nn.relu, 3)            # (N, 3, 60)
    xc = conv(xp, p["c4_w"], p["c4_b"], jnp.tanh, 1)              # (N, 1, 80)
    h1 = xc[:, 0, :] @ p["l1b_w"].T + p["l1_b"][:, 0]
    for w in range(3):
        h1 = h1 + xp[:, w, :] @ p["l1a_w"][w].T
    logits = h1 @ p["l2_w"].T + p["l2_b"][:, 0]
    return jax.nn.softmax(logits, axis=-1)


# ----------------------------------------------------------------------------
if __name__ == "__main__":
    key = jax.random.PRNGKey(0)
    k_param, k_x = jax.random.split(key)

    params = init_params(k_param)
    # Input implied by the module: NCHW with C=13, H=1, W=50 (=> linear1 in=260).
    x = jax.random.normal(k_x, (2, 13, 1, 50), jnp.float32)

    out = jax.block_until_ready(forward(x, params))

    assert out.shape == (2, 2)
    assert bool(jnp.all(jnp.isfinite(out)))
    ref = forward_reference(x, params)
    assert bool(jnp.allclose(out, ref, rtol=2e-3, atol=2e-3)), (out, ref)
    print("KERNEL_OK")
</pallas_src>

<mosaic_0001>
module attributes {stable_mosaic.version = 11 : i64} {
  func.func @_fused_forward_kernel(%arg0: i32, %arg1: memref<13x6400xf32, #tpu.memory_space<vmem>>, %arg2: memref<3x20x13xf32, #tpu.memory_space<vmem>>, %arg3: memref<20x1xf32, #tpu.memory_space<vmem>>, %arg4: memref<3x40x20xf32, #tpu.memory_space<vmem>>, %arg5: memref<40x1xf32, #tpu.memory_space<vmem>>, %arg6: memref<3x60x40xf32, #tpu.memory_space<vmem>>, %arg7: memref<60x1xf32, #tpu.memory_space<vmem>>, %arg8: memref<3x80x60xf32, #tpu.memory_space<vmem>>, %arg9: memref<80x1xf32, #tpu.memory_space<vmem>>, %arg10: memref<3x100x60xf32, #tpu.memory_space<vmem>>, %arg11: memref<100x80xf32, #tpu.memory_space<vmem>>, %arg12: memref<100x1xf32, #tpu.memory_space<vmem>>, %arg13: memref<2x100xf32, #tpu.memory_space<vmem>>, %arg14: memref<2x1xf32, #tpu.memory_space<vmem>>, %arg15: memref<2x128xf32, #tpu.memory_space<vmem>>) attributes {dimension_semantics = [#tpu.dimension_semantics<parallel>], iteration_bounds = array<i64: 1>, scalar_prefetch = 0 : i64, scratch_operands = 0 : i64, tpu.core_type = #tpu.core_type<tc>, window_params = [{transform_indices = @transform_0, window_bounds = array<i64: 13, 6400>}, {pipeline_mode = #tpu.pipeline_mode<synchronous>, transform_indices = @transform_1, window_bounds = array<i64: 3, 20, 13>}, {pipeline_mode = #tpu.pipeline_mode<synchronous>, transform_indices = @transform_2, window_bounds = array<i64: 20, 1>}, {pipeline_mode = #tpu.pipeline_mode<synchronous>, transform_indices = @transform_3, window_bounds = array<i64: 3, 40, 20>}, {pipeline_mode = #tpu.pipeline_mode<synchronous>, transform_indices = @transform_4, window_bounds = array<i64: 40, 1>}, {pipeline_mode = #tpu.pipeline_mode<synchronous>, transform_indices = @transform_5, window_bounds = array<i64: 3, 60, 40>}, {pipeline_mode = #tpu.pipeline_mode<synchronous>, transform_indices = @transform_6, window_bounds = array<i64: 60, 1>}, {pipeline_mode = #tpu.pipeline_mode<synchronous>, transform_indices = @transform_7, window_bounds = array<i64: 3, 80, 60>}, {pipeline_mode = #tpu.pipeline_mode<synchronous>, transform_indices = @transform_8, window_bounds = array<i64: 80, 1>}, {pipeline_mode = #tpu.pipeline_mode<synchronous>, transform_indices = @transform_9, window_bounds = array<i64: 3, 100, 60>}, {pipeline_mode = #tpu.pipeline_mode<synchronous>, transform_indices = @transform_10, window_bounds = array<i64: 100, 80>}, {pipeline_mode = #tpu.pipeline_mode<synchronous>, transform_indices = @transform_11, window_bounds = array<i64: 100, 1>}, {pipeline_mode = #tpu.pipeline_mode<synchronous>, transform_indices = @transform_12, window_bounds = array<i64: 2, 100>}, {pipeline_mode = #tpu.pipeline_mode<synchronous>, transform_indices = @transform_13, window_bounds = array<i64: 2, 1>}, {transform_indices = @transform_14, window_bounds = array<i64: 2, 128>}]} {
    %c0 = arith.constant 0 : index
    %c0_0 = arith.constant 0 : index
    %0 = vector.load %arg1[%c0, %c0_0] : memref<13x6400xf32, #tpu.memory_space<vmem>>, vector<13x6400xf32>
    %c0_1 = arith.constant 0 : index
    %c0_2 = arith.constant 0 : index
    %c0_3 = arith.constant 0 : index
    %1 = vector.load %arg2[%c0_1, %c0_2, %c0_3] : memref<3x20x13xf32, #tpu.memory_space<vmem>>, vector<1x20x13xf32>
    %2 = vector.shape_cast %1 : vector<1x20x13xf32> to vector<20x13xf32>
    %3 = vector.extract_strided_slice %0 {offsets = [0, 0], sizes = [13, 6144], strides = [1, 1]} : vector<13x6400xf32> to vector<13x6144xf32>
    %cst = arith.constant dense<0.000000e+00> : vector<20x6144xf32>
    %4 = tpu.matmul %2, %3, %cst {dimension_numbers = #tpu.dot_dimension_numbers<[1], [0], [0], [1], [0, 0, 1, 1], [], []>} : vector<20x13xf32>, vector<13x6144xf32>, vector<20x6144xf32> -> vector<20x6144xf32>
    %c1 = arith.constant 1 : index
    %c0_4 = arith.constant 0 : index
    %c0_5 = arith.constant 0 : index
    %5 = vector.load %arg2[%c1, %c0_4, %c0_5] : memref<3x20x13xf32, #tpu.memory_space<vmem>>, vector<1x20x13xf32>
    %6 = vector.shape_cast %5 : vector<1x20x13xf32> to vector<20x13xf32>
    %7 = vector.extract_strided_slice %0 {offsets = [0, 128], sizes = [13, 6144], strides = [1, 1]} : vector<13x6400xf32> to vector<13x6144xf32>
    %cst_6 = arith.constant dense<0.000000e+00> : vector<20x6144xf32>
    %8 = tpu.matmul %6, %7, %cst_6 {dimension_numbers = #tpu.dot_dimension_numbers<[1], [0], [0], [1], [0, 0, 1, 1], [], []>} : vector<20x13xf32>, vector<13x6144xf32>, vector<20x6144xf32> -> vector<20x6144xf32>
    %9 = arith.addf %4, %8 : vector<20x6144xf32>
    %c2 = arith.constant 2 : index
    %c0_7 = arith.constant 0 : index
    %c0_8 = arith.constant 0 : index
    %10 = vector.load %arg2[%c2, %c0_7, %c0_8] : memref<3x20x13xf32, #tpu.memory_space<vmem>>, vector<1x20x13xf32>
    %11 = vector.shape_cast %10 : vector<1x20x13xf32> to vector<20x13xf32>
    %12 = vector.extract_strided_slice %0 {offsets = [0, 256], sizes = [13, 6144], strides = [1, 1]} : vector<13x6400xf32> to vector<13x6144xf32>
    %cst_9 = arith.constant dense<0.000000e+00> : vector<20x6144xf32>
    %13 = tpu.matmul %11, %12, %cst_9 {dimension_numbers = #tpu.dot_dimension_numbers<[1], [0], [0], [1], [0, 0, 1, 1], [], []>} : vector<20x13xf32>, vector<13x6144xf32>, vector<20x6144xf32> -> vector<20x6144xf32>
    %14 = arith.addf %9, %13 : vector<20x6144xf32>
    %c0_10 = arith.constant 0 : index
    %c0_11 = arith.constant 0 : index
    %15 = vector.load %arg3[%c0_10, %c0_11] : memref<20x1xf32, #tpu.memory_space<vmem>>, vector<20x1xf32>
    %16 = vector.broadcast %15 : vector<20x1xf32> to vector<20x6144xf32>
    %17 = arith.addf %14, %16 : vector<20x6144xf32>
    %cst_12 = arith.constant 0.000000e+00 : f32
    %18 = vector.broadcast %cst_12 : f32 to vector<20x6144xf32>
    %19 = arith.maximumf %17, %18 : vector<20x6144xf32>
    %20 = vector.extract_strided_slice %19 {offsets = [0, 0], sizes = [20, 128], strides = [1, 1]} : vector<20x6144xf32> to vector<20x128xf32>
    %21 = vector.extract_strided_slice %19 {offsets = [0, 128], sizes = [20, 128], strides = [1, 1]} : vector<20x6144xf32> to vector<20x128xf32>
    %22 = arith.maximumf %20, %21 : vector<20x128xf32>
    %23 = vector.extract_strided_slice %19 {offsets = [0, 256], sizes = [20, 128], strides = [1, 1]} : vector<20x6144xf32> to vector<20x128xf32>
    %24 = vector.extract_strided_slice %19 {offsets = [0, 384], sizes = [20, 128], strides = [1, 1]} : vector<20x6144xf32> to vector<20x128xf32>
    %25 = arith.maximumf %23, %24 : vector<20x128xf32>
    %26 = vector.extract_strided_slice %19 {offsets = [0, 512], sizes = [20, 128], strides = [1, 1]} : vector<20x6144xf32> to vector<20x128xf32>
    %27 = vector.extract_strided_slice %19 {offsets = [0, 640], sizes = [20, 128], strides = [1, 1]} : vector<20x6144xf32> to vector<20x128xf32>
    %28 = arith.maximumf %26, %27 : vector<20x128xf32>
    %29 = vector.extract_strided_slice %19 {offsets = [0, 768], sizes = [20, 128], strides = [1, 1]} : vector<20x6144xf32> to vector<20x128xf32>
    %30 = vector.extract_strided_slice %19 {offsets = [0, 896], sizes = [20, 128], strides = [1, 1]} : vector<20x6144xf32> to vector<20x128xf32>
    %31 = arith.maximumf %29, %30 : vector<20x128xf32>
    %32 = vector.extract_strided_slice %19 {offsets = [0, 1024], sizes = [20, 128], strides = [1, 1]} : vector<20x6144xf32> to vector<20x128xf32>
    %33 = vector.extract_strided_slice %19 {offsets = [0, 1152], sizes = [20, 128], strides = [1, 1]} : vector<20x6144xf32> to vector<20x128xf32>
    %34 = arith.maximumf %32, %33 : vector<20x128xf32>
    %35 = vector.extract_strided_slice %19 {offsets = [0, 1280], sizes = [20, 128], strides = [1, 1]} : vector<20x6144xf32> to vector<20x128xf32>
    %36 = vector.extract_strided_slice %19 {offsets = [0, 1408], sizes = [20, 128], strides = [1, 1]} : vector<20x6144xf32> to vector<20x128xf32>
    %37 = arith.maximumf %35, %36 : vector<20x128xf32>
    %38 = vector.extract_strided_slice %19 {offsets = [0, 1536], sizes = [20, 128], strides = [1, 1]} : vector<20x6144xf32> to vector<20x128xf32>
    %39 = vector.extract_strided_slice %19 {offsets = [0, 1664], sizes = [20, 128], strides = [1, 1]} : vector<20x6144xf32> to vector<20x128xf32>
    %40 = arith.maximumf %38, %39 : vector<20x128xf32>
    %41 = vector.extract_strided_slice %19 {offsets = [0, 1792], sizes = [20, 128], strides = [1, 1]} : vector<20x6144xf32> to vector<20x128xf32>
    %42 = vector.extract_strided_slice %19 {offsets = [0, 1920], sizes = [20, 128], strides = [1, 1]} : vector<20x6144xf32> to vector<20x128xf32>
    %43 = arith.maximumf %41, %42 : vector<20x128xf32>
    %44 = vector.extract_strided_slice %19 {offsets = [0, 2048], sizes = [20, 128], strides = [1, 1]} : vector<20x6144xf32> to vector<20x128xf32>
    %45 = vector.extract_strided_slice %19 {offsets = [0, 2176], sizes = [20, 128], strides = [1, 1]} : vector<20x6144xf32> to vector<20x128xf32>
    %46 = arith.maximumf %44, %45 : vector<20x128xf32>
    %47 = vector.extract_strided_slice %19 {offsets = [0, 2304], sizes = [20, 128], strides = [1, 1]} : vector<20x6144xf32> to vector<20x128xf32>
    %48 = vector.extract_strided_slice %19 {offsets = [0, 2432], sizes = [20, 128], strides = [1, 1]} : vector<20x6144xf32> to vector<20x128xf32>
    %49 = arith.maximumf %47, %48 : vector<20x128xf32>
    %50 = vector.extract_strided_slice %19 {offsets = [0, 2560], sizes = [20, 128], strides = [1, 1]} : vector<20x6144xf32> to vector<20x128xf32>
    %51 = vector.extract_strided_slice %19 {offsets = [0, 2688], sizes = [20, 128], strides = [1, 1]} : vector<20x6144xf32> to vector<20x128xf32>
    %52 = arith.maximumf %50, %51 : vector<20x128xf32>
    %53 = vector.extract_strided_slice %19 {offsets = [0, 2816], sizes = [20, 128], strides = [1, 1]} : vector<20x6144xf32> to vector<20x128xf32>
    %54 = vector.extract_strided_slice %19 {offsets = [0, 2944], sizes = [20, 128], strides = [1, 1]} : vector<20x6144xf32> to vector<20x128xf32>
    %55 = arith.maximumf %53, %54 : vector<20x128xf32>
    %56 = vector.extract_strided_slice %19 {offsets = [0, 3072], sizes = [20, 128], strides = [1, 1]} : vector<20x6144xf32> to vector<20x128xf32>
    %57 = vector.extract_strided_slice %19 {offsets = [0, 3200], sizes = [20, 128], strides = [1, 1]} : vector<20x6144xf32> to vector<20x128xf32>
    %58 = arith.maximumf %56, %57 : vector<20x128xf32>
    %59 = vector.extract_strided_slice %19 {offsets = [0, 3328], sizes = [20, 128], strides = [1, 1]} : vector<20x6144xf32> to vector<20x128xf32>
    %60 = vector.extract_strided_slice %19 {offsets = [0, 3456], sizes = [20, 128], strides = [1, 1]} : vector<20x6144xf32> to vector<20x128xf32>
    %61 = arith.maximumf %59, %60 : vector<20x128xf32>
    %62 = vector.extract_strided_slice %19 {offsets = [0, 3584], sizes = [20, 128], strides = [1, 1]} : vector<20x6144xf32> to vector<20x128xf32>
    %63 = vector.extract_strided_slice %19 {offsets = [0, 3712], sizes = [20, 128], strides = [1, 1]} : vector<20x6144xf32> to vector<20x128xf32>
    %64 = arith.maximumf %62, %63 : vector<20x128xf32>
    %65 = vector.extract_strided_slice %19 {offsets = [0, 3840], sizes = [20, 128], strides = [1, 1]} : vector<20x6144xf32> to vector<20x128xf32>
    %66 = vector.extract_strided_slice %19 {offsets = [0, 3968], sizes = [20, 128], strides = [1, 1]} : vector<20x6144xf32> to vector<20x128xf32>
    %67 = arith.maximumf %65, %66 : vector<20x128xf32>
    %68 = vector.extract_strided_slice %19 {offsets = [0, 4096], sizes = [20, 128], strides = [1, 1]} : vector<20x6144xf32> to vector<20x128xf32>
    %69 = vector.extract_strided_slice %19 {offsets = [0, 4224], sizes = [20, 128], strides = [1, 1]} : vector<20x6144xf32> to vector<20x128xf32>
    %70 = arith.maximumf %68, %69 : vector<20x128xf32>
    %71 = vector.extract_strided_slice %19 {offsets = [0, 4352], sizes = [20, 128], strides = [1, 1]} : vector<20x6144xf32> to vector<20x128xf32>
    %72 = vector.extract_strided_slice %19 {offsets = [0, 4480], sizes = [20, 128], strides = [1, 1]} : vector<20x6144xf32> to vector<20x128xf32>
    %73 = arith.maximumf %71, %72 : vector<20x128xf32>
    %74 = vector.extract_strided_slice %19 {offsets = [0, 4608], sizes = [20, 128], strides = [1, 1]} : vector<20x6144xf32> to vector<20x128xf32>
    %75 = vector.extract_strided_slice %19 {offsets = [0, 4736], sizes = [20, 128], strides = [1, 1]} : vector<20x6144xf32> to vector<20x128xf32>
    %76 = arith.maximumf %74, %75 : vector<20x128xf32>
    %77 = vector.extract_strided_slice %19 {offsets = [0, 4864], sizes = [20, 128], strides = [1, 1]} : vector<20x6144xf32> to vector<20x128xf32>
    %78 = vector.extract_strided_slice %19 {offsets = [0, 4992], sizes = [20, 128], strides = [1, 1]} : vector<20x6144xf32> to vector<20x128xf32>
    %79 = arith.maximumf %77, %78 : vector<20x128xf32>
    %80 = vector.extract_strided_slice %19 {offsets = [0, 5120], sizes = [20, 128], strides = [1, 1]} : vector<20x6144xf32> to vector<20x128xf32>
    %81 = vector.extract_strided_slice %19 {offsets = [0, 5248], sizes = [20, 128], strides = [1, 1]} : vector<20x6144xf32> to vector<20x128xf32>
    %82 = arith.maximumf %80, %81 : vector<20x128xf32>
    %83 = vector.extract_strided_slice %19 {offsets = [0, 5376], sizes = [20, 128], strides = [1, 1]} : vector<20x6144xf32> to vector<20x128xf32>
    %84 = vector.extract_strided_slice %19 {offsets = [0, 5504], sizes = [20, 128], strides = [1, 1]} : vector<20x6144xf32> to vector<20x128xf32>
    %85 = arith.maximumf %83, %84 : vector<20x128xf32>
    %86 = vector.extract_strided_slice %19 {offsets = [0, 5632], sizes = [20, 128], strides = [1, 1]} : vector<20x6144xf32> to vector<20x128xf32>
    %87 = vector.extract_strided_slice %19 {offsets = [0, 5760], sizes = [20, 128], strides = [1, 1]} : vector<20x6144xf32> to vector<20x128xf32>
    %88 = arith.maximumf %86, %87 : vector<20x128xf32>
    %89 = vector.extract_strided_slice %19 {offsets = [0, 5888], sizes = [20, 128], strides = [1, 1]} : vector<20x6144xf32> to vector<20x128xf32>
    %90 = vector.extract_strided_slice %19 {offsets = [0, 6016], sizes = [20, 128], strides = [1, 1]} : vector<20x6144xf32> to vector<20x128xf32>
    %91 = arith.maximumf %89, %90 : vector<20x128xf32>
    %92 = tpu.concatenate %22, %25, %28, %31, %34, %37, %40, %43, %46, %49, %52, %55, %58, %61, %64, %67 in 1 : vector<20x128xf32>, vector<20x128xf32>, vector<20x128xf32>, vector<20x128xf32>, vector<20x128xf32>, vector<20x128xf32>, vector<20x128xf32>, vector<20x128xf32>, vector<20x128xf32>, vector<20x128xf32>, vector<20x128xf32>, vector<20x128xf32>, vector<20x128xf32>, vector<20x128xf32>, vector<20x128xf32>, vector<20x128xf32> -> vector<20x2048xf32>
    %93 = tpu.concatenate %70, %73, %76, %79, %82, %85, %88, %91 in 1 : vector<20x128xf32>, vector<20x128xf32>, vector<20x128xf32>, vector<20x128xf32>, vector<20x128xf32>, vector<20x128xf32>, vector<20x128xf32>, vector<20x128xf32> -> vector<20x1024xf32>
    %94 = tpu.concatenate %92, %93 in 1 : vector<20x2048xf32>, vector<20x1024xf32> -> vector<20x3072xf32>
    %c0_13 = arith.constant 0 : index
    %c0_14 = arith.constant 0 : index
    %c0_15 = arith.constant 0 : index
    %95 = vector.load %arg4[%c0_13, %c0_14, %c0_15] : memref<3x40x20xf32, #tpu.memory_space<vmem>>, vector<1x40x20xf32>
    %96 = vector.shape_cast %95 : vector<1x40x20xf32> to vector<40x20xf32>
    %97 = vector.extract_strided_slice %94 {offsets = [0, 0], sizes = [20, 2816], strides = [1, 1]} : vector<20x3072xf32> to vector<20x2816xf32>
    %cst_16 = arith.constant dense<0.000000e+00> : vector<40x2816xf32>
    %98 = tpu.matmul %96, %97, %cst_16 {dimension_numbers = #tpu.dot_dimension_numbers<[1], [0], [0], [1], [0, 0, 1, 1], [], []>} : vector<40x20xf32>, vector<20x2816xf32>, vector<40x2816xf32> -> vector<40x2816xf32>
    %c1_17 = arith.constant 1 : index
    %c0_18 = arith.constant 0 : index
    %c0_19 = arith.constant 0 : index
    %99 = vector.load %arg4[%c1_17, %c0_18, %c0_19] : memref<3x40x20xf32, #tpu.memory_space<vmem>>, vector<1x40x20xf32>
    %100 = vector.shape_cast %99 : vector<1x40x20xf32> to vector<40x20xf32>
    %101 = vector.extract_strided_slice %94 {offsets = [0, 128], sizes = [20, 2816], strides = [1, 1]} : vector<20x3072xf32> to vector<20x2816xf32>
    %cst_20 = arith.constant dense<0.000000e+00> : vector<40x2816xf32>
    %102 = tpu.matmul %100, %101, %cst_20 {dimension_numbers = #tpu.dot_dimension_numbers<[1], [0], [0], [1], [0, 0, 1, 1], [], []>} : vector<40x20xf32>, vector<20x2816xf32>, vector<40x2816xf32> -> vector<40x2816xf32>
    %103 = arith.addf %98, %102 : vector<40x2816xf32>
    %c2_21 = arith.constant 2 : index
    %c0_22 = arith.constant 0 : index
    %c0_23 = arith.constant 0 : index
    %104 = vector.load %arg4[%c2_21, %c0_22, %c0_23] : memref<3x40x20xf32, #tpu.memory_space<vmem>>, vector<1x40x20xf32>
    %105 = vector.shape_cast %104 : vector<1x40x20xf32> to vector<40x20xf32>
    %106 = vector.extract_strided_slice %94 {offsets = [0, 256], sizes = [20, 2816], strides = [1, 1]} : vector<20x3072xf32> to vector<20x2816xf32>
    %cst_24 = arith.constant dense<0.000000e+00> : vector<40x2816xf32>
    %107 = tpu.matmul %105, %106, %cst_24 {dimension_numbers = #tpu.dot_dimension_numbers<[1], [0], [0], [1], [0, 0, 1, 1], [], []>} : vector<40x20xf32>, vector<20x2816xf32>, vector<40x2816xf32> -> vector<40x2816xf32>
    %108 = arith.addf %103, %107 : vector<40x2816xf32>
    %c0_25 = arith.constant 0 : index
    %c0_26 = arith.constant 0 : index
    %109 = vector.load %arg5[%c0_25, %c0_26] : memref<40x1xf32, #tpu.memory_space<vmem>>, vector<40x1xf32>
    %110 = vector.broadcast %109 : vector<40x1xf32> to vector<40x2816xf32>
    %111 = arith.addf %108, %110 : vector<40x2816xf32>
    %112 = math.tanh %111 : vector<40x2816xf32>
    %113 = vector.extract_strided_slice %112 {offsets = [0, 0], sizes = [40, 128], strides = [1, 1]} : vector<40x2816xf32> to vector<40x128xf32>
    %114 = vector.extract_strided_slice %112 {offsets = [0, 128], sizes = [40, 128], strides = [1, 1]} : vector<40x2816xf32> to vector<40x128xf32>
    %115 = arith.maximumf %113, %114 : vector<40x128xf32>
    %116 = vector.extract_strided_slice %112 {offsets = [0, 256], sizes = [40, 128], strides = [1, 1]} : vector<40x2816xf32> to vector<40x128xf32>
    %117 = vector.extract_strided_slice %112 {offsets = [0, 384], sizes = [40, 128], strides = [1, 1]} : vector<40x2816xf32> to vector<40x128xf32>
    %118 = arith.maximumf %116, %117 : vector<40x128xf32>
    %119 = vector.extract_strided_slice %112 {offsets = [0, 512], sizes = [40, 128], strides = [1, 1]} : vector<40x2816xf32> to vector<40x128xf32>
    %120 = vector.extract_strided_slice %112 {offsets = [0, 640], sizes = [40, 128], strides = [1, 1]} : vector<40x2816xf32> to vector<40x128xf32>
    %121 = arith.maximumf %119, %120 : vector<40x128xf32>
    %122 = vector.extract_strided_slice %112 {offsets = [0, 768], sizes = [40, 128], strides = [1, 1]} : vector<40x2816xf32> to vector<40x128xf32>
    %123 = vector.extract_strided_slice %112 {offsets = [0, 896], sizes = [40, 128], strides = [1, 1]} : vector<40x2816xf32> to vector<40x128xf32>
    %124 = arith.maximumf %122, %123 : vector<40x128xf32>
    %125 = vector.extract_strided_slice %112 {offsets = [0, 1024], sizes = [40, 128], strides = [1, 1]} : vector<40x2816xf32> to vector<40x128xf32>
    %126 = vector.extract_strided_slice %112 {offsets = [0, 1152], sizes = [40, 128], strides = [1, 1]} : vector<40x2816xf32> to vector<40x128xf32>
    %127 = arith.maximumf %125, %126 : vector<40x128xf32>
    %128 = vector.extract_strided_slice %112 {offsets = [0, 1280], sizes = [40, 128], strides = [1, 1]} : vector<40x2816xf32> to vector<40x128xf32>
    %129 = vector.extract_strided_slice %112 {offsets = [0, 1408], sizes = [40, 128], strides = [1, 1]} : vector<40x2816xf32> to vector<40x128xf32>
    %130 = arith.maximumf %128, %129 : vector<40x128xf32>
    %131 = vector.extract_strided_slice %112 {offsets = [0, 1536], sizes = [40, 128], strides = [1, 1]} : vector<40x2816xf32> to vector<40x128xf32>
    %132 = vector.extract_strided_slice %112 {offsets = [0, 1664], sizes = [40, 128], strides = [1, 1]} : vector<40x2816xf32> to vector<40x128xf32>
    %133 = arith.maximumf %131, %132 : vector<40x128xf32>
    %134 = vector.extract_strided_slice %112 {offsets = [0, 1792], sizes = [40, 128], strides = [1, 1]} : vector<40x2816xf32> to vector<40x128xf32>
    %135 = vector.extract_strided_slice %112 {offsets = [0, 1920], sizes = [40, 128], strides = [1, 1]} : vector<40x2816xf32> to vector<40x128xf32>
    %136 = arith.maximumf %134, %135 : vector<40x128xf32>
    %137 = vector.extract_strided_slice %112 {offsets = [0, 2048], sizes = [40, 128], strides = [1, 1]} : vector<40x2816xf32> to vector<40x128xf32>
    %138 = vector.extract_strided_slice %112 {offsets = [0, 2176], sizes = [40, 128], strides = [1, 1]} : vector<40x2816xf32> to vector<40x128xf32>
    %139 = arith.maximumf %137, %138 : vector<40x128xf32>
    %140 = vector.extract_strided_slice %112 {offsets = [0, 2304], sizes = [40, 128], strides = [1, 1]} : vector<40x2816xf32> to vector<40x128xf32>
    %141 = vector.extract_strided_slice %112 {offsets = [0, 2432], sizes = [40, 128], strides = [1, 1]} : vector<40x2816xf32> to vector<40x128xf32>
    %142 = arith.maximumf %140, %141 : vector<40x128xf32>
    %143 = vector.extract_strided_slice %112 {offsets = [0, 2560], sizes = [40, 128], strides = [1, 1]} : vector<40x2816xf32> to vector<40x128xf32>
    %144 = vector.extract_strided_slice %112 {offsets = [0, 2688], sizes = [40, 128], strides = [1, 1]} : vector<40x2816xf32> to vector<40x128xf32>
    %145 = arith.maximumf %143, %144 : vector<40x128xf32>
    %146 = tpu.concatenate %115, %118, %121, %124, %127, %130, %133, %136, %139, %142, %145 in 1 : vector<40x128xf32>, vector<40x128xf32>, vector<40x128xf32>, vector<40x128xf32>, vector<40x128xf32>, vector<40x128xf32>, vector<40x128xf32>, vector<40x128xf32>, vector<40x128xf32>, vector<40x128xf32>, vector<40x128xf32> -> vector<40x1408xf32>
    %c0_27 = arith.constant 0 : index
    %c0_28 = arith.constant 0 : index
    %c0_29 = arith.constant 0 : index
    %147 = vector.load %arg6[%c0_27, %c0_28, %c0_29] : memref<3x60x40xf32, #tpu.memory_space<vmem>>, vector<1x60x40xf32>
    %148 = vector.shape_cast %147 : vector<1x60x40xf32> to vector<60x40xf32>
    %149 = vector.extract_strided_slice %146 {offsets = [0, 0], sizes = [40, 1152], strides = [1, 1]} : vector<40x1408xf32> to vector<40x1152xf32>
    %cst_30 = arith.constant dense<0.000000e+00> : vector<60x1152xf32>
    %150 = tpu.matmul %148, %149, %cst_30 {dimension_numbers = #tpu.dot_dimension_numbers<[1], [0], [0], [1], [0, 0, 1, 1], [], []>} : vector<60x40xf32>, vector<40x1152xf32>, vector<60x1152xf32> -> vector<60x1152xf32>
    %c1_31 = arith.constant 1 : index
    %c0_32 = arith.constant 0 : index
    %c0_33 = arith.constant 0 : index
    %151 = vector.load %arg6[%c1_31, %c0_32, %c0_33] : memref<3x60x40xf32, #tpu.memory_space<vmem>>, vector<1x60x40xf32>
    %152 = vector.shape_cast %151 : vector<1x60x40xf32> to vector<60x40xf32>
    %153 = vector.extract_strided_slice %146 {offsets = [0, 128], sizes = [40, 1152], strides = [1, 1]} : vector<40x1408xf32> to vector<40x1152xf32>
    %cst_34 = arith.constant dense<0.000000e+00> : vector<60x1152xf32>
    %154 = tpu.matmul %152, %153, %cst_34 {dimension_numbers = #tpu.dot_dimension_numbers<[1], [0], [0], [1], [0, 0, 1, 1], [], []>} : vector<60x40xf32>, vector<40x1152xf32>, vector<60x1152xf32> -> vector<60x1152xf32>
    %155 = arith.addf %150, %154 : vector<60x1152xf32>
    %c2_35 = arith.constant 2 : index
    %c0_36 = arith.constant 0 : index
    %c0_37 = arith.constant 0 : index
    %156 = vector.load %arg6[%c2_35, %c0_36, %c0_37] : memref<3x60x40xf32, #tpu.memory_space<vmem>>, vector<1x60x40xf32>
    %157 = vector.shape_cast %156 : vector<1x60x40xf32> to vector<60x40xf32>
    %158 = vector.extract_strided_slice %146 {offsets = [0, 256], sizes = [40, 1152], strides = [1, 1]} : vector<40x1408xf32> to vector<40x1152xf32>
    %cst_38 = arith.constant dense<0.000000e+00> : vector<60x1152xf32>
    %159 = tpu.matmul %157, %158, %cst_38 {dimension_numbers = #tpu.dot_dimension_numbers<[1], [0], [0], [1], [0, 0, 1, 1], [], []>} : vector<60x40xf32>, vector<40x1152xf32>, vector<60x1152xf32> -> vector<60x1152xf32>
    %160 = arith.addf %155, %159 : vector<60x1152xf32>
    %c0_39 = arith.constant 0 : index
    %c0_40 = arith.constant 0 : index
    %161 = vector.load %arg7[%c0_39, %c0_40] : memref<60x1xf32, #tpu.memory_space<vmem>>, vector<60x1xf32>
    %162 = vector.broadcast %161 : vector<60x1xf32> to vector<60x1152xf32>
    %163 = arith.addf %160, %162 : vector<60x1152xf32>
    %cst_41 = arith.constant 0.000000e+00 : f32
    %164 = vector.broadcast %cst_41 : f32 to vector<60x1152xf32>
    %165 = arith.maximumf %163, %164 : vector<60x1152xf32>
    %166 = vector.extract_strided_slice %165 {offsets = [0, 0], sizes = [60, 128], strides = [1, 1]} : vector<60x1152xf32> to vector<60x128xf32>
    %167 = vector.extract_strided_slice %165 {offsets = [0, 128], sizes = [60, 128], strides = [1, 1]} : vector<60x1152xf32> to vector<60x128xf32>
    %168 = arith.maximumf %166, %167 : vector<60x128xf32>
    %169 = vector.extract_strided_slice %165 {offsets = [0, 256], sizes = [60, 128], strides = [1, 1]} : vector<60x1152xf32> to vector<60x128xf32>
    %170 = arith.maximumf %168, %169 : vector<60x128xf32>
    %171 = vector.extract_strided_slice %165 {offsets = [0, 384], sizes = [60, 128], strides = [1, 1]} : vector<60x1152xf32> to vector<60x128xf32>
    %172 = vector.extract_strided_slice %165 {offsets = [0, 512], sizes = [60, 128], strides = [1, 1]} : vector<60x1152xf32> to vector<60x128xf32>
    %173 = arith.maximumf %171, %172 : vector<60x128xf32>
    %174 = vector.extract_strided_slice %165 {offsets = [0, 640], sizes = [60, 128], strides = [1, 1]} : vector<60x1152xf32> to vector<60x128xf32>
    %175 = arith.maximumf %173, %174 : vector<60x128xf32>
    %176 = vector.extract_strided_slice %165 {offsets = [0, 768], sizes = [60, 128], strides = [1, 1]} : vector<60x1152xf32> to vector<60x128xf32>
    %177 = vector.extract_strided_slice %165 {offsets = [0, 896], sizes = [60, 128], strides = [1, 1]} : vector<60x1152xf32> to vector<60x128xf32>
    %178 = arith.maximumf %176, %177 : vector<60x128xf32>
    %179 = vector.extract_strided_slice %165 {offsets = [0, 1024], sizes = [60, 128], strides = [1, 1]} : vector<60x1152xf32> to vector<60x128xf32>
    %180 = arith.maximumf %178, %179 : vector<60x128xf32>
    %181 = tpu.concatenate %170, %175, %180 in 1 : vector<60x128xf32>, vector<60x128xf32>, vector<60x128xf32> -> vector<60x384xf32>
    %c0_42 = arith.constant 0 : index
    %c0_43 = arith.constant 0 : index
    %c0_44 = arith.constant 0 : index
    %182 = vector.load %arg8[%c0_42, %c0_43, %c0_44] : memref<3x80x60xf32, #tpu.memory_space<vmem>>, vector<1x80x60xf32>
    %183 = vector.shape_cast %182 : vector<1x80x60xf32> to vector<80x60xf32>
    %184 = vector.extract_strided_slice %181 {offsets = [0, 0], sizes = [60, 128], strides = [1, 1]} : vector<60x384xf32> to vector<60x128xf32>
    %cst_45 = arith.constant dense<0.000000e+00> : vector<80x128xf32>
    %185 = tpu.matmul %183, %184, %cst_45 {dimension_numbers = #tpu.dot_dimension_numbers<[1], [0], [0], [1], [0, 0, 1, 1], [], []>} : vector<80x60xf32>, vector<60x128xf32>, vector<80x128xf32> -> vector<80x128xf32>
    %c1_46 = arith.constant 1 : index
    %c0_47 = arith.constant 0 : index
    %c0_48 = arith.constant 0 : index
    %186 = vector.load %arg8[%c1_46, %c0_47, %c0_48] : memref<3x80x60xf32, #tpu.memory_space<vmem>>, vector<1x80x60xf32>
    %187 = vector.shape_cast %186 : vector<1x80x60xf32> to vector<80x60xf32>
    %188 = vector.extract_strided_slice %181 {offsets = [0, 128], sizes = [60, 128], strides = [1, 1]} : vector<60x384xf32> to vector<60x128xf32>
    %cst_49 = arith.constant dense<0.000000e+00> : vector<80x128xf32>
    %189 = tpu.matmul %187, %188, %cst_49 {dimension_numbers = #tpu.dot_dimension_numbers<[1], [0], [0], [1], [0, 0, 1, 1], [], []>} : vector<80x60xf32>, vector<60x128xf32>, vector<80x128xf32> -> vector<80x128xf32>
    %190 = arith.addf %185, %189 : vector<80x128xf32>
    %c2_50 = arith.constant 2 : index
    %c0_51 = arith.constant 0 : index
    %c0_52 = arith.constant 0 : index
    %191 = vector.load %arg8[%c2_50, %c0_51, %c0_52] : memref<3x80x60xf32, #tpu.memory_space<vmem>>, vector<1x80x60xf32>
    %192 = vector.shape_cast %191 : vector<1x80x60xf32> to vector<80x60xf32>
    %193 = vector.extract_strided_slice %181 {offsets = [0, 256], sizes = [60, 128], strides = [1, 1]} : vector<60x384xf32> to vector<60x128xf32>
    %cst_53 = arith.constant dense<0.000000e+00> : vector<80x128xf32>
    %194 = tpu.matmul %192, %193, %cst_53 {dimension_numbers = #tpu.dot_dimension_numbers<[1], [0], [0], [1], [0, 0, 1, 1], [], []>} : vector<80x60xf32>, vector<60x128xf32>, vector<80x128xf32> -> vector<80x128xf32>
    %195 = arith.addf %190, %194 : vector<80x128xf32>
    %c0_54 = arith.constant 0 : index
    %c0_55 = arith.constant 0 : index
    %196 = vector.load %arg9[%c0_54, %c0_55] : memref<80x1xf32, #tpu.memory_space<vmem>>, vector<80x1xf32>
    %197 = vector.broadcast %196 : vector<80x1xf32> to vector<80x128xf32>
    %198 = arith.addf %195, %197 : vector<80x128xf32>
    %199 = math.tanh %198 : vector<80x128xf32>
    %c0_56 = arith.constant 0 : index
    %c0_57 = arith.constant 0 : index
    %200 = vector.load %arg11[%c0_56, %c0_57] : memref<100x80xf32, #tpu.memory_space<vmem>>, vector<100x80xf32>
    %cst_58 = arith.constant dense<0.000000e+00> : vector<100x128xf32>
    %201 = tpu.matmul %200, %199, %cst_58 {dimension_numbers = #tpu.dot_dimension_numbers<[1], [0], [0], [1], [0, 0, 1, 1], [], []>} : vector<100x80xf32>, vector<80x128xf32>, vector<100x128xf32> -> vector<100x128xf32>
    %c0_59 = arith.constant 0 : index
    %c0_60 = arith.constant 0 : index
    %202 = vector.load %arg12[%c0_59, %c0_60] : memref<100x1xf32, #tpu.memory_space<vmem>>, vector<100x1xf32>
    %203 = vector.broadcast %202 : vector<100x1xf32> to vector<100x128xf32>
    %204 = arith.addf %201, %203 : vector<100x128xf32>
    %c0_61 = arith.constant 0 : index
    %c0_62 = arith.constant 0 : index
    %c0_63 = arith.constant 0 : index
    %205 = vector.load %arg10[%c0_61, %c0_62, %c0_63] : memref<3x100x60xf32, #tpu.memory_space<vmem>>, vector<1x100x60xf32>
    %206 = vector.shape_cast %205 : vector<1x100x60xf32> to vector<100x60xf32>
    %207 = vector.extract_strided_slice %181 {offsets = [0, 0], sizes = [60, 128], strides = [1, 1]} : vector<60x384xf32> to vector<60x128xf32>
    %cst_64 = arith.constant dense<0.000000e+00> : vector<100x128xf32>
    %208 = tpu.matmul %206, %207, %cst_64 {dimension_numbers = #tpu.dot_dimension_numbers<[1], [0], [0], [1], [0, 0, 1, 1], [], []>} : vector<100x60xf32>, vector<60x128xf32>, vector<100x128xf32> -> vector<100x128xf32>
    %209 = arith.addf %204, %208 : vector<100x128xf32>
    %c1_65 = arith.constant 1 : index
    %c0_66 = arith.constant 0 : index
    %c0_67 = arith.constant 0 : index
    %210 = vector.load %arg10[%c1_65, %c0_66, %c0_67] : memref<3x100x60xf32, #tpu.memory_space<vmem>>, vector<1x100x60xf32>
    %211 = vector.shape_cast %210 : vector<1x100x60xf32> to vector<100x60xf32>
    %212 = vector.extract_strided_slice %181 {offsets = [0, 128], sizes = [60, 128], strides = [1, 1]} : vector<60x384xf32> to vector<60x128xf32>
    %cst_68 = arith.constant dense<0.000000e+00> : vector<100x128xf32>
    %213 = tpu.matmul %211, %212, %cst_68 {dimension_numbers = #tpu.dot_dimension_numbers<[1], [0], [0], [1], [0, 0, 1, 1], [], []>} : vector<100x60xf32>, vector<60x128xf32>, vector<100x128xf32> -> vector<100x128xf32>
    %214 = arith.addf %209, %213 : vector<100x128xf32>
    %c2_69 = arith.constant 2 : index
    %c0_70 = arith.constant 0 : index
    %c0_71 = arith.constant 0 : index
    %215 = vector.load %arg10[%c2_69, %c0_70, %c0_71] : memref<3x100x60xf32, #tpu.memory_space<vmem>>, vector<1x100x60xf32>
    %216 = vector.shape_cast %215 : vector<1x100x60xf32> to vector<100x60xf32>
    %217 = vector.extract_strided_slice %181 {offsets = [0, 256], sizes = [60, 128], strides = [1, 1]} : vector<60x384xf32> to vector<60x128xf32>
    %cst_72 = arith.constant dense<0.000000e+00> : vector<100x128xf32>
    %218 = tpu.matmul %216, %217, %cst_72 {dimension_numbers = #tpu.dot_dimension_numbers<[1], [0], [0], [1], [0, 0, 1, 1], [], []>} : vector<100x60xf32>, vector<60x128xf32>, vector<100x128xf32> -> vector<100x128xf32>
    %219 = arith.addf %214, %218 : vector<100x128xf32>
    %c0_73 = arith.constant 0 : index
    %c0_74 = arith.constant 0 : index
    %220 = vector.load %arg13[%c0_73, %c0_74] : memref<2x100xf32, #tpu.memory_space<vmem>>, vector<2x100xf32>
    %cst_75 = arith.constant dense<0.000000e+00> : vector<2x128xf32>
    %221 = tpu.matmul %220, %219, %cst_75 {dimension_numbers = #tpu.dot_dimension_numbers<[1], [0], [0], [1], [0, 0, 1, 1], [], []>} : vector<2x100xf32>, vector<100x128xf32>, vector<2x128xf32> -> vector<2x128xf32>
    %c0_76 = arith.constant 0 : index
    %c0_77 = arith.constant 0 : index
    %222 = vector.load %arg14[%c0_76, %c0_77] : memref<2x1xf32, #tpu.memory_space<vmem>>, vector<2x1xf32>
    %223 = vector.broadcast %222 : vector<2x1xf32> to vector<2x128xf32>
    %224 = arith.addf %221, %223 : vector<2x128xf32>
    %225 = vector.extract_strided_slice %224 {offsets = [0, 0], sizes = [1, 128], strides = [1, 1]} : vector<2x128xf32> to vector<1x128xf32>
    %226 = vector.extract_strided_slice %224 {offsets = [1, 0], sizes = [1, 128], strides = [1, 1]} : vector<2x128xf32> to vector<1x128xf32>
    %227 = arith.subf %225, %226 : vector<1x128xf32>
    %228 = math.exp %227 : vector<1x128xf32>
    %cst_78 = arith.constant 1.000000e+00 : f32
    %229 = vector.broadcast %cst_78 : f32 to vector<1x128xf32>
    %230 = arith.addf %229, %228 : vector<1x128xf32>
    %cst_79 = arith.constant 1.000000e+00 : f32
    %231 = vector.broadcast %cst_79 : f32 to vector<1x128xf32>
    %232 = arith.divf %231, %230 : vector<1x128xf32>
    %cst_80 = arith.constant 1.000000e+00 : f32
    %233 = vector.broadcast %cst_80 : f32 to vector<1x128xf32>
    %234 = arith.subf %233, %232 : vector<1x128xf32>
    %235 = tpu.concatenate %234, %232 in 0 : vector<1x128xf32>, vector<1x128xf32> -> vector<2x128xf32>
    %c0_81 = arith.constant 0 : index
    %c0_82 = arith.constant 0 : index
    %236 = vector.load %arg15[%c0_81, %c0_82] : memref<2x128xf32, #tpu.memory_space<vmem>>, vector<2x128xf32>
    tpu.vector_store %arg15[%c0_81, %c0_82], %235 {strides = array<i32>} : memref<2x128xf32, #tpu.memory_space<vmem>>, vector<2x128xf32>,
    return
  }
  func.func @transform_0(%arg0: i32) -> (i32, i32) {
    %c0_i32 = arith.constant 0 : i32
    %c0_i32_0 = arith.constant 0 : i32
    return %c0_i32, %arg0 : i32, i32
  }
  func.func @transform_1(%arg0: i32) -> (i32, i32, i32) {
    %c0_i32 = arith.constant 0 : i32
    %c0_i32_0 = arith.constant 0 : i32
    %c0_i32_1 = arith.constant 0 : i32
    %c0_i32_2 = arith.constant 0 : i32
    return %c0_i32, %c0_i32_0, %c0_i32_1 : i32, i32, i32
  }
  func.func @transform_2(%arg0: i32) -> (i32, i32) {
    %c0_i32 = arith.constant 0 : i32
    %c0_i32_0 = arith.constant 0 : i32
    %c0_i32_1 = arith.constant 0 : i32
    return %c0_i32, %c0_i32_0 : i32, i32
  }
  func.func @transform_3(%arg0: i32) -> (i32, i32, i32) {
    %c0_i32 = arith.constant 0 : i32
    %c0_i32_0 = arith.constant 0 : i32
    %c0_i32_1 = arith.constant 0 : i32
    %c0_i32_2 = arith.constant 0 : i32
    return %c0_i32, %c0_i32_0, %c0_i32_1 : i32, i32, i32
  }
  func.func @transform_4(%arg0: i32) -> (i32, i32) {
    %c0_i32 = arith.constant 0 : i32
    %c0_i32_0 = arith.constant 0 : i32
    %c0_i32_1 = arith.constant 0 : i32
    return %c0_i32, %c0_i32_0 : i32, i32
  }
  func.func @transform_5(%arg0: i32) -> (i32, i32, i32) {
    %c0_i32 = arith.constant 0 : i32
    %c0_i32_0 = arith.constant 0 : i32
    %c0_i32_1 = arith.constant 0 : i32
    %c0_i32_2 = arith.constant 0 : i32
    return %c0_i32, %c0_i32_0, %c0_i32_1 : i32, i32, i32
  }
  func.func @transform_6(%arg0: i32) -> (i32, i32) {
    %c0_i32 = arith.constant 0 : i32
    %c0_i32_0 = arith.constant 0 : i32
    %c0_i32_1 = arith.constant 0 : i32
    return %c0_i32, %c0_i32_0 : i32, i32
  }
  func.func @transform_7(%arg0: i32) -> (i32, i32, i32) {
    %c0_i32 = arith.constant 0 : i32
    %c0_i32_0 = arith.constant 0 : i32
    %c0_i32_1 = arith.constant 0 : i32
    %c0_i32_2 = arith.constant 0 : i32
    return %c0_i32, %c0_i32_0, %c0_i32_1 : i32, i32, i32
  }
  func.func @transform_8(%arg0: i32) -> (i32, i32) {
    %c0_i32 = arith.constant 0 : i32
    %c0_i32_0 = arith.constant 0 : i32
    %c0_i32_1 = arith.constant 0 : i32
    return %c0_i32, %c0_i32_0 : i32, i32
  }
  func.func @transform_9(%arg0: i32) -> (i32, i32, i32) {
    %c0_i32 = arith.constant 0 : i32
    %c0_i32_0 = arith.constant 0 : i32
    %c0_i32_1 = arith.constant 0 : i32
    %c0_i32_2 = arith.constant 0 : i32
    return %c0_i32, %c0_i32_0, %c0_i32_1 : i32, i32, i32
  }
  func.func @transform_10(%arg0: i32) -> (i32, i32) {
    %c0_i32 = arith.constant 0 : i32
    %c0_i32_0 = arith.constant 0 : i32
    %c0_i32_1 = arith.constant 0 : i32
    return %c0_i32, %c0_i32_0 : i32, i32
  }
  func.func @transform_11(%arg0: i32) -> (i32, i32) {
    %c0_i32 = arith.constant 0 : i32
    %c0_i32_0 = arith.constant 0 : i32
    %c0_i32_1 = arith.constant 0 : i32
    return %c0_i32, %c0_i32_0 : i32, i32
  }
  func.func @transform_12(%arg0: i32) -> (i32, i32) {
    %c0_i32 = arith.constant 0 : i32
    %c0_i32_0 = arith.constant 0 : i32
    %c0_i32_1 = arith.constant 0 : i32
    return %c0_i32, %c0_i32_0 : i32, i32
  }
  func.func @transform_13(%arg0: i32) -> (i32, i32) {
    %c0_i32 = arith.constant 0 : i32
    %c0_i32_0 = arith.constant 0 : i32
    %c0_i32_1 = arith.constant 0 : i32
    return %c0_i32, %c0_i32_0 : i32, i32
  }
  func.func @transform_14(%arg0: i32) -> (i32, i32) {
    %c0_i32 = arith.constant 0 : i32
    %c0_i32_0 = arith.constant 0 : i32
    return %c0_i32, %arg0 : i32, i32
  }
}

</mosaic_0001>

<llo_original>
// kernel: forward.1
$region0: #{forward.1}
  #allocation0 [shape = 'u32[]', space=smem, size = 0x4, offset = 0x4, fixed_abs, tag = 'smem constant byte address 0x4 - core index']
  #allocation1 [shape = 'u32[72,128]{1,0:T(1,128)}', space=vmem, size = 0x9000, scoped, tag = 'internal scratch']
  %s0 = inlined_call_operand.vmem [shape: f32[13,6400], index: 0, kind: input, shape index: {}]
  %s1 = inlined_call_operand.vmem [shape: f32[3,20,13], index: 1, kind: input, shape index: {}]
  %s2 = inlined_call_operand.vmem [shape: f32[20,1], index: 2, kind: input, shape index: {}]
  %s3 = inlined_call_operand.vmem [shape: f32[3,40,20], index: 3, kind: input, shape index: {}]
  %s4 = inlined_call_operand.vmem [shape: f32[40,1], index: 4, kind: input, shape index: {}]
  %s5 = inlined_call_operand.vmem [shape: f32[3,60,40], index: 5, kind: input, shape index: {}]
  %s6 = inlined_call_operand.vmem [shape: f32[60,1], index: 6, kind: input, shape index: {}]
  %s7 = inlined_call_operand.vmem [shape: f32[3,80,60], index: 7, kind: input, shape index: {}]
  %s8 = inlined_call_operand.vmem [shape: f32[80,1], index: 8, kind: input, shape index: {}]
  %s9 = inlined_call_operand.vmem [shape: f32[3,100,60], index: 9, kind: input, shape index: {}]
  %s10 = inlined_call_operand.vmem [shape: f32[100,80], index: 10, kind: input, shape index: {}]
  %s11 = inlined_call_operand.vmem [shape: f32[100,1], index: 11, kind: input, shape index: {}]
  %s12 = inlined_call_operand.vmem [shape: f32[2,100], index: 12, kind: input, shape index: {}]
  %s13 = inlined_call_operand.vmem [shape: f32[2,1], index: 13, kind: input, shape index: {}]
  %s14 = inlined_call_operand.vmem [shape: f32[2,128], index: 14, kind: output, shape index: {}]
  %s15 = sld [smem:[#allocation0]]
  $region66: #{forward.1} parent=0
    _
  %s17 = ssub.s32 1, %s15
  %s18 = scalar_select 0, %s17, %s15
  // Predicated region
  $region2: #{forward.1} parent=0 // pred_check
    _
  $region3: #{forward.1} parent=0 // pred_check_branch
    %20 = sbr.rel (0) target = $region5
  $region4: #{forward.1} parent=0 // pred_region
    _
  $region5: #{forward.1} parent=0 // pred_fallthru
    _
  // Predicated region
  $region6: #{forward.1} parent=0 // pred_check
    _
  $region7: #{forward.1} parent=0 // pred_check_branch
    %22 = sbr.rel (0) target = $region9
  $region8: #{forward.1} parent=0 // pred_region
    _
  $region9: #{forward.1} parent=0 // pred_fallthru
    _
  // Predicated region
  $region10: #{forward.1} parent=0 // pred_check
    _
  $region11: #{forward.1} parent=0 // pred_check_branch
    %24 = sbr.rel (0) target = $region13
  $region12: #{forward.1} parent=0 // pred_region
    _
  $region13: #{forward.1} parent=0 // pred_fallthru
    _
  // Predicated region
  $region14: #{forward.1} parent=0 // pred_check
    _
  $region15: #{forward.1} parent=0 // pred_check_branch
    %26 = sbr.rel (0) target = $region17
  $region16: #{forward.1} parent=0 // pred_region
    _
  $region17: #{forward.1} parent=0 // pred_fallthru
    _
  // Predicated region
  $region18: #{forward.1} parent=0 // pred_check
    _
  $region19: #{forward.1} parent=0 // pred_check_branch
    %28 = sbr.rel (0) target = $region21
  $region20: #{forward.1} parent=0 // pred_region
    _
  $region21: #{forward.1} parent=0 // pred_fallthru
    _
  // Predicated region
  $region22: #{forward.1} parent=0 // pred_check
    _
  $region23: #{forward.1} parent=0 // pred_check_branch
    %30 = sbr.rel (0) target = $region25
  $region24: #{forward.1} parent=0 // pred_region
    _
  $region25: #{forward.1} parent=0 // pred_fallthru
    _
  // Predicated region
  $region26: #{forward.1} parent=0 // pred_check
    _
  $region27: #{forward.1} parent=0 // pred_check_branch
    %32 = sbr.rel (0) target = $region29
  $region28: #{forward.1} parent=0 // pred_region
    _
  $region29: #{forward.1} parent=0 // pred_fallthru
    _
  // Predicated region
  $region30: #{forward.1} parent=0 // pred_check
    _
  $region31: #{forward.1} parent=0 // pred_check_branch
    %34 = sbr.rel (0) target = $region33
  $region32: #{forward.1} parent=0 // pred_region
    _
  $region33: #{forward.1} parent=0 // pred_fallthru
    _
  // Predicated region
  $region34: #{forward.1} parent=0 // pred_check
    _
  $region35: #{forward.1} parent=0 // pred_check_branch
    %36 = sbr.rel (0) target = $region37
  $region36: #{forward.1} parent=0 // pred_region
    _
  $region37: #{forward.1} parent=0 // pred_fallthru
    _
  // Predicated region
  $region38: #{forward.1} parent=0 // pred_check
    _
  $region39: #{forward.1} parent=0 // pred_check_branch
    %38 = sbr.rel (0) target = $region41
  $region40: #{forward.1} parent=0 // pred_region
    _
  $region41: #{forward.1} parent=0 // pred_fallthru
    _
  // Predicated region
  $region42: #{forward.1} parent=0 // pred_check
    _
  $region43: #{forward.1} parent=0 // pred_check_branch
    %40 = sbr.rel (0) target = $region45
  $region44: #{forward.1} parent=0 // pred_region
    _
  $region45: #{forward.1} parent=0 // pred_fallthru
    _
  // Predicated region
  $region46: #{forward.1} parent=0 // pred_check
    _
  $region47: #{forward.1} parent=0 // pred_check_branch
    %42 = sbr.rel (0) target = $region49
  $region48: #{forward.1} parent=0 // pred_region
    _
  $region49: #{forward.1} parent=0 // pred_fallthru
    _
  // Predicated region
  $region50: #{forward.1} parent=0 // pred_check
    _
  $region51: #{forward.1} parent=0 // pred_check_branch
    %44 = sbr.rel (0) target = $region53
  $region52: #{forward.1} parent=0 // pred_region
    _
  $region53: #{forward.1} parent=0 // pred_fallthru
    _
  // Predicated region
  $region54: #{forward.1} parent=0 // pred_check
    _
  $region55: #{forward.1} parent=0 // pred_check_branch
    %46 = sbr.rel (0) target = $region57
  $region56: #{forward.1} parent=0 // pred_region
    _
  $region57: #{forward.1} parent=0 // pred_fallthru
    _
  %v47 = vld [vmem:[%s0] sm:$0xff]
  %v48 = vld [vmem:[%s0 + $0x8] sm:$0xff]
  %v49 = vld [vmem:[%s0 + $0x10] sm:$0xff]
  %v50 = vld [vmem:[%s0 + $0x18] sm:$0xff]
  %v51 = vld [vmem:[%s0 + $0x20] sm:$0xff]
  %v52 = vld [vmem:[%s0 + $0x28] sm:$0xff]
  %v53 = vld [vmem:[%s0 + $0x30] sm:$0xff]
  %v54 = vld [vmem:[%s0 + $0x38] sm:$0xff]
  %v55 = vld [vmem:[%s0 + $0x40] sm:$0xff]
  %v56 = vld [vmem:[%s0 + $0x48] sm:$0xff]
  %v57 = vld [vmem:[%s0 + $0x50] sm:$0xff]
  %v58 = vld [vmem:[%s0 + $0x58] sm:$0xff]
  %v59 = vld [vmem:[%s0 + $0x60] sm:$0xff]
  %v60 = vld [vmem:[%s0 + $0x68] sm:$0xff]
  %v61 = vld [vmem:[%s0 + $0x70] sm:$0xff]
  %v62 = vld [vmem:[%s0 + $0x78] sm:$0xff]
  %v63 = vld [vmem:[%s0 + $0x80] sm:$0xff]
  %v64 = vld [vmem:[%s0 + $0x88] sm:$0xff]
  %v65 = vld [vmem:[%s0 + $0x90] sm:$0xff]
  %v66 = vld [vmem:[%s0 + $0x98] sm:$0xff]
  %v67 = vld [vmem:[%s0 + $0xa0] sm:$0xff]
  %v68 = vld [vmem:[%s0 + $0xa8] sm:$0xff]
  %v69 = vld [vmem:[%s0 + $0xb0] sm:$0xff]
  %v70 = vld [vmem:[%s0 + $0xb8] sm:$0xff]
  %v71 = vld [vmem:[%s0 + $0xc0] sm:$0xff]
  %v72 = vld [vmem:[%s0 + $0xc8] sm:$0xff]
  %v73 = vld [vmem:[%s0 + $0xd0] sm:$0xff]
  %v74 = vld [vmem:[%s0 + $0xd8] sm:$0xff]
  %v75 = vld [vmem:[%s0 + $0xe0] sm:$0xff]
  %v76 = vld [vmem:[%s0 + $0xe8] sm:$0xff]
  %v77 = vld [vmem:[%s0 + $0xf0] sm:$0xff]
  %v78 = vld [vmem:[%s0 + $0xf8] sm:$0xff]
  %v79 = vld [vmem:[%s0 + $0x100] sm:$0xff]
  %v80 = vld [vmem:[%s0 + $0x108] sm:$0xff]
  %v81 = vld [vmem:[%s0 + $0x110] sm:$0xff]
  %v82 = vld [vmem:[%s0 + $0x118] sm:$0xff]
  %v83 = vld [vmem:[%s0 + $0x120] sm:$0xff]
  %v84 = vld [vmem:[%s0 + $0x128] sm:$0xff]
  %v85 = vld [vmem:[%s0 + $0x130] sm:$0xff]
  %v86 = vld [vmem:[%s0 + $0x138] sm:$0xff]
  %v87 = vld [vmem:[%s0 + $0x140] sm:$0xff]
  %v88 = vld [vmem:[%s0 + $0x148] sm:$0xff]
  %v89 = vld [vmem:[%s0 + $0x150] sm:$0xff]
  %v90 = vld [vmem:[%s0 + $0x158] sm:$0xff]
  %v91 = vld [vmem:[%s0 + $0x160] sm:$0xff]
  %v92 = vld [vmem:[%s0 + $0x168] sm:$0xff]
  %v93 = vld [vmem:[%s0 + $0x170] sm:$0xff]
  %v94 = vld [vmem:[%s0 + $0x178] sm:$0xff]
  %v95 = vld [vmem:[%s0 + $0x180] sm:$0xff]
  %v96 = vld [vmem:[%s0 + $0x188] sm:$0xff]
  %v97 = vld [vmem:[%s0 + $0x190] sm:$0x1f]
  %v98 = vld [vmem:[%s0 + $0x198] sm:$0x1f]
  %v99 = vld [vmem:[%s0 + $0x1a0] sm:$0x1f]
  %v100 = vld [vmem:[%s0 + $0x1a8] sm:$0x1f]
  %v101 = vld [vmem:[%s0 + $0x1b0] sm:$0x1f]
  %v102 = vld [vmem:[%s0 + $0x1b8] sm:$0x1f]
  %v103 = vld [vmem:[%s0 + $0x1c0] sm:$0x1f]
  %v104 = vld [vmem:[%s0 + $0x1c8] sm:$0x1f]
  %v105 = vld [vmem:[%s0 + $0x1d0] sm:$0x1f]
  %v106 = vld [vmem:[%s0 + $0x1d8] sm:$0x1f]
  %v107 = vld [vmem:[%s0 + $0x1e0] sm:$0x1f]
  %v108 = vld [vmem:[%s0 + $0x1e8] sm:$0x1f]
  %v109 = vld [vmem:[%s0 + $0x1f0] sm:$0x1f]
  %v110 = vld [vmem:[%s0 + $0x1f8] sm:$0x1f]
  %v111 = vld [vmem:[%s0 + $0x200] sm:$0x1f]
  %v112 = vld [vmem:[%s0 + $0x208] sm:$0x1f]
  %v113 = vld [vmem:[%s0 + $0x210] sm:$0x1f]
  %v114 = vld [vmem:[%s0 + $0x218] sm:$0x1f]
  %v115 = vld [vmem:[%s0 + $0x220] sm:$0x1f]
  %v116 = vld [vmem:[%s0 + $0x228] sm:$0x1f]
  %v117 = vld [vmem:[%s0 + $0x230] sm:$0x1f]
  %v118 = vld [vmem:[%s0 + $0x238] sm:$0x1f]
  %v119 = vld [vmem:[%s0 + $0x240] sm:$0x1f]
  %v120 = vld [vmem:[%s0 + $0x248] sm:$0x1f]
  %v121 = vld [vmem:[%s0 + $0x250] sm:$0x1f]
  %v122 = vld [vmem:[%s0 + $0x258] sm:$0x1f]
  %v123 = vld [vmem:[%s0 + $0x260] sm:$0x1f]
  %v124 = vld [vmem:[%s0 + $0x268] sm:$0x1f]
  %v125 = vld [vmem:[%s0 + $0x270] sm:$0x1f]
  %v126 = vld [vmem:[%s0 + $0x278] sm:$0x1f]
  %v127 = vld [vmem:[%s0 + $0x280] sm:$0x1f]
  %v128 = vld [vmem:[%s0 + $0x288] sm:$0x1f]
  %v129 = vld [vmem:[%s0 + $0x290] sm:$0x1f]
  %v130 = vld [vmem:[%s0 + $0x298] sm:$0x1f]
  %v131 = vld [vmem:[%s0 + $0x2a0] sm:$0x1f]
  %v132 = vld [vmem:[%s0 + $0x2a8] sm:$0x1f]
  %v133 = vld [vmem:[%s0 + $0x2b0] sm:$0x1f]
  %v134 = vld [vmem:[%s0 + $0x2b8] sm:$0x1f]
  %v135 = vld [vmem:[%s0 + $0x2c0] sm:$0x1f]
  %v136 = vld [vmem:[%s0 + $0x2c8] sm:$0x1f]
  %v137 = vld [vmem:[%s0 + $0x2d0] sm:$0x1f]
  %v138 = vld [vmem:[%s0 + $0x2d8] sm:$0x1f]
  %v139 = vld [vmem:[%s0 + $0x2e0] sm:$0x1f]
  %v140 = vld [vmem:[%s0 + $0x2e8] sm:$0x1f]
  %v141 = vld [vmem:[%s0 + $0x2f0] sm:$0x1f]
  %v142 = vld [vmem:[%s0 + $0x2f8] sm:$0x1f]
  %v143 = vld [vmem:[%s0 + $0x300] sm:$0x1f]
  %v144 = vld [vmem:[%s0 + $0x308] sm:$0x1f]
  %v145 = vld [vmem:[%s0 + $0x310] sm:$0x1f]
  %v146 = vld [vmem:[%s0 + $0x318] sm:$0x1f]
  %v147 = vld [vmem:[%s1] sm:$0xff]
  %v148 = vld [vmem:[%s1 + $0x8] sm:$0xff]
  %v149 = vld [vmem:[%s1 + $0x10] sm:$0xf]
  %s150 = scalar_lea.vmem %s1, 24
  %v151 = vld [vmem:[%s150] sm:$0xff]
  %v152 = vld [vmem:[%s150 + $0x8] sm:$0xff]
  %v153 = vld [vmem:[%s150 + $0x10] sm:$0xf]
  %vm154 = vcmask 105472
  %v156 = vsel %vm154, %v151, 0
  %v159 = vsel %vm154, %v152, 0
  %v162 = vsel %vm154, %v153, 0
  %vm164 = vcmask 1044480
  %v166 = vsel %vm164, %v98, 0
  %v169 = vsel %vm164, %v99, 0
  %v172 = vsel %vm164, %v100, 0
  %v175 = vsel %vm164, %v101, 0
  %v178 = vsel %vm164, %v102, 0
  %v181 = vsel %vm164, %v103, 0
  %v184 = vsel %vm164, %v104, 0
  %v187 = vsel %vm164, %v105, 0
  %v190 = vsel %vm164, %v106, 0
  %v193 = vsel %vm164, %v107, 0
  %v196 = vsel %vm164, %v108, 0
  %v199 = vsel %vm164, %v109, 0
  %v202 = vsel %vm164, %v110, 0
  %v205 = vsel %vm164, %v111, 0
  %v208 = vsel %vm164, %v112, 0
  %v211 = vsel %vm164, %v113, 0
  %v214 = vsel %vm164, %v114, 0
  %v217 = vsel %vm164, %v115, 0
  %v220 = vsel %vm164, %v116, 0
  %v223 = vsel %vm164, %v117, 0
  %v226 = vsel %vm164, %v118, 0
  %v229 = vsel %vm164, %v119, 0
  %v232 = vsel %vm164, %v120, 0
  %v235 = vsel %vm164, %v121, 0
  %v238 = vsel %vm164, %v122, 0
  %v241 = vsel %vm164, %v123, 0
  %v244 = vsel %vm164, %v124, 0
  %v247 = vsel %vm164, %v125, 0
  %v250 = vsel %vm164, %v126, 0
  %v253 = vsel %vm164, %v127, 0
  %v256 = vsel %vm164, %v128, 0
  %v259 = vsel %vm164, %v129, 0
  %v262 = vsel %vm164, %v130, 0
  %v265 = vsel %vm164, %v131, 0
  %v268 = vsel %vm164, %v132, 0
  %v271 = vsel %vm164, %v133, 0
  %v274 = vsel %vm164, %v134, 0
  %v277 = vsel %vm164, %v135, 0
  %v280 = vsel %vm164, %v136, 0
  %v283 = vsel %vm164, %v137, 0
  %v286 = vsel %vm164, %v138, 0
  %v289 = vsel %vm164, %v139, 0
  %v292 = vsel %vm164, %v140, 0
  %v295 = vsel %vm164, %v141, 0
  %v298 = vsel %vm164, %v142, 0
  %v301 = vsel %vm164, %v143, 0
  %v304 = vsel %vm164, %v144, 0
  %v307 = vsel %vm164, %v145, 0
  %309 = vmatpush.msra.mxu0 0.0
  %310 = vmatpush.msra.mxu0 0.0
  %311 = vmatpush.msra.mxu0 0.0
  %312 = vmatpush.msra.mxu0 0.0
  %313 = vmatpush.msra.mxu0 0.0
  %314 = vmatpush.msra.mxu0 0.0
  %315 = vmatpush.msra.mxu0 0.0
  %316 = vmatpush.msra.mxu0 0.0
  %317 = vmatpush.msra.mxu0 0.0
  %318 = vmatpush.msra.mxu0 0.0
  %319 = vmatpush.msra.mxu0 0.0
  %320 = vmatpush.msra.mxu0 0.0
  %321 = vmatpush.msra.mxu0 0.0
  %322 = vmatpush.msra.mxu0 0.0
  %323 = vmatpush.msra.mxu0 %v166
  %324 = vmatpush.msra.mxu0 %v48
  %325 = vmatmul.f32.gmra.mxu0 %v156
  %v326 = vpop.f32.mrf.mxu0
  %v327 = vadd.f32 0.0, %v326
  %328 = vmatmul.f32.gmra.mxu0 %v159
  %v329 = vpop.f32.mrf.mxu0
  %v330 = vadd.f32 0.0, %v329
  %331 = vmatmul.f32.gmra.mxu0 %v162
  %v332 = vpop.f32.mrf.mxu0
  %v333 = vadd.f32 0.0, %v332
  %334 = vdwg.mxu0
  %335 = vmatpush.msra.mxu0 0.0
  %336 = vmatpush.msra.mxu0 0.0
  %337 = vmatpush.msra.mxu0 0.0
  %338 = vmatpush.msra.mxu0 0.0
  %339 = vmatpush.msra.mxu0 0.0
  %340 = vmatpush.msra.mxu0 0.0
  %341 = vmatpush.msra.mxu0 0.0
  %342 = vmatpush.msra.mxu0 0.0
  %343 = vmatpush.msra.mxu0 0.0
  %344 = vmatpush.msra.mxu0 0.0
  %345 = vmatpush.msra.mxu0 0.0
  %346 = vmatpush.msra.mxu0 0.0
  %347 = vmatpush.msra.mxu0 0.0
  %348 = vmatpush.msra.mxu0 0.0
  %349 = vmatpush.msra.mxu0 %v169
  %350 = vmatpush.msra.mxu0 %v49
  %351 = vmatmul.f32.gmra.mxu0 %v156
  %v352 = vpop.f32.mrf.mxu0
  %v353 = vadd.f32 0.0, %v352
  %354 = vmatmul.f32.gmra.mxu0 %v159
  %v355 = vpop.f32.mrf.mxu0
  %v356 = vadd.f32 0.0, %v355
  %357 = vmatmul.f32.gmra.mxu0 %v162
  %v358 = vpop.f32.mrf.mxu0
  %v359 = vadd.f32 0.0, %v358
  %360 = vdwg.mxu0
  %361 = vmatpush.msra.mxu0 0.0
  %362 = vmatpush.msra.mxu0 0.0
  %363 = vmatpush.msra.mxu0 0.0
  %364 = vmatpush.msra.mxu0 0.0
  %365 = vmatpush.msra.mxu0 0.0
  %366 = vmatpush.msra.mxu0 0.0
  %367 = vmatpush.msra.mxu0 0.0
  %368 = vmatpush.msra.mxu0 0.0
  %369 = vmatpush.msra.mxu0 0.0
  %370 = vmatpush.msra.mxu0 0.0
  %371 = vmatpush.msra.mxu0 0.0
  %372 = vmatpush.msra.mxu0 0.0
  %373 = vmatpush.msra.mxu0 0.0
  %374 = vmatpush.msra.mxu0 0.0
  %375 = vmatpush.msra.mxu0 %v172
  %376 = vmatpush.msra.mxu0 %v50
  %377 = vmatmul.f32.gmra.mxu0 %v156
  %v378 = vpop.f32.mrf.mxu0
  %v379 = vadd.f32 0.0, %v378
  %380 = vmatmul.f32.gmra.mxu0 %v159
  %v381 = vpop.f32.mrf.mxu0
  %v382 = vadd.f32 0.0, %v381
  %383 = vmatmul.f32.gmra.mxu0 %v162
  %v384 = vpop.f32.mrf.mxu0
  %v385 = vadd.f32 0.0, %v384
  %386 = vdwg.mxu0
  %387 = vmatpush.msra.mxu0 0.0
  %388 = vmatpush.msra.mxu0 0.0
  %389 = vmatpush.msra.mxu0 0.0
  %390 = vmatpush.msra.mxu0 0.0
  %391 = vmatpush.msra.mxu0 0.0
  %392 = vmatpush.msra.mxu0 0.0
  %393 = vmatpush.msra.mxu0 0.0
  %394 = vmatpush.msra.mxu0 0.0
  %395 = vmatpush.msra.mxu0 0.0
  %396 = vmatpush.msra.mxu0 0.0
  %397 = vmatpush.msra.mxu0 0.0
  %398 = vmatpush.msra.mxu0 0.0
  %399 = vmatpush.msra.mxu0 0.0
  %400 = vmatpush.msra.mxu0 0.0
  %401 = vmatpush.msra.mxu0 %v175
  %402 = vmatpush.msra.mxu0 %v51
  %403 = vmatmul.f32.gmra.mxu0 %v156
  %v404 = vpop.f32.mrf.mxu0
  %v405 = vadd.f32 0.0, %v404
  %406 = vmatmul.f32.gmra.mxu0 %v159
  %v407 = vpop.f32.mrf.mxu0
  %v408 = vadd.f32 0.0, %v407
  %409 = vmatmul.f32.gmra.mxu0 %v162
  %v410 = vpop.f32.mrf.mxu0
  %v411 = vadd.f32 0.0, %v410
  %412 = vdwg.mxu0
  %413 = vmatpush.msra.mxu0 0.0
  %414 = vmatpush.msra.mxu0 0.0
  %415 = vmatpush.msra.mxu0 0.0
  %416 = vmatpush.msra.mxu0 0.0
  %417 = vmatpush.msra.mxu0 0.0
  %418 = vmatpush.msra.mxu0 0.0
  %419 = vmatpush.msra.mxu0 0.0
  %420 = vmatpush.msra.mxu0 0.0
  %421 = vmatpush.msra.mxu0 0.0
  %422 = vmatpush.msra.mxu0 0.0
  %423 = vmatpush.msra.mxu0 0.0
  %424 = vmatpush.msra.mxu0 0.0
  %425 = vmatpush.msra.mxu0 0.0
  %426 = vmatpush.msra.mxu0 0.0
  %427 = vmatpush.msra.mxu0 %v178
  %428 = vmatpush.msra.mxu0 %v52
  %429 = vmatmul.f32.gmra.mxu0 %v156
  %v430 = vpop.f32.mrf.mxu0
  %v431 = vadd.f32 0.0, %v430
  %432 = vmatmul.f32.gmra.mxu0 %v159
  %v433 = vpop.f32.mrf.mxu0
  %v434 = vadd.f32 0.0, %v433
  %435 = vmatmul.f32.gmra.mxu0 %v162
  %v436 = vpop.f32.mrf.mxu0
  %v437 = vadd.f32 0.0, %v436
  %438 = vdwg.mxu0
  %439 = vmatpush.msra.mxu0 0.0
  %440 = vmatpush.msra.mxu0 0.0
  %441 = vmatpush.msra.mxu0 0.0
  %442 = vmatpush.msra.mxu0 0.0
  %443 = vmatpush.msra.mxu0 0.0
  %444 = vmatpush.msra.mxu0 0.0
  %445 = vmatpush.msra.mxu0 0.0
  %446 = vmatpush.msra.mxu0 0.0
  %447 = vmatpush.msra.mxu0 0.0
  %448 = vmatpush.msra.mxu0 0.0
  %449 = vmatpush.msra.mxu0 0.0
  %450 = vmatpush.msra.mxu0 0.0
  %451 = vmatpush.msra.mxu0 0.0
  %452 = vmatpush.msra.mxu0 0.0
  %453 = vmatpush.msra.mxu0 %v181
  %454 = vmatpush.msra.mxu0 %v53
  %455 = vmatmul.f32.gmra.mxu0 %v156
  %v456 = vpop.f32.mrf.mxu0
  %v457 = vadd.f32 0.0, %v456
  %458 = vmatmul.f32.gmra.mxu0 %v159
  %v459 = vpop.f32.mrf.mxu0
  %v460 = vadd.f32 0.0, %v459
  %461 = vmatmul.f32.gmra.mxu0 %v162
  %v462 = vpop.f32.mrf.mxu0
  %v463 = vadd.f32 0.0, %v462
  %464 = vdwg.mxu0
  %465 = vmatpush.msra.mxu0 0.0
  %466 = vmatpush.msra.mxu0 0.0
  %467 = vmatpush.msra.mxu0 0.0
  %468 = vmatpush.msra.mxu0 0.0
  %469 = vmatpush.msra.mxu0 0.0
  %470 = vmatpush.msra.mxu0 0.0
  %471 = vmatpush.msra.mxu0 0.0
  %472 = vmatpush.msra.mxu0 0.0
  %473 = vmatpush.msra.mxu0 0.0
  %474 = vmatpush.msra.mxu0 0.0
  %475 = vmatpush.msra.mxu0 0.0
  %476 = vmatpush.msra.mxu0 0.0
  %477 = vmatpush.msra.mxu0 0.0
  %478 = vmatpush.msra.mxu0 0.0
  %479 = vmatpush.msra.mxu0 %v184
  %480 = vmatpush.msra.mxu0 %v54
  %481 = vmatmul.f32.gmra.mxu0 %v156
  %v482 = vpop.f32.mrf.mxu0
  %v483 = vadd.f32 0.0, %v482
  %484 = vmatmul.f32.gmra.mxu0 %v159
  %v485 = vpop.f32.mrf.mxu0
  %v486 = vadd.f32 0.0, %v485
  %487 = vmatmul.f32.gmra.mxu0 %v162
  %v488 = vpop.f32.mrf.mxu0
  %v489 = vadd.f32 0.0, %v488
  %490 = vdwg.mxu0
  %491 = vmatpush.msra.mxu0 0.0
  %492 = vmatpush.msra.mxu0 0.0
  %493 = vmatpush.msra.mxu0 0.0
  %494 = vmatpush.msra.mxu0 0.0
  %495 = vmatpush.msra.mxu0 0.0
  %496 = vmatpush.msra.mxu0 0.0
  %497 = vmatpush.msra.mxu0 0.0
  %498 = vmatpush.msra.mxu0 0.0
  %499 = vmatpush.msra.mxu0 0.0
  %500 = vmatpush.msra.mxu0 0.0
  %501 = vmatpush.msra.mxu0 0.0
  %502 = vmatpush.msra.mxu0 0.0
  %503 = vmatpush.msra.mxu0 0.0
  %504 = vmatpush.msra.mxu0 0.0
  %505 = vmatpush.msra.mxu0 %v187
  %506 = vmatpush.msra.mxu0 %v55
  %507 = vmatmul.f32.gmra.mxu0 %v156
  %v508 = vpop.f32.mrf.mxu0
  %v509 = vadd.f32 0.0, %v508
  %510 = vmatmul.f32.gmra.mxu0 %v159
  %v511 = vpop.f32.mrf.mxu0
  %v512 = vadd.f32 0.0, %v511
  %513 = vmatmul.f32.gmra.mxu0 %v162
  %v514 = vpop.f32.mrf.mxu0
  %v515 = vadd.f32 0.0, %v514
  %516 = vdwg.mxu0
  %517 = vmatpush.msra.mxu0 0.0
  %518 = vmatpush.msra.mxu0 0.0
  %519 = vmatpush.msra.mxu0 0.0
  %520 = vmatpush.msra.mxu0 0.0
  %521 = vmatpush.msra.mxu0 0.0
  %522 = vmatpush.msra.mxu0 0.0
  %523 = vmatpush.msra.mxu0 0.0
  %524 = vmatpush.msra.mxu0 0.0
  %525 = vmatpush.msra.mxu0 0.0
  %526 = vmatpush.msra.mxu0 0.0
  %527 = vmatpush.msra.mxu0 0.0
  %528 = vmatpush.msra.mxu0 0.0
  %529 = vmatpush.msra.mxu0 0.0
  %530 = vmatpush.msra.mxu0 0.0
  %531 = vmatpush.msra.mxu0 %v190
  %532 = vmatpush.msra.mxu0 %v56
  %533 = vmatmul.f32.gmra.mxu0 %v156
  %v534 = vpop.f32.mrf.mxu0
  %v535 = vadd.f32 0.0, %v534
  %536 = vmatmul.f32.gmra.mxu0 %v159
  %v537 = vpop.f32.mrf.mxu0
  %v538 = vadd.f32 0.0, %v537
  %539 = vmatmul.f32.gmra.mxu0 %v162
  %v540 = vpop.f32.mrf.mxu0
  %v541 = vadd.f32 0.0, %v540
  %542 = vdwg.mxu0
  %543 = vmatpush.msra.mxu0 0.0
  %544 = vmatpush.msra.mxu0 0.0
  %545 = vmatpush.msra.mxu0 0.0
  %546 = vmatpush.msra.mxu0 0.0
  %547 = vmatpush.msra.mxu0 0.0
  %548 = vmatpush.msra.mxu0 0.0
  %549 = vmatpush.msra.mxu0 0.0
  %550 = vmatpush.msra.mxu0 0.0
  %551 = vmatpush.msra.mxu0 0.0
  %552 = vmatpush.msra.mxu0 0.0
  %553 = vmatpush.msra.mxu0 0.0
  %554 = vmatpush.msra.mxu0 0.0
  %555 = vmatpush.msra.mxu0 0.0
  %556 = vmatpush.msra.mxu0 0.0
  %557 = vmatpush.msra.mxu0 %v193
  %558 = vmatpush.msra.mxu0 %v57
  %559 = vmatmul.f32.gmra.mxu0 %v156
  %v560 = vpop.f32.mrf.mxu0
  %v561 = vadd.f32 0.0, %v560
  %562 = vmatmul.f32.gmra.mxu0 %v159
  %v563 = vpop.f32.mrf.mxu0
  %v564 = vadd.f32 0.0, %v563
  %565 = vmatmul.f32.gmra.mxu0 %v162
  %v566 = vpop.f32.mrf.mxu0
  %v567 = vadd.f32 0.0, %v566
  %568 = vdwg.mxu0
  %569 = vmatpush.msra.mxu0 0.0
  %570 = vmatpush.msra.mxu0 0.0
  %571 = vmatpush.msra.mxu0 0.0
  %572 = vmatpush.msra.mxu0 0.0
  %573 = vmatpush.msra.mxu0 0.0
  %574 = vmatpush.msra.mxu0 0.0
  %575 = vmatpush.msra.mxu0 0.0
  %576 = vmatpush.msra.mxu0 0.0
  %577 = vmatpush.msra.mxu0 0.0
  %578 = vmatpush.msra.mxu0 0.0
  %579 = vmatpush.msra.mxu0 0.0
  %580 = vmatpush.msra.mxu0 0.0
  %581 = vmatpush.msra.mxu0 0.0
  %582 = vmatpush.msra.mxu0 0.0
  %583 = vmatpush.msra.mxu0 %v196
  %584 = vmatpush.msra.mxu0 %v58
  %585 = vmatmul.f32.gmra.mxu0 %v156
  %v586 = vpop.f32.mrf.mxu0
  %v587 = vadd.f32 0.0, %v586
  %588 = vmatmul.f32.gmra.mxu0 %v159
  %v589 = vpop.f32.mrf.mxu0
  %v590 = vadd.f32 0.0, %v589
  %591 = vmatmul.f32.gmra.mxu0 %v162
  %v592 = vpop.f32.mrf.mxu0
  %v593 = vadd.f32 0.0, %v592
  %594 = vdwg.mxu0
  %595 = vmatpush.msra.mxu0 0.0
  %596 = vmatpush.msra.mxu0 0.0
  %597 = vmatpush.msra.mxu0 0.0
  %598 = vmatpush.msra.mxu0 0.0
  %599 = vmatpush.msra.mxu0 0.0
  %600 = vmatpush.msra.mxu0 0.0
  %601 = vmatpush.msra.mxu0 0.0
  %602 = vmatpush.msra.mxu0 0.0
  %603 = vmatpush.msra.mxu0 0.0
  %604 = vmatpush.msra.mxu0 0.0
  %605 = vmatpush.msra.mxu0 0.0
  %606 = vmatpush.msra.mxu0 0.0
  %607 = vmatpush.msra.mxu0 0.0
  %608 = vmatpush.msra.mxu0 0.0
  %609 = vmatpush.msra.mxu0 %v199
  %610 = vmatpush.msra.mxu0 %v59
  %611 = vmatmul.f32.gmra.mxu0 %v156
  %v612 = vpop.f32.mrf.mxu0
  %v613 = vadd.f32 0.0, %v612
  %614 = vmatmul.f32.gmra.mxu0 %v159
  %v615 = vpop.f32.mrf.mxu0
  %v616 = vadd.f32 0.0, %v615
  %617 = vmatmul.f32.gmra.mxu0 %v162
  %v618 = vpop.f32.mrf.mxu0
  %v619 = vadd.f32 0.0, %v618
  %620 = vdwg.mxu0
  %621 = vmatpush.msra.mxu0 0.0
  %622 = vmatpush.msra.mxu0 0.0
  %623 = vmatpush.msra.mxu0 0.0
  %624 = vmatpush.msra.mxu0 0.0
  %625 = vmatpush.msra.mxu0 0.0
  %626 = vmatpush.msra.mxu0 0.0
  %627 = vmatpush.msra.mxu0 0.0
  %628 = vmatpush.msra.mxu0 0.0
  %629 = vmatpush.msra.mxu0 0.0
  %630 = vmatpush.msra.mxu0 0.0
  %631 = vmatpush.msra.mxu0 0.0
  %632 = vmatpush.msra.mxu0 0.0
  %633 = vmatpush.msra.mxu0 0.0
  %634 = vmatpush.msra.mxu0 0.0
  %635 = vmatpush.msra.mxu0 %v202
  %636 = vmatpush.msra.mxu0 %v60
  %637 = vmatmul.f32.gmra.mxu0 %v156
  %v638 = vpop.f32.mrf.mxu0
  %v639 = vadd.f32 0.0, %v638
  %640 = vmatmul.f32.gmra.mxu0 %v159
  %v641 = vpop.f32.mrf.mxu0
  %v642 = vadd.f32 0.0, %v641
  %643 = vmatmul.f32.gmra.mxu0 %v162
  %v644 = vpop.f32.mrf.mxu0
  %v645 = vadd.f32 0.0, %v644
  %646 = vdwg.mxu0
  %647 = vmatpush.msra.mxu0 0.0
  %648 = vmatpush.msra.mxu0 0.0
  %649 = vmatpush.msra.mxu0 0.0
  %650 = vmatpush.msra.mxu0 0.0
  %651 = vmatpush.msra.mxu0 0.0
  %652 = vmatpush.msra.mxu0 0.0
  %653 = vmatpush.msra.mxu0 0.0
  %654 = vmatpush.msra.mxu0 0.0
  %655 = vmatpush.msra.mxu0 0.0
  %656 = vmatpush.msra.mxu0 0.0
  %657 = vmatpush.msra.mxu0 0.0
  %658 = vmatpush.msra.mxu0 0.0
  %659 = vmatpush.msra.mxu0 0.0
  %660 = vmatpush.msra.mxu0 0.0
  %661 = vmatpush.msra.mxu0 %v205
  %662 = vmatpush.msra.mxu0 %v61
  %663 = vmatmul.f32.gmra.mxu0 %v156
  %v664 = vpop.f32.mrf.mxu0
  %v665 = vadd.f32 0.0, %v664
  %666 = vmatmul.f32.gmra.mxu0 %v159
  %v667 = vpop.f32.mrf.mxu0
  %v668 = vadd.f32 0.0, %v667
  %669 = vmatmul.f32.gmra.mxu0 %v162
  %v670 = vpop.f32.mrf.mxu0
  %v671 = vadd.f32 0.0, %v670
  %672 = vdwg.mxu0
  %673 = vmatpush.msra.mxu0 0.0
  %674 = vmatpush.msra.mxu0 0.0
  %675 = vmatpush.msra.mxu0 0.0
  %676 = vmatpush.msra.mxu0 0.0
  %677 = vmatpush.msra.mxu0 0.0
  %678 = vmatpush.msra.mxu0 0.0
  %679 = vmatpush.msra.mxu0 0.0
  %680 = vmatpush.msra.mxu0 0.0
  %681 = vmatpush.msra.mxu0 0.0
  %682 = vmatpush.msra.mxu0 0.0
  %683 = vmatpush.msra.mxu0 0.0
  %684 = vmatpush.msra.mxu0 0.0
  %685 = vmatpush.msra.mxu0 0.0
  %686 = vmatpush.msra.mxu0 0.0
  %687 = vmatpush.msra.mxu0 %v208
  %688 = vmatpush.msra.mxu0 %v62
  %689 = vmatmul.f32.gmra.mxu0 %v156
  %v690 = vpop.f32.mrf.mxu0
  %v691 = vadd.f32 0.0, %v690
  %692 = vmatmul.f32.gmra.mxu0 %v159
  %v693 = vpop.f32.mrf.mxu0
  %v694 = vadd.f32 0.0, %v693
  %695 = vmatmul.f32.gmra.mxu0 %v162
  %v696 = vpop.f32.mrf.mxu0
  %v697 = vadd.f32 0.0, %v696
  %698 = vdwg.mxu0
  %699 = vmatpush.msra.mxu0 0.0
  %700 = vmatpush.msra.mxu0 0.0
  %701 = vmatpush.msra.mxu0 0.0
  %702 = vmatpush.msra.mxu0 0.0
  %703 = vmatpush.msra.mxu0 0.0
  %704 = vmatpush.msra.mxu0 0.0
  %705 = vmatpush.msra.mxu0 0.0
  %706 = vmatpush.msra.mxu0 0.0
  %707 = vmatpush.msra.mxu0 0.0
  %708 = vmatpush.msra.mxu0 0.0
  %709 = vmatpush.msra.mxu0 0.0
  %710 = vmatpush.msra.mxu0 0.0
  %711 = vmatpush.msra.mxu0 0.0
  %712 = vmatpush.msra.mxu0 0.0
  %713 = vmatpush.msra.mxu0 %v211
  %714 = vmatpush.msra.mxu0 %v63
  %715 = vmatmul.f32.gmra.mxu0 %v156
  %v716 = vpop.f32.mrf.mxu0
  %v717 = vadd.f32 0.0, %v716
  %718 = vmatmul.f32.gmra.mxu0 %v159
  %v719 = vpop.f32.mrf.mxu0
  %v720 = vadd.f32 0.0, %v719
  %721 = vmatmul.f32.gmra.mxu0 %v162
  %v722 = vpop.f32.mrf.mxu0
  %v723 = vadd.f32 0.0, %v722
  %724 = vdwg.mxu0
  %725 = vmatpush.msra.mxu0 0.0
  %726 = vmatpush.msra.mxu0 0.0
  %727 = vmatpush.msra.mxu0 0.0
  %728 = vmatpush.msra.mxu0 0.0
  %729 = vmatpush.msra.mxu0 0.0
  %730 = vmatpush.msra.mxu0 0.0
  %731 = vmatpush.msra.mxu0 0.0
  %732 = vmatpush.msra.mxu0 0.0
  %733 = vmatpush.msra.mxu0 0.0
  %734 = vmatpush.msra.mxu0 0.0
  %735 = vmatpush.msra.mxu0 0.0
  %736 = vmatpush.msra.mxu0 0.0
  %737 = vmatpush.msra.mxu0 0.0
  %738 = vmatpush.msra.mxu0 0.0
  %739 = vmatpush.msra.mxu0 %v214
  %740 = vmatpush.msra.mxu0 %v64
  %741 = vmatmul.f32.gmra.mxu0 %v156
  %v742 = vpop.f32.mrf.mxu0
  %v743 = vadd.f32 0.0, %v742
  %744 = vmatmul.f32.gmra.mxu0 %v159
  %v745 = vpop.f32.mrf.mxu0
  %v746 = vadd.f32 0.0, %v745
  %747 = vmatmul.f32.gmra.mxu0 %v162
  %v748 = vpop.f32.mrf.mxu0
  %v749 = vadd.f32 0.0, %v748
  %750 = vdwg.mxu0
  %751 = vmatpush.msra.mxu0 0.0
  %752 = vmatpush.msra.mxu0 0.0
  %753 = vmatpush.msra.mxu0 0.0
  %754 = vmatpush.msra.mxu0 0.0
  %755 = vmatpush.msra.mxu0 0.0
  %756 = vmatpush.msra.mxu0 0.0
  %757 = vmatpush.msra.mxu0 0.0
  %758 = vmatpush.msra.mxu0 0.0
  %759 = vmatpush.msra.mxu0 0.0
  %760 = vmatpush.msra.mxu0 0.0
  %761 = vmatpush.msra.mxu0 0.0
  %762 = vmatpush.msra.mxu0 0.0
  %763 = vmatpush.msra.mxu0 0.0
  %764 = vmatpush.msra.mxu0 0.0
  %765 = vmatpush.msra.mxu0 %v217
  %766 = vmatpush.msra.mxu0 %v65
  %767 = vmatmul.f32.gmra.mxu0 %v156
  %v768 = vpop.f32.mrf.mxu0
  %v769 = vadd.f32 0.0, %v768
  %770 = vmatmul.f32.gmra.mxu0 %v159
  %v771 = vpop.f32.mrf.mxu0
  %v772 = vadd.f32 0.0, %v771
  %773 = vmatmul.f32.gmra.mxu0 %v162
  %v774 = vpop.f32.mrf.mxu0
  %v775 = vadd.f32 0.0, %v774
  %776 = vdwg.mxu0
  %777 = vmatpush.msra.mxu0 0.0
  %778 = vmatpush.msra.mxu0 0.0
  %779 = vmatpush.msra.mxu0 0.0
  %780 = vmatpush.msra.mxu0 0.0
  %781 = vmatpush.msra.mxu0 0.0
  %782 = vmatpush.msra.mxu0 0.0
  %783 = vmatpush.msra.mxu0 0.0
  %784 = vmatpush.msra.mxu0 0.0
  %785 = vmatpush.msra.mxu0 0.0
  %786 = vmatpush.msra.mxu0 0.0
  %787 = vmatpush.msra.mxu0 0.0
  %788 = vmatpush.msra.mxu0 0.0
  %789 = vmatpush.msra.mxu0 0.0
  %790 = vmatpush.msra.mxu0 0.0
  %791 = vmatpush.msra.mxu0 %v220
  %792 = vmatpush.msra.mxu0 %v66
  %793 = vmatmul.f32.gmra.mxu0 %v156
  %v794 = vpop.f32.mrf.mxu0
  %v795 = vadd.f32 0.0, %v794
  %796 = vmatmul.f32.gmra.mxu0 %v159
  %v797 = vpop.f32.mrf.mxu0
  %v798 = vadd.f32 0.0, %v797
  %799 = vmatmul.f32.gmra.mxu0 %v162
  %v800 = vpop.f32.mrf.mxu0
  %v801 = vadd.f32 0.0, %v800
  %802 = vdwg.mxu0
  %803 = vmatpush.msra.mxu0 0.0
  %804 = vmatpush.msra.mxu0 0.0
  %805 = vmatpush.msra.mxu0 0.0
  %806 = vmatpush.msra.mxu0 0.0
  %807 = vmatpush.msra.mxu0 0.0
  %808 = vmatpush.msra.mxu0 0.0
  %809 = vmatpush.msra.mxu0 0.0
  %810 = vmatpush.msra.mxu0 0.0
  %811 = vmatpush.msra.mxu0 0.0
  %812 = vmatpush.msra.mxu0 0.0
  %813 = vmatpush.msra.mxu0 0.0
  %814 = vmatpush.msra.mxu0 0.0
  %815 = vmatpush.msra.mxu0 0.0
  %816 = vmatpush.msra.mxu0 0.0
  %817 = vmatpush.msra.mxu0 %v223
  %818 = vmatpush.msra.mxu0 %v67
  %819 = vmatmul.f32.gmra.mxu0 %v156
  %v820 = vpop.f32.mrf.mxu0
  %v821 = vadd.f32 0.0, %v820
  %822 = vmatmul.f32.gmra.mxu0 %v159
  %v823 = vpop.f32.mrf.mxu0
  %v824 = vadd.f32 0.0, %v823
  %825 = vmatmul.f32.gmra.mxu0 %v162
  %v826 = vpop.f32.mrf.mxu0
  %v827 = vadd.f32 0.0, %v826
  %828 = vdwg.mxu0
  %829 = vmatpush.msra.mxu0 0.0
  %830 = vmatpush.msra.mxu0 0.0
  %831 = vmatpush.msra.mxu0 0.0
  %832 = vmatpush.msra.mxu0 0.0
  %833 = vmatpush.msra.mxu0 0.0
  %834 = vmatpush.msra.mxu0 0.0
  %835 = vmatpush.msra.mxu0 0.0
  %836 = vmatpush.msra.mxu0 0.0
  %837 = vmatpush.msra.mxu0 0.0
  %838 = vmatpush.msra.mxu0 0.0
  %839 = vmatpush.msra.mxu0 0.0
  %840 = vmatpush.msra.mxu0 0.0
  %841 = vmatpush.msra.mxu0 0.0
  %842 = vmatpush.msra.mxu0 0.0
  %843 = vmatpush.msra.mxu0 %v226
  %844 = vmatpush.msra.mxu0 %v68
  %845 = vmatmul.f32.gmra.mxu0 %v156
  %v846 = vpop.f32.mrf.mxu0
  %v847 = vadd.f32 0.0, %v846
  %848 = vmatmul.f32.gmra.mxu0 %v159
  %v849 = vpop.f32.mrf.mxu0
  %v850 = vadd.f32 0.0, %v849
  %851 = vmatmul.f32.gmra.mxu0 %v162
  %v852 = vpop.f32.mrf.mxu0
  %v853 = vadd.f32 0.0, %v852
  %854 = vdwg.mxu0
  %855 = vmatpush.msra.mxu0 0.0
  %856 = vmatpush.msra.mxu0 0.0
  %857 = vmatpush.msra.mxu0 0.0
  %858 = vmatpush.msra.mxu0 0.0
  %859 = vmatpush.msra.mxu0 0.0
  %860 = vmatpush.msra.mxu0 0.0
  %861 = vmatpush.msra.mxu0 0.0
  %862 = vmatpush.msra.mxu0 0.0
  %863 = vmatpush.msra.mxu0 0.0
  %864 = vmatpush.msra.mxu0 0.0
  %865 = vmatpush.msra.mxu0 0.0
  %866 = vmatpush.msra.mxu0 0.0
  %867 = vmatpush.msra.mxu0 0.0
  %868 = vmatpush.msra.mxu0 0.0
  %869 = vmatpush.msra.mxu0 %v229
  %870 = vmatpush.msra.mxu0 %v69
  %871 = vmatmul.f32.gmra.mxu0 %v156
  %v872 = vpop.f32.mrf.mxu0
  %v873 = vadd.f32 0.0, %v872
  %874 = vmatmul.f32.gmra.mxu0 %v159
  %v875 = vpop.f32.mrf.mxu0
  %v876 = vadd.f32 0.0, %v875
  %877 = vmatmul.f32.gmra.mxu0 %v162
  %v878 = vpop.f32.mrf.mxu0
  %v879 = vadd.f32 0.0, %v878
  %880 = vdwg.mxu0
  %881 = vmatpush.msra.mxu0 0.0
  %882 = vmatpush.msra.mxu0 0.0
  %883 = vmatpush.msra.mxu0 0.0
  %884 = vmatpush.msra.mxu0 0.0
  %885 = vmatpush.msra.mxu0 0.0
  %886 = vmatpush.msra.mxu0 0.0
  %887 = vmatpush.msra.mxu0 0.0
  %888 = vmatpush.msra.mxu0 0.0
  %889 = vmatpush.msra.mxu0 0.0
  %890 = vmatpush.msra.mxu0 0.0
  %891 = vmatpush.msra.mxu0 0.0
  %892 = vmatpush.msra.mxu0 0.0
  %893 = vmatpush.msra.mxu0 0.0
  %894 = vmatpush.msra.mxu0 0.0
  %895 = vmatpush.msra.mxu0 %v232
  %896 = vmatpush.msra.mxu0 %v70
  %897 = vmatmul.f32.gmra.mxu0 %v156
  %v898 = vpop.f32.mrf.mxu0
  %v899 = vadd.f32 0.0, %v898
  %900 = vmatmul.f32.gmra.mxu0 %v159
  %v901 = vpop.f32.mrf.mxu0
  %v902 = vadd.f32 0.0, %v901
  %903 = vmatmul.f32.gmra.mxu0 %v162
  %v904 = vpop.f32.mrf.mxu0
  %v905 = vadd.f32 0.0, %v904
  %906 = vdwg.mxu0
  %907 = vmatpush.msra.mxu0 0.0
  %908 = vmatpush.msra.mxu0 0.0
  %909 = vmatpush.msra.mxu0 0.0
  %910 = vmatpush.msra.mxu0 0.0
  %911 = vmatpush.msra.mxu0 0.0
  %912 = vmatpush.msra.mxu0 0.0
  %913 = vmatpush.msra.mxu0 0.0
  %914 = vmatpush.msra.mxu0 0.0
  %915 = vmatpush.msra.mxu0 0.0
  %916 = vmatpush.msra.mxu0 0.0
  %917 = vmatpush.msra.mxu0 0.0
  %918 = vmatpush.msra.mxu0 0.0
  %919 = vmatpush.msra.mxu0 0.0
  %920 = vmatpush.msra.mxu0 0.0
  %921 = vmatpush.msra.mxu0 %v235
  %922 = vmatpush.msra.mxu0 %v71
  %923 = vmatmul.f32.gmra.mxu0 %v156
  %v924 = vpop.f32.mrf.mxu0
  %v925 = vadd.f32 0.0, %v924
  %926 = vmatmul.f32.gmra.mxu0 %v159
  %v927 = vpop.f32.mrf.mxu0
  %v928 = vadd.f32 0.0, %v927
  %929 = vmatmul.f32.gmra.mxu0 %v162
  %v930 = vpop.f32.mrf.mxu0
  %v931 = vadd.f32 0.0, %v930
  %932 = vdwg.mxu0
  %933 = vmatpush.msra.mxu0 0.0
  %934 = vmatpush.msra.mxu0 0.0
  %935 = vmatpush.msra.mxu0 0.0
  %936 = vmatpush.msra.mxu0 0.0
  %937 = vmatpush.msra.mxu0 0.0
  %938 = vmatpush.msra.mxu0 0.0
  %939 = vmatpush.msra.mxu0 0.0
  %940 = vmatpush.msra.mxu0 0.0
  %941 = vmatpush.msra.mxu0 0.0
  %942 = vmatpush.msra.mxu0 0.0
  %943 = vmatpush.msra.mxu0 0.0
  %944 = vmatpush.msra.mxu0 0.0
  %945 = vmatpush.msra.mxu0 0.0
  %946 = vmatpush.msra.mxu0 0.0
  %947 = vmatpush.msra.mxu0 %v238
  %948 = vmatpush.msra.mxu0 %v72
  %949 = vmatmul.f32.gmra.mxu0 %v156
  %v950 = vpop.f32.mrf.mxu0
  %v951 = vadd.f32 0.0, %v950
  %952 = vmatmul.f32.gmra.mxu0 %v159
  %v953 = vpop.f32.mrf.mxu0
  %v954 = vadd.f32 0.0, %v953
  %955 = vmatmul.f32.gmra.mxu0 %v162
  %v956 = vpop.f32.mrf.mxu0
  %v957 = vadd.f32 0.0, %v956
  %958 = vdwg.mxu0
  %959 = vmatpush.msra.mxu0 0.0
  %960 = vmatpush.msra.mxu0 0.0
  %961 = vmatpush.msra.mxu0 0.0
  %962 = vmatpush.msra.mxu0 0.0
  %963 = vmatpush.msra.mxu0 0.0
  %964 = vmatpush.msra.mxu0 0.0
  %965 = vmatpush.msra.mxu0 0.0
  %966 = vmatpush.msra.mxu0 0.0
  %967 = vmatpush.msra.mxu0 0.0
  %968 = vmatpush.msra.mxu0 0.0
  %969 = vmatpush.msra.mxu0 0.0
  %970 = vmatpush.msra.mxu0 0.0
  %971 = vmatpush.msra.mxu0 0.0
  %972 = vmatpush.msra.mxu0 0.0
  %973 = vmatpush.msra.mxu0 %v241
  %974 = vmatpush.msra.mxu0 %v73
  %975 = vmatmul.f32.gmra.mxu0 %v156
  %v976 = vpop.f32.mrf.mxu0
  %v977 = vadd.f32 0.0, %v976
  %978 = vmatmul.f32.gmra.mxu0 %v159
  %v979 = vpop.f32.mrf.mxu0
  %v980 = vadd.f32 0.0, %v979
  %981 = vmatmul.f32.gmra.mxu0 %v162
  %v982 = vpop.f32.mrf.mxu0
  %v983 = vadd.f32 0.0, %v982
  %984 = vdwg.mxu0
  %985 = vmatpush.msra.mxu0 0.0
  %986 = vmatpush.msra.mxu0 0.0
  %987 = vmatpush.msra.mxu0 0.0
  %988 = vmatpush.msra.mxu0 0.0
  %989 = vmatpush.msra.mxu0 0.0
  %990 = vmatpush.msra.mxu0 0.0
  %991 = vmatpush.msra.mxu0 0.0
  %992 = vmatpush.msra.mxu0 0.0
  %993 = vmatpush.msra.mxu0 0.0
  %994 = vmatpush.msra.mxu0 0.0
  %995 = vmatpush.msra.mxu0 0.0
  %996 = vmatpush.msra.mxu0 0.0
  %997 = vmatpush.msra.mxu0 0.0
  %998 = vmatpush.msra.mxu0 0.0
  %999 = vmatpush.msra.mxu0 %v244
  %1000 = vmatpush.msra.mxu0 %v74
  %1001 = vmatmul.f32.gmra.mxu0 %v156
  %v1002 = vpop.f32.mrf.mxu0
  %v1003 = vadd.f32 0.0, %v1002
  %1004 = vmatmul.f32.gmra.mxu0 %v159
  %v1005 = vpop.f32.mrf.mxu0
  %v1006 = vadd.f32 0.0, %v1005
  %1007 = vmatmul.f32.gmra.mxu0 %v162
  %v1008 = vpop.f32.mrf.mxu0
  %v1009 = vadd.f32 0.0, %v1008
  %1010 = vdwg.mxu0
  %1011 = vmatpush.msra.mxu0 0.0
  %1012 = vmatpush.msra.mxu0 0.0
  %1013 = vmatpush.msra.mxu0 0.0
  %1014 = vmatpush.msra.mxu0 0.0
  %1015 = vmatpush.msra.mxu0 0.0
  %1016 = vmatpush.msra.mxu0 0.0
  %1017 = vmatpush.msra.mxu0 0.0
  %1018 = vmatpush.msra.mxu0 0.0
  %1019 = vmatpush.msra.mxu0 0.0
  %1020 = vmatpush.msra.mxu0 0.0
  %1021 = vmatpush.msra.mxu0 0.0
  %1022 = vmatpush.msra.mxu0 0.0
  %1023 = vmatpush.msra.mxu0 0.0
  %1024 = vmatpush.msra.mxu0 0.0
  %1025 = vmatpush.msra.mxu0 %v247
  %1026 = vmatpush.msra.mxu0 %v75
  %1027 = vmatmul.f32.gmra.mxu0 %v156
  %v1028 = vpop.f32.mrf.mxu0
  %v1029 = vadd.f32 0.0, %v1028
  %1030 = vmatmul.f32.gmra.mxu0 %v159
  %v1031 = vpop.f32.mrf.mxu0
  %v1032 = vadd.f32 0.0, %v1031
  %1033 = vmatmul.f32.gmra.mxu0 %v162
  %v1034 = vpop.f32.mrf.mxu0
  %v1035 = vadd.f32 0.0, %v1034
  %1036 = vdwg.mxu0
  %1037 = vmatpush.msra.mxu0 0.0
  %1038 = vmatpush.msra.mxu0 0.0
  %1039 = vmatpush.msra.mxu0 0.0
  %1040 = vmatpush.msra.mxu0 0.0
  %1041 = vmatpush.msra.mxu0 0.0
  %1042 = vmatpush.msra.mxu0 0.0
  %1043 = vmatpush.msra.mxu0 0.0
  %1044 = vmatpush.msra.mxu0 0.0
  %1045 = vmatpush.msra.mxu0 0.0
  %1046 = vmatpush.msra.mxu0 0.0
  %1047 = vmatpush.msra.mxu0 0.0
  %1048 = vmatpush.msra.mxu0 0.0
  %1049 = vmatpush.msra.mxu0 0.0
  %1050 = vmatpush.msra.mxu0 0.0
  %1051 = vmatpush.msra.mxu0 %v250
  %1052 = vmatpush.msra.mxu0 %v76
  %1053 = vmatmul.f32.gmra.mxu0 %v156
  %v1054 = vpop.f32.mrf.mxu0
  %v1055 = vadd.f32 0.0, %v1054
  %1056 = vmatmul.f32.gmra.mxu0 %v159
  %v1057 = vpop.f32.mrf.mxu0
  %v1058 = vadd.f32 0.0, %v1057
  %1059 = vmatmul.f32.gmra.mxu0 %v162
  %v1060 = vpop.f32.mrf.mxu0
  %v1061 = vadd.f32 0.0, %v1060
  %1062 = vdwg.mxu0
  %1063 = vmatpush.msra.mxu0 0.0
  %1064 = vmatpush.msra.mxu0 0.0
  %1065 = vmatpush.msra.mxu0 0.0
  %1066 = vmatpush.msra.mxu0 0.0
  %1067 = vmatpush.msra.mxu0 0.0
  %1068 = vmatpush.msra.mxu0 0.0
  %1069 = vmatpush.msra.mxu0 0.0
  %1070 = vmatpush.msra.mxu0 0.0
  %1071 = vmatpush.msra.mxu0 0.0
  %1072 = vmatpush.msra.mxu0 0.0
  %1073 = vmatpush.msra.mxu0 0.0
  %1074 = vmatpush.msra.mxu0 0.0
  %1075 = vmatpush.msra.mxu0 0.0
  %1076 = vmatpush.msra.mxu0 0.0
  %1077 = vmatpush.msra.mxu0 %v253
  %1078 = vmatpush.msra.mxu0 %v77
  %1079 = vmatmul.f32.gmra.mxu0 %v156
  %v1080 = vpop.f32.mrf.mxu0
  %v1081 = vadd.f32 0.0, %v1080
  %1082 = vmatmul.f32.gmra.mxu0 %v159
  %v1083 = vpop.f32.mrf.mxu0
  %v1084 = vadd.f32 0.0, %v1083
  %1085 = vmatmul.f32.gmra.mxu0 %v162
  %v1086 = vpop.f32.mrf.mxu0
  %v1087 = vadd.f32 0.0, %v1086
  %1088 = vdwg.mxu0
  %1089 = vmatpush.msra.mxu0 0.0
  %1090 = vmatpush.msra.mxu0 0.0
  %1091 = vmatpush.msra.mxu0 0.0
  %1092 = vmatpush.msra.mxu0 0.0
  %1093 = vmatpush.msra.mxu0 0.0
  %1094 = vmatpush.msra.mxu0 0.0
  %1095 = vmatpush.msra.mxu0 0.0
  %1096 = vmatpush.msra.mxu0 0.0
  %1097 = vmatpush.msra.mxu0 0.0
  %1098 = vmatpush.msra.mxu0 0.0
  %1099 = vmatpush.msra.mxu0 0.0
  %1100 = vmatpush.msra.mxu0 0.0
  %1101 = vmatpush.msra.mxu0 0.0
  %1102 = vmatpush.msra.mxu0 0.0
  %1103 = vmatpush.msra.mxu0 %v256
  %1104 = vmatpush.msra.mxu0 %v78
  %1105 = vmatmul.f32.gmra.mxu0 %v156
  %v1106 = vpop.f32.mrf.mxu0
  %v1107 = vadd.f32 0.0, %v1106
  %1108 = vmatmul.f32.gmra.mxu0 %v159
  %v1109 = vpop.f32.mrf.mxu0
  %v1110 = vadd.f32 0.0, %v1109
  %1111 = vmatmul.f32.gmra.mxu0 %v162
  %v1112 = vpop.f32.mrf.mxu0
  %v1113 = vadd.f32 0.0, %v1112
  %1114 = vdwg.mxu0
  %1115 = vmatpush.msra.mxu0 0.0
  %1116 = vmatpush.msra.mxu0 0.0
  %1117 = vmatpush.msra.mxu0 0.0
  %1118 = vmatpush.msra.mxu0 0.0
  %1119 = vmatpush.msra.mxu0 0.0
  %1120 = vmatpush.msra.mxu0 0.0
  %1121 = vmatpush.msra.mxu0 0.0
  %1122 = vmatpush.msra.mxu0 0.0
  %1123 = vmatpush.msra.mxu0 0.0
  %1124 = vmatpush.msra.mxu0 0.0
  %1125 = vmatpush.msra.mxu0 0.0
  %1126 = vmatpush.msra.mxu0 0.0
  %1127 = vmatpush.msra.mxu0 0.0
  %1128 = vmatpush.msra.mxu0 0.0
  %1129 = vmatpush.msra.mxu0 %v259
  %1130 = vmatpush.msra.mxu0 %v79
  %1131 = vmatmul.f32.gmra.mxu0 %v156
  %v1132 = vpop.f32.mrf.mxu0
  %v1133 = vadd.f32 0.0, %v1132
  %1134 = vmatmul.f32.gmra.mxu0 %v159
  %v1135 = vpop.f32.mrf.mxu0
  %v1136 = vadd.f32 0.0, %v1135
  %1137 = vmatmul.f32.gmra.mxu0 %v162
  %v1138 = vpop.f32.mrf.mxu0
  %v1139 = vadd.f32 0.0, %v1138
  %1140 = vdwg.mxu0
  %1141 = vmatpush.msra.mxu0 0.0
  %1142 = vmatpush.msra.mxu0 0.0
  %1143 = vmatpush.msra.mxu0 0.0
  %1144 = vmatpush.msra.mxu0 0.0
  %1145 = vmatpush.msra.mxu0 0.0
  %1146 = vmatpush.msra.mxu0 0.0
  %1147 = vmatpush.msra.mxu0 0.0
  %1148 = vmatpush.msra.mxu0 0.0
  %1149 = vmatpush.msra.mxu0 0.0
  %1150 = vmatpush.msra.mxu0 0.0
  %1151 = vmatpush.msra.mxu0 0.0
  %1152 = vmatpush.msra.mxu0 0.0
  %1153 = vmatpush.msra.mxu0 0.0
  %1154 = vmatpush.msra.mxu0 0.0
  %1155 = vmatpush.msra.mxu0 %v262
  %1156 = vmatpush.msra.mxu0 %v80
  %1157 = vmatmul.f32.gmra.mxu0 %v156
  %v1158 = vpop.f32.mrf.mxu0
  %v1159 = vadd.f32 0.0, %v1158
  %1160 = vmatmul.f32.gmra.mxu0 %v159
  %v1161 = vpop.f32.mrf.mxu0
  %v1162 = vadd.f32 0.0, %v1161
  %1163 = vmatmul.f32.gmra.mxu0 %v162
  %v1164 = vpop.f32.mrf.mxu0
  %v1165 = vadd.f32 0.0, %v1164
  %1166 = vdwg.mxu0
  %1167 = vmatpush.msra.mxu0 0.0
  %1168 = vmatpush.msra.mxu0 0.0
  %1169 = vmatpush.msra.mxu0 0.0
  %1170 = vmatpush.msra.mxu0 0.0
  %1171 = vmatpush.msra.mxu0 0.0
  %1172 = vmatpush.msra.mxu0 0.0
  %1173 = vmatpush.msra.mxu0 0.0
  %1174 = vmatpush.msra.mxu0 0.0
  %1175 = vmatpush.msra.mxu0 0.0
  %1176 = vmatpush.msra.mxu0 0.0
  %1177 = vmatpush.msra.mxu0 0.0
  %1178 = vmatpush.msra.mxu0 0.0
  %1179 = vmatpush.msra.mxu0 0.0
  %1180 = vmatpush.msra.mxu0 0.0
  %1181 = vmatpush.msra.mxu0 %v265
  %1182 = vmatpush.msra.mxu0 %v81
  %1183 = vmatmul.f32.gmra.mxu0 %v156
  %v1184 = vpop.f32.mrf.mxu0
  %v1185 = vadd.f32 0.0, %v1184
  %1186 = vmatmul.f32.gmra.mxu0 %v159
  %v1187 = vpop.f32.mrf.mxu0
  %v1188 = vadd.f32 0.0, %v1187
  %1189 = vmatmul.f32.gmra.mxu0 %v162
  %v1190 = vpop.f32.mrf.mxu0
  %v1191 = vadd.f32 0.0, %v1190
  %1192 = vdwg.mxu0
  %1193 = vmatpush.msra.mxu0 0.0
  %1194 = vmatpush.msra.mxu0 0.0
  %1195 = vmatpush.msra.mxu0 0.0
  %1196 = vmatpush.msra.mxu0 0.0
  %1197 = vmatpush.msra.mxu0 0.0
  %1198 = vmatpush.msra.mxu0 0.0
  %1199 = vmatpush.msra.mxu0 0.0
  %1200 = vmatpush.msra.mxu0 0.0
  %1201 = vmatpush.msra.mxu0 0.0
  %1202 = vmatpush.msra.mxu0 0.0
  %1203 = vmatpush.msra.mxu0 0.0
  %1204 = vmatpush.msra.mxu0 0.0
  %1205 = vmatpush.msra.mxu0 0.0
  %1206 = vmatpush.msra.mxu0 0.0
  %1207 = vmatpush.msra.mxu0 %v268
  %1208 = vmatpush.msra.mxu0 %v82
  %1209 = vmatmul.f32.gmra.mxu0 %v156
  %v1210 = vpop.f32.mrf.mxu0
  %v1211 = vadd.f32 0.0, %v1210
  %1212 = vmatmul.f32.gmra.mxu0 %v159
  %v1213 = vpop.f32.mrf.mxu0
  %v1214 = vadd.f32 0.0, %v1213
  %1215 = vmatmul.f32.gmra.mxu0 %v162
  %v1216 = vpop.f32.mrf.mxu0
  %v1217 = vadd.f32 0.0, %v1216
  %1218 = vdwg.mxu0
  %1219 = vmatpush.msra.mxu0 0.0
  %1220 = vmatpush.msra.mxu0 0.0
  %1221 = vmatpush.msra.mxu0 0.0
  %1222 = vmatpush.msra.mxu0 0.0
  %1223 = vmatpush.msra.mxu0 0.0
  %1224 = vmatpush.msra.mxu0 0.0
  %1225 = vmatpush.msra.mxu0 0.0
  %1226 = vmatpush.msra.mxu0 0.0
  %1227 = vmatpush.msra.mxu0 0.0
  %1228 = vmatpush.msra.mxu0 0.0
  %1229 = vmatpush.msra.mxu0 0.0
  %1230 = vmatpush.msra.mxu0 0.0
  %1231 = vmatpush.msra.mxu0 0.0
  %1232 = vmatpush.msra.mxu0 0.0
  %1233 = vmatpush.msra.mxu0 %v271
  %1234 = vmatpush.msra.mxu0 %v83
  %1235 = vmatmul.f32.gmra.mxu0 %v156
  %v1236 = vpop.f32.mrf.mxu0
  %v1237 = vadd.f32 0.0, %v1236
  %1238 = vmatmul.f32.gmra.mxu0 %v159
  %v1239 = vpop.f32.mrf.mxu0
  %v1240 = vadd.f32 0.0, %v1239
  %1241 = vmatmul.f32.gmra.mxu0 %v162
  %v1242 = vpop.f32.mrf.mxu0
  %v1243 = vadd.f32 0.0, %v1242
  %1244 = vdwg.mxu0
  %1245 = vmatpush.msra.mxu0 0.0
  %1246 = vmatpush.msra.mxu0 0.0
  %1247 = vmatpush.msra.mxu0 0.0
  %1248 = vmatpush.msra.mxu0 0.0
  %1249 = vmatpush.msra.mxu0 0.0
  %1250 = vmatpush.msra.mxu0 0.0
  %1251 = vmatpush.msra.mxu0 0.0
  %1252 = vmatpush.msra.mxu0 0.0
  %1253 = vmatpush.msra.mxu0 0.0
  %1254 = vmatpush.msra.mxu0 0.0
  %1255 = vmatpush.msra.mxu0 0.0
  %1256 = vmatpush.msra.mxu0 0.0
  %1257 = vmatpush.msra.mxu0 0.0
  %1258 = vmatpush.msra.mxu0 0.0
  %1259 = vmatpush.msra.mxu0 %v274
  %1260 = vmatpush.msra.mxu0 %v84
  %1261 = vmatmul.f32.gmra.mxu0 %v156
  %v1262 = vpop.f32.mrf.mxu0
  %v1263 = vadd.f32 0.0, %v1262
  %1264 = vmatmul.f32.gmra.mxu0 %v159
  %v1265 = vpop.f32.mrf.mxu0
  %v1266 = vadd.f32 0.0, %v1265
  %1267 = vmatmul.f32.gmra.mxu0 %v162
  %v1268 = vpop.f32.mrf.mxu0
  %v1269 = vadd.f32 0.0, %v1268
  %1270 = vdwg.mxu0
  %1271 = vmatpush.msra.mxu0 0.0
  %1272 = vmatpush.msra.mxu0 0.0
  %1273 = vmatpush.msra.mxu0 0.0
  %1274 = vmatpush.msra.mxu0 0.0
  %1275 = vmatpush.msra.mxu0 0.0
  %1276 = vmatpush.msra.mxu0 0.0
  %1277 = vmatpush.msra.mxu0 0.0
  %1278 = vmatpush.msra.mxu0 0.0
  %1279 = vmatpush.msra.mxu0 0.0
  %1280 = vmatpush.msra.mxu0 0.0
  %1281 = vmatpush.msra.mxu0 0.0
  %1282 = vmatpush.msra.mxu0 0.0
  %1283 = vmatpush.msra.mxu0 0.0
  %1284 = vmatpush.msra.mxu0 0.0
  %1285 = vmatpush.msra.mxu0 %v277
  %1286 = vmatpush.msra.mxu0 %v85
  %1287 = vmatmul.f32.gmra.mxu0 %v156
  %v1288 = vpop.f32.mrf.mxu0
  %v1289 = vadd.f32 0.0, %v1288
  %1290 = vmatmul.f32.gmra.mxu0 %v159
  %v1291 = vpop.f32.mrf.mxu0
  %v1292 = vadd.f32 0.0, %v1291
  %1293 = vmatmul.f32.gmra.mxu0 %v162
  %v1294 = vpop.f32.mrf.mxu0
  %v1295 = vadd.f32 0.0, %v1294
  %1296 = vdwg.mxu0
  %1297 = vmatpush.msra.mxu0 0.0
  %1298 = vmatpush.msra.mxu0 0.0
  %1299 = vmatpush.msra.mxu0 0.0
  %1300 = vmatpush.msra.mxu0 0.0
  %1301 = vmatpush.msra.mxu0 0.0
  %1302 = vmatpush.msra.mxu0 0.0
  %1303 = vmatpush.msra.mxu0 0.0
  %1304 = vmatpush.msra.mxu0 0.0
  %1305 = vmatpush.msra.mxu0 0.0
  %1306 = vmatpush.msra.mxu0 0.0
  %1307 = vmatpush.msra.mxu0 0.0
  %1308 = vmatpush.msra.mxu0 0.0
  %1309 = vmatpush.msra.mxu0 0.0
  %1310 = vmatpush.msra.mxu0 0.0
  %1311 = vmatpush.msra.mxu0 %v280
  %1312 = vmatpush.msra.mxu0 %v86
  %1313 = vmatmul.f32.gmra.mxu0 %v156
  %v1314 = vpop.f32.mrf.mxu0
  %v1315 = vadd.f32 0.0, %v1314
  %1316 = vmatmul.f32.gmra.mxu0 %v159
  %v1317 = vpop.f32.mrf.mxu0
  %v1318 = vadd.f32 0.0, %v1317
  %1319 = vmatmul.f32.gmra.mxu0 %v162
  %v1320 = vpop.f32.mrf.mxu0
  %v1321 = vadd.f32 0.0, %v1320
  %1322 = vdwg.mxu0
  %1323 = vmatpush.msra.mxu0 0.0
  %1324 = vmatpush.msra.mxu0 0.0
  %1325 = vmatpush.msra.mxu0 0.0
  %1326 = vmatpush.msra.mxu0 0.0
  %1327 = vmatpush.msra.mxu0 0.0
  %1328 = vmatpush.msra.mxu0 0.0
  %1329 = vmatpush.msra.mxu0 0.0
  %1330 = vmatpush.msra.mxu0 0.0
  %1331 = vmatpush.msra.mxu0 0.0
  %1332 = vmatpush.msra.mxu0 0.0
  %1333 = vmatpush.msra.mxu0 0.0
  %1334 = vmatpush.msra.mxu0 0.0
  %1335 = vmatpush.msra.mxu0 0.0
  %1336 = vmatpush.msra.mxu0 0.0
  %1337 = vmatpush.msra.mxu0 %v283
  %1338 = vmatpush.msra.mxu0 %v87
  %1339 = vmatmul.f32.gmra.mxu0 %v156
  %v1340 = vpop.f32.mrf.mxu0
  %v1341 = vadd.f32 0.0, %v1340
  %1342 = vmatmul.f32.gmra.mxu0 %v159
  %v1343 = vpop.f32.mrf.mxu0
  %v1344 = vadd.f32 0.0, %v1343
  %1345 = vmatmul.f32.gmra.mxu0 %v162
  %v1346 = vpop.f32.mrf.mxu0
  %v1347 = vadd.f32 0.0, %v1346
  %1348 = vdwg.mxu0
  %1349 = vmatpush.msra.mxu0 0.0
  %1350 = vmatpush.msra.mxu0 0.0
  %1351 = vmatpush.msra.mxu0 0.0
  %1352 = vmatpush.msra.mxu0 0.0
  %1353 = vmatpush.msra.mxu0 0.0
  %1354 = vmatpush.msra.mxu0 0.0
  %1355 = vmatpush.msra.mxu0 0.0
  %1356 = vmatpush.msra.mxu0 0.0
  %1357 = vmatpush.msra.mxu0 0.0
  %1358 = vmatpush.msra.mxu0 0.0
  %1359 = vmatpush.msra.mxu0 0.0
  %1360 = vmatpush.msra.mxu0 0.0
  %1361 = vmatpush.msra.mxu0 0.0
  %1362 = vmatpush.msra.mxu0 0.0
  %1363 = vmatpush.msra.mxu0 %v286
  %1364 = vmatpush.msra.mxu0 %v88
  %1365 = vmatmul.f32.gmra.mxu0 %v156
  %v1366 = vpop.f32.mrf.mxu0
  %v1367 = vadd.f32 0.0, %v1366
  %1368 = vmatmul.f32.gmra.mxu0 %v159
  %v1369 = vpop.f32.mrf.mxu0
  %v1370 = vadd.f32 0.0, %v1369
  %1371 = vmatmul.f32.gmra.mxu0 %v162
  %v1372 = vpop.f32.mrf.mxu0
  %v1373 = vadd.f32 0.0, %v1372
  %1374 = vdwg.mxu0
  %1375 = vmatpush.msra.mxu0 0.0
  %1376 = vmatpush.msra.mxu0 0.0
  %1377 = vmatpush.msra.mxu0 0.0
  %1378 = vmatpush.msra.mxu0 0.0
  %1379 = vmatpush.msra.mxu0 0.0
  %1380 = vmatpush.msra.mxu0 0.0
  %1381 = vmatpush.msra.mxu0 0.0
  %1382 = vmatpush.msra.mxu0 0.0
  %1383 = vmatpush.msra.mxu0 0.0
  %1384 = vmatpush.msra.mxu0 0.0
  %1385 = vmatpush.msra.mxu0 0.0
  %1386 = vmatpush.msra.mxu0 0.0
  %1387 = vmatpush.msra.mxu0 0.0
  %1388 = vmatpush.msra.mxu0 0.0
  %1389 = vmatpush.msra.mxu0 %v289
  %1390 = vmatpush.msra.mxu0 %v89
  %1391 = vmatmul.f32.gmra.mxu0 %v156
  %v1392 = vpop.f32.mrf.mxu0
  %v1393 = vadd.f32 0.0, %v1392
  %1394 = vmatmul.f32.gmra.mxu0 %v159
  %v1395 = vpop.f32.mrf.mxu0
  %v1396 = vadd.f32 0.0, %v1395
  %1397 = vmatmul.f32.gmra.mxu0 %v162
  %v1398 = vpop.f32.mrf.mxu0
  %v1399 = vadd.f32 0.0, %v1398
  %1400 = vdwg.mxu0
  %1401 = vmatpush.msra.mxu0 0.0
  %1402 = vmatpush.msra.mxu0 0.0
  %1403 = vmatpush.msra.mxu0 0.0
  %1404 = vmatpush.msra.mxu0 0.0
  %1405 = vmatpush.msra.mxu0 0.0
  %1406 = vmatpush.msra.mxu0 0.0
  %1407 = vmatpush.msra.mxu0 0.0
  %1408 = vmatpush.msra.mxu0 0.0
  %1409 = vmatpush.msra.mxu0 0.0
  %1410 = vmatpush.msra.mxu0 0.0
  %1411 = vmatpush.msra.mxu0 0.0
  %1412 = vmatpush.msra.mxu0 0.0
  %1413 = vmatpush.msra.mxu0 0.0
  %1414 = vmatpush.msra.mxu0 0.0
  %1415 = vmatpush.msra.mxu0 %v292
  %1416 = vmatpush.msra.mxu0 %v90
  %1417 = vmatmul.f32.gmra.mxu0 %v156
  %v1418 = vpop.f32.mrf.mxu0
  %v1419 = vadd.f32 0.0, %v1418
  %1420 = vmatmul.f32.gmra.mxu0 %v159
  %v1421 = vpop.f32.mrf.mxu0
  %v1422 = vadd.f32 0.0, %v1421
  %1423 = vmatmul.f32.gmra.mxu0 %v162
  %v1424 = vpop.f32.mrf.mxu0
  %v1425 = vadd.f32 0.0, %v1424
  %1426 = vdwg.mxu0
  %1427 = vmatpush.msra.mxu0 0.0
  %1428 = vmatpush.msra.mxu0 0.0
  %1429 = vmatpush.msra.mxu0 0.0
  %1430 = vmatpush.msra.mxu0 0.0
  %1431 = vmatpush.msra.mxu0 0.0
  %1432 = vmatpush.msra.mxu0 0.0
  %1433 = vmatpush.msra.mxu0 0.0
  %1434 = vmatpush.msra.mxu0 0.0
  %1435 = vmatpush.msra.mxu0 0.0
  %1436 = vmatpush.msra.mxu0 0.0
  %1437 = vmatpush.msra.mxu0 0.0
  %1438 = vmatpush.msra.mxu0 0.0
  %1439 = vmatpush.msra.mxu0 0.0
  %1440 = vmatpush.msra.mxu0 0.0
  %1441 = vmatpush.msra.mxu0 %v295
  %1442 = vmatpush.msra.mxu0 %v91
  %1443 = vmatmul.f32.gmra.mxu0 %v156
  %v1444 = vpop.f32.mrf.mxu0
  %v1445 = vadd.f32 0.0, %v1444
  %1446 = vmatmul.f32.gmra.mxu0 %v159
  %v1447 = vpop.f32.mrf.mxu0
  %v1448 = vadd.f32 0.0, %v1447
  %1449 = vmatmul.f32.gmra.mxu0 %v162
  %v1450 = vpop.f32.mrf.mxu0
  %v1451 = vadd.f32 0.0, %v1450
  %1452 = vdwg.mxu0
  %1453 = vmatpush.msra.mxu0 0.0
  %1454 = vmatpush.msra.mxu0 0.0
  %1455 = vmatpush.msra.mxu0 0.0
  %1456 = vmatpush.msra.mxu0 0.0
  %1457 = vmatpush.msra.mxu0 0.0
  %1458 = vmatpush.msra.mxu0 0.0
  %1459 = vmatpush.msra.mxu0 0.0
  %1460 = vmatpush.msra.mxu0 0.0
  %1461 = vmatpush.msra.mxu0 0.0
  %1462 = vmatpush.msra.mxu0 0.0
  %1463 = vmatpush.msra.mxu0 0.0
  %1464 = vmatpush.msra.mxu0 0.0
  %1465 = vmatpush.msra.mxu0 0.0
  %1466 = vmatpush.msra.mxu0 0.0
  %1467 = vmatpush.msra.mxu0 %v298
  %1468 = vmatpush.msra.mxu0 %v92
  %1469 = vmatmul.f32.gmra.mxu0 %v156
  %v1470 = vpop.f32.mrf.mxu0
  %v1471 = vadd.f32 0.0, %v1470
  %1472 = vmatmul.f32.gmra.mxu0 %v159
  %v1473 = vpop.f32.mrf.mxu0
  %v1474 = vadd.f32 0.0, %v1473
  %1475 = vmatmul.f32.gmra.mxu0 %v162
  %v1476 = vpop.f32.mrf.mxu0
  %v1477 = vadd.f32 0.0, %v1476
  %1478 = vdwg.mxu0
  %1479 = vmatpush.msra.mxu0 0.0
  %1480 = vmatpush.msra.mxu0 0.0
  %1481 = vmatpush.msra.mxu0 0.0
  %1482 = vmatpush.msra.mxu0 0.0
  %1483 = vmatpush.msra.mxu0 0.0
  %1484 = vmatpush.msra.mxu0 0.0
  %1485 = vmatpush.msra.mxu0 0.0
  %1486 = vmatpush.msra.mxu0 0.0
  %1487 = vmatpush.msra.mxu0 0.0
  %1488 = vmatpush.msra.mxu0 0.0
  %1489 = vmatpush.msra.mxu0 0.0
  %1490 = vmatpush.msra.mxu0 0.0
  %1491 = vmatpush.msra.mxu0 0.0
  %1492 = vmatpush.msra.mxu0 0.0
  %1493 = vmatpush.msra.mxu0 %v301
  %1494 = vmatpush.msra.mxu0 %v93
  %1495 = vmatmul.f32.gmra.mxu0 %v156
  %v1496 = vpop.f32.mrf.mxu0
  %v1497 = vadd.f32 0.0, %v1496
  %1498 = vmatmul.f32.gmra.mxu0 %v159
  %v1499 = vpop.f32.mrf.mxu0
  %v1500 = vadd.f32 0.0, %v1499
  %1501 = vmatmul.f32.gmra.mxu0 %v162
  %v1502 = vpop.f32.mrf.mxu0
  %v1503 = vadd.f32 0.0, %v1502
  %1504 = vdwg.mxu0
  %1505 = vmatpush.msra.mxu0 0.0
  %1506 = vmatpush.msra.mxu0 0.0
  %1507 = vmatpush.msra.mxu0 0.0
  %1508 = vmatpush.msra.mxu0 0.0
  %1509 = vmatpush.msra.mxu0 0.0
  %1510 = vmatpush.msra.mxu0 0.0
  %1511 = vmatpush.msra.mxu0 0.0
  %1512 = vmatpush.msra.mxu0 0.0
  %1513 = vmatpush.msra.mxu0 0.0
  %1514 = vmatpush.msra.mxu0 0.0
  %1515 = vmatpush.msra.mxu0 0.0
  %1516 = vmatpush.msra.mxu0 0.0
  %1517 = vmatpush.msra.mxu0 0.0
  %1518 = vmatpush.msra.mxu0 0.0
  %1519 = vmatpush.msra.mxu0 %v304
  %1520 = vmatpush.msra.mxu0 %v94
  %1521 = vmatmul.f32.gmra.mxu0 %v156
  %v1522 = vpop.f32.mrf.mxu0
  %v1523 = vadd.f32 0.0, %v1522
  %1524 = vmatmul.f32.gmra.mxu0 %v159
  %v1525 = vpop.f32.mrf.mxu0
  %v1526 = vadd.f32 0.0, %v1525
  %1527 = vmatmul.f32.gmra.mxu0 %v162
  %v1528 = vpop.f32.mrf.mxu0
  %v1529 = vadd.f32 0.0, %v1528
  %1530 = vdwg.mxu0
  %1531 = vmatpush.msra.mxu0 0.0
  %1532 = vmatpush.msra.mxu0 0.0
  %1533 = vmatpush.msra.mxu0 0.0
  %1534 = vmatpush.msra.mxu0 0.0
  %1535 = vmatpush.msra.mxu0 0.0
  %1536 = vmatpush.msra.mxu0 0.0
  %1537 = vmatpush.msra.mxu0 0.0
  %1538 = vmatpush.msra.mxu0 0.0
  %1539 = vmatpush.msra.mxu0 0.0
  %1540 = vmatpush.msra.mxu0 0.0
  %1541 = vmatpush.msra.mxu0 0.0
  %1542 = vmatpush.msra.mxu0 0.0
  %1543 = vmatpush.msra.mxu0 0.0
  %1544 = vmatpush.msra.mxu0 0.0
  %1545 = vmatpush.msra.mxu0 %v307
  %1546 = vmatpush.msra.mxu0 %v95
  %1547 = vmatmul.f32.gmra.mxu0 %v156
  %v1548 = vpop.f32.mrf.mxu0
  %v1549 = vadd.f32 0.0, %v1548
  %1550 = vmatmul.f32.gmra.mxu0 %v159
  %v1551 = vpop.f32.mrf.mxu0
  %v1552 = vadd.f32 0.0, %v1551
  %1553 = vmatmul.f32.gmra.mxu0 %v162
  %v1554 = vpop.f32.mrf.mxu0
  %v1555 = vadd.f32 0.0, %v1554
  %1556 = vdwg.mxu0
  %v1558 = vsel %vm154, %v147, 0
  %v1561 = vsel %vm154, %v148, 0
  %v1564 = vsel %vm154, %v149, 0
  %v1567 = vsel %vm164, %v97, 0
  %1569 = vmatpush.msra.mxu0 0.0
  %1570 = vmatpush.msra.mxu0 0.0
  %1571 = vmatpush.msra.mxu0 0.0
  %1572 = vmatpush.msra.mxu0 0.0
  %1573 = vmatpush.msra.mxu0 0.0
  %1574 = vmatpush.msra.mxu0 0.0
  %1575 = vmatpush.msra.mxu0 0.0
  %1576 = vmatpush.msra.mxu0 0.0
  %1577 = vmatpush.msra.mxu0 0.0
  %1578 = vmatpush.msra.mxu0 0.0
  %1579 = vmatpush.msra.mxu0 0.0
  %1580 = vmatpush.msra.mxu0 0.0
  %1581 = vmatpush.msra.mxu0 0.0
  %1582 = vmatpush.msra.mxu0 0.0
  %1583 = vmatpush.msra.mxu0 %v1567
  %1584 = vmatpush.msra.mxu0 %v47
  %1585 = vmatmul.f32.gmra.mxu0 %v1558
  %v1586 = vpop.f32.mrf.mxu0
  %v1587 = vadd.f32 %v327, %v1586
  %1588 = vmatmul.f32.gmra.mxu0 %v1561
  %v1589 = vpop.f32.mrf.mxu0
  %v1590 = vadd.f32 %v330, %v1589
  %1591 = vmatmul.f32.gmra.mxu0 %v1564
  %v1592 = vpop.f32.mrf.mxu0
  %v1593 = vadd.f32 %v333, %v1592
  %1594 = vdwg.mxu0
  %1595 = vmatpush.msra.mxu0 0.0
  %1596 = vmatpush.msra.mxu0 0.0
  %1597 = vmatpush.msra.mxu0 0.0
  %1598 = vmatpush.msra.mxu0 0.0
  %1599 = vmatpush.msra.mxu0 0.0
  %1600 = vmatpush.msra.mxu0 0.0
  %1601 = vmatpush.msra.mxu0 0.0
  %1602 = vmatpush.msra.mxu0 0.0
  %1603 = vmatpush.msra.mxu0 0.0
  %1604 = vmatpush.msra.mxu0 0.0
  %1605 = vmatpush.msra.mxu0 0.0
  %1606 = vmatpush.msra.mxu0 0.0
  %1607 = vmatpush.msra.mxu0 0.0
  %1608 = vmatpush.msra.mxu0 0.0
  %1609 = vmatpush.msra.mxu0 %v166
  %1610 = vmatpush.msra.mxu0 %v48
  %1611 = vmatmul.f32.gmra.mxu0 %v1558
  %v1612 = vpop.f32.mrf.mxu0
  %v1613 = vadd.f32 %v353, %v1612
  %1614 = vmatmul.f32.gmra.mxu0 %v1561
  %v1615 = vpop.f32.mrf.mxu0
  %v1616 = vadd.f32 %v356, %v1615
  %1617 = vmatmul.f32.gmra.mxu0 %v1564
  %v1618 = vpop.f32.mrf.mxu0
  %v1619 = vadd.f32 %v359, %v1618
  %1620 = vdwg.mxu0
  %1621 = vmatpush.msra.mxu0 0.0
  %1622 = vmatpush.msra.mxu0 0.0
  %1623 = vmatpush.msra.mxu0 0.0
  %1624 = vmatpush.msra.mxu0 0.0
  %1625 = vmatpush.msra.mxu0 0.0
  %1626 = vmatpush.msra.mxu0 0.0
  %1627 = vmatpush.msra.mxu0 0.0
  %1628 = vmatpush.msra.mxu0 0.0
  %1629 = vmatpush.msra.mxu0 0.0
  %1630 = vmatpush.msra.mxu0 0.0
  %1631 = vmatpush.msra.mxu0 0.0
  %1632 = vmatpush.msra.mxu0 0.0
  %1633 = vmatpush.msra.mxu0 0.0
  %1634 = vmatpush.msra.mxu0 0.0
  %1635 = vmatpush.msra.mxu0 %v169
  %1636 = vmatpush.msra.mxu0 %v49
  %1637 = vmatmul.f32.gmra.mxu0 %v1558
  %v1638 = vpop.f32.mrf.mxu0
  %v1639 = vadd.f32 %v379, %v1638
  %1640 = vmatmul.f32.gmra.mxu0 %v1561
  %v1641 = vpop.f32.mrf.mxu0
  %v1642 = vadd.f32 %v382, %v1641
  %1643 = vmatmul.f32.gmra.mxu0 %v1564
  %v1644 = vpop.f32.mrf.mxu0
  %v1645 = vadd.f32 %v385, %v1644
  %1646 = vdwg.mxu0
  %1647 = vmatpush.msra.mxu0 0.0
  %1648 = vmatpush.msra.mxu0 0.0
  %1649 = vmatpush.msra.mxu0 0.0
  %1650 = vmatpush.msra.mxu0 0.0
  %1651 = vmatpush.msra.mxu0 0.0
  %1652 = vmatpush.msra.mxu0 0.0
  %1653 = vmatpush.msra.mxu0 0.0
  %1654 = vmatpush.msra.mxu0 0.0
  %1655 = vmatpush.msra.mxu0 0.0
  %1656 = vmatpush.msra.mxu0 0.0
  %1657 = vmatpush.msra.mxu0 0.0
  %1658 = vmatpush.msra.mxu0 0.0
  %1659 = vmatpush.msra.mxu0 0.0
  %1660 = vmatpush.msra.mxu0 0.0
  %1661 = vmatpush.msra.mxu0 %v172
  %1662 = vmatpush.msra.mxu0 %v50
  %1663 = vmatmul.f32.gmra.mxu0 %v1558
  %v1664 = vpop.f32.mrf.mxu0
  %v1665 = vadd.f32 %v405, %v1664
  %1666 = vmatmul.f32.gmra.mxu0 %v1561
  %v1667 = vpop.f32.mrf.mxu0
  %v1668 = vadd.f32 %v408, %v1667
  %1669 = vmatmul.f32.gmra.mxu0 %v1564
  %v1670 = vpop.f32.mrf.mxu0
  %v1671 = vadd.f32 %v411, %v1670
  %1672 = vdwg.mxu0
  %1673 = vmatpush.msra.mxu0 0.0
  %1674 = vmatpush.msra.mxu0 0.0
  %1675 = vmatpush.msra.mxu0 0.0
  %1676 = vmatpush.msra.mxu0 0.0
  %1677 = vmatpush.msra.mxu0 0.0
  %1678 = vmatpush.msra.mxu0 0.0
  %1679 = vmatpush.msra.mxu0 0.0
  %1680 = vmatpush.msra.mxu0 0.0
  %1681 = vmatpush.msra.mxu0 0.0
  %1682 = vmatpush.msra.mxu0 0.0
  %1683 = vmatpush.msra.mxu0 0.0
  %1684 = vmatpush.msra.mxu0 0.0
  %1685 = vmatpush.msra.mxu0 0.0
  %1686 = vmatpush.msra.mxu0 0.0
  %1687 = vmatpush.msra.mxu0 %v175
  %1688 = vmatpush.msra.mxu0 %v51
  %1689 = vmatmul.f32.gmra.mxu0 %v1558
  %v1690 = vpop.f32.mrf.mxu0
  %v1691 = vadd.f32 %v431, %v1690
  %1692 = vmatmul.f32.gmra.mxu0 %v1561
  %v1693 = vpop.f32.mrf.mxu0
  %v1694 = vadd.f32 %v434, %v1693
  %1695 = vmatmul.f32.gmra.mxu0 %v1564
  %v1696 = vpop.f32.mrf.mxu0
  %v1697 = vadd.f32 %v437, %v1696
  %1698 = vdwg.mxu0
  %1699 = vmatpush.msra.mxu0 0.0
  %1700 = vmatpush.msra.mxu0 0.0
  %1701 = vmatpush.msra.mxu0 0.0
  %1702 = vmatpush.msra.mxu0 0.0
  %1703 = vmatpush.msra.mxu0 0.0
  %1704 = vmatpush.msra.mxu0 0.0
  %1705 = vmatpush.msra.mxu0 0.0
  %1706 = vmatpush.msra.mxu0 0.0
  %1707 = vmatpush.msra.mxu0 0.0
  %1708 = vmatpush.msra.mxu0 0.0
  %1709 = vmatpush.msra.mxu0 0.0
  %1710 = vmatpush.msra.mxu0 0.0
  %1711 = vmatpush.msra.mxu0 0.0
  %1712 = vmatpush.msra.mxu0 0.0
  %1713 = vmatpush.msra.mxu0 %v178
  %1714 = vmatpush.msra.mxu0 %v52
  %1715 = vmatmul.f32.gmra.mxu0 %v1558
  %v1716 = vpop.f32.mrf.mxu0
  %v1717 = vadd.f32 %v457, %v1716
  %1718 = vmatmul.f32.gmra.mxu0 %v1561
  %v1719 = vpop.f32.mrf.mxu0
  %v1720 = vadd.f32 %v460, %v1719
  %1721 = vmatmul.f32.gmra.mxu0 %v1564
  %v1722 = vpop.f32.mrf.mxu0
  %v1723 = vadd.f32 %v463, %v1722
  %1724 = vdwg.mxu0
  %1725 = vmatpush.msra.mxu0 0.0
  %1726 = vmatpush.msra.mxu0 0.0
  %1727 = vmatpush.msra.mxu0 0.0
  %1728 = vmatpush.msra.mxu0 0.0
  %1729 = vmatpush.msra.mxu0 0.0
  %1730 = vmatpush.msra.mxu0 0.0
  %1731 = vmatpush.msra.mxu0 0.0
  %1732 = vmatpush.msra.mxu0 0.0
  %1733 = vmatpush.msra.mxu0 0.0
  %1734 = vmatpush.msra.mxu0 0.0
  %1735 = vmatpush.msra.mxu0 0.0
  %1736 = vmatpush.msra.mxu0 0.0
  %1737 = vmatpush.msra.mxu0 0.0
  %1738 = vmatpush.msra.mxu0 0.0
  %1739 = vmatpush.msra.mxu0 %v181
  %1740 = vmatpush.msra.mxu0 %v53
  %1741 = vmatmul.f32.gmra.mxu0 %v1558
  %v1742 = vpop.f32.mrf.mxu0
  %v1743 = vadd.f32 %v483, %v1742
  %1744 = vmatmul.f32.gmra.mxu0 %v1561
  %v1745 = vpop.f32.mrf.mxu0
  %v1746 = vadd.f32 %v486, %v1745
  %1747 = vmatmul.f32.gmra.mxu0 %v1564
  %v1748 = vpop.f32.mrf.mxu0
  %v1749 = vadd.f32 %v489, %v1748
  %1750 = vdwg.mxu0
  %1751 = vmatpush.msra.mxu0 0.0
  %1752 = vmatpush.msra.mxu0 0.0
  %1753 = vmatpush.msra.mxu0 0.0
  %1754 = vmatpush.msra.mxu0 0.0
  %1755 = vmatpush.msra.mxu0 0.0
  %1756 = vmatpush.msra.mxu0 0.0
  %1757 = vmatpush.msra.mxu0 0.0
  %1758 = vmatpush.msra.mxu0 0.0
  %1759 = vmatpush.msra.mxu0 0.0
  %1760 = vmatpush.msra.mxu0 0.0
  %1761 = vmatpush.msra.mxu0 0.0
  %1762 = vmatpush.msra.mxu0 0.0
  %1763 = vmatpush.msra.mxu0 0.0
  %1764 = vmatpush.msra.mxu0 0.0
  %1765 = vmatpush.msra.mxu0 %v184
  %1766 = vmatpush.msra.mxu0 %v54
  %1767 = vmatmul.f32.gmra.mxu0 %v1558
  %v1768 = vpop.f32.mrf.mxu0
  %v1769 = vadd.f32 %v509, %v1768
  %1770 = vmatmul.f32.gmra.mxu0 %v1561
  %v1771 = vpop.f32.mrf.mxu0
  %v1772 = vadd.f32 %v512, %v1771
  %1773 = vmatmul.f32.gmra.mxu0 %v1564
  %v1774 = vpop.f32.mrf.mxu0
  %v1775 = vadd.f32 %v515, %v1774
  %1776 = vdwg.mxu0
  %1777 = vmatpush.msra.mxu0 0.0
  %1778 = vmatpush.msra.mxu0 0.0
  %1779 = vmatpush.msra.mxu0 0.0
  %1780 = vmatpush.msra.mxu0 0.0
  %1781 = vmatpush.msra.mxu0 0.0
  %1782 = vmatpush.msra.mxu0 0.0
  %1783 = vmatpush.msra.mxu0 0.0
  %1784 = vmatpush.msra.mxu0 0.0
  %1785 = vmatpush.msra.mxu0 0.0
  %1786 = vmatpush.msra.mxu0 0.0
  %1787 = vmatpush.msra.mxu0 0.0
  %1788 = vmatpush.msra.mxu0 0.0
  %1789 = vmatpush.msra.mxu0 0.0
  %1790 = vmatpush.msra.mxu0 0.0
  %1791 = vmatpush.msra.mxu0 %v187
  %1792 = vmatpush.msra.mxu0 %v55
  %1793 = vmatmul.f32.gmra.mxu0 %v1558
  %v1794 = vpop.f32.mrf.mxu0
  %v1795 = vadd.f32 %v535, %v1794
  %1796 = vmatmul.f32.gmra.mxu0 %v1561
  %v1797 = vpop.f32.mrf.mxu0
  %v1798 = vadd.f32 %v538, %v1797
  %1799 = vmatmul.f32.gmra.mxu0 %v1564
  %v1800 = vpop.f32.mrf.mxu0
  %v1801 = vadd.f32 %v541, %v1800
  %1802 = vdwg.mxu0
  %1803 = vmatpush.msra.mxu0 0.0
  %1804 = vmatpush.msra.mxu0 0.0
  %1805 = vmatpush.msra.mxu0 0.0
  %1806 = vmatpush.msra.mxu0 0.0
  %1807 = vmatpush.msra.mxu0 0.0
  %1808 = vmatpush.msra.mxu0 0.0
  %1809 = vmatpush.msra.mxu0 0.0
  %1810 = vmatpush.msra.mxu0 0.0
  %1811 = vmatpush.msra.mxu0 0.0
  %1812 = vmatpush.msra.mxu0 0.0
  %1813 = vmatpush.msra.mxu0 0.0
  %1814 = vmatpush.msra.mxu0 0.0
  %1815 = vmatpush.msra.mxu0 0.0
  %1816 = vmatpush.msra.mxu0 0.0
  %1817 = vmatpush.msra.mxu0 %v190
  %1818 = vmatpush.msra.mxu0 %v56
  %1819 = vmatmul.f32.gmra.mxu0 %v1558
  %v1820 = vpop.f32.mrf.mxu0
  %v1821 = vadd.f32 %v561, %v1820
  %1822 = vmatmul.f32.gmra.mxu0 %v1561
  %v1823 = vpop.f32.mrf.mxu0
  %v1824 = vadd.f32 %v564, %v1823
  %1825 = vmatmul.f32.gmra.mxu0 %v1564
  %v1826 = vpop.f32.mrf.mxu0
  %v1827 = vadd.f32 %v567, %v1826
  %1828 = vdwg.mxu0
  %1829 = vmatpush.msra.mxu0 0.0
  %1830 = vmatpush.msra.mxu0 0.0
  %1831 = vmatpush.msra.mxu0 0.0
  %1832 = vmatpush.msra.mxu0 0.0
  %1833 = vmatpush.msra.mxu0 0.0
  %1834 = vmatpush.msra.mxu0 0.0
  %1835 = vmatpush.msra.mxu0 0.0
  %1836 = vmatpush.msra.mxu0 0.0
  %1837 = vmatpush.msra.mxu0 0.0
  %1838 = vmatpush.msra.mxu0 0.0
  %1839 = vmatpush.msra.mxu0 0.0
  %1840 = vmatpush.msra.mxu0 0.0
  %1841 = vmatpush.msra.mxu0 0.0
  %1842 = vmatpush.msra.mxu0 0.0
  %1843 = vmatpush.msra.mxu0 %v193
  %1844 = vmatpush.msra.mxu0 %v57
  %1845 = vmatmul.f32.gmra.mxu0 %v1558
  %v1846 = vpop.f32.mrf.mxu0
  %v1847 = vadd.f32 %v587, %v1846
  %1848 = vmatmul.f32.gmra.mxu0 %v1561
  %v1849 = vpop.f32.mrf.mxu0
  %v1850 = vadd.f32 %v590, %v1849
  %1851 = vmatmul.f32.gmra.mxu0 %v1564
  %v1852 = vpop.f32.mrf.mxu0
  %v1853 = vadd.f32 %v593, %v1852
  %1854 = vdwg.mxu0
  %1855 = vmatpush.msra.mxu0 0.0
  %1856 = vmatpush.msra.mxu0 0.0
  %1857 = vmatpush.msra.mxu0 0.0
  %1858 = vmatpush.msra.mxu0 0.0
  %1859 = vmatpush.msra.mxu0 0.0
  %1860 = vmatpush.msra.mxu0 0.0
  %1861 = vmatpush.msra.mxu0 0.0
  %1862 = vmatpush.msra.mxu0 0.0
  %1863 = vmatpush.msra.mxu0 0.0
  %1864 = vmatpush.msra.mxu0 0.0
  %1865 = vmatpush.msra.mxu0 0.0
  %1866 = vmatpush.msra.mxu0 0.0
  %1867 = vmatpush.msra.mxu0 0.0
  %1868 = vmatpush.msra.mxu0 0.0
  %1869 = vmatpush.msra.mxu0 %v196
  %1870 = vmatpush.msra.mxu0 %v58
  %1871 = vmatmul.f32.gmra.mxu0 %v1558
  %v1872 = vpop.f32.mrf.mxu0
  %v1873 = vadd.f32 %v613, %v1872
  %1874 = vmatmul.f32.gmra.mxu0 %v1561
  %v1875 = vpop.f32.mrf.mxu0
  %v1876 = vadd.f32 %v616, %v1875
  %1877 = vmatmul.f32.gmra.mxu0 %v1564
  %v1878 = vpop.f32.mrf.mxu0
  %v1879 = vadd.f32 %v619, %v1878
  %1880 = vdwg.mxu0
  %1881 = vmatpush.msra.mxu0 0.0
  %1882 = vmatpush.msra.mxu0 0.0
  %1883 = vmatpush.msra.mxu0 0.0
  %1884 = vmatpush.msra.mxu0 0.0
  %1885 = vmatpush.msra.mxu0 0.0
  %1886 = vmatpush.msra.mxu0 0.0
  %1887 = vmatpush.msra.mxu0 0.0
  %1888 = vmatpush.msra.mxu0 0.0
  %1889 = vmatpush.msra.mxu0 0.0
  %1890 = vmatpush.msra.mxu0 0.0
  %1891 = vmatpush.msra.mxu0 0.0
  %1892 = vmatpush.msra.mxu0 0.0
  %1893 = vmatpush.msra.mxu0 0.0
  %1894 = vmatpush.msra.mxu0 0.0
  %1895 = vmatpush.msra.mxu0 %v199
  %1896 = vmatpush.msra.mxu0 %v59
  %1897 = vmatmul.f32.gmra.mxu0 %v1558
  %v1898 = vpop.f32.mrf.mxu0
  %v1899 = vadd.f32 %v639, %v1898
  %1900 = vmatmul.f32.gmra.mxu0 %v1561
  %v1901 = vpop.f32.mrf.mxu0
  %v1902 = vadd.f32 %v642, %v1901
  %1903 = vmatmul.f32.gmra.mxu0 %v1564
  %v1904 = vpop.f32.mrf.mxu0
  %v1905 = vadd.f32 %v645, %v1904
  %1906 = vdwg.mxu0
  %1907 = vmatpush.msra.mxu0 0.0
  %1908 = vmatpush.msra.mxu0 0.0
  %1909 = vmatpush.msra.mxu0 0.0
  %1910 = vmatpush.msra.mxu0 0.0
  %1911 = vmatpush.msra.mxu0 0.0
  %1912 = vmatpush.msra.mxu0 0.0
  %1913 = vmatpush.msra.mxu0 0.0
  %1914 = vmatpush.msra.mxu0 0.0
  %1915 = vmatpush.msra.mxu0 0.0
  %1916 = vmatpush.msra.mxu0 0.0
  %1917 = vmatpush.msra.mxu0 0.0
  %1918 = vmatpush.msra.mxu0 0.0
  %1919 = vmatpush.msra.mxu0 0.0
  %1920 = vmatpush.msra.mxu0 0.0
  %1921 = vmatpush.msra.mxu0 %v202
  %1922 = vmatpush.msra.mxu0 %v60
  %1923 = vmatmul.f32.gmra.mxu0 %v1558
  %v1924 = vpop.f32.mrf.mxu0
  %v1925 = vadd.f32 %v665, %v1924
  %1926 = vmatmul.f32.gmra.mxu0 %v1561
  %v1927 = vpop.f32.mrf.mxu0
  %v1928 = vadd.f32 %v668, %v1927
  %1929 = vmatmul.f32.gmra.mxu0 %v1564
  %v1930 = vpop.f32.mrf.mxu0
  %v1931 = vadd.f32 %v671, %v1930
  %1932 = vdwg.mxu0
  %1933 = vmatpush.msra.mxu0 0.0
  %1934 = vmatpush.msra.mxu0 0.0
  %1935 = vmatpush.msra.mxu0 0.0
  %1936 = vmatpush.msra.mxu0 0.0
  %1937 = vmatpush.msra.mxu0 0.0
  %1938 = vmatpush.msra.mxu0 0.0
  %1939 = vmatpush.msra.mxu0 0.0
  %1940 = vmatpush.msra.mxu0 0.0
  %1941 = vmatpush.msra.mxu0 0.0
  %1942 = vmatpush.msra.mxu0 0.0
  %1943 = vmatpush.msra.mxu0 0.0
  %1944 = vmatpush.msra.mxu0 0.0
  %1945 = vmatpush.msra.mxu0 0.0
  %1946 = vmatpush.msra.mxu0 0.0
  %1947 = vmatpush.msra.mxu0 %v205
  %1948 = vmatpush.msra.mxu0 %v61
  %1949 = vmatmul.f32.gmra.mxu0 %v1558
  %v1950 = vpop.f32.mrf.mxu0
  %v1951 = vadd.f32 %v691, %v1950
  %1952 = vmatmul.f32.gmra.mxu0 %v1561
  %v1953 = vpop.f32.mrf.mxu0
  %v1954 = vadd.f32 %v694, %v1953
  %1955 = vmatmul.f32.gmra.mxu0 %v1564
  %v1956 = vpop.f32.mrf.mxu0
  %v1957 = vadd.f32 %v697, %v1956
  %1958 = vdwg.mxu0
  %1959 = vmatpush.msra.mxu0 0.0
  %1960 = vmatpush.msra.mxu0 0.0
  %1961 = vmatpush.msra.mxu0 0.0
  %1962 = vmatpush.msra.mxu0 0.0
  %1963 = vmatpush.msra.mxu0 0.0
  %1964 = vmatpush.msra.mxu0 0.0
  %1965 = vmatpush.msra.mxu0 0.0
  %1966 = vmatpush.msra.mxu0 0.0
  %1967 = vmatpush.msra.mxu0 0.0
  %1968 = vmatpush.msra.mxu0 0.0
  %1969 = vmatpush.msra.mxu0 0.0
  %1970 = vmatpush.msra.mxu0 0.0
  %1971 = vmatpush.msra.mxu0 0.0
  %1972 = vmatpush.msra.mxu0 0.0
  %1973 = vmatpush.msra.mxu0 %v208
  %1974 = vmatpush.msra.mxu0 %v62
  %1975 = vmatmul.f32.gmra.mxu0 %v1558
  %v1976 = vpop.f32.mrf.mxu0
  %v1977 = vadd.f32 %v717, %v1976
  %1978 = vmatmul.f32.gmra.mxu0 %v1561
  %v1979 = vpop.f32.mrf.mxu0
  %v1980 = vadd.f32 %v720, %v1979
  %1981 = vmatmul.f32.gmra.mxu0 %v1564
  %v1982 = vpop.f32.mrf.mxu0
  %v1983 = vadd.f32 %v723, %v1982
  %1984 = vdwg.mxu0
  %1985 = vmatpush.msra.mxu0 0.0
  %1986 = vmatpush.msra.mxu0 0.0
  %1987 = vmatpush.msra.mxu0 0.0
  %1988 = vmatpush.msra.mxu0 0.0
  %1989 = vmatpush.msra.mxu0 0.0
  %1990 = vmatpush.msra.mxu0 0.0
  %1991 = vmatpush.msra.mxu0 0.0
  %1992 = vmatpush.msra.mxu0 0.0
  %1993 = vmatpush.msra.mxu0 0.0
  %1994 = vmatpush.msra.mxu0 0.0
  %1995 = vmatpush.msra.mxu0 0.0
  %1996 = vmatpush.msra.mxu0 0.0
  %1997 = vmatpush.msra.mxu0 0.0
  %1998 = vmatpush.msra.mxu0 0.0
  %1999 = vmatpush.msra.mxu0 %v211
  %2000 = vmatpush.msra.mxu0 %v63
  %2001 = vmatmul.f32.gmra.mxu0 %v1558
  %v2002 = vpop.f32.mrf.mxu0
  %v2003 = vadd.f32 %v743, %v2002
  %2004 = vmatmul.f32.gmra.mxu0 %v1561
  %v2005 = vpop.f32.mrf.mxu0
  %v2006 = vadd.f32 %v746, %v2005
  %2007 = vmatmul.f32.gmra.mxu0 %v1564
  %v2008 = vpop.f32.mrf.mxu0
  %v2009 = vadd.f32 %v749, %v2008
  %2010 = vdwg.mxu0
  %2011 = vmatpush.msra.mxu0 0.0
  %2012 = vmatpush.msra.mxu0 0.0
  %2013 = vmatpush.msra.mxu0 0.0
  %2014 = vmatpush.msra.mxu0 0.0
  %2015 = vmatpush.msra.mxu0 0.0
  %2016 = vmatpush.msra.mxu0 0.0
  %2017 = vmatpush.msra.mxu0 0.0
  %2018 = vmatpush.msra.mxu0 0.0
  %2019 = vmatpush.msra.mxu0 0.0
  %2020 = vmatpush.msra.mxu0 0.0
  %2021 = vmatpush.msra.mxu0 0.0
  %2022 = vmatpush.msra.mxu0 0.0
  %2023 = vmatpush.msra.mxu0 0.0
  %2024 = vmatpush.msra.mxu0 0.0
  %2025 = vmatpush.msra.mxu0 %v214
  %2026 = vmatpush.msra.mxu0 %v64
  %2027 = vmatmul.f32.gmra.mxu0 %v1558
  %v2028 = vpop.f32.mrf.mxu0
  %v2029 = vadd.f32 %v769, %v2028
  %2030 = vmatmul.f32.gmra.mxu0 %v1561
  %v2031 = vpop.f32.mrf.mxu0
  %v2032 = vadd.f32 %v772, %v2031
  %2033 = vmatmul.f32.gmra.mxu0 %v1564
  %v2034 = vpop.f32.mrf.mxu0
  %v2035 = vadd.f32 %v775, %v2034
  %2036 = vdwg.mxu0
  %2037 = vmatpush.msra.mxu0 0.0
  %2038 = vmatpush.msra.mxu0 0.0
  %2039 = vmatpush.msra.mxu0 0.0
  %2040 = vmatpush.msra.mxu0 0.0
  %2041 = vmatpush.msra.mxu0 0.0
  %2042 = vmatpush.msra.mxu0 0.0
  %2043 = vmatpush.msra.mxu0 0.0
  %2044 = vmatpush.msra.mxu0 0.0
  %2045 = vmatpush.msra.mxu0 0.0
  %2046 = vmatpush.msra.mxu0 0.0
  %2047 = vmatpush.msra.mxu0 0.0
  %2048 = vmatpush.msra.mxu0 0.0
  %2049 = vmatpush.msra.mxu0 0.0
  %2050 = vmatpush.msra.mxu0 0.0
  %2051 = vmatpush.msra.mxu0 %v217
  %2052 = vmatpush.msra.mxu0 %v65
  %2053 = vmatmul.f32.gmra.mxu0 %v1558
  %v2054 = vpop.f32.mrf.mxu0
  %v2055 = vadd.f32 %v795, %v2054
  %2056 = vmatmul.f32.gmra.mxu0 %v1561
  %v2057 = vpop.f32.mrf.mxu0
  %v2058 = vadd.f32 %v798, %v2057
  %2059 = vmatmul.f32.gmra.mxu0 %v1564
  %v2060 = vpop.f32.mrf.mxu0
  %v2061 = vadd.f32 %v801, %v2060
  %2062 = vdwg.mxu0
  %2063 = vmatpush.msra.mxu0 0.0
  %2064 = vmatpush.msra.mxu0 0.0
  %2065 = vmatpush.msra.mxu0 0.0
  %2066 = vmatpush.msra.mxu0 0.0
  %2067 = vmatpush.msra.mxu0 0.0
  %2068 = vmatpush.msra.mxu0 0.0
  %2069 = vmatpush.msra.mxu0 0.0
  %2070 = vmatpush.msra.mxu0 0.0
  %2071 = vmatpush.msra.mxu0 0.0
  %2072 = vmatpush.msra.mxu0 0.0
  %2073 = vmatpush.msra.mxu0 0.0
  %2074 = vmatpush.msra.mxu0 0.0
  %2075 = vmatpush.msra.mxu0 0.0
  %2076 = vmatpush.msra.mxu0 0.0
  %2077 = vmatpush.msra.mxu0 %v220
  %2078 = vmatpush.msra.mxu0 %v66
  %2079 = vmatmul.f32.gmra.mxu0 %v1558
  %v2080 = vpop.f32.mrf.mxu0
  %v2081 = vadd.f32 %v821, %v2080
  %2082 = vmatmul.f32.gmra.mxu0 %v1561
  %v2083 = vpop.f32.mrf.mxu0
  %v2084 = vadd.f32 %v824, %v2083
  %2085 = vmatmul.f32.gmra.mxu0 %v1564
  %v2086 = vpop.f32.mrf.mxu0
  %v2087 = vadd.f32 %v827, %v2086
  %2088 = vdwg.mxu0
  %2089 = vmatpush.msra.mxu0 0.0
  %2090 = vmatpush.msra.mxu0 0.0
  %2091 = vmatpush.msra.mxu0 0.0
  %2092 = vmatpush.msra.mxu0 0.0
  %2093 = vmatpush.msra.mxu0 0.0
  %2094 = vmatpush.msra.mxu0 0.0
  %2095 = vmatpush.msra.mxu0 0.0
  %2096 = vmatpush.msra.mxu0 0.0
  %2097 = vmatpush.msra.mxu0 0.0
  %2098 = vmatpush.msra.mxu0 0.0
  %2099 = vmatpush.msra.mxu0 0.0
  %2100 = vmatpush.msra.mxu0 0.0
  %2101 = vmatpush.msra.mxu0 0.0
  %2102 = vmatpush.msra.mxu0 0.0
  %2103 = vmatpush.msra.mxu0 %v223
  %2104 = vmatpush.msra.mxu0 %v67
  %2105 = vmatmul.f32.gmra.mxu0 %v1558
  %v2106 = vpop.f32.mrf.mxu0
  %v2107 = vadd.f32 %v847, %v2106
  %2108 = vmatmul.f32.gmra.mxu0 %v1561
  %v2109 = vpop.f32.mrf.mxu0
  %v2110 = vadd.f32 %v850, %v2109
  %2111 = vmatmul.f32.gmra.mxu0 %v1564
  %v2112 = vpop.f32.mrf.mxu0
  %v2113 = vadd.f32 %v853, %v2112
  %2114 = vdwg.mxu0
  %2115 = vmatpush.msra.mxu0 0.0
  %2116 = vmatpush.msra.mxu0 0.0
  %2117 = vmatpush.msra.mxu0 0.0
  %2118 = vmatpush.msra.mxu0 0.0
  %2119 = vmatpush.msra.mxu0 0.0
  %2120 = vmatpush.msra.mxu0 0.0
  %2121 = vmatpush.msra.mxu0 0.0
  %2122 = vmatpush.msra.mxu0 0.0
  %2123 = vmatpush.msra.mxu0 0.0
  %2124 = vmatpush.msra.mxu0 0.0
  %2125 = vmatpush.msra.mxu0 0.0
  %2126 = vmatpush.msra.mxu0 0.0
  %2127 = vmatpush.msra.mxu0 0.0
  %2128 = vmatpush.msra.mxu0 0.0
  %2129 = vmatpush.msra.mxu0 %v226
  %2130 = vmatpush.msra.mxu0 %v68
  %2131 = vmatmul.f32.gmra.mxu0 %v1558
  %v2132 = vpop.f32.mrf.mxu0
  %v2133 = vadd.f32 %v873, %v2132
  %2134 = vmatmul.f32.gmra.mxu0 %v1561
  %v2135 = vpop.f32.mrf.mxu0
  %v2136 = vadd.f32 %v876, %v2135
  %2137 = vmatmul.f32.gmra.mxu0 %v1564
  %v2138 = vpop.f32.mrf.mxu0
  %v2139 = vadd.f32 %v879, %v2138
  %2140 = vdwg.mxu0
  %2141 = vmatpush.msra.mxu0 0.0
  %2142 = vmatpush.msra.mxu0 0.0
  %2143 = vmatpush.msra.mxu0 0.0
  %2144 = vmatpush.msra.mxu0 0.0
  %2145 = vmatpush.msra.mxu0 0.0
  %2146 = vmatpush.msra.mxu0 0.0
  %2147 = vmatpush.msra.mxu0 0.0
  %2148 = vmatpush.msra.mxu0 0.0
  %2149 = vmatpush.msra.mxu0 0.0
  %2150 = vmatpush.msra.mxu0 0.0
  %2151 = vmatpush.msra.mxu0 0.0
  %2152 = vmatpush.msra.mxu0 0.0
  %2153 = vmatpush.msra.mxu0 0.0
  %2154 = vmatpush.msra.mxu0 0.0
  %2155 = vmatpush.msra.mxu0 %v229
  %2156 = vmatpush.msra.mxu0 %v69
  %2157 = vmatmul.f32.gmra.mxu0 %v1558
  %v2158 = vpop.f32.mrf.mxu0
  %v2159 = vadd.f32 %v899, %v2158
  %2160 = vmatmul.f32.gmra.mxu0 %v1561
  %v2161 = vpop.f32.mrf.mxu0
  %v2162 = vadd.f32 %v902, %v2161
  %2163 = vmatmul.f32.gmra.mxu0 %v1564
  %v2164 = vpop.f32.mrf.mxu0
  %v2165 = vadd.f32 %v905, %v2164
  %2166 = vdwg.mxu0
  %2167 = vmatpush.msra.mxu0 0.0
  %2168 = vmatpush.msra.mxu0 0.0
  %2169 = vmatpush.msra.mxu0 0.0
  %2170 = vmatpush.msra.mxu0 0.0
  %2171 = vmatpush.msra.mxu0 0.0
  %2172 = vmatpush.msra.mxu0 0.0
  %2173 = vmatpush.msra.mxu0 0.0
  %2174 = vmatpush.msra.mxu0 0.0
  %2175 = vmatpush.msra.mxu0 0.0
  %2176 = vmatpush.msra.mxu0 0.0
  %2177 = vmatpush.msra.mxu0 0.0
  %2178 = vmatpush.msra.mxu0 0.0
  %2179 = vmatpush.msra.mxu0 0.0
  %2180 = vmatpush.msra.mxu0 0.0
  %2181 = vmatpush.msra.mxu0 %v232
  %2182 = vmatpush.msra.mxu0 %v70
  %2183 = vmatmul.f32.gmra.mxu0 %v1558
  %v2184 = vpop.f32.mrf.mxu0
  %v2185 = vadd.f32 %v925, %v2184
  %2186 = vmatmul.f32.gmra.mxu0 %v1561
  %v2187 = vpop.f32.mrf.mxu0
  %v2188 = vadd.f32 %v928, %v2187
  %2189 = vmatmul.f32.gmra.mxu0 %v1564
  %v2190 = vpop.f32.mrf.mxu0
  %v2191 = vadd.f32 %v931, %v2190
  %2192 = vdwg.mxu0
  %2193 = vmatpush.msra.mxu0 0.0
  %2194 = vmatpush.msra.mxu0 0.0
  %2195 = vmatpush.msra.mxu0 0.0
  %2196 = vmatpush.msra.mxu0 0.0
  %2197 = vmatpush.msra.mxu0 0.0
  %2198 = vmatpush.msra.mxu0 0.0
  %2199 = vmatpush.msra.mxu0 0.0
  %2200 = vmatpush.msra.mxu0 0.0
  %2201 = vmatpush.msra.mxu0 0.0
  %2202 = vmatpush.msra.mxu0 0.0
  %2203 = vmatpush.msra.mxu0 0.0
  %2204 = vmatpush.msra.mxu0 0.0
  %2205 = vmatpush.msra.mxu0 0.0
  %2206 = vmatpush.msra.mxu0 0.0
  %2207 = vmatpush.msra.mxu0 %v235
  %2208 = vmatpush.msra.mxu0 %v71
  %2209 = vmatmul.f32.gmra.mxu0 %v1558
  %v2210 = vpop.f32.mrf.mxu0
  %v2211 = vadd.f32 %v951, %v2210
  %2212 = vmatmul.f32.gmra.mxu0 %v1561
  %v2213 = vpop.f32.mrf.mxu0
  %v2214 = vadd.f32 %v954, %v2213
  %2215 = vmatmul.f32.gmra.mxu0 %v1564
  %v2216 = vpop.f32.mrf.mxu0
  %v2217 = vadd.f32 %v957, %v2216
  %2218 = vdwg.mxu0
  %2219 = vmatpush.msra.mxu0 0.0
  %2220 = vmatpush.msra.mxu0 0.0
  %2221 = vmatpush.msra.mxu0 0.0
  %2222 = vmatpush.msra.mxu0 0.0
  %2223 = vmatpush.msra.mxu0 0.0
  %2224 = vmatpush.msra.mxu0 0.0
  %2225 = vmatpush.msra.mxu0 0.0
  %2226 = vmatpush.msra.mxu0 0.0
  %2227 = vmatpush.msra.mxu0 0.0
  %2228 = vmatpush.msra.mxu0 0.0
  %2229 = vmatpush.msra.mxu0 0.0
  %2230 = vmatpush.msra.mxu0 0.0
  %2231 = vmatpush.msra.mxu0 0.0
  %2232 = vmatpush.msra.mxu0 0.0
  %2233 = vmatpush.msra.mxu0 %v238
  %2234 = vmatpush.msra.mxu0 %v72
  %2235 = vmatmul.f32.gmra.mxu0 %v1558
  %v2236 = vpop.f32.mrf.mxu0
  %v2237 = vadd.f32 %v977, %v2236
  %2238 = vmatmul.f32.gmra.mxu0 %v1561
  %v2239 = vpop.f32.mrf.mxu0
  %v2240 = vadd.f32 %v980, %v2239
  %2241 = vmatmul.f32.gmra.mxu0 %v1564
  %v2242 = vpop.f32.mrf.mxu0
  %v2243 = vadd.f32 %v983, %v2242
  %2244 = vdwg.mxu0
  %2245 = vmatpush.msra.mxu0 0.0
  %2246 = vmatpush.msra.mxu0 0.0
  %2247 = vmatpush.msra.mxu0 0.0
  %2248 = vmatpush.msra.mxu0 0.0
  %2249 = vmatpush.msra.mxu0 0.0
  %2250 = vmatpush.msra.mxu0 0.0
  %2251 = vmatpush.msra.mxu0 0.0
  %2252 = vmatpush.msra.mxu0 0.0
  %2253 = vmatpush.msra.mxu0 0.0
  %2254 = vmatpush.msra.mxu0 0.0
  %2255 = vmatpush.msra.mxu0 0.0
  %2256 = vmatpush.msra.mxu0 0.0
  %2257 = vmatpush.msra.mxu0 0.0
  %2258 = vmatpush.msra.mxu0 0.0
  %2259 = vmatpush.msra.mxu0 %v241
  %2260 = vmatpush.msra.mxu0 %v73
  %2261 = vmatmul.f32.gmra.mxu0 %v1558
  %v2262 = vpop.f32.mrf.mxu0
  %v2263 = vadd.f32 %v1003, %v2262
  %2264 = vmatmul.f32.gmra.mxu0 %v1561
  %v2265 = vpop.f32.mrf.mxu0
  %v2266 = vadd.f32 %v1006, %v2265
  %2267 = vmatmul.f32.gmra.mxu0 %v1564
  %v2268 = vpop.f32.mrf.mxu0
  %v2269 = vadd.f32 %v1009, %v2268
  %2270 = vdwg.mxu0
  %2271 = vmatpush.msra.mxu0 0.0
  %2272 = vmatpush.msra.mxu0 0.0
  %2273 = vmatpush.msra.mxu0 0.0
  %2274 = vmatpush.msra.mxu0 0.0
  %2275 = vmatpush.msra.mxu0 0.0
  %2276 = vmatpush.msra.mxu0 0.0
  %2277 = vmatpush.msra.mxu0 0.0
  %2278 = vmatpush.msra.mxu0 0.0
  %2279 = vmatpush.msra.mxu0 0.0
  %2280 = vmatpush.msra.mxu0 0.0
  %2281 = vmatpush.msra.mxu0 0.0
  %2282 = vmatpush.msra.mxu0 0.0
  %2283 = vmatpush.msra.mxu0 0.0
  %2284 = vmatpush.msra.mxu0 0.0
  %2285 = vmatpush.msra.mxu0 %v244
  %2286 = vmatpush.msra.mxu0 %v74
  %2287 = vmatmul.f32.gmra.mxu0 %v1558
  %v2288 = vpop.f32.mrf.mxu0
  %v2289 = vadd.f32 %v1029, %v2288
  %2290 = vmatmul.f32.gmra.mxu0 %v1561
  %v2291 = vpop.f32.mrf.mxu0
  %v2292 = vadd.f32 %v1032, %v2291
  %2293 = vmatmul.f32.gmra.mxu0 %v1564
  %v2294 = vpop.f32.mrf.mxu0
  %v2295 = vadd.f32 %v1035, %v2294
  %2296 = vdwg.mxu0
  %2297 = vmatpush.msra.mxu0 0.0
  %2298 = vmatpush.msra.mxu0 0.0
  %2299 = vmatpush.msra.mxu0 0.0
  %2300 = vmatpush.msra.mxu0 0.0
  %2301 = vmatpush.msra.mxu0 0.0
  %2302 = vmatpush.msra.mxu0 0.0
  %2303 = vmatpush.msra.mxu0 0.0
  %2304 = vmatpush.msra.mxu0 0.0
  %2305 = vmatpush.msra.mxu0 0.0
  %2306 = vmatpush.msra.mxu0 0.0
  %2307 = vmatpush.msra.mxu0 0.0
  %2308 = vmatpush.msra.mxu0 0.0
  %2309 = vmatpush.msra.mxu0 0.0
  %2310 = vmatpush.msra.mxu0 0.0
  %2311 = vmatpush.msra.mxu0 %v247
  %2312 = vmatpush.msra.mxu0 %v75
  %2313 = vmatmul.f32.gmra.mxu0 %v1558
  %v2314 = vpop.f32.mrf.mxu0
  %v2315 = vadd.f32 %v1055, %v2314
  %2316 = vmatmul.f32.gmra.mxu0 %v1561
  %v2317 = vpop.f32.mrf.mxu0
  %v2318 = vadd.f32 %v1058, %v2317
  %2319 = vmatmul.f32.gmra.mxu0 %v1564
  %v2320 = vpop.f32.mrf.mxu0
  %v2321 = vadd.f32 %v1061, %v2320
  %2322 = vdwg.mxu0
  %2323 = vmatpush.msra.mxu0 0.0
  %2324 = vmatpush.msra.mxu0 0.0
  %2325 = vmatpush.msra.mxu0 0.0
  %2326 = vmatpush.msra.mxu0 0.0
  %2327 = vmatpush.msra.mxu0 0.0
  %2328 = vmatpush.msra.mxu0 0.0
  %2329 = vmatpush.msra.mxu0 0.0
  %2330 = vmatpush.msra.mxu0 0.0
  %2331 = vmatpush.msra.mxu0 0.0
  %2332 = vmatpush.msra.mxu0 0.0
  %2333 = vmatpush.msra.mxu0 0.0
  %2334 = vmatpush.msra.mxu0 0.0
  %2335 = vmatpush.msra.mxu0 0.0
  %2336 = vmatpush.msra.mxu0 0.0
  %2337 = vmatpush.msra.mxu0 %v250
  %2338 = vmatpush.msra.mxu0 %v76
  %2339 = vmatmul.f32.gmra.mxu0 %v1558
  %v2340 = vpop.f32.mrf.mxu0
  %v2341 = vadd.f32 %v1081, %v2340
  %2342 = vmatmul.f32.gmra.mxu0 %v1561
  %v2343 = vpop.f32.mrf.mxu0
  %v2344 = vadd.f32 %v1084, %v2343
  %2345 = vmatmul.f32.gmra.mxu0 %v1564
  %v2346 = vpop.f32.mrf.mxu0
  %v2347 = vadd.f32 %v1087, %v2346
  %2348 = vdwg.mxu0
  %2349 = vmatpush.msra.mxu0 0.0
  %2350 = vmatpush.msra.mxu0 0.0
  %2351 = vmatpush.msra.mxu0 0.0
  %2352 = vmatpush.msra.mxu0 0.0
  %2353 = vmatpush.msra.mxu0 0.0
  %2354 = vmatpush.msra.mxu0 0.0
  %2355 = vmatpush.msra.mxu0 0.0
  %2356 = vmatpush.msra.mxu0 0.0
  %2357 = vmatpush.msra.mxu0 0.0
  %2358 = vmatpush.msra.mxu0 0.0
  %2359 = vmatpush.msra.mxu0 0.0
  %2360 = vmatpush.msra.mxu0 0.0
  %2361 = vmatpush.msra.mxu0 0.0
  %2362 = vmatpush.msra.mxu0 0.0
  %2363 = vmatpush.msra.mxu0 %v253
  %2364 = vmatpush.msra.mxu0 %v77
  %2365 = vmatmul.f32.gmra.mxu0 %v1558
  %v2366 = vpop.f32.mrf.mxu0
  %v2367 = vadd.f32 %v1107, %v2366
  %2368 = vmatmul.f32.gmra.mxu0 %v1561
  %v2369 = vpop.f32.mrf.mxu0
  %v2370 = vadd.f32 %v1110, %v2369
  %2371 = vmatmul.f32.gmra.mxu0 %v1564
  %v2372 = vpop.f32.mrf.mxu0
  %v2373 = vadd.f32 %v1113, %v2372
  %2374 = vdwg.mxu0
  %2375 = vmatpush.msra.mxu0 0.0
  %2376 = vmatpush.msra.mxu0 0.0
  %2377 = vmatpush.msra.mxu0 0.0
  %2378 = vmatpush.msra.mxu0 0.0
  %2379 = vmatpush.msra.mxu0 0.0
  %2380 = vmatpush.msra.mxu0 0.0
  %2381 = vmatpush.msra.mxu0 0.0
  %2382 = vmatpush.msra.mxu0 0.0
  %2383 = vmatpush.msra.mxu0 0.0
  %2384 = vmatpush.msra.mxu0 0.0
  %2385 = vmatpush.msra.mxu0 0.0
  %2386 = vmatpush.msra.mxu0 0.0
  %2387 = vmatpush.msra.mxu0 0.0
  %2388 = vmatpush.msra.mxu0 0.0
  %2389 = vmatpush.msra.mxu0 %v256
  %2390 = vmatpush.msra.mxu0 %v78
  %2391 = vmatmul.f32.gmra.mxu0 %v1558
  %v2392 = vpop.f32.mrf.mxu0
  %v2393 = vadd.f32 %v1133, %v2392
  %2394 = vmatmul.f32.gmra.mxu0 %v1561
  %v2395 = vpop.f32.mrf.mxu0
  %v2396 = vadd.f32 %v1136, %v2395
  %2397 = vmatmul.f32.gmra.mxu0 %v1564
  %v2398 = vpop.f32.mrf.mxu0
  %v2399 = vadd.f32 %v1139, %v2398
  %2400 = vdwg.mxu0
  %2401 = vmatpush.msra.mxu0 0.0
  %2402 = vmatpush.msra.mxu0 0.0
  %2403 = vmatpush.msra.mxu0 0.0
  %2404 = vmatpush.msra.mxu0 0.0
  %2405 = vmatpush.msra.mxu0 0.0
  %2406 = vmatpush.msra.mxu0 0.0
  %2407 = vmatpush.msra.mxu0 0.0
  %2408 = vmatpush.msra.mxu0 0.0
  %2409 = vmatpush.msra.mxu0 0.0
  %2410 = vmatpush.msra.mxu0 0.0
  %2411 = vmatpush.msra.mxu0 0.0
  %2412 = vmatpush.msra.mxu0 0.0
  %2413 = vmatpush.msra.mxu0 0.0
  %2414 = vmatpush.msra.mxu0 0.0
  %2415 = vmatpush.msra.mxu0 %v259
  %2416 = vmatpush.msra.mxu0 %v79
  %2417 = vmatmul.f32.gmra.mxu0 %v1558
  %v2418 = vpop.f32.mrf.mxu0
  %v2419 = vadd.f32 %v1159, %v2418
  %2420 = vmatmul.f32.gmra.mxu0 %v1561
  %v2421 = vpop.f32.mrf.mxu0
  %v2422 = vadd.f32 %v1162, %v2421
  %2423 = vmatmul.f32.gmra.mxu0 %v1564
  %v2424 = vpop.f32.mrf.mxu0
  %v2425 = vadd.f32 %v1165, %v2424
  %2426 = vdwg.mxu0
  %2427 = vmatpush.msra.mxu0 0.0
  %2428 = vmatpush.msra.mxu0 0.0
  %2429 = vmatpush.msra.mxu0 0.0
  %2430 = vmatpush.msra.mxu0 0.0
  %2431 = vmatpush.msra.mxu0 0.0
  %2432 = vmatpush.msra.mxu0 0.0
  %2433 = vmatpush.msra.mxu0 0.0
  %2434 = vmatpush.msra.mxu0 0.0
  %2435 = vmatpush.msra.mxu0 0.0
  %2436 = vmatpush.msra.mxu0 0.0
  %2437 = vmatpush.msra.mxu0 0.0
  %2438 = vmatpush.msra.mxu0 0.0
  %2439 = vmatpush.msra.mxu0 0.0
  %2440 = vmatpush.msra.mxu0 0.0
  %2441 = vmatpush.msra.mxu0 %v262
  %2442 = vmatpush.msra.mxu0 %v80
  %2443 = vmatmul.f32.gmra.mxu0 %v1558
  %v2444 = vpop.f32.mrf.mxu0
  %v2445 = vadd.f32 %v1185, %v2444
  %2446 = vmatmul.f32.gmra.mxu0 %v1561
  %v2447 = vpop.f32.mrf.mxu0
  %v2448 = vadd.f32 %v1188, %v2447
  %2449 = vmatmul.f32.gmra.mxu0 %v1564
  %v2450 = vpop.f32.mrf.mxu0
  %v2451 = vadd.f32 %v1191, %v2450
  %2452 = vdwg.mxu0
  %2453 = vmatpush.msra.mxu0 0.0
  %2454 = vmatpush.msra.mxu0 0.0
  %2455 = vmatpush.msra.mxu0 0.0
  %2456 = vmatpush.msra.mxu0 0.0
  %2457 = vmatpush.msra.mxu0 0.0
  %2458 = vmatpush.msra.mxu0 0.0
  %2459 = vmatpush.msra.mxu0 0.0
  %2460 = vmatpush.msra.mxu0 0.0
  %2461 = vmatpush.msra.mxu0 0.0
  %2462 = vmatpush.msra.mxu0 0.0
  %2463 = vmatpush.msra.mxu0 0.0
  %2464 = vmatpush.msra.mxu0 0.0
  %2465 = vmatpush.msra.mxu0 0.0
  %2466 = vmatpush.msra.mxu0 0.0
  %2467 = vmatpush.msra.mxu0 %v265
  %2468 = vmatpush.msra.mxu0 %v81
  %2469 = vmatmul.f32.gmra.mxu0 %v1558
  %v2470 = vpop.f32.mrf.mxu0
  %v2471 = vadd.f32 %v1211, %v2470
  %2472 = vmatmul.f32.gmra.mxu0 %v1561
  %v2473 = vpop.f32.mrf.mxu0
  %v2474 = vadd.f32 %v1214, %v2473
  %2475 = vmatmul.f32.gmra.mxu0 %v1564
  %v2476 = vpop.f32.mrf.mxu0
  %v2477 = vadd.f32 %v1217, %v2476
  %2478 = vdwg.mxu0
  %2479 = vmatpush.msra.mxu0 0.0
  %2480 = vmatpush.msra.mxu0 0.0
  %2481 = vmatpush.msra.mxu0 0.0
  %2482 = vmatpush.msra.mxu0 0.0
  %2483 = vmatpush.msra.mxu0 0.0
  %2484 = vmatpush.msra.mxu0 0.0
  %2485 = vmatpush.msra.mxu0 0.0
  %2486 = vmatpush.msra.mxu0 0.0
  %2487 = vmatpush.msra.mxu0 0.0
  %2488 = vmatpush.msra.mxu0 0.0
  %2489 = vmatpush.msra.mxu0 0.0
  %2490 = vmatpush.msra.mxu0 0.0
  %2491 = vmatpush.msra.mxu0 0.0
  %2492 = vmatpush.msra.mxu0 0.0
  %2493 = vmatpush.msra.mxu0 %v268
  %2494 = vmatpush.msra.mxu0 %v82
  %2495 = vmatmul.f32.gmra.mxu0 %v1558
  %v2496 = vpop.f32.mrf.mxu0
  %v2497 = vadd.f32 %v1237, %v2496
  %2498 = vmatmul.f32.gmra.mxu0 %v1561
  %v2499 = vpop.f32.mrf.mxu0
  %v2500 = vadd.f32 %v1240, %v2499
  %2501 = vmatmul.f32.gmra.mxu0 %v1564
  %v2502 = vpop.f32.mrf.mxu0
  %v2503 = vadd.f32 %v1243, %v2502
  %2504 = vdwg.mxu0
  %2505 = vmatpush.msra.mxu0 0.0
  %2506 = vmatpush.msra.mxu0 0.0
  %2507 = vmatpush.msra.mxu0 0.0
  %2508 = vmatpush.msra.mxu0 0.0
  %2509 = vmatpush.msra.mxu0 0.0
  %2510 = vmatpush.msra.mxu0 0.0
  %2511 = vmatpush.msra.mxu0 0.0
  %2512 = vmatpush.msra.mxu0 0.0
  %2513 = vmatpush.msra.mxu0 0.0
  %2514 = vmatpush.msra.mxu0 0.0
  %2515 = vmatpush.msra.mxu0 0.0
  %2516 = vmatpush.msra.mxu0 0.0
  %2517 = vmatpush.msra.mxu0 0.0
  %2518 = vmatpush.msra.mxu0 0.0
  %2519 = vmatpush.msra.mxu0 %v271
  %2520 = vmatpush.msra.mxu0 %v83
  %2521 = vmatmul.f32.gmra.mxu0 %v1558
  %v2522 = vpop.f32.mrf.mxu0
  %v2523 = vadd.f32 %v1263, %v2522
  %2524 = vmatmul.f32.gmra.mxu0 %v1561
  %v2525 = vpop.f32.mrf.mxu0
  %v2526 = vadd.f32 %v1266, %v2525
  %2527 = vmatmul.f32.gmra.mxu0 %v1564
  %v2528 = vpop.f32.mrf.mxu0
  %v2529 = vadd.f32 %v1269, %v2528
  %2530 = vdwg.mxu0
  %2531 = vmatpush.msra.mxu0 0.0
  %2532 = vmatpush.msra.mxu0 0.0
  %2533 = vmatpush.msra.mxu0 0.0
  %2534 = vmatpush.msra.mxu0 0.0
  %2535 = vmatpush.msra.mxu0 0.0
  %2536 = vmatpush.msra.mxu0 0.0
  %2537 = vmatpush.msra.mxu0 0.0
  %2538 = vmatpush.msra.mxu0 0.0
  %2539 = vmatpush.msra.mxu0 0.0
  %2540 = vmatpush.msra.mxu0 0.0
  %2541 = vmatpush.msra.mxu0 0.0
  %2542 = vmatpush.msra.mxu0 0.0
  %2543 = vmatpush.msra.mxu0 0.0
  %2544 = vmatpush.msra.mxu0 0.0
  %2545 = vmatpush.msra.mxu0 %v274
  %2546 = vmatpush.msra.mxu0 %v84
  %2547 = vmatmul.f32.gmra.mxu0 %v1558
  %v2548 = vpop.f32.mrf.mxu0
  %v2549 = vadd.f32 %v1289, %v2548
  %2550 = vmatmul.f32.gmra.mxu0 %v1561
  %v2551 = vpop.f32.mrf.mxu0
  %v2552 = vadd.f32 %v1292, %v2551
  %2553 = vmatmul.f32.gmra.mxu0 %v1564
  %v2554 = vpop.f32.mrf.mxu0
  %v2555 = vadd.f32 %v1295, %v2554
  %2556 = vdwg.mxu0
  %2557 = vmatpush.msra.mxu0 0.0
  %2558 = vmatpush.msra.mxu0 0.0
  %2559 = vmatpush.msra.mxu0 0.0
  %2560 = vmatpush.msra.mxu0 0.0
  %2561 = vmatpush.msra.mxu0 0.0
  %2562 = vmatpush.msra.mxu0 0.0
  %2563 = vmatpush.msra.mxu0 0.0
  %2564 = vmatpush.msra.mxu0 0.0
  %2565 = vmatpush.msra.mxu0 0.0
  %2566 = vmatpush.msra.mxu0 0.0
  %2567 = vmatpush.msra.mxu0 0.0
  %2568 = vmatpush.msra.mxu0 0.0
  %2569 = vmatpush.msra.mxu0 0.0
  %2570 = vmatpush.msra.mxu0 0.0
  %2571 = vmatpush.msra.mxu0 %v277
  %2572 = vmatpush.msra.mxu0 %v85
  %2573 = vmatmul.f32.gmra.mxu0 %v1558
  %v2574 = vpop.f32.mrf.mxu0
  %v2575 = vadd.f32 %v1315, %v2574
  %2576 = vmatmul.f32.gmra.mxu0 %v1561
  %v2577 = vpop.f32.mrf.mxu0
  %v2578 = vadd.f32 %v1318, %v2577
  %2579 = vmatmul.f32.gmra.mxu0 %v1564
  %v2580 = vpop.f32.mrf.mxu0
  %v2581 = vadd.f32 %v1321, %v2580
  %2582 = vdwg.mxu0
  %2583 = vmatpush.msra.mxu0 0.0
  %2584 = vmatpush.msra.mxu0 0.0
  %2585 = vmatpush.msra.mxu0 0.0
  %2586 = vmatpush.msra.mxu0 0.0
  %2587 = vmatpush.msra.mxu0 0.0
  %2588 = vmatpush.msra.mxu0 0.0
  %2589 = vmatpush.msra.mxu0 0.0
  %2590 = vmatpush.msra.mxu0 0.0
  %2591 = vmatpush.msra.mxu0 0.0
  %2592 = vmatpush.msra.mxu0 0.0
  %2593 = vmatpush.msra.mxu0 0.0
  %2594 = vmatpush.msra.mxu0 0.0
  %2595 = vmatpush.msra.mxu0 0.0
  %2596 = vmatpush.msra.mxu0 0.0
  %2597 = vmatpush.msra.mxu0 %v280
  %2598 = vmatpush.msra.mxu0 %v86
  %2599 = vmatmul.f32.gmra.mxu0 %v1558
  %v2600 = vpop.f32.mrf.mxu0
  %v2601 = vadd.f32 %v1341, %v2600
  %2602 = vmatmul.f32.gmra.mxu0 %v1561
  %v2603 = vpop.f32.mrf.mxu0
  %v2604 = vadd.f32 %v1344, %v2603
  %2605 = vmatmul.f32.gmra.mxu0 %v1564
  %v2606 = vpop.f32.mrf.mxu0
  %v2607 = vadd.f32 %v1347, %v2606
  %2608 = vdwg.mxu0
  %2609 = vmatpush.msra.mxu0 0.0
  %2610 = vmatpush.msra.mxu0 0.0
  %2611 = vmatpush.msra.mxu0 0.0
  %2612 = vmatpush.msra.mxu0 0.0
  %2613 = vmatpush.msra.mxu0 0.0
  %2614 = vmatpush.msra.mxu0 0.0
  %2615 = vmatpush.msra.mxu0 0.0
  %2616 = vmatpush.msra.mxu0 0.0
  %2617 = vmatpush.msra.mxu0 0.0
  %2618 = vmatpush.msra.mxu0 0.0
  %2619 = vmatpush.msra.mxu0 0.0
  %2620 = vmatpush.msra.mxu0 0.0
  %2621 = vmatpush.msra.mxu0 0.0
  %2622 = vmatpush.msra.mxu0 0.0
  %2623 = vmatpush.msra.mxu0 %v283
  %2624 = vmatpush.msra.mxu0 %v87
  %2625 = vmatmul.f32.gmra.mxu0 %v1558
  %v2626 = vpop.f32.mrf.mxu0
  %v2627 = vadd.f32 %v1367, %v2626
  %2628 = vmatmul.f32.gmra.mxu0 %v1561
  %v2629 = vpop.f32.mrf.mxu0
  %v2630 = vadd.f32 %v1370, %v2629
  %2631 = vmatmul.f32.gmra.mxu0 %v1564
  %v2632 = vpop.f32.mrf.mxu0
  %v2633 = vadd.f32 %v1373, %v2632
  %2634 = vdwg.mxu0
  %2635 = vmatpush.msra.mxu0 0.0
  %2636 = vmatpush.msra.mxu0 0.0
  %2637 = vmatpush.msra.mxu0 0.0
  %2638 = vmatpush.msra.mxu0 0.0
  %2639 = vmatpush.msra.mxu0 0.0
  %2640 = vmatpush.msra.mxu0 0.0
  %2641 = vmatpush.msra.mxu0 0.0
  %2642 = vmatpush.msra.mxu0 0.0
  %2643 = vmatpush.msra.mxu0 0.0
  %2644 = vmatpush.msra.mxu0 0.0
  %2645 = vmatpush.msra.mxu0 0.0
  %2646 = vmatpush.msra.mxu0 0.0
  %2647 = vmatpush.msra.mxu0 0.0
  %2648 = vmatpush.msra.mxu0 0.0
  %2649 = vmatpush.msra.mxu0 %v286
  %2650 = vmatpush.msra.mxu0 %v88
  %2651 = vmatmul.f32.gmra.mxu0 %v1558
  %v2652 = vpop.f32.mrf.mxu0
  %v2653 = vadd.f32 %v1393, %v2652
  %2654 = vmatmul.f32.gmra.mxu0 %v1561
  %v2655 = vpop.f32.mrf.mxu0
  %v2656 = vadd.f32 %v1396, %v2655
  %2657 = vmatmul.f32.gmra.mxu0 %v1564
  %v2658 = vpop.f32.mrf.mxu0
  %v2659 = vadd.f32 %v1399, %v2658
  %2660 = vdwg.mxu0
  %2661 = vmatpush.msra.mxu0 0.0
  %2662 = vmatpush.msra.mxu0 0.0
  %2663 = vmatpush.msra.mxu0 0.0
  %2664 = vmatpush.msra.mxu0 0.0
  %2665 = vmatpush.msra.mxu0 0.0
  %2666 = vmatpush.msra.mxu0 0.0
  %2667 = vmatpush.msra.mxu0 0.0
  %2668 = vmatpush.msra.mxu0 0.0
  %2669 = vmatpush.msra.mxu0 0.0
  %2670 = vmatpush.msra.mxu0 0.0
  %2671 = vmatpush.msra.mxu0 0.0
  %2672 = vmatpush.msra.mxu0 0.0
  %2673 = vmatpush.msra.mxu0 0.0
  %2674 = vmatpush.msra.mxu0 0.0
  %2675 = vmatpush.msra.mxu0 %v289
  %2676 = vmatpush.msra.mxu0 %v89
  %2677 = vmatmul.f32.gmra.mxu0 %v1558
  %v2678 = vpop.f32.mrf.mxu0
  %v2679 = vadd.f32 %v1419, %v2678
  %2680 = vmatmul.f32.gmra.mxu0 %v1561
  %v2681 = vpop.f32.mrf.mxu0
  %v2682 = vadd.f32 %v1422, %v2681
  %2683 = vmatmul.f32.gmra.mxu0 %v1564
  %v2684 = vpop.f32.mrf.mxu0
  %v2685 = vadd.f32 %v1425, %v2684
  %2686 = vdwg.mxu0
  %2687 = vmatpush.msra.mxu0 0.0
  %2688 = vmatpush.msra.mxu0 0.0
  %2689 = vmatpush.msra.mxu0 0.0
  %2690 = vmatpush.msra.mxu0 0.0
  %2691 = vmatpush.msra.mxu0 0.0
  %2692 = vmatpush.msra.mxu0 0.0
  %2693 = vmatpush.msra.mxu0 0.0
  %2694 = vmatpush.msra.mxu0 0.0
  %2695 = vmatpush.msra.mxu0 0.0
  %2696 = vmatpush.msra.mxu0 0.0
  %2697 = vmatpush.msra.mxu0 0.0
  %2698 = vmatpush.msra.mxu0 0.0
  %2699 = vmatpush.msra.mxu0 0.0
  %2700 = vmatpush.msra.mxu0 0.0
  %2701 = vmatpush.msra.mxu0 %v292
  %2702 = vmatpush.msra.mxu0 %v90
  %2703 = vmatmul.f32.gmra.mxu0 %v1558
  %v2704 = vpop.f32.mrf.mxu0
  %v2705 = vadd.f32 %v1445, %v2704
  %2706 = vmatmul.f32.gmra.mxu0 %v1561
  %v2707 = vpop.f32.mrf.mxu0
  %v2708 = vadd.f32 %v1448, %v2707
  %2709 = vmatmul.f32.gmra.mxu0 %v1564
  %v2710 = vpop.f32.mrf.mxu0
  %v2711 = vadd.f32 %v1451, %v2710
  %2712 = vdwg.mxu0
  %2713 = vmatpush.msra.mxu0 0.0
  %2714 = vmatpush.msra.mxu0 0.0
  %2715 = vmatpush.msra.mxu0 0.0
  %2716 = vmatpush.msra.mxu0 0.0
  %2717 = vmatpush.msra.mxu0 0.0
  %2718 = vmatpush.msra.mxu0 0.0
  %2719 = vmatpush.msra.mxu0 0.0
  %2720 = vmatpush.msra.mxu0 0.0
  %2721 = vmatpush.msra.mxu0 0.0
  %2722 = vmatpush.msra.mxu0 0.0
  %2723 = vmatpush.msra.mxu0 0.0
  %2724 = vmatpush.msra.mxu0 0.0
  %2725 = vmatpush.msra.mxu0 0.0
  %2726 = vmatpush.msra.mxu0 0.0
  %2727 = vmatpush.msra.mxu0 %v295
  %2728 = vmatpush.msra.mxu0 %v91
  %2729 = vmatmul.f32.gmra.mxu0 %v1558
  %v2730 = vpop.f32.mrf.mxu0
  %v2731 = vadd.f32 %v1471, %v2730
  %2732 = vmatmul.f32.gmra.mxu0 %v1561
  %v2733 = vpop.f32.mrf.mxu0
  %v2734 = vadd.f32 %v1474, %v2733
  %2735 = vmatmul.f32.gmra.mxu0 %v1564
  %v2736 = vpop.f32.mrf.mxu0
  %v2737 = vadd.f32 %v1477, %v2736
  %2738 = vdwg.mxu0
  %2739 = vmatpush.msra.mxu0 0.0
  %2740 = vmatpush.msra.mxu0 0.0
  %2741 = vmatpush.msra.mxu0 0.0
  %2742 = vmatpush.msra.mxu0 0.0
  %2743 = vmatpush.msra.mxu0 0.0
  %2744 = vmatpush.msra.mxu0 0.0
  %2745 = vmatpush.msra.mxu0 0.0
  %2746 = vmatpush.msra.mxu0 0.0
  %2747 = vmatpush.msra.mxu0 0.0
  %2748 = vmatpush.msra.mxu0 0.0
  %2749 = vmatpush.msra.mxu0 0.0
  %2750 = vmatpush.msra.mxu0 0.0
  %2751 = vmatpush.msra.mxu0 0.0
  %2752 = vmatpush.msra.mxu0 0.0
  %2753 = vmatpush.msra.mxu0 %v298
  %2754 = vmatpush.msra.mxu0 %v92
  %2755 = vmatmul.f32.gmra.mxu0 %v1558
  %v2756 = vpop.f32.mrf.mxu0
  %v2757 = vadd.f32 %v1497, %v2756
  %2758 = vmatmul.f32.gmra.mxu0 %v1561
  %v2759 = vpop.f32.mrf.mxu0
  %v2760 = vadd.f32 %v1500, %v2759
  %2761 = vmatmul.f32.gmra.mxu0 %v1564
  %v2762 = vpop.f32.mrf.mxu0
  %v2763 = vadd.f32 %v1503, %v2762
  %2764 = vdwg.mxu0
  %2765 = vmatpush.msra.mxu0 0.0
  %2766 = vmatpush.msra.mxu0 0.0
  %2767 = vmatpush.msra.mxu0 0.0
  %2768 = vmatpush.msra.mxu0 0.0
  %2769 = vmatpush.msra.mxu0 0.0
  %2770 = vmatpush.msra.mxu0 0.0
  %2771 = vmatpush.msra.mxu0 0.0
  %2772 = vmatpush.msra.mxu0 0.0
  %2773 = vmatpush.msra.mxu0 0.0
  %2774 = vmatpush.msra.mxu0 0.0
  %2775 = vmatpush.msra.mxu0 0.0
  %2776 = vmatpush.msra.mxu0 0.0
  %2777 = vmatpush.msra.mxu0 0.0
  %2778 = vmatpush.msra.mxu0 0.0
  %2779 = vmatpush.msra.mxu0 %v301
  %2780 = vmatpush.msra.mxu0 %v93
  %2781 = vmatmul.f32.gmra.mxu0 %v1558
  %v2782 = vpop.f32.mrf.mxu0
  %v2783 = vadd.f32 %v1523, %v2782
  %2784 = vmatmul.f32.gmra.mxu0 %v1561
  %v2785 = vpop.f32.mrf.mxu0
  %v2786 = vadd.f32 %v1526, %v2785
  %2787 = vmatmul.f32.gmra.mxu0 %v1564
  %v2788 = vpop.f32.mrf.mxu0
  %v2789 = vadd.f32 %v1529, %v2788
  %2790 = vdwg.mxu0
  %2791 = vmatpush.msra.mxu0 0.0
  %2792 = vmatpush.msra.mxu0 0.0
  %2793 = vmatpush.msra.mxu0 0.0
  %2794 = vmatpush.msra.mxu0 0.0
  %2795 = vmatpush.msra.mxu0 0.0
  %2796 = vmatpush.msra.mxu0 0.0
  %2797 = vmatpush.msra.mxu0 0.0
  %2798 = vmatpush.msra.mxu0 0.0
  %2799 = vmatpush.msra.mxu0 0.0
  %2800 = vmatpush.msra.mxu0 0.0
  %2801 = vmatpush.msra.mxu0 0.0
  %2802 = vmatpush.msra.mxu0 0.0
  %2803 = vmatpush.msra.mxu0 0.0
  %2804 = vmatpush.msra.mxu0 0.0
  %2805 = vmatpush.msra.mxu0 %v304
  %2806 = vmatpush.msra.mxu0 %v94
  %2807 = vmatmul.f32.gmra.mxu0 %v1558
  %v2808 = vpop.f32.mrf.mxu0
  %v2809 = vadd.f32 %v1549, %v2808
  %2810 = vmatmul.f32.gmra.mxu0 %v1561
  %v2811 = vpop.f32.mrf.mxu0
  %v2812 = vadd.f32 %v1552, %v2811
  %2813 = vmatmul.f32.gmra.mxu0 %v1564
  %v2814 = vpop.f32.mrf.mxu0
  %v2815 = vadd.f32 %v1555, %v2814
  %2816 = vdwg.mxu0
  %s2817 = scalar_lea.vmem %s1, 48
  %v2818 = vld [vmem:[%s2817] sm:$0xff]
  %v2819 = vld [vmem:[%s2817 + $0x8] sm:$0xff]
  %v2820 = vld [vmem:[%s2817 + $0x10] sm:$0xf]
  %v2822 = vsel %vm154, %v2818, 0
  %v2825 = vsel %vm154, %v2819, 0
  %v2828 = vsel %vm154, %v2820, 0
  %v2831 = vsel %vm164, %v146, 0
  %2833 = vmatpush.msra.mxu0 0.0
  %2834 = vmatpush.msra.mxu0 0.0
  %2835 = vmatpush.msra.mxu0 0.0
  %2836 = vmatpush.msra.mxu0 0.0
  %2837 = vmatpush.msra.mxu0 0.0
  %2838 = vmatpush.msra.mxu0 0.0
  %2839 = vmatpush.msra.mxu0 0.0
  %2840 = vmatpush.msra.mxu0 0.0
  %2841 = vmatpush.msra.mxu0 0.0
  %2842 = vmatpush.msra.mxu0 0.0
  %2843 = vmatpush.msra.mxu0 0.0
  %2844 = vmatpush.msra.mxu0 0.0
  %2845 = vmatpush.msra.mxu0 0.0
  %2846 = vmatpush.msra.mxu0 0.0
  %2847 = vmatpush.msra.mxu0 %v169
  %2848 = vmatpush.msra.mxu0 %v49
  %2849 = vmatmul.f32.gmra.mxu0 %v2822
  %v2850 = vpop.f32.mrf.mxu0
  %v2851 = vadd.f32 0.0, %v2850
  %2852 = vmatmul.f32.gmra.mxu0 %v2825
  %v2853 = vpop.f32.mrf.mxu0
  %v2854 = vadd.f32 0.0, %v2853
  %2855 = vmatmul.f32.gmra.mxu0 %v2828
  %v2856 = vpop.f32.mrf.mxu0
  %v2857 = vadd.f32 0.0, %v2856
  %2858 = vdwg.mxu0
  %2859 = vmatpush.msra.mxu0 0.0
  %2860 = vmatpush.msra.mxu0 0.0
  %2861 = vmatpush.msra.mxu0 0.0
  %2862 = vmatpush.msra.mxu0 0.0
  %2863 = vmatpush.msra.mxu0 0.0
  %2864 = vmatpush.msra.mxu0 0.0
  %2865 = vmatpush.msra.mxu0 0.0
  %2866 = vmatpush.msra.mxu0 0.0
  %2867 = vmatpush.msra.mxu0 0.0
  %2868 = vmatpush.msra.mxu0 0.0
  %2869 = vmatpush.msra.mxu0 0.0
  %2870 = vmatpush.msra.mxu0 0.0
  %2871 = vmatpush.msra.mxu0 0.0
  %2872 = vmatpush.msra.mxu0 0.0
  %2873 = vmatpush.msra.mxu0 %v172
  %2874 = vmatpush.msra.mxu0 %v50
  %2875 = vmatmul.f32.gmra.mxu0 %v2822
  %v2876 = vpop.f32.mrf.mxu0
  %v2877 = vadd.f32 0.0, %v2876
  %2878 = vmatmul.f32.gmra.mxu0 %v2825
  %v2879 = vpop.f32.mrf.mxu0
  %v2880 = vadd.f32 0.0, %v2879
  %2881 = vmatmul.f32.gmra.mxu0 %v2828
  %v2882 = vpop.f32.mrf.mxu0
  %v2883 = vadd.f32 0.0, %v2882
  %2884 = vdwg.mxu0
  %2885 = vmatpush.msra.mxu0 0.0
  %2886 = vmatpush.msra.mxu0 0.0
  %2887 = vmatpush.msra.mxu0 0.0
  %2888 = vmatpush.msra.mxu0 0.0
  %2889 = vmatpush.msra.mxu0 0.0
  %2890 = vmatpush.msra.mxu0 0.0
  %2891 = vmatpush.msra.mxu0 0.0
  %2892 = vmatpush.msra.mxu0 0.0
  %2893 = vmatpush.msra.mxu0 0.0
  %2894 = vmatpush.msra.mxu0 0.0
  %2895 = vmatpush.msra.mxu0 0.0
  %2896 = vmatpush.msra.mxu0 0.0
  %2897 = vmatpush.msra.mxu0 0.0
  %2898 = vmatpush.msra.mxu0 0.0
  %2899 = vmatpush.msra.mxu0 %v175
  %2900 = vmatpush.msra.mxu0 %v51
  %2901 = vmatmul.f32.gmra.mxu0 %v2822
  %v2902 = vpop.f32.mrf.mxu0
  %v2903 = vadd.f32 0.0, %v2902
  %2904 = vmatmul.f32.gmra.mxu0 %v2825
  %v2905 = vpop.f32.mrf.mxu0
  %v2906 = vadd.f32 0.0, %v2905
  %2907 = vmatmul.f32.gmra.mxu0 %v2828
  %v2908 = vpop.f32.mrf.mxu0
  %v2909 = vadd.f32 0.0, %v2908
  %2910 = vdwg.mxu0
  %2911 = vmatpush.msra.mxu0 0.0
  %2912 = vmatpush.msra.mxu0 0.0
  %2913 = vmatpush.msra.mxu0 0.0
  %2914 = vmatpush.msra.mxu0 0.0
  %2915 = vmatpush.msra.mxu0 0.0
  %2916 = vmatpush.msra.mxu0 0.0
  %2917 = vmatpush.msra.mxu0 0.0
  %2918 = vmatpush.msra.mxu0 0.0
  %2919 = vmatpush.msra.mxu0 0.0
  %2920 = vmatpush.msra.mxu0 0.0
  %2921 = vmatpush.msra.mxu0 0.0
  %2922 = vmatpush.msra.mxu0 0.0
  %2923 = vmatpush.msra.mxu0 0.0
  %2924 = vmatpush.msra.mxu0 0.0
  %2925 = vmatpush.msra.mxu0 %v178
  %2926 = vmatpush.msra.mxu0 %v52
  %2927 = vmatmul.f32.gmra.mxu0 %v2822
  %v2928 = vpop.f32.mrf.mxu0
  %v2929 = vadd.f32 0.0, %v2928
  %2930 = vmatmul.f32.gmra.mxu0 %v2825
  %v2931 = vpop.f32.mrf.mxu0
  %v2932 = vadd.f32 0.0, %v2931
  %2933 = vmatmul.f32.gmra.mxu0 %v2828
  %v2934 = vpop.f32.mrf.mxu0
  %v2935 = vadd.f32 0.0, %v2934
  %2936 = vdwg.mxu0
  %2937 = vmatpush.msra.mxu0 0.0
  %2938 = vmatpush.msra.mxu0 0.0
  %2939 = vmatpush.msra.mxu0 0.0
  %2940 = vmatpush.msra.mxu0 0.0
  %2941 = vmatpush.msra.mxu0 0.0
  %2942 = vmatpush.msra.mxu0 0.0
  %2943 = vmatpush.msra.mxu0 0.0
  %2944 = vmatpush.msra.mxu0 0.0
  %2945 = vmatpush.msra.mxu0 0.0
  %2946 = vmatpush.msra.mxu0 0.0
  %2947 = vmatpush.msra.mxu0 0.0
  %2948 = vmatpush.msra.mxu0 0.0
  %2949 = vmatpush.msra.mxu0 0.0
  %2950 = vmatpush.msra.mxu0 0.0
  %2951 = vmatpush.msra.mxu0 %v181
  %2952 = vmatpush.msra.mxu0 %v53
  %2953 = vmatmul.f32.gmra.mxu0 %v2822
  %v2954 = vpop.f32.mrf.mxu0
  %v2955 = vadd.f32 0.0, %v2954
  %2956 = vmatmul.f32.gmra.mxu0 %v2825
  %v2957 = vpop.f32.mrf.mxu0
  %v2958 = vadd.f32 0.0, %v2957
  %2959 = vmatmul.f32.gmra.mxu0 %v2828
  %v2960 = vpop.f32.mrf.mxu0
  %v2961 = vadd.f32 0.0, %v2960
  %2962 = vdwg.mxu0
  %2963 = vmatpush.msra.mxu0 0.0
  %2964 = vmatpush.msra.mxu0 0.0
  %2965 = vmatpush.msra.mxu0 0.0
  %2966 = vmatpush.msra.mxu0 0.0
  %2967 = vmatpush.msra.mxu0 0.0
  %2968 = vmatpush.msra.mxu0 0.0
  %2969 = vmatpush.msra.mxu0 0.0
  %2970 = vmatpush.msra.mxu0 0.0
  %2971 = vmatpush.msra.mxu0 0.0
  %2972 = vmatpush.msra.mxu0 0.0
  %2973 = vmatpush.msra.mxu0 0.0
  %2974 = vmatpush.msra.mxu0 0.0
  %2975 = vmatpush.msra.mxu0 0.0
  %2976 = vmatpush.msra.mxu0 0.0
  %2977 = vmatpush.msra.mxu0 %v184
  %2978 = vmatpush.msra.mxu0 %v54
  %2979 = vmatmul.f32.gmra.mxu0 %v2822
  %v2980 = vpop.f32.mrf.mxu0
  %v2981 = vadd.f32 0.0, %v2980
  %2982 = vmatmul.f32.gmra.mxu0 %v2825
  %v2983 = vpop.f32.mrf.mxu0
  %v2984 = vadd.f32 0.0, %v2983
  %2985 = vmatmul.f32.gmra.mxu0 %v2828
  %v2986 = vpop.f32.mrf.mxu0
  %v2987 = vadd.f32 0.0, %v2986
  %2988 = vdwg.mxu0
  %2989 = vmatpush.msra.mxu0 0.0
  %2990 = vmatpush.msra.mxu0 0.0
  %2991 = vmatpush.msra.mxu0 0.0
  %2992 = vmatpush.msra.mxu0 0.0
  %2993 = vmatpush.msra.mxu0 0.0
  %2994 = vmatpush.msra.mxu0 0.0
  %2995 = vmatpush.msra.mxu0 0.0
  %2996 = vmatpush.msra.mxu0 0.0
  %2997 = vmatpush.msra.mxu0 0.0
  %2998 = vmatpush.msra.mxu0 0.0
  %2999 = vmatpush.msra.mxu0 0.0
  %3000 = vmatpush.msra.mxu0 0.0
  %3001 = vmatpush.msra.mxu0 0.0
  %3002 = vmatpush.msra.mxu0 0.0
  %3003 = vmatpush.msra.mxu0 %v187
  %3004 = vmatpush.msra.mxu0 %v55
  %3005 = vmatmul.f32.gmra.mxu0 %v2822
  %v3006 = vpop.f32.mrf.mxu0
  %v3007 = vadd.f32 0.0, %v3006
  %3008 = vmatmul.f32.gmra.mxu0 %v2825
  %v3009 = vpop.f32.mrf.mxu0
  %v3010 = vadd.f32 0.0, %v3009
  %3011 = vmatmul.f32.gmra.mxu0 %v2828
  %v3012 = vpop.f32.mrf.mxu0
  %v3013 = vadd.f32 0.0, %v3012
  %3014 = vdwg.mxu0
  %3015 = vmatpush.msra.mxu0 0.0
  %3016 = vmatpush.msra.mxu0 0.0
  %3017 = vmatpush.msra.mxu0 0.0
  %3018 = vmatpush.msra.mxu0 0.0
  %3019 = vmatpush.msra.mxu0 0.0
  %3020 = vmatpush.msra.mxu0 0.0
  %3021 = vmatpush.msra.mxu0 0.0
  %3022 = vmatpush.msra.mxu0 0.0
  %3023 = vmatpush.msra.mxu0 0.0
  %3024 = vmatpush.msra.mxu0 0.0
  %3025 = vmatpush.msra.mxu0 0.0
  %3026 = vmatpush.msra.mxu0 0.0
  %3027 = vmatpush.msra.mxu0 0.0
  %3028 = vmatpush.msra.mxu0 0.0
  %3029 = vmatpush.msra.mxu0 %v190
  %3030 = vmatpush.msra.mxu0 %v56
  %3031 = vmatmul.f32.gmra.mxu0 %v2822
  %v3032 = vpop.f32.mrf.mxu0
  %v3033 = vadd.f32 0.0, %v3032
  %3034 = vmatmul.f32.gmra.mxu0 %v2825
  %v3035 = vpop.f32.mrf.mxu0
  %v3036 = vadd.f32 0.0, %v3035
  %3037 = vmatmul.f32.gmra.mxu0 %v2828
  %v3038 = vpop.f32.mrf.mxu0
  %v3039 = vadd.f32 0.0, %v3038
  %3040 = vdwg.mxu0
  %3041 = vmatpush.msra.mxu0 0.0
  %3042 = vmatpush.msra.mxu0 0.0
  %3043 = vmatpush.msra.mxu0 0.0
  %3044 = vmatpush.msra.mxu0 0.0
  %3045 = vmatpush.msra.mxu0 0.0
  %3046 = vmatpush.msra.mxu0 0.0
  %3047 = vmatpush.msra.mxu0 0.0
  %3048 = vmatpush.msra.mxu0 0.0
  %3049 = vmatpush.msra.mxu0 0.0
  %3050 = vmatpush.msra.mxu0 0.0
  %3051 = vmatpush.msra.mxu0 0.0
  %3052 = vmatpush.msra.mxu0 0.0
  %3053 = vmatpush.msra.mxu0 0.0
  %3054 = vmatpush.msra.mxu0 0.0
  %3055 = vmatpush.msra.mxu0 %v193
  %3056 = vmatpush.msra.mxu0 %v57
  %3057 = vmatmul.f32.gmra.mxu0 %v2822
  %v3058 = vpop.f32.mrf.mxu0
  %v3059 = vadd.f32 0.0, %v3058
  %3060 = vmatmul.f32.gmra.mxu0 %v2825
  %v3061 = vpop.f32.mrf.mxu0
  %v3062 = vadd.f32 0.0, %v3061
  %3063 = vmatmul.f32.gmra.mxu0 %v2828
  %v3064 = vpop.f32.mrf.mxu0
  %v3065 = vadd.f32 0.0, %v3064
  %3066 = vdwg.mxu0
  %3067 = vmatpush.msra.mxu0 0.0
  %3068 = vmatpush.msra.mxu0 0.0
  %3069 = vmatpush.msra.mxu0 0.0
  %3070 = vmatpush.msra.mxu0 0.0
  %3071 = vmatpush.msra.mxu0 0.0
  %3072 = vmatpush.msra.mxu0 0.0
  %3073 = vmatpush.msra.mxu0 0.0
  %3074 = vmatpush.msra.mxu0 0.0
  %3075 = vmatpush.msra.mxu0 0.0
  %3076 = vmatpush.msra.mxu0 0.0
  %3077 = vmatpush.msra.mxu0 0.0
  %3078 = vmatpush.msra.mxu0 0.0
  %3079 = vmatpush.msra.mxu0 0.0
  %3080 = vmatpush.msra.mxu0 0.0
  %3081 = vmatpush.msra.mxu0 %v196
  %3082 = vmatpush.msra.mxu0 %v58
  %3083 = vmatmul.f32.gmra.mxu0 %v2822
  %v3084 = vpop.f32.mrf.mxu0
  %v3085 = vadd.f32 0.0, %v3084
  %3086 = vmatmul.f32.gmra.mxu0 %v2825
  %v3087 = vpop.f32.mrf.mxu0
  %v3088 = vadd.f32 0.0, %v3087
  %3089 = vmatmul.f32.gmra.mxu0 %v2828
  %v3090 = vpop.f32.mrf.mxu0
  %v3091 = vadd.f32 0.0, %v3090
  %3092 = vdwg.mxu0
  %3093 = vmatpush.msra.mxu0 0.0
  %3094 = vmatpush.msra.mxu0 0.0
  %3095 = vmatpush.msra.mxu0 0.0
  %3096 = vmatpush.msra.mxu0 0.0
  %3097 = vmatpush.msra.mxu0 0.0
  %3098 = vmatpush.msra.mxu0 0.0
  %3099 = vmatpush.msra.mxu0 0.0
  %3100 = vmatpush.msra.mxu0 0.0
  %3101 = vmatpush.msra.mxu0 0.0
  %3102 = vmatpush.msra.mxu0 0.0
  %3103 = vmatpush.msra.mxu0 0.0
  %3104 = vmatpush.msra.mxu0 0.0
  %3105 = vmatpush.msra.mxu0 0.0
  %3106 = vmatpush.msra.mxu0 0.0
  %3107 = vmatpush.msra.mxu0 %v199
  %3108 = vmatpush.msra.mxu0 %v59
  %3109 = vmatmul.f32.gmra.mxu0 %v2822
  %v3110 = vpop.f32.mrf.mxu0
  %v3111 = vadd.f32 0.0, %v3110
  %3112 = vmatmul.f32.gmra.mxu0 %v2825
  %v3113 = vpop.f32.mrf.mxu0
  %v3114 = vadd.f32 0.0, %v3113
  %3115 = vmatmul.f32.gmra.mxu0 %v2828
  %v3116 = vpop.f32.mrf.mxu0
  %v3117 = vadd.f32 0.0, %v3116
  %3118 = vdwg.mxu0
  %3119 = vmatpush.msra.mxu0 0.0
  %3120 = vmatpush.msra.mxu0 0.0
  %3121 = vmatpush.msra.mxu0 0.0
  %3122 = vmatpush.msra.mxu0 0.0
  %3123 = vmatpush.msra.mxu0 0.0
  %3124 = vmatpush.msra.mxu0 0.0
  %3125 = vmatpush.msra.mxu0 0.0
  %3126 = vmatpush.msra.mxu0 0.0
  %3127 = vmatpush.msra.mxu0 0.0
  %3128 = vmatpush.msra.mxu0 0.0
  %3129 = vmatpush.msra.mxu0 0.0
  %3130 = vmatpush.msra.mxu0 0.0
  %3131 = vmatpush.msra.mxu0 0.0
  %3132 = vmatpush.msra.mxu0 0.0
  %3133 = vmatpush.msra.mxu0 %v202
  %3134 = vmatpush.msra.mxu0 %v60
  %3135 = vmatmul.f32.gmra.mxu0 %v2822
  %v3136 = vpop.f32.mrf.mxu0
  %v3137 = vadd.f32 0.0, %v3136
  %3138 = vmatmul.f32.gmra.mxu0 %v2825
  %v3139 = vpop.f32.mrf.mxu0
  %v3140 = vadd.f32 0.0, %v3139
  %3141 = vmatmul.f32.gmra.mxu0 %v2828
  %v3142 = vpop.f32.mrf.mxu0
  %v3143 = vadd.f32 0.0, %v3142
  %3144 = vdwg.mxu0
  %3145 = vmatpush.msra.mxu0 0.0
  %3146 = vmatpush.msra.mxu0 0.0
  %3147 = vmatpush.msra.mxu0 0.0
  %3148 = vmatpush.msra.mxu0 0.0
  %3149 = vmatpush.msra.mxu0 0.0
  %3150 = vmatpush.msra.mxu0 0.0
  %3151 = vmatpush.msra.mxu0 0.0
  %3152 = vmatpush.msra.mxu0 0.0
  %3153 = vmatpush.msra.mxu0 0.0
  %3154 = vmatpush.msra.mxu0 0.0
  %3155 = vmatpush.msra.mxu0 0.0
  %3156 = vmatpush.msra.mxu0 0.0
  %3157 = vmatpush.msra.mxu0 0.0
  %3158 = vmatpush.msra.mxu0 0.0
  %3159 = vmatpush.msra.mxu0 %v205
  %3160 = vmatpush.msra.mxu0 %v61
  %3161 = vmatmul.f32.gmra.mxu0 %v2822
  %v3162 = vpop.f32.mrf.mxu0
  %v3163 = vadd.f32 0.0, %v3162
  %3164 = vmatmul.f32.gmra.mxu0 %v2825
  %v3165 = vpop.f32.mrf.mxu0
  %v3166 = vadd.f32 0.0, %v3165
  %3167 = vmatmul.f32.gmra.mxu0 %v2828
  %v3168 = vpop.f32.mrf.mxu0
  %v3169 = vadd.f32 0.0, %v3168
  %3170 = vdwg.mxu0
  %3171 = vmatpush.msra.mxu0 0.0
  %3172 = vmatpush.msra.mxu0 0.0
  %3173 = vmatpush.msra.mxu0 0.0
  %3174 = vmatpush.msra.mxu0 0.0
  %3175 = vmatpush.msra.mxu0 0.0
  %3176 = vmatpush.msra.mxu0 0.0
  %3177 = vmatpush.msra.mxu0 0.0
  %3178 = vmatpush.msra.mxu0 0.0
  %3179 = vmatpush.msra.mxu0 0.0
  %3180 = vmatpush.msra.mxu0 0.0
  %3181 = vmatpush.msra.mxu0 0.0
  %3182 = vmatpush.msra.mxu0 0.0
  %3183 = vmatpush.msra.mxu0 0.0
  %3184 = vmatpush.msra.mxu0 0.0
  %3185 = vmatpush.msra.mxu0 %v208
  %3186 = vmatpush.msra.mxu0 %v62
  %3187 = vmatmul.f32.gmra.mxu0 %v2822
  %v3188 = vpop.f32.mrf.mxu0
  %v3189 = vadd.f32 0.0, %v3188
  %3190 = vmatmul.f32.gmra.mxu0 %v2825
  %v3191 = vpop.f32.mrf.mxu0
  %v3192 = vadd.f32 0.0, %v3191
  %3193 = vmatmul.f32.gmra.mxu0 %v2828
  %v3194 = vpop.f32.mrf.mxu0
  %v3195 = vadd.f32 0.0, %v3194
  %3196 = vdwg.mxu0
  %3197 = vmatpush.msra.mxu0 0.0
  %3198 = vmatpush.msra.mxu0 0.0
  %3199 = vmatpush.msra.mxu0 0.0
  %3200 = vmatpush.msra.mxu0 0.0
  %3201 = vmatpush.msra.mxu0 0.0
  %3202 = vmatpush.msra.mxu0 0.0
  %3203 = vmatpush.msra.mxu0 0.0
  %3204 = vmatpush.msra.mxu0 0.0
  %3205 = vmatpush.msra.mxu0 0.0
  %3206 = vmatpush.msra.mxu0 0.0
  %3207 = vmatpush.msra.mxu0 0.0
  %3208 = vmatpush.msra.mxu0 0.0
  %3209 = vmatpush.msra.mxu0 0.0
  %3210 = vmatpush.msra.mxu0 0.0
  %3211 = vmatpush.msra.mxu0 %v211
  %3212 = vmatpush.msra.mxu0 %v63
  %3213 = vmatmul.f32.gmra.mxu0 %v2822
  %v3214 = vpop.f32.mrf.mxu0
  %v3215 = vadd.f32 0.0, %v3214
  %3216 = vmatmul.f32.gmra.mxu0 %v2825
  %v3217 = vpop.f32.mrf.mxu0
  %v3218 = vadd.f32 0.0, %v3217
  %3219 = vmatmul.f32.gmra.mxu0 %v2828
  %v3220 = vpop.f32.mrf.mxu0
  %v3221 = vadd.f32 0.0, %v3220
  %3222 = vdwg.mxu0
  %3223 = vmatpush.msra.mxu0 0.0
  %3224 = vmatpush.msra.mxu0 0.0
  %3225 = vmatpush.msra.mxu0 0.0
  %3226 = vmatpush.msra.mxu0 0.0
  %3227 = vmatpush.msra.mxu0 0.0
  %3228 = vmatpush.msra.mxu0 0.0
  %3229 = vmatpush.msra.mxu0 0.0
  %3230 = vmatpush.msra.mxu0 0.0
  %3231 = vmatpush.msra.mxu0 0.0
  %3232 = vmatpush.msra.mxu0 0.0
  %3233 = vmatpush.msra.mxu0 0.0
  %3234 = vmatpush.msra.mxu0 0.0
  %3235 = vmatpush.msra.mxu0 0.0
  %3236 = vmatpush.msra.mxu0 0.0
  %3237 = vmatpush.msra.mxu0 %v214
  %3238 = vmatpush.msra.mxu0 %v64
  %3239 = vmatmul.f32.gmra.mxu0 %v2822
  %v3240 = vpop.f32.mrf.mxu0
  %v3241 = vadd.f32 0.0, %v3240
  %3242 = vmatmul.f32.gmra.mxu0 %v2825
  %v3243 = vpop.f32.mrf.mxu0
  %v3244 = vadd.f32 0.0, %v3243
  %3245 = vmatmul.f32.gmra.mxu0 %v2828
  %v3246 = vpop.f32.mrf.mxu0
  %v3247 = vadd.f32 0.0, %v3246
  %3248 = vdwg.mxu0
  %3249 = vmatpush.msra.mxu0 0.0
  %3250 = vmatpush.msra.mxu0 0.0
  %3251 = vmatpush.msra.mxu0 0.0
  %3252 = vmatpush.msra.mxu0 0.0
  %3253 = vmatpush.msra.mxu0 0.0
  %3254 = vmatpush.msra.mxu0 0.0
  %3255 = vmatpush.msra.mxu0 0.0
  %3256 = vmatpush.msra.mxu0 0.0
  %3257 = vmatpush.msra.mxu0 0.0
  %3258 = vmatpush.msra.mxu0 0.0
  %3259 = vmatpush.msra.mxu0 0.0
  %3260 = vmatpush.msra.mxu0 0.0
  %3261 = vmatpush.msra.mxu0 0.0
  %3262 = vmatpush.msra.mxu0 0.0
  %3263 = vmatpush.msra.mxu0 %v217
  %3264 = vmatpush.msra.mxu0 %v65
  %3265 = vmatmul.f32.gmra.mxu0 %v2822
  %v3266 = vpop.f32.mrf.mxu0
  %v3267 = vadd.f32 0.0, %v3266
  %3268 = vmatmul.f32.gmra.mxu0 %v2825
  %v3269 = vpop.f32.mrf.mxu0
  %v3270 = vadd.f32 0.0, %v3269
  %3271 = vmatmul.f32.gmra.mxu0 %v2828
  %v3272 = vpop.f32.mrf.mxu0
  %v3273 = vadd.f32 0.0, %v3272
  %3274 = vdwg.mxu0
  %3275 = vmatpush.msra.mxu0 0.0
  %3276 = vmatpush.msra.mxu0 0.0
  %3277 = vmatpush.msra.mxu0 0.0
  %3278 = vmatpush.msra.mxu0 0.0
  %3279 = vmatpush.msra.mxu0 0.0
  %3280 = vmatpush.msra.mxu0 0.0
  %3281 = vmatpush.msra.mxu0 0.0
  %3282 = vmatpush.msra.mxu0 0.0
  %3283 = vmatpush.msra.mxu0 0.0
  %3284 = vmatpush.msra.mxu0 0.0
  %3285 = vmatpush.msra.mxu0 0.0
  %3286 = vmatpush.msra.mxu0 0.0
  %3287 = vmatpush.msra.mxu0 0.0
  %3288 = vmatpush.msra.mxu0 0.0
  %3289 = vmatpush.msra.mxu0 %v220
  %3290 = vmatpush.msra.mxu0 %v66
  %3291 = vmatmul.f32.gmra.mxu0 %v2822
  %v3292 = vpop.f32.mrf.mxu0
  %v3293 = vadd.f32 0.0, %v3292
  %3294 = vmatmul.f32.gmra.mxu0 %v2825
  %v3295 = vpop.f32.mrf.mxu0
  %v3296 = vadd.f32 0.0, %v3295
  %3297 = vmatmul.f32.gmra.mxu0 %v2828
  %v3298 = vpop.f32.mrf.mxu0
  %v3299 = vadd.f32 0.0, %v3298
  %3300 = vdwg.mxu0
  %3301 = vmatpush.msra.mxu0 0.0
  %3302 = vmatpush.msra.mxu0 0.0
  %3303 = vmatpush.msra.mxu0 0.0
  %3304 = vmatpush.msra.mxu0 0.0
  %3305 = vmatpush.msra.mxu0 0.0
  %3306 = vmatpush.msra.mxu0 0.0
  %3307 = vmatpush.msra.mxu0 0.0
  %3308 = vmatpush.msra.mxu0 0.0
  %3309 = vmatpush.msra.mxu0 0.0
  %3310 = vmatpush.msra.mxu0 0.0
  %3311 = vmatpush.msra.mxu0 0.0
  %3312 = vmatpush.msra.mxu0 0.0
  %3313 = vmatpush.msra.mxu0 0.0
  %3314 = vmatpush.msra.mxu0 0.0
  %3315 = vmatpush.msra.mxu0 %v223
  %3316 = vmatpush.msra.mxu0 %v67
  %3317 = vmatmul.f32.gmra.mxu0 %v2822
  %v3318 = vpop.f32.mrf.mxu0
  %v3319 = vadd.f32 0.0, %v3318
  %3320 = vmatmul.f32.gmra.mxu0 %v2825
  %v3321 = vpop.f32.mrf.mxu0
  %v3322 = vadd.f32 0.0, %v3321
  %3323 = vmatmul.f32.gmra.mxu0 %v2828
  %v3324 = vpop.f32.mrf.mxu0
  %v3325 = vadd.f32 0.0, %v3324
  %3326 = vdwg.mxu0
  %3327 = vmatpush.msra.mxu0 0.0
  %3328 = vmatpush.msra.mxu0 0.0
  %3329 = vmatpush.msra.mxu0 0.0
  %3330 = vmatpush.msra.mxu0 0.0
  %3331 = vmatpush.msra.mxu0 0.0
  %3332 = vmatpush.msra.mxu0 0.0
  %3333 = vmatpush.msra.mxu0 0.0
  %3334 = vmatpush.msra.mxu0 0.0
  %3335 = vmatpush.msra.mxu0 0.0
  %3336 = vmatpush.msra.mxu0 0.0
  %3337 = vmatpush.msra.mxu0 0.0
  %3338 = vmatpush.msra.mxu0 0.0
  %3339 = vmatpush.msra.mxu0 0.0
  %3340 = vmatpush.msra.mxu0 0.0
  %3341 = vmatpush.msra.mxu0 %v226
  %3342 = vmatpush.msra.mxu0 %v68
  %3343 = vmatmul.f32.gmra.mxu0 %v2822
  %v3344 = vpop.f32.mrf.mxu0
  %v3345 = vadd.f32 0.0, %v3344
  %3346 = vmatmul.f32.gmra.mxu0 %v2825
  %v3347 = vpop.f32.mrf.mxu0
  %v3348 = vadd.f32 0.0, %v3347
  %3349 = vmatmul.f32.gmra.mxu0 %v2828
  %v3350 = vpop.f32.mrf.mxu0
  %v3351 = vadd.f32 0.0, %v3350
  %3352 = vdwg.mxu0
  %3353 = vmatpush.msra.mxu0 0.0
  %3354 = vmatpush.msra.mxu0 0.0
  %3355 = vmatpush.msra.mxu0 0.0
  %3356 = vmatpush.msra.mxu0 0.0
  %3357 = vmatpush.msra.mxu0 0.0
  %3358 = vmatpush.msra.mxu0 0.0
  %3359 = vmatpush.msra.mxu0 0.0
  %3360 = vmatpush.msra.mxu0 0.0
  %3361 = vmatpush.msra.mxu0 0.0
  %3362 = vmatpush.msra.mxu0 0.0
  %3363 = vmatpush.msra.mxu0 0.0
  %3364 = vmatpush.msra.mxu0 0.0
  %3365 = vmatpush.msra.mxu0 0.0
  %3366 = vmatpush.msra.mxu0 0.0
  %3367 = vmatpush.msra.mxu0 %v229
  %3368 = vmatpush.msra.mxu0 %v69
  %3369 = vmatmul.f32.gmra.mxu0 %v2822
  %v3370 = vpop.f32.mrf.mxu0
  %v3371 = vadd.f32 0.0, %v3370
  %3372 = vmatmul.f32.gmra.mxu0 %v2825
  %v3373 = vpop.f32.mrf.mxu0
  %v3374 = vadd.f32 0.0, %v3373
  %3375 = vmatmul.f32.gmra.mxu0 %v2828
  %v3376 = vpop.f32.mrf.mxu0
  %v3377 = vadd.f32 0.0, %v3376
  %3378 = vdwg.mxu0
  %3379 = vmatpush.msra.mxu0 0.0
  %3380 = vmatpush.msra.mxu0 0.0
  %3381 = vmatpush.msra.mxu0 0.0
  %3382 = vmatpush.msra.mxu0 0.0
  %3383 = vmatpush.msra.mxu0 0.0
  %3384 = vmatpush.msra.mxu0 0.0
  %3385 = vmatpush.msra.mxu0 0.0
  %3386 = vmatpush.msra.mxu0 0.0
  %3387 = vmatpush.msra.mxu0 0.0
  %3388 = vmatpush.msra.mxu0 0.0
  %3389 = vmatpush.msra.mxu0 0.0
  %3390 = vmatpush.msra.mxu0 0.0
  %3391 = vmatpush.msra.mxu0 0.0
  %3392 = vmatpush.msra.mxu0 0.0
  %3393 = vmatpush.msra.mxu0 %v232
  %3394 = vmatpush.msra.mxu0 %v70
  %3395 = vmatmul.f32.gmra.mxu0 %v2822
  %v3396 = vpop.f32.mrf.mxu0
  %v3397 = vadd.f32 0.0, %v3396
  %3398 = vmatmul.f32.gmra.mxu0 %v2825
  %v3399 = vpop.f32.mrf.mxu0
  %v3400 = vadd.f32 0.0, %v3399
  %3401 = vmatmul.f32.gmra.mxu0 %v2828
  %v3402 = vpop.f32.mrf.mxu0
  %v3403 = vadd.f32 0.0, %v3402
  %3404 = vdwg.mxu0
  %3405 = vmatpush.msra.mxu0 0.0
  %3406 = vmatpush.msra.mxu0 0.0
  %3407 = vmatpush.msra.mxu0 0.0
  %3408 = vmatpush.msra.mxu0 0.0
  %3409 = vmatpush.msra.mxu0 0.0
  %3410 = vmatpush.msra.mxu0 0.0
  %3411 = vmatpush.msra.mxu0 0.0
  %3412 = vmatpush.msra.mxu0 0.0
  %3413 = vmatpush.msra.mxu0 0.0
  %3414 = vmatpush.msra.mxu0 0.0
  %3415 = vmatpush.msra.mxu0 0.0
  %3416 = vmatpush.msra.mxu0 0.0
  %3417 = vmatpush.msra.mxu0 0.0
  %3418 = vmatpush.msra.mxu0 0.0
  %3419 = vmatpush.msra.mxu0 %v235
  %3420 = vmatpush.msra.mxu0 %v71
  %3421 = vmatmul.f32.gmra.mxu0 %v2822
  %v3422 = vpop.f32.mrf.mxu0
  %v3423 = vadd.f32 0.0, %v3422
  %3424 = vmatmul.f32.gmra.mxu0 %v2825
  %v3425 = vpop.f32.mrf.mxu0
  %v3426 = vadd.f32 0.0, %v3425
  %3427 = vmatmul.f32.gmra.mxu0 %v2828
  %v3428 = vpop.f32.mrf.mxu0
  %v3429 = vadd.f32 0.0, %v3428
  %3430 = vdwg.mxu0
  %3431 = vmatpush.msra.mxu0 0.0
  %3432 = vmatpush.msra.mxu0 0.0
  %3433 = vmatpush.msra.mxu0 0.0
  %3434 = vmatpush.msra.mxu0 0.0
  %3435 = vmatpush.msra.mxu0 0.0
  %3436 = vmatpush.msra.mxu0 0.0
  %3437 = vmatpush.msra.mxu0 0.0
  %3438 = vmatpush.msra.mxu0 0.0
  %3439 = vmatpush.msra.mxu0 0.0
  %3440 = vmatpush.msra.mxu0 0.0
  %3441 = vmatpush.msra.mxu0 0.0
  %3442 = vmatpush.msra.mxu0 0.0
  %3443 = vmatpush.msra.mxu0 0.0
  %3444 = vmatpush.msra.mxu0 0.0
  %3445 = vmatpush.msra.mxu0 %v238
  %3446 = vmatpush.msra.mxu0 %v72
  %3447 = vmatmul.f32.gmra.mxu0 %v2822
  %v3448 = vpop.f32.mrf.mxu0
  %v3449 = vadd.f32 0.0, %v3448
  %3450 = vmatmul.f32.gmra.mxu0 %v2825
  %v3451 = vpop.f32.mrf.mxu0
  %v3452 = vadd.f32 0.0, %v3451
  %3453 = vmatmul.f32.gmra.mxu0 %v2828
  %v3454 = vpop.f32.mrf.mxu0
  %v3455 = vadd.f32 0.0, %v3454
  %3456 = vdwg.mxu0
  %3457 = vmatpush.msra.mxu0 0.0
  %3458 = vmatpush.msra.mxu0 0.0
  %3459 = vmatpush.msra.mxu0 0.0
  %3460 = vmatpush.msra.mxu0 0.0
  %3461 = vmatpush.msra.mxu0 0.0
  %3462 = vmatpush.msra.mxu0 0.0
  %3463 = vmatpush.msra.mxu0 0.0
  %3464 = vmatpush.msra.mxu0 0.0
  %3465 = vmatpush.msra.mxu0 0.0
  %3466 = vmatpush.msra.mxu0 0.0
  %3467 = vmatpush.msra.mxu0 0.0
  %3468 = vmatpush.msra.mxu0 0.0
  %3469 = vmatpush.msra.mxu0 0.0
  %3470 = vmatpush.msra.mxu0 0.0
  %3471 = vmatpush.msra.mxu0 %v241
  %3472 = vmatpush.msra.mxu0 %v73
  %3473 = vmatmul.f32.gmra.mxu0 %v2822
  %v3474 = vpop.f32.mrf.mxu0
  %v3475 = vadd.f32 0.0, %v3474
  %3476 = vmatmul.f32.gmra.mxu0 %v2825
  %v3477 = vpop.f32.mrf.mxu0
  %v3478 = vadd.f32 0.0, %v3477
  %3479 = vmatmul.f32.gmra.mxu0 %v2828
  %v3480 = vpop.f32.mrf.mxu0
  %v3481 = vadd.f32 0.0, %v3480
  %3482 = vdwg.mxu0
  %3483 = vmatpush.msra.mxu0 0.0
  %3484 = vmatpush.msra.mxu0 0.0
  %3485 = vmatpush.msra.mxu0 0.0
  %3486 = vmatpush.msra.mxu0 0.0
  %3487 = vmatpush.msra.mxu0 0.0
  %3488 = vmatpush.msra.mxu0 0.0
  %3489 = vmatpush.msra.mxu0 0.0
  %3490 = vmatpush.msra.mxu0 0.0
  %3491 = vmatpush.msra.mxu0 0.0
  %3492 = vmatpush.msra.mxu0 0.0
  %3493 = vmatpush.msra.mxu0 0.0
  %3494 = vmatpush.msra.mxu0 0.0
  %3495 = vmatpush.msra.mxu0 0.0
  %3496 = vmatpush.msra.mxu0 0.0
  %3497 = vmatpush.msra.mxu0 %v244
  %3498 = vmatpush.msra.mxu0 %v74
  %3499 = vmatmul.f32.gmra.mxu0 %v2822
  %v3500 = vpop.f32.mrf.mxu0
  %v3501 = vadd.f32 0.0, %v3500
  %3502 = vmatmul.f32.gmra.mxu0 %v2825
  %v3503 = vpop.f32.mrf.mxu0
  %v3504 = vadd.f32 0.0, %v3503
  %3505 = vmatmul.f32.gmra.mxu0 %v2828
  %v3506 = vpop.f32.mrf.mxu0
  %v3507 = vadd.f32 0.0, %v3506
  %3508 = vdwg.mxu0
  %3509 = vmatpush.msra.mxu0 0.0
  %3510 = vmatpush.msra.mxu0 0.0
  %3511 = vmatpush.msra.mxu0 0.0
  %3512 = vmatpush.msra.mxu0 0.0
  %3513 = vmatpush.msra.mxu0 0.0
  %3514 = vmatpush.msra.mxu0 0.0
  %3515 = vmatpush.msra.mxu0 0.0
  %3516 = vmatpush.msra.mxu0 0.0
  %3517 = vmatpush.msra.mxu0 0.0
  %3518 = vmatpush.msra.mxu0 0.0
  %3519 = vmatpush.msra.mxu0 0.0
  %3520 = vmatpush.msra.mxu0 0.0
  %3521 = vmatpush.msra.mxu0 0.0
  %3522 = vmatpush.msra.mxu0 0.0
  %3523 = vmatpush.msra.mxu0 %v247
  %3524 = vmatpush.msra.mxu0 %v75
  %3525 = vmatmul.f32.gmra.mxu0 %v2822
  %v3526 = vpop.f32.mrf.mxu0
  %v3527 = vadd.f32 0.0, %v3526
  %3528 = vmatmul.f32.gmra.mxu0 %v2825
  %v3529 = vpop.f32.mrf.mxu0
  %v3530 = vadd.f32 0.0, %v3529
  %3531 = vmatmul.f32.gmra.mxu0 %v2828
  %v3532 = vpop.f32.mrf.mxu0
  %v3533 = vadd.f32 0.0, %v3532
  %3534 = vdwg.mxu0
  %3535 = vmatpush.msra.mxu0 0.0
  %3536 = vmatpush.msra.mxu0 0.0
  %3537 = vmatpush.msra.mxu0 0.0
  %3538 = vmatpush.msra.mxu0 0.0
  %3539 = vmatpush.msra.mxu0 0.0
  %3540 = vmatpush.msra.mxu0 0.0
  %3541 = vmatpush.msra.mxu0 0.0
  %3542 = vmatpush.msra.mxu0 0.0
  %3543 = vmatpush.msra.mxu0 0.0
  %3544 = vmatpush.msra.mxu0 0.0
  %3545 = vmatpush.msra.mxu0 0.0
  %3546 = vmatpush.msra.mxu0 0.0
  %3547 = vmatpush.msra.mxu0 0.0
  %3548 = vmatpush.msra.mxu0 0.0
  %3549 = vmatpush.msra.mxu0 %v250
  %3550 = vmatpush.msra.mxu0 %v76
  %3551 = vmatmul.f32.gmra.mxu0 %v2822
  %v3552 = vpop.f32.mrf.mxu0
  %v3553 = vadd.f32 0.0, %v3552
  %3554 = vmatmul.f32.gmra.mxu0 %v2825
  %v3555 = vpop.f32.mrf.mxu0
  %v3556 = vadd.f32 0.0, %v3555
  %3557 = vmatmul.f32.gmra.mxu0 %v2828
  %v3558 = vpop.f32.mrf.mxu0
  %v3559 = vadd.f32 0.0, %v3558
  %3560 = vdwg.mxu0
  %3561 = vmatpush.msra.mxu0 0.0
  %3562 = vmatpush.msra.mxu0 0.0
  %3563 = vmatpush.msra.mxu0 0.0
  %3564 = vmatpush.msra.mxu0 0.0
  %3565 = vmatpush.msra.mxu0 0.0
  %3566 = vmatpush.msra.mxu0 0.0
  %3567 = vmatpush.msra.mxu0 0.0
  %3568 = vmatpush.msra.mxu0 0.0
  %3569 = vmatpush.msra.mxu0 0.0
  %3570 = vmatpush.msra.mxu0 0.0
  %3571 = vmatpush.msra.mxu0 0.0
  %3572 = vmatpush.msra.mxu0 0.0
  %3573 = vmatpush.msra.mxu0 0.0
  %3574 = vmatpush.msra.mxu0 0.0
  %3575 = vmatpush.msra.mxu0 %v253
  %3576 = vmatpush.msra.mxu0 %v77
  %3577 = vmatmul.f32.gmra.mxu0 %v2822
  %v3578 = vpop.f32.mrf.mxu0
  %v3579 = vadd.f32 0.0, %v3578
  %3580 = vmatmul.f32.gmra.mxu0 %v2825
  %v3581 = vpop.f32.mrf.mxu0
  %v3582 = vadd.f32 0.0, %v3581
  %3583 = vmatmul.f32.gmra.mxu0 %v2828
  %v3584 = vpop.f32.mrf.mxu0
  %v3585 = vadd.f32 0.0, %v3584
  %3586 = vdwg.mxu0
  %3587 = vmatpush.msra.mxu0 0.0
  %3588 = vmatpush.msra.mxu0 0.0
  %3589 = vmatpush.msra.mxu0 0.0
  %3590 = vmatpush.msra.mxu0 0.0
  %3591 = vmatpush.msra.mxu0 0.0
  %3592 = vmatpush.msra.mxu0 0.0
  %3593 = vmatpush.msra.mxu0 0.0
  %3594 = vmatpush.msra.mxu0 0.0
  %3595 = vmatpush.msra.mxu0 0.0
  %3596 = vmatpush.msra.mxu0 0.0
  %3597 = vmatpush.msra.mxu0 0.0
  %3598 = vmatpush.msra.mxu0 0.0
  %3599 = vmatpush.msra.mxu0 0.0
  %3600 = vmatpush.msra.mxu0 0.0
  %3601 = vmatpush.msra.mxu0 %v256
  %3602 = vmatpush.msra.mxu0 %v78
  %3603 = vmatmul.f32.gmra.mxu0 %v2822
  %v3604 = vpop.f32.mrf.mxu0
  %v3605 = vadd.f32 0.0, %v3604
  %3606 = vmatmul.f32.gmra.mxu0 %v2825
  %v3607 = vpop.f32.mrf.mxu0
  %v3608 = vadd.f32 0.0, %v3607
  %3609 = vmatmul.f32.gmra.mxu0 %v2828
  %v3610 = vpop.f32.mrf.mxu0
  %v3611 = vadd.f32 0.0, %v3610
  %3612 = vdwg.mxu0
  %3613 = vmatpush.msra.mxu0 0.0
  %3614 = vmatpush.msra.mxu0 0.0
  %3615 = vmatpush.msra.mxu0 0.0
  %3616 = vmatpush.msra.mxu0 0.0
  %3617 = vmatpush.msra.mxu0 0.0
  %3618 = vmatpush.msra.mxu0 0.0
  %3619 = vmatpush.msra.mxu0 0.0
  %3620 = vmatpush.msra.mxu0 0.0
  %3621 = vmatpush.msra.mxu0 0.0
  %3622 = vmatpush.msra.mxu0 0.0
  %3623 = vmatpush.msra.mxu0 0.0
  %3624 = vmatpush.msra.mxu0 0.0
  %3625 = vmatpush.msra.mxu0 0.0
  %3626 = vmatpush.msra.mxu0 0.0
  %3627 = vmatpush.msra.mxu0 %v259
  %3628 = vmatpush.msra.mxu0 %v79
  %3629 = vmatmul.f32.gmra.mxu0 %v2822
  %v3630 = vpop.f32.mrf.mxu0
  %v3631 = vadd.f32 0.0, %v3630
  %3632 = vmatmul.f32.gmra.mxu0 %v2825
  %v3633 = vpop.f32.mrf.mxu0
  %v3634 = vadd.f32 0.0, %v3633
  %3635 = vmatmul.f32.gmra.mxu0 %v2828
  %v3636 = vpop.f32.mrf.mxu0
  %v3637 = vadd.f32 0.0, %v3636
  %3638 = vdwg.mxu0
  %3639 = vmatpush.msra.mxu0 0.0
  %3640 = vmatpush.msra.mxu0 0.0
  %3641 = vmatpush.msra.mxu0 0.0
  %3642 = vmatpush.msra.mxu0 0.0
  %3643 = vmatpush.msra.mxu0 0.0
  %3644 = vmatpush.msra.mxu0 0.0
  %3645 = vmatpush.msra.mxu0 0.0
  %3646 = vmatpush.msra.mxu0 0.0
  %3647 = vmatpush.msra.mxu0 0.0
  %3648 = vmatpush.msra.mxu0 0.0
  %3649 = vmatpush.msra.mxu0 0.0
  %3650 = vmatpush.msra.mxu0 0.0
  %3651 = vmatpush.msra.mxu0 0.0
  %3652 = vmatpush.msra.mxu0 0.0
  %3653 = vmatpush.msra.mxu0 %v262
  %3654 = vmatpush.msra.mxu0 %v80
  %3655 = vmatmul.f32.gmra.mxu0 %v2822
  %v3656 = vpop.f32.mrf.mxu0
  %v3657 = vadd.f32 0.0, %v3656
  %3658 = vmatmul.f32.gmra.mxu0 %v2825
  %v3659 = vpop.f32.mrf.mxu0
  %v3660 = vadd.f32 0.0, %v3659
  %3661 = vmatmul.f32.gmra.mxu0 %v2828
  %v3662 = vpop.f32.mrf.mxu0
  %v3663 = vadd.f32 0.0, %v3662
  %3664 = vdwg.mxu0
  %3665 = vmatpush.msra.mxu0 0.0
  %3666 = vmatpush.msra.mxu0 0.0
  %3667 = vmatpush.msra.mxu0 0.0
  %3668 = vmatpush.msra.mxu0 0.0
  %3669 = vmatpush.msra.mxu0 0.0
  %3670 = vmatpush.msra.mxu0 0.0
  %3671 = vmatpush.msra.mxu0 0.0
  %3672 = vmatpush.msra.mxu0 0.0
  %3673 = vmatpush.msra.mxu0 0.0
  %3674 = vmatpush.msra.mxu0 0.0
  %3675 = vmatpush.msra.mxu0 0.0
  %3676 = vmatpush.msra.mxu0 0.0
  %3677 = vmatpush.msra.mxu0 0.0
  %3678 = vmatpush.msra.mxu0 0.0
  %3679 = vmatpush.msra.mxu0 %v265
  %3680 = vmatpush.msra.mxu0 %v81
  %3681 = vmatmul.f32.gmra.mxu0 %v2822
  %v3682 = vpop.f32.mrf.mxu0
  %v3683 = vadd.f32 0.0, %v3682
  %3684 = vmatmul.f32.gmra.mxu0 %v2825
  %v3685 = vpop.f32.mrf.mxu0
  %v3686 = vadd.f32 0.0, %v3685
  %3687 = vmatmul.f32.gmra.mxu0 %v2828
  %v3688 = vpop.f32.mrf.mxu0
  %v3689 = vadd.f32 0.0, %v3688
  %3690 = vdwg.mxu0
  %3691 = vmatpush.msra.mxu0 0.0
  %3692 = vmatpush.msra.mxu0 0.0
  %3693 = vmatpush.msra.mxu0 0.0
  %3694 = vmatpush.msra.mxu0 0.0
  %3695 = vmatpush.msra.mxu0 0.0
  %3696 = vmatpush.msra.mxu0 0.0
  %3697 = vmatpush.msra.mxu0 0.0
  %3698 = vmatpush.msra.mxu0 0.0
  %3699 = vmatpush.msra.mxu0 0.0
  %3700 = vmatpush.msra.mxu0 0.0
  %3701 = vmatpush.msra.mxu0 0.0
  %3702 = vmatpush.msra.mxu0 0.0
  %3703 = vmatpush.msra.mxu0 0.0
  %3704 = vmatpush.msra.mxu0 0.0
  %3705 = vmatpush.msra.mxu0 %v268
  %3706 = vmatpush.msra.mxu0 %v82
  %3707 = vmatmul.f32.gmra.mxu0 %v2822
  %v3708 = vpop.f32.mrf.mxu0
  %v3709 = vadd.f32 0.0, %v3708
  %3710 = vmatmul.f32.gmra.mxu0 %v2825
  %v3711 = vpop.f32.mrf.mxu0
  %v3712 = vadd.f32 0.0, %v3711
  %3713 = vmatmul.f32.gmra.mxu0 %v2828
  %v3714 = vpop.f32.mrf.mxu0
  %v3715 = vadd.f32 0.0, %v3714
  %3716 = vdwg.mxu0
  %3717 = vmatpush.msra.mxu0 0.0
  %3718 = vmatpush.msra.mxu0 0.0
  %3719 = vmatpush.msra.mxu0 0.0
  %3720 = vmatpush.msra.mxu0 0.0
  %3721 = vmatpush.msra.mxu0 0.0
  %3722 = vmatpush.msra.mxu0 0.0
  %3723 = vmatpush.msra.mxu0 0.0
  %3724 = vmatpush.msra.mxu0 0.0
  %3725 = vmatpush.msra.mxu0 0.0
  %3726 = vmatpush.msra.mxu0 0.0
  %3727 = vmatpush.msra.mxu0 0.0
  %3728 = vmatpush.msra.mxu0 0.0
  %3729 = vmatpush.msra.mxu0 0.0
  %3730 = vmatpush.msra.mxu0 0.0
  %3731 = vmatpush.msra.mxu0 %v271
  %3732 = vmatpush.msra.mxu0 %v83
  %3733 = vmatmul.f32.gmra.mxu0 %v2822
  %v3734 = vpop.f32.mrf.mxu0
  %v3735 = vadd.f32 0.0, %v3734
  %3736 = vmatmul.f32.gmra.mxu0 %v2825
  %v3737 = vpop.f32.mrf.mxu0
  %v3738 = vadd.f32 0.0, %v3737
  %3739 = vmatmul.f32.gmra.mxu0 %v2828
  %v3740 = vpop.f32.mrf.mxu0
  %v3741 = vadd.f32 0.0, %v3740
  %3742 = vdwg.mxu0
  %3743 = vmatpush.msra.mxu0 0.0
  %3744 = vmatpush.msra.mxu0 0.0
  %3745 = vmatpush.msra.mxu0 0.0
  %3746 = vmatpush.msra.mxu0 0.0
  %3747 = vmatpush.msra.mxu0 0.0
  %3748 = vmatpush.msra.mxu0 0.0
  %3749 = vmatpush.msra.mxu0 0.0
  %3750 = vmatpush.msra.mxu0 0.0
  %3751 = vmatpush.msra.mxu0 0.0
  %3752 = vmatpush.msra.mxu0 0.0
  %3753 = vmatpush.msra.mxu0 0.0
  %3754 = vmatpush.msra.mxu0 0.0
  %3755 = vmatpush.msra.mxu0 0.0
  %3756 = vmatpush.msra.mxu0 0.0
  %3757 = vmatpush.msra.mxu0 %v274
  %3758 = vmatpush.msra.mxu0 %v84
  %3759 = vmatmul.f32.gmra.mxu0 %v2822
  %v3760 = vpop.f32.mrf.mxu0
  %v3761 = vadd.f32 0.0, %v3760
  %3762 = vmatmul.f32.gmra.mxu0 %v2825
  %v3763 = vpop.f32.mrf.mxu0
  %v3764 = vadd.f32 0.0, %v3763
  %3765 = vmatmul.f32.gmra.mxu0 %v2828
  %v3766 = vpop.f32.mrf.mxu0
  %v3767 = vadd.f32 0.0, %v3766
  %3768 = vdwg.mxu0
  %3769 = vmatpush.msra.mxu0 0.0
  %3770 = vmatpush.msra.mxu0 0.0
  %3771 = vmatpush.msra.mxu0 0.0
  %3772 = vmatpush.msra.mxu0 0.0
  %3773 = vmatpush.msra.mxu0 0.0
  %3774 = vmatpush.msra.mxu0 0.0
  %3775 = vmatpush.msra.mxu0 0.0
  %3776 = vmatpush.msra.mxu0 0.0
  %3777 = vmatpush.msra.mxu0 0.0
  %3778 = vmatpush.msra.mxu0 0.0
  %3779 = vmatpush.msra.mxu0 0.0
  %3780 = vmatpush.msra.mxu0 0.0
  %3781 = vmatpush.msra.mxu0 0.0
  %3782 = vmatpush.msra.mxu0 0.0
  %3783 = vmatpush.msra.mxu0 %v277
  %3784 = vmatpush.msra.mxu0 %v85
  %3785 = vmatmul.f32.gmra.mxu0 %v2822
  %v3786 = vpop.f32.mrf.mxu0
  %v3787 = vadd.f32 0.0, %v3786
  %3788 = vmatmul.f32.gmra.mxu0 %v2825
  %v3789 = vpop.f32.mrf.mxu0
  %v3790 = vadd.f32 0.0, %v3789
  %3791 = vmatmul.f32.gmra.mxu0 %v2828
  %v3792 = vpop.f32.mrf.mxu0
  %v3793 = vadd.f32 0.0, %v3792
  %3794 = vdwg.mxu0
  %3795 = vmatpush.msra.mxu0 0.0
  %3796 = vmatpush.msra.mxu0 0.0
  %3797 = vmatpush.msra.mxu0 0.0
  %3798 = vmatpush.msra.mxu0 0.0
  %3799 = vmatpush.msra.mxu0 0.0
  %3800 = vmatpush.msra.mxu0 0.0
  %3801 = vmatpush.msra.mxu0 0.0
  %3802 = vmatpush.msra.mxu0 0.0
  %3803 = vmatpush.msra.mxu0 0.0
  %3804 = vmatpush.msra.mxu0 0.0
  %3805 = vmatpush.msra.mxu0 0.0
  %3806 = vmatpush.msra.mxu0 0.0
  %3807 = vmatpush.msra.mxu0 0.0
  %3808 = vmatpush.msra.mxu0 0.0
  %3809 = vmatpush.msra.mxu0 %v280
  %3810 = vmatpush.msra.mxu0 %v86
  %3811 = vmatmul.f32.gmra.mxu0 %v2822
  %v3812 = vpop.f32.mrf.mxu0
  %v3813 = vadd.f32 0.0, %v3812
  %3814 = vmatmul.f32.gmra.mxu0 %v2825
  %v3815 = vpop.f32.mrf.mxu0
  %v3816 = vadd.f32 0.0, %v3815
  %3817 = vmatmul.f32.gmra.mxu0 %v2828
  %v3818 = vpop.f32.mrf.mxu0
  %v3819 = vadd.f32 0.0, %v3818
  %3820 = vdwg.mxu0
  %3821 = vmatpush.msra.mxu0 0.0
  %3822 = vmatpush.msra.mxu0 0.0
  %3823 = vmatpush.msra.mxu0 0.0
  %3824 = vmatpush.msra.mxu0 0.0
  %3825 = vmatpush.msra.mxu0 0.0
  %3826 = vmatpush.msra.mxu0 0.0
  %3827 = vmatpush.msra.mxu0 0.0
  %3828 = vmatpush.msra.mxu0 0.0
  %3829 = vmatpush.msra.mxu0 0.0
  %3830 = vmatpush.msra.mxu0 0.0
  %3831 = vmatpush.msra.mxu0 0.0
  %3832 = vmatpush.msra.mxu0 0.0
  %3833 = vmatpush.msra.mxu0 0.0
  %3834 = vmatpush.msra.mxu0 0.0
  %3835 = vmatpush.msra.mxu0 %v283
  %3836 = vmatpush.msra.mxu0 %v87
  %3837 = vmatmul.f32.gmra.mxu0 %v2822
  %v3838 = vpop.f32.mrf.mxu0
  %v3839 = vadd.f32 0.0, %v3838
  %3840 = vmatmul.f32.gmra.mxu0 %v2825
  %v3841 = vpop.f32.mrf.mxu0
  %v3842 = vadd.f32 0.0, %v3841
  %3843 = vmatmul.f32.gmra.mxu0 %v2828
  %v3844 = vpop.f32.mrf.mxu0
  %v3845 = vadd.f32 0.0, %v3844
  %3846 = vdwg.mxu0
  %3847 = vmatpush.msra.mxu0 0.0
  %3848 = vmatpush.msra.mxu0 0.0
  %3849 = vmatpush.msra.mxu0 0.0
  %3850 = vmatpush.msra.mxu0 0.0
  %3851 = vmatpush.msra.mxu0 0.0
  %3852 = vmatpush.msra.mxu0 0.0
  %3853 = vmatpush.msra.mxu0 0.0
  %3854 = vmatpush.msra.mxu0 0.0
  %3855 = vmatpush.msra.mxu0 0.0
  %3856 = vmatpush.msra.mxu0 0.0
  %3857 = vmatpush.msra.mxu0 0.0
  %3858 = vmatpush.msra.mxu0 0.0
  %3859 = vmatpush.msra.mxu0 0.0
  %3860 = vmatpush.msra.mxu0 0.0
  %3861 = vmatpush.msra.mxu0 %v286
  %3862 = vmatpush.msra.mxu0 %v88
  %3863 = vmatmul.f32.gmra.mxu0 %v2822
  %v3864 = vpop.f32.mrf.mxu0
  %v3865 = vadd.f32 0.0, %v3864
  %3866 = vmatmul.f32.gmra.mxu0 %v2825
  %v3867 = vpop.f32.mrf.mxu0
  %v3868 = vadd.f32 0.0, %v3867
  %3869 = vmatmul.f32.gmra.mxu0 %v2828
  %v3870 = vpop.f32.mrf.mxu0
  %v3871 = vadd.f32 0.0, %v3870
  %3872 = vdwg.mxu0
  %3873 = vmatpush.msra.mxu0 0.0
  %3874 = vmatpush.msra.mxu0 0.0
  %3875 = vmatpush.msra.mxu0 0.0
  %3876 = vmatpush.msra.mxu0 0.0
  %3877 = vmatpush.msra.mxu0 0.0
  %3878 = vmatpush.msra.mxu0 0.0
  %3879 = vmatpush.msra.mxu0 0.0
  %3880 = vmatpush.msra.mxu0 0.0
  %3881 = vmatpush.msra.mxu0 0.0
  %3882 = vmatpush.msra.mxu0 0.0
  %3883 = vmatpush.msra.mxu0 0.0
  %3884 = vmatpush.msra.mxu0 0.0
  %3885 = vmatpush.msra.mxu0 0.0
  %3886 = vmatpush.msra.mxu0 0.0
  %3887 = vmatpush.msra.mxu0 %v289
  %3888 = vmatpush.msra.mxu0 %v89
  %3889 = vmatmul.f32.gmra.mxu0 %v2822
  %v3890 = vpop.f32.mrf.mxu0
  %v3891 = vadd.f32 0.0, %v3890
  %3892 = vmatmul.f32.gmra.mxu0 %v2825
  %v3893 = vpop.f32.mrf.mxu0
  %v3894 = vadd.f32 0.0, %v3893
  %3895 = vmatmul.f32.gmra.mxu0 %v2828
  %v3896 = vpop.f32.mrf.mxu0
  %v3897 = vadd.f32 0.0, %v3896
  %3898 = vdwg.mxu0
  %3899 = vmatpush.msra.mxu0 0.0
  %3900 = vmatpush.msra.mxu0 0.0
  %3901 = vmatpush.msra.mxu0 0.0
  %3902 = vmatpush.msra.mxu0 0.0
  %3903 = vmatpush.msra.mxu0 0.0
  %3904 = vmatpush.msra.mxu0 0.0
  %3905 = vmatpush.msra.mxu0 0.0
  %3906 = vmatpush.msra.mxu0 0.0
  %3907 = vmatpush.msra.mxu0 0.0
  %3908 = vmatpush.msra.mxu0 0.0
  %3909 = vmatpush.msra.mxu0 0.0
  %3910 = vmatpush.msra.mxu0 0.0
  %3911 = vmatpush.msra.mxu0 0.0
  %3912 = vmatpush.msra.mxu0 0.0
  %3913 = vmatpush.msra.mxu0 %v292
  %3914 = vmatpush.msra.mxu0 %v90
  %3915 = vmatmul.f32.gmra.mxu0 %v2822
  %v3916 = vpop.f32.mrf.mxu0
  %v3917 = vadd.f32 0.0, %v3916
  %3918 = vmatmul.f32.gmra.mxu0 %v2825
  %v3919 = vpop.f32.mrf.mxu0
  %v3920 = vadd.f32 0.0, %v3919
  %3921 = vmatmul.f32.gmra.mxu0 %v2828
  %v3922 = vpop.f32.mrf.mxu0
  %v3923 = vadd.f32 0.0, %v3922
  %3924 = vdwg.mxu0
  %3925 = vmatpush.msra.mxu0 0.0
  %3926 = vmatpush.msra.mxu0 0.0
  %3927 = vmatpush.msra.mxu0 0.0
  %3928 = vmatpush.msra.mxu0 0.0
  %3929 = vmatpush.msra.mxu0 0.0
  %3930 = vmatpush.msra.mxu0 0.0
  %3931 = vmatpush.msra.mxu0 0.0
  %3932 = vmatpush.msra.mxu0 0.0
  %3933 = vmatpush.msra.mxu0 0.0
  %3934 = vmatpush.msra.mxu0 0.0
  %3935 = vmatpush.msra.mxu0 0.0
  %3936 = vmatpush.msra.mxu0 0.0
  %3937 = vmatpush.msra.mxu0 0.0
  %3938 = vmatpush.msra.mxu0 0.0
  %3939 = vmatpush.msra.mxu0 %v295
  %3940 = vmatpush.msra.mxu0 %v91
  %3941 = vmatmul.f32.gmra.mxu0 %v2822
  %v3942 = vpop.f32.mrf.mxu0
  %v3943 = vadd.f32 0.0, %v3942
  %3944 = vmatmul.f32.gmra.mxu0 %v2825
  %v3945 = vpop.f32.mrf.mxu0
  %v3946 = vadd.f32 0.0, %v3945
  %3947 = vmatmul.f32.gmra.mxu0 %v2828
  %v3948 = vpop.f32.mrf.mxu0
  %v3949 = vadd.f32 0.0, %v3948
  %3950 = vdwg.mxu0
  %3951 = vmatpush.msra.mxu0 0.0
  %3952 = vmatpush.msra.mxu0 0.0
  %3953 = vmatpush.msra.mxu0 0.0
  %3954 = vmatpush.msra.mxu0 0.0
  %3955 = vmatpush.msra.mxu0 0.0
  %3956 = vmatpush.msra.mxu0 0.0
  %3957 = vmatpush.msra.mxu0 0.0
  %3958 = vmatpush.msra.mxu0 0.0
  %3959 = vmatpush.msra.mxu0 0.0
  %3960 = vmatpush.msra.mxu0 0.0
  %3961 = vmatpush.msra.mxu0 0.0
  %3962 = vmatpush.msra.mxu0 0.0
  %3963 = vmatpush.msra.mxu0 0.0
  %3964 = vmatpush.msra.mxu0 0.0
  %3965 = vmatpush.msra.mxu0 %v298
  %3966 = vmatpush.msra.mxu0 %v92
  %3967 = vmatmul.f32.gmra.mxu0 %v2822
  %v3968 = vpop.f32.mrf.mxu0
  %v3969 = vadd.f32 0.0, %v3968
  %3970 = vmatmul.f32.gmra.mxu0 %v2825
  %v3971 = vpop.f32.mrf.mxu0
  %v3972 = vadd.f32 0.0, %v3971
  %3973 = vmatmul.f32.gmra.mxu0 %v2828
  %v3974 = vpop.f32.mrf.mxu0
  %v3975 = vadd.f32 0.0, %v3974
  %3976 = vdwg.mxu0
  %3977 = vmatpush.msra.mxu0 0.0
  %3978 = vmatpush.msra.mxu0 0.0
  %3979 = vmatpush.msra.mxu0 0.0
  %3980 = vmatpush.msra.mxu0 0.0
  %3981 = vmatpush.msra.mxu0 0.0
  %3982 = vmatpush.msra.mxu0 0.0
  %3983 = vmatpush.msra.mxu0 0.0
  %3984 = vmatpush.msra.mxu0 0.0
  %3985 = vmatpush.msra.mxu0 0.0
  %3986 = vmatpush.msra.mxu0 0.0
  %3987 = vmatpush.msra.mxu0 0.0
  %3988 = vmatpush.msra.mxu0 0.0
  %3989 = vmatpush.msra.mxu0 0.0
  %3990 = vmatpush.msra.mxu0 0.0
  %3991 = vmatpush.msra.mxu0 %v301
  %3992 = vmatpush.msra.mxu0 %v93
  %3993 = vmatmul.f32.gmra.mxu0 %v2822
  %v3994 = vpop.f32.mrf.mxu0
  %v3995 = vadd.f32 0.0, %v3994
  %3996 = vmatmul.f32.gmra.mxu0 %v2825
  %v3997 = vpop.f32.mrf.mxu0
  %v3998 = vadd.f32 0.0, %v3997
  %3999 = vmatmul.f32.gmra.mxu0 %v2828
  %v4000 = vpop.f32.mrf.mxu0
  %v4001 = vadd.f32 0.0, %v4000
  %4002 = vdwg.mxu0
  %4003 = vmatpush.msra.mxu0 0.0
  %4004 = vmatpush.msra.mxu0 0.0
  %4005 = vmatpush.msra.mxu0 0.0
  %4006 = vmatpush.msra.mxu0 0.0
  %4007 = vmatpush.msra.mxu0 0.0
  %4008 = vmatpush.msra.mxu0 0.0
  %4009 = vmatpush.msra.mxu0 0.0
  %4010 = vmatpush.msra.mxu0 0.0
  %4011 = vmatpush.msra.mxu0 0.0
  %4012 = vmatpush.msra.mxu0 0.0
  %4013 = vmatpush.msra.mxu0 0.0
  %4014 = vmatpush.msra.mxu0 0.0
  %4015 = vmatpush.msra.mxu0 0.0
  %4016 = vmatpush.msra.mxu0 0.0
  %4017 = vmatpush.msra.mxu0 %v304
  %4018 = vmatpush.msra.mxu0 %v94
  %4019 = vmatmul.f32.gmra.mxu0 %v2822
  %v4020 = vpop.f32.mrf.mxu0
  %v4021 = vadd.f32 0.0, %v4020
  %4022 = vmatmul.f32.gmra.mxu0 %v2825
  %v4023 = vpop.f32.mrf.mxu0
  %v4024 = vadd.f32 0.0, %v4023
  %4025 = vmatmul.f32.gmra.mxu0 %v2828
  %v4026 = vpop.f32.mrf.mxu0
  %v4027 = vadd.f32 0.0, %v4026
  %4028 = vdwg.mxu0
  %4029 = vmatpush.msra.mxu0 0.0
  %4030 = vmatpush.msra.mxu0 0.0
  %4031 = vmatpush.msra.mxu0 0.0
  %4032 = vmatpush.msra.mxu0 0.0
  %4033 = vmatpush.msra.mxu0 0.0
  %4034 = vmatpush.msra.mxu0 0.0
  %4035 = vmatpush.msra.mxu0 0.0
  %4036 = vmatpush.msra.mxu0 0.0
  %4037 = vmatpush.msra.mxu0 0.0
  %4038 = vmatpush.msra.mxu0 0.0
  %4039 = vmatpush.msra.mxu0 0.0
  %4040 = vmatpush.msra.mxu0 0.0
  %4041 = vmatpush.msra.mxu0 0.0
  %4042 = vmatpush.msra.mxu0 0.0
  %4043 = vmatpush.msra.mxu0 %v307
  %4044 = vmatpush.msra.mxu0 %v95
  %4045 = vmatmul.f32.gmra.mxu0 %v2822
  %v4046 = vpop.f32.mrf.mxu0
  %v4047 = vadd.f32 0.0, %v4046
  %4048 = vmatmul.f32.gmra.mxu0 %v2825
  %v4049 = vpop.f32.mrf.mxu0
  %v4050 = vadd.f32 0.0, %v4049
  %4051 = vmatmul.f32.gmra.mxu0 %v2828
  %v4052 = vpop.f32.mrf.mxu0
  %v4053 = vadd.f32 0.0, %v4052
  %4054 = vdwg.mxu0
  %4055 = vmatpush.msra.mxu0 0.0
  %4056 = vmatpush.msra.mxu0 0.0
  %4057 = vmatpush.msra.mxu0 0.0
  %4058 = vmatpush.msra.mxu0 0.0
  %4059 = vmatpush.msra.mxu0 0.0
  %4060 = vmatpush.msra.mxu0 0.0
  %4061 = vmatpush.msra.mxu0 0.0
  %4062 = vmatpush.msra.mxu0 0.0
  %4063 = vmatpush.msra.mxu0 0.0
  %4064 = vmatpush.msra.mxu0 0.0
  %4065 = vmatpush.msra.mxu0 0.0
  %4066 = vmatpush.msra.mxu0 0.0
  %4067 = vmatpush.msra.mxu0 0.0
  %4068 = vmatpush.msra.mxu0 0.0
  %4069 = vmatpush.msra.mxu0 %v2831
  %4070 = vmatpush.msra.mxu0 %v96
  %4071 = vmatmul.f32.gmra.mxu0 %v2822
  %v4072 = vpop.f32.mrf.mxu0
  %v4073 = vadd.f32 0.0, %v4072
  %4074 = vmatmul.f32.gmra.mxu0 %v2825
  %v4075 = vpop.f32.mrf.mxu0
  %v4076 = vadd.f32 0.0, %v4075
  %4077 = vmatmul.f32.gmra.mxu0 %v2828
  %v4078 = vpop.f32.mrf.mxu0
  %v4079 = vadd.f32 0.0, %v4078
  %4080 = vdwg.mxu0
  %v4081 = vadd.f32 %v1587, %v2851
  %v4082 = vadd.f32 %v1613, %v2877
  %v4083 = vadd.f32 %v1639, %v2903
  %v4084 = vadd.f32 %v1665, %v2929
  %v4085 = vadd.f32 %v1691, %v2955
  %v4086 = vadd.f32 %v1717, %v2981
  %v4087 = vadd.f32 %v1743, %v3007
  %v4088 = vadd.f32 %v1769, %v3033
  %v4089 = vadd.f32 %v1795, %v3059
  %v4090 = vadd.f32 %v1821, %v3085
  %v4091 = vadd.f32 %v1847, %v3111
  %v4092 = vadd.f32 %v1873, %v3137
  %v4093 = vadd.f32 %v1899, %v3163
  %v4094 = vadd.f32 %v1925, %v3189
  %v4095 = vadd.f32 %v1951, %v3215
  %v4096 = vadd.f32 %v1977, %v3241
  %v4097 = vadd.f32 %v2003, %v3267
  %v4098 = vadd.f32 %v2029, %v3293
  %v4099 = vadd.f32 %v2055, %v3319
  %v4100 = vadd.f32 %v2081, %v3345
  %v4101 = vadd.f32 %v2107, %v3371
  %v4102 = vadd.f32 %v2133, %v3397
  %v4103 = vadd.f32 %v2159, %v3423
  %v4104 = vadd.f32 %v2185, %v3449
  %v4105 = vadd.f32 %v2211, %v3475
  %v4106 = vadd.f32 %v2237, %v3501
  %v4107 = vadd.f32 %v2263, %v3527
  %v4108 = vadd.f32 %v2289, %v3553
  %v4109 = vadd.f32 %v2315, %v3579
  %v4110 = vadd.f32 %v2341, %v3605
  %v4111 = vadd.f32 %v2367, %v3631
  %v4112 = vadd.f32 %v2393, %v3657
  %v4113 = vadd.f32 %v2419, %v3683
  %v4114 = vadd.f32 %v2445, %v3709
  %v4115 = vadd.f32 %v2471, %v3735
  %v4116 = vadd.f32 %v2497, %v3761
  %v4117 = vadd.f32 %v2523, %v3787
  %v4118 = vadd.f32 %v2549, %v3813
  %v4119 = vadd.f32 %v2575, %v3839
  %v4120 = vadd.f32 %v2601, %v3865
  %v4121 = vadd.f32 %v2627, %v3891
  %v4122 = vadd.f32 %v2653, %v3917
  %v4123 = vadd.f32 %v2679, %v3943
  %v4124 = vadd.f32 %v2705, %v3969
  %v4125 = vadd.f32 %v2731, %v3995
  %v4126 = vadd.f32 %v2757, %v4021
  %v4127 = vadd.f32 %v2783, %v4047
  %v4128 = vadd.f32 %v2809, %v4073
  %v4129 = vadd.f32 %v1590, %v2854
  %v4130 = vadd.f32 %v1616, %v2880
  %v4131 = vadd.f32 %v1642, %v2906
  %v4132 = vadd.f32 %v1668, %v2932
  %v4133 = vadd.f32 %v1694, %v2958
  %v4134 = vadd.f32 %v1720, %v2984
  %v4135 = vadd.f32 %v1746, %v3010
  %v4136 = vadd.f32 %v1772, %v3036
  %v4137 = vadd.f32 %v1798, %v3062
  %v4138 = vadd.f32 %v1824, %v3088
  %v4139 = vadd.f32 %v1850, %v3114
  %v4140 = vadd.f32 %v1876, %v3140
  %v4141 = vadd.f32 %v1902, %v3166
  %v4142 = vadd.f32 %v1928, %v3192
  %v4143 = vadd.f32 %v1954, %v3218
  %v4144 = vadd.f32 %v1980, %v3244
  %v4145 = vadd.f32 %v2006, %v3270
  %v4146 = vadd.f32 %v2032, %v3296
  %v4147 = vadd.f32 %v2058, %v3322
  %v4148 = vadd.f32 %v2084, %v3348
  %v4149 = vadd.f32 %v2110, %v3374
  %v4150 = vadd.f32 %v2136, %v3400
  %v4151 = vadd.f32 %v2162, %v3426
  %v4152 = vadd.f32 %v2188, %v3452
  %v4153 = vadd.f32 %v2214, %v3478
  %v4154 = vadd.f32 %v2240, %v3504
  %v4155 = vadd.f32 %v2266, %v3530
  %v4156 = vadd.f32 %v2292, %v3556
  %v4157 = vadd.f32 %v2318, %v3582
  %v4158 = vadd.f32 %v2344, %v3608
  %v4159 = vadd.f32 %v2370, %v3634
  %v4160 = vadd.f32 %v2396, %v3660
  %v4161 = vadd.f32 %v2422, %v3686
  %v4162 = vadd.f32 %v2448, %v3712
  %v4163 = vadd.f32 %v2474, %v3738
  %v4164 = vadd.f32 %v2500, %v3764
  %v4165 = vadd.f32 %v2526, %v3790
  %v4166 = vadd.f32 %v2552, %v3816
  %v4167 = vadd.f32 %v2578, %v3842
  %v4168 = vadd.f32 %v2604, %v3868
  %v4169 = vadd.f32 %v2630, %v3894
  %v4170 = vadd.f32 %v2656, %v3920
  %v4171 = vadd.f32 %v2682, %v3946
  %v4172 = vadd.f32 %v2708, %v3972
  %v4173 = vadd.f32 %v2734, %v3998
  %v4174 = vadd.f32 %v2760, %v4024
  %v4175 = vadd.f32 %v2786, %v4050
  %v4176 = vadd.f32 %v2812, %v4076
  %v4177 = vadd.f32 %v1593, %v2857
  %v4178 = vadd.f32 %v1619, %v2883
  %v4179 = vadd.f32 %v1645, %v2909
  %v4180 = vadd.f32 %v1671, %v2935
  %v4181 = vadd.f32 %v1697, %v2961
  %v4182 = vadd.f32 %v1723, %v2987
  %v4183 = vadd.f32 %v1749, %v3013
  %v4184 = vadd.f32 %v1775, %v3039
  %v4185 = vadd.f32 %v1801, %v3065
  %v4186 = vadd.f32 %v1827, %v3091
  %v4187 = vadd.f32 %v1853, %v3117
  %v4188 = vadd.f32 %v1879, %v3143
  %v4189 = vadd.f32 %v1905, %v3169
  %v4190 = vadd.f32 %v1931, %v3195
  %v4191 = vadd.f32 %v1957, %v3221
  %v4192 = vadd.f32 %v1983, %v3247
  %v4193 = vadd.f32 %v2009, %v3273
  %v4194 = vadd.f32 %v2035, %v3299
  %v4195 = vadd.f32 %v2061, %v3325
  %v4196 = vadd.f32 %v2087, %v3351
  %v4197 = vadd.f32 %v2113, %v3377
  %v4198 = vadd.f32 %v2139, %v3403
  %v4199 = vadd.f32 %v2165, %v3429
  %v4200 = vadd.f32 %v2191, %v3455
  %v4201 = vadd.f32 %v2217, %v3481
  %v4202 = vadd.f32 %v2243, %v3507
  %v4203 = vadd.f32 %v2269, %v3533
  %v4204 = vadd.f32 %v2295, %v3559
  %v4205 = vadd.f32 %v2321, %v3585
  %v4206 = vadd.f32 %v2347, %v3611
  %v4207 = vadd.f32 %v2373, %v3637
  %v4208 = vadd.f32 %v2399, %v3663
  %v4209 = vadd.f32 %v2425, %v3689
  %v4210 = vadd.f32 %v2451, %v3715
  %v4211 = vadd.f32 %v2477, %v3741
  %v4212 = vadd.f32 %v2503, %v3767
  %v4213 = vadd.f32 %v2529, %v3793
  %v4214 = vadd.f32 %v2555, %v3819
  %v4215 = vadd.f32 %v2581, %v3845
  %v4216 = vadd.f32 %v2607, %v3871
  %v4217 = vadd.f32 %v2633, %v3897
  %v4218 = vadd.f32 %v2659, %v3923
  %v4219 = vadd.f32 %v2685, %v3949
  %v4220 = vadd.f32 %v2711, %v3975
  %v4221 = vadd.f32 %v2737, %v4001
  %v4222 = vadd.f32 %v2763, %v4027
  %v4223 = vadd.f32 %v2789, %v4053
  %v4224 = vadd.f32 %v2815, %v4079
  %v4225 = vld [vmem:[%s2] sm:$0xff]
  %v4226 = vld [vmem:[%s2 + $0x8] sm:$0xff]
  %v4227 = vld [vmem:[%s2 + $0x10] sm:$0xf]
  %4229 = vset.pattern.permute.xlu0 0
  %4230 = vperm.xlu0 %4229, %v4225
  %v4231 = vpop.permute.xlu0 %4230
  %4234 = vset.pattern.permute.xlu0 0
  %4235 = vperm.xlu0 %4234, %v4226
  %v4236 = vpop.permute.xlu0 %4235
  %4239 = vset.pattern.permute.xlu0 0
  %4240 = vperm.xlu0 %4239, %v4227
  %v4241 = vpop.permute.xlu0 %4240
  %v4243 = vadd.f32 %v4081, %v4231
  %v4244 = vadd.f32 %v4082, %v4231
  %v4245 = vadd.f32 %v4083, %v4231
  %v4246 = vadd.f32 %v4084, %v4231
  %v4247 = vadd.f32 %v4085, %v4231
  %v4248 = vadd.f32 %v4086, %v4231
  %v4249 = vadd.f32 %v4087, %v4231
  %v4250 = vadd.f32 %v4088, %v4231
  %v4251 = vadd.f32 %v4089, %v4231
  %v4252 = vadd.f32 %v4090, %v4231
  %v4253 = vadd.f32 %v4091, %v4231
  %v4254 = vadd.f32 %v4092, %v4231
  %v4255 = vadd.f32 %v4093, %v4231
  %v4256 = vadd.f32 %v4094, %v4231
  %v4257 = vadd.f32 %v4095, %v4231
  %v4258 = vadd.f32 %v4096, %v4231
  %v4259 = vadd.f32 %v4097, %v4231
  %v4260 = vadd.f32 %v4098, %v4231
  %v4261 = vadd.f32 %v4099, %v4231
  %v4262 = vadd.f32 %v4100, %v4231
  %v4263 = vadd.f32 %v4101, %v4231
  %v4264 = vadd.f32 %v4102, %v4231
  %v4265 = vadd.f32 %v4103, %v4231
  %v4266 = vadd.f32 %v4104, %v4231
  %v4267 = vadd.f32 %v4105, %v4231
  %v4268 = vadd.f32 %v4106, %v4231
  %v4269 = vadd.f32 %v4107, %v4231
  %v4270 = vadd.f32 %v4108, %v4231
  %v4271 = vadd.f32 %v4109, %v4231
  %v4272 = vadd.f32 %v4110, %v4231
  %v4273 = vadd.f32 %v4111, %v4231
  %v4274 = vadd.f32 %v4112, %v4231
  %v4275 = vadd.f32 %v4113, %v4231
  %v4276 = vadd.f32 %v4114, %v4231
  %v4277 = vadd.f32 %v4115, %v4231
  %v4278 = vadd.f32 %v4116, %v4231
  %v4279 = vadd.f32 %v4117, %v4231
  %v4280 = vadd.f32 %v4118, %v4231
  %v4281 = vadd.f32 %v4119, %v4231
  %v4282 = vadd.f32 %v4120, %v4231
  %v4283 = vadd.f32 %v4121, %v4231
  %v4284 = vadd.f32 %v4122, %v4231
  %v4285 = vadd.f32 %v4123, %v4231
  %v4286 = vadd.f32 %v4124, %v4231
  %v4287 = vadd.f32 %v4125, %v4231
  %v4288 = vadd.f32 %v4126, %v4231
  %v4289 = vadd.f32 %v4127, %v4231
  %v4290 = vadd.f32 %v4128, %v4231
  %v4291 = vadd.f32 %v4129, %v4236
  %v4292 = vadd.f32 %v4130, %v4236
  %v4293 = vadd.f32 %v4131, %v4236
  %v4294 = vadd.f32 %v4132, %v4236
  %v4295 = vadd.f32 %v4133, %v4236
  %v4296 = vadd.f32 %v4134, %v4236
  %v4297 = vadd.f32 %v4135, %v4236
  %v4298 = vadd.f32 %v4136, %v4236
  %v4299 = vadd.f32 %v4137, %v4236
  %v4300 = vadd.f32 %v4138, %v4236
  %v4301 = vadd.f32 %v4139, %v4236
  %v4302 = vadd.f32 %v4140, %v4236
  %v4303 = vadd.f32 %v4141, %v4236
  %v4304 = vadd.f32 %v4142, %v4236
  %v4305 = vadd.f32 %v4143, %v4236
  %v4306 = vadd.f32 %v4144, %v4236
  %v4307 = vadd.f32 %v4145, %v4236
  %v4308 = vadd.f32 %v4146, %v4236
  %v4309 = vadd.f32 %v4147, %v4236
  %v4310 = vadd.f32 %v4148, %v4236
  %v4311 = vadd.f32 %v4149, %v4236
  %v4312 = vadd.f32 %v4150, %v4236
  %v4313 = vadd.f32 %v4151, %v4236
  %v4314 = vadd.f32 %v4152, %v4236
  %v4315 = vadd.f32 %v4153, %v4236
  %v4316 = vadd.f32 %v4154, %v4236
  %v4317 = vadd.f32 %v4155, %v4236
  %v4318 = vadd.f32 %v4156, %v4236
  %v4319 = vadd.f32 %v4157, %v4236
  %v4320 = vadd.f32 %v4158, %v4236
  %v4321 = vadd.f32 %v4159, %v4236
  %v4322 = vadd.f32 %v4160, %v4236
  %v4323 = vadd.f32 %v4161, %v4236
  %v4324 = vadd.f32 %v4162, %v4236
  %v4325 = vadd.f32 %v4163, %v4236
  %v4326 = vadd.f32 %v4164, %v4236
  %v4327 = vadd.f32 %v4165, %v4236
  %v4328 = vadd.f32 %v4166, %v4236
  %v4329 = vadd.f32 %v4167, %v4236
  %v4330 = vadd.f32 %v4168, %v4236
  %v4331 = vadd.f32 %v4169, %v4236
  %v4332 = vadd.f32 %v4170, %v4236
  %v4333 = vadd.f32 %v4171, %v4236
  %v4334 = vadd.f32 %v4172, %v4236
  %v4335 = vadd.f32 %v4173, %v4236
  %v4336 = vadd.f32 %v4174, %v4236
  %v4337 = vadd.f32 %v4175, %v4236
  %v4338 = vadd.f32 %v4176, %v4236
  %v4339 = vadd.f32 %v4177, %v4241
  %v4340 = vadd.f32 %v4178, %v4241
  %v4341 = vadd.f32 %v4179, %v4241
  %v4342 = vadd.f32 %v4180, %v4241
  %v4343 = vadd.f32 %v4181, %v4241
  %v4344 = vadd.f32 %v4182, %v4241
  %v4345 = vadd.f32 %v4183, %v4241
  %v4346 = vadd.f32 %v4184, %v4241
  %v4347 = vadd.f32 %v4185, %v4241
  %v4348 = vadd.f32 %v4186, %v4241
  %v4349 = vadd.f32 %v4187, %v4241
  %v4350 = vadd.f32 %v4188, %v4241
  %v4351 = vadd.f32 %v4189, %v4241
  %v4352 = vadd.f32 %v4190, %v4241
  %v4353 = vadd.f32 %v4191, %v4241
  %v4354 = vadd.f32 %v4192, %v4241
  %v4355 = vadd.f32 %v4193, %v4241
  %v4356 = vadd.f32 %v4194, %v4241
  %v4357 = vadd.f32 %v4195, %v4241
  %v4358 = vadd.f32 %v4196, %v4241
  %v4359 = vadd.f32 %v4197, %v4241
  %v4360 = vadd.f32 %v4198, %v4241
  %v4361 = vadd.f32 %v4199, %v4241
  %v4362 = vadd.f32 %v4200, %v4241
  %v4363 = vadd.f32 %v4201, %v4241
  %v4364 = vadd.f32 %v4202, %v4241
  %v4365 = vadd.f32 %v4203, %v4241
  %v4366 = vadd.f32 %v4204, %v4241
  %v4367 = vadd.f32 %v4205, %v4241
  %v4368 = vadd.f32 %v4206, %v4241
  %v4369 = vadd.f32 %v4207, %v4241
  %v4370 = vadd.f32 %v4208, %v4241
  %v4371 = vadd.f32 %v4209, %v4241
  %v4372 = vadd.f32 %v4210, %v4241
  %v4373 = vadd.f32 %v4211, %v4241
  %v4374 = vadd.f32 %v4212, %v4241
  %v4375 = vadd.f32 %v4213, %v4241
  %v4376 = vadd.f32 %v4214, %v4241
  %v4377 = vadd.f32 %v4215, %v4241
  %v4378 = vadd.f32 %v4216, %v4241
  %v4379 = vadd.f32 %v4217, %v4241
  %v4380 = vadd.f32 %v4218, %v4241
  %v4381 = vadd.f32 %v4219, %v4241
  %v4382 = vadd.f32 %v4220, %v4241
  %v4383 = vadd.f32 %v4221, %v4241
  %v4384 = vadd.f32 %v4222, %v4241
  %v4385 = vadd.f32 %v4223, %v4241
  %v4386 = vadd.f32 %v4224, %v4241
  %v4387 = vmax.f32 %v4243, 0.0
  %v4388 = vmax.f32 %v4244, 0.0
  %v4389 = vmax.f32 %v4245, 0.0
  %v4390 = vmax.f32 %v4246, 0.0
  %v4391 = vmax.f32 %v4247, 0.0
  %v4392 = vmax.f32 %v4248, 0.0
  %v4393 = vmax.f32 %v4249, 0.0
  %v4394 = vmax.f32 %v4250, 0.0
  %v4395 = vmax.f32 %v4251, 0.0
  %v4396 = vmax.f32 %v4252, 0.0
  %v4397 = vmax.f32 %v4253, 0.0
  %v4398 = vmax.f32 %v4254, 0.0
  %v4399 = vmax.f32 %v4255, 0.0
  %v4400 = vmax.f32 %v4256, 0.0
  %v4401 = vmax.f32 %v4257, 0.0
  %v4402 = vmax.f32 %v4258, 0.0
  %v4403 = vmax.f32 %v4259, 0.0
  %v4404 = vmax.f32 %v4260, 0.0
  %v4405 = vmax.f32 %v4261, 0.0
  %v4406 = vmax.f32 %v4262, 0.0
  %v4407 = vmax.f32 %v4263, 0.0
  %v4408 = vmax.f32 %v4264, 0.0
  %v4409 = vmax.f32 %v4265, 0.0
  %v4410 = vmax.f32 %v4266, 0.0
  %v4411 = vmax.f32 %v4267, 0.0
  %v4412 = vmax.f32 %v4268, 0.0
  %v4413 = vmax.f32 %v4269, 0.0
  %v4414 = vmax.f32 %v4270, 0.0
  %v4415 = vmax.f32 %v4271, 0.0
  %v4416 = vmax.f32 %v4272, 0.0
  %v4417 = vmax.f32 %v4273, 0.0
  %v4418 = vmax.f32 %v4274, 0.0
  %v4419 = vmax.f32 %v4275, 0.0
  %v4420 = vmax.f32 %v4276, 0.0
  %v4421 = vmax.f32 %v4277, 0.0
  %v4422 = vmax.f32 %v4278, 0.0
  %v4423 = vmax.f32 %v4279, 0.0
  %v4424 = vmax.f32 %v4280, 0.0
  %v4425 = vmax.f32 %v4281, 0.0
  %v4426 = vmax.f32 %v4282, 0.0
  %v4427 = vmax.f32 %v4283, 0.0
  %v4428 = vmax.f32 %v4284, 0.0
  %v4429 = vmax.f32 %v4285, 0.0
  %v4430 = vmax.f32 %v4286, 0.0
  %v4431 = vmax.f32 %v4287, 0.0
  %v4432 = vmax.f32 %v4288, 0.0
  %v4433 = vmax.f32 %v4289, 0.0
  %v4434 = vmax.f32 %v4290, 0.0
  %v4435 = vmax.f32 %v4291, 0.0
  %v4436 = vmax.f32 %v4292, 0.0
  %v4437 = vmax.f32 %v4293, 0.0
  %v4438 = vmax.f32 %v4294, 0.0
  %v4439 = vmax.f32 %v4295, 0.0
  %v4440 = vmax.f32 %v4296, 0.0
  %v4441 = vmax.f32 %v4297, 0.0
  %v4442 = vmax.f32 %v4298, 0.0
  %v4443 = vmax.f32 %v4299, 0.0
  %v4444 = vmax.f32 %v4300, 0.0
  %v4445 = vmax.f32 %v4301, 0.0
  %v4446 = vmax.f32 %v4302, 0.0
  %v4447 = vmax.f32 %v4303, 0.0
  %v4448 = vmax.f32 %v4304, 0.0
  %v4449 = vmax.f32 %v4305, 0.0
  %v4450 = vmax.f32 %v4306, 0.0
  %v4451 = vmax.f32 %v4307, 0.0
  %v4452 = vmax.f32 %v4308, 0.0
  %v4453 = vmax.f32 %v4309, 0.0
  %v4454 = vmax.f32 %v4310, 0.0
  %v4455 = vmax.f32 %v4311, 0.0
  %v4456 = vmax.f32 %v4312, 0.0
  %v4457 = vmax.f32 %v4313, 0.0
  %v4458 = vmax.f32 %v4314, 0.0
  %v4459 = vmax.f32 %v4315, 0.0
  %v4460 = vmax.f32 %v4316, 0.0
  %v4461 = vmax.f32 %v4317, 0.0
  %v4462 = vmax.f32 %v4318, 0.0
  %v4463 = vmax.f32 %v4319, 0.0
  %v4464 = vmax.f32 %v4320, 0.0
  %v4465 = vmax.f32 %v4321, 0.0
  %v4466 = vmax.f32 %v4322, 0.0
  %v4467 = vmax.f32 %v4323, 0.0
  %v4468 = vmax.f32 %v4324, 0.0
  %v4469 = vmax.f32 %v4325, 0.0
  %v4470 = vmax.f32 %v4326, 0.0
  %v4471 = vmax.f32 %v4327, 0.0
  %v4472 = vmax.f32 %v4328, 0.0
  %v4473 = vmax.f32 %v4329, 0.0
  %v4474 = vmax.f32 %v4330, 0.0
  %v4475 = vmax.f32 %v4331, 0.0
  %v4476 = vmax.f32 %v4332, 0.0
  %v4477 = vmax.f32 %v4333, 0.0
  %v4478 = vmax.f32 %v4334, 0.0
  %v4479 = vmax.f32 %v4335, 0.0
  %v4480 = vmax.f32 %v4336, 0.0
  %v4481 = vmax.f32 %v4337, 0.0
  %v4482 = vmax.f32 %v4338, 0.0
  %v4483 = vmax.f32 %v4339, 0.0
  %v4484 = vmax.f32 %v4340, 0.0
  %v4485 = vmax.f32 %v4341, 0.0
  %v4486 = vmax.f32 %v4342, 0.0
  %v4487 = vmax.f32 %v4343, 0.0
  %v4488 = vmax.f32 %v4344, 0.0
  %v4489 = vmax.f32 %v4345, 0.0
  %v4490 = vmax.f32 %v4346, 0.0
  %v4491 = vmax.f32 %v4347, 0.0
  %v4492 = vmax.f32 %v4348, 0.0
  %v4493 = vmax.f32 %v4349, 0.0
  %v4494 = vmax.f32 %v4350, 0.0
  %v4495 = vmax.f32 %v4351, 0.0
  %v4496 = vmax.f32 %v4352, 0.0
  %v4497 = vmax.f32 %v4353, 0.0
  %v4498 = vmax.f32 %v4354, 0.0
  %v4499 = vmax.f32 %v4355, 0.0
  %v4500 = vmax.f32 %v4356, 0.0
  %v4501 = vmax.f32 %v4357, 0.0
  %v4502 = vmax.f32 %v4358, 0.0
  %v4503 = vmax.f32 %v4359, 0.0
  %v4504 = vmax.f32 %v4360, 0.0
  %v4505 = vmax.f32 %v4361, 0.0
  %v4506 = vmax.f32 %v4362, 0.0
  %v4507 = vmax.f32 %v4363, 0.0
  %v4508 = vmax.f32 %v4364, 0.0
  %v4509 = vmax.f32 %v4365, 0.0
  %v4510 = vmax.f32 %v4366, 0.0
  %v4511 = vmax.f32 %v4367, 0.0
  %v4512 = vmax.f32 %v4368, 0.0
  %v4513 = vmax.f32 %v4369, 0.0
  %v4514 = vmax.f32 %v4370, 0.0
  %v4515 = vmax.f32 %v4371, 0.0
  %v4516 = vmax.f32 %v4372, 0.0
  %v4517 = vmax.f32 %v4373, 0.0
  %v4518 = vmax.f32 %v4374, 0.0
  %v4519 = vmax.f32 %v4375, 0.0
  %v4520 = vmax.f32 %v4376, 0.0
  %v4521 = vmax.f32 %v4377, 0.0
  %v4522 = vmax.f32 %v4378, 0.0
  %v4523 = vmax.f32 %v4379, 0.0
  %v4524 = vmax.f32 %v4380, 0.0
  %v4525 = vmax.f32 %v4381, 0.0
  %v4526 = vmax.f32 %v4382, 0.0
  %v4527 = vmax.f32 %v4383, 0.0
  %v4528 = vmax.f32 %v4384, 0.0
  %v4529 = vmax.f32 %v4385, 0.0
  %v4530 = vmax.f32 %v4386, 0.0
  %v4531 = vmax.f32 %v4387, %v4388
  %v4532 = vmax.f32 %v4435, %v4436
  %v4533 = vmax.f32 %v4483, %v4484
  %v4534 = vmax.f32 %v4389, %v4390
  %v4535 = vmax.f32 %v4437, %v4438
  %v4536 = vmax.f32 %v4485, %v4486
  %v4537 = vmax.f32 %v4391, %v4392
  %v4538 = vmax.f32 %v4439, %v4440
  %v4539 = vmax.f32 %v4487, %v4488
  %v4540 = vmax.f32 %v4393, %v4394
  %v4541 = vmax.f32 %v4441, %v4442
  %v4542 = vmax.f32 %v4489, %v4490
  %v4543 = vmax.f32 %v4395, %v4396
  %v4544 = vmax.f32 %v4443, %v4444
  %v4545 = vmax.f32 %v4491, %v4492
  %v4546 = vmax.f32 %v4397, %v4398
  %v4547 = vmax.f32 %v4445, %v4446
  %v4548 = vmax.f32 %v4493, %v4494
  %v4549 = vmax.f32 %v4399, %v4400
  %v4550 = vmax.f32 %v4447, %v4448
  %v4551 = vmax.f32 %v4495, %v4496
  %v4552 = vmax.f32 %v4401, %v4402
  %v4553 = vmax.f32 %v4449, %v4450
  %v4554 = vmax.f32 %v4497, %v4498
  %v4555 = vmax.f32 %v4403, %v4404
  %v4556 = vmax.f32 %v4451, %v4452
  %v4557 = vmax.f32 %v4499, %v4500
  %v4558 = vmax.f32 %v4405, %v4406
  %v4559 = vmax.f32 %v4453, %v4454
  %v4560 = vmax.f32 %v4501, %v4502
  %v4561 = vmax.f32 %v4407, %v4408
  %v4562 = vmax.f32 %v4455, %v4456
  %v4563 = vmax.f32 %v4503, %v4504
  %v4564 = vmax.f32 %v4409, %v4410
  %v4565 = vmax.f32 %v4457, %v4458
  %v4566 = vmax.f32 %v4505, %v4506
  %v4567 = vmax.f32 %v4411, %v4412
  %v4568 = vmax.f32 %v4459, %v4460
  %v4569 = vmax.f32 %v4507, %v4508
  %v4570 = vmax.f32 %v4413, %v4414
  %v4571 = vmax.f32 %v4461, %v4462
  %v4572 = vmax.f32 %v4509, %v4510
  %v4573 = vmax.f32 %v4415, %v4416
  %v4574 = vmax.f32 %v4463, %v4464
  %v4575 = vmax.f32 %v4511, %v4512
  %v4576 = vmax.f32 %v4417, %v4418
  %v4577 = vmax.f32 %v4465, %v4466
  %v4578 = vmax.f32 %v4513, %v4514
  %v4579 = vmax.f32 %v4419, %v4420
  %v4580 = vmax.f32 %v4467, %v4468
  %v4581 = vmax.f32 %v4515, %v4516
  %v4582 = vmax.f32 %v4421, %v4422
  %v4583 = vmax.f32 %v4469, %v4470
  %v4584 = vmax.f32 %v4517, %v4518
  %v4585 = vmax.f32 %v4423, %v4424
  %v4586 = vmax.f32 %v4471, %v4472
  %v4587 = vmax.f32 %v4519, %v4520
  %v4588 = vmax.f32 %v4425, %v4426
  %v4589 = vmax.f32 %v4473, %v4474
  %v4590 = vmax.f32 %v4521, %v4522
  %v4591 = vmax.f32 %v4427, %v4428
  %v4592 = vmax.f32 %v4475, %v4476
  %v4593 = vmax.f32 %v4523, %v4524
  %v4594 = vmax.f32 %v4429, %v4430
  %v4595 = vmax.f32 %v4477, %v4478
  %v4596 = vmax.f32 %v4525, %v4526
  %v4597 = vmax.f32 %v4431, %v4432
  %v4598 = vmax.f32 %v4479, %v4480
  %v4599 = vmax.f32 %v4527, %v4528
  %v4600 = vmax.f32 %v4433, %v4434
  %v4601 = vmax.f32 %v4481, %v4482
  %v4602 = vmax.f32 %v4529, %v4530
  %v4603 = vld [vmem:[%s3] sm:$0xff]
  %v4604 = vld [vmem:[%s3 + $0x8] sm:$0xff]
  %v4605 = vld [vmem:[%s3 + $0x10] sm:$0xff]
  %v4606 = vld [vmem:[%s3 + $0x18] sm:$0xff]
  %v4607 = vld [vmem:[%s3 + $0x20] sm:$0xff]
  %s4608 = scalar_lea.vmem %s3, 40
  %v4609 = vld [vmem:[%s4608] sm:$0xff]
  %v4610 = vld [vmem:[%s4608 + $0x8] sm:$0xff]
  %v4611 = vld [vmem:[%s4608 + $0x10] sm:$0xff]
  %v4612 = vld [vmem:[%s4608 + $0x18] sm:$0xff]
  %v4613 = vld [vmem:[%s4608 + $0x20] sm:$0xff]
  %vm4614 = vcmask 162816
  %v4616 = vsel %vm4614, %v4609, 0
  %v4619 = vsel %vm4614, %v4610, 0
  %v4622 = vsel %vm4614, %v4611, 0
  %v4625 = vsel %vm4614, %v4612, 0
  %v4628 = vsel %vm4614, %v4613, 0
  %vm4630 = vcmask 1043456
  %v4632 = vsel %vm4630, %v4536, 0
  %v4635 = vsel %vm4630, %v4539, 0
  %v4638 = vsel %vm4630, %v4542, 0
  %v4641 = vsel %vm4630, %v4545, 0
  %v4644 = vsel %vm4630, %v4548, 0
  %v4647 = vsel %vm4630, %v4551, 0
  %v4650 = vsel %vm4630, %v4554, 0
  %v4653 = vsel %vm4630, %v4557, 0
  %v4656 = vsel %vm4630, %v4560, 0
  %v4659 = vsel %vm4630, %v4563, 0
  %v4662 = vsel %vm4630, %v4566, 0
  %v4665 = vsel %vm4630, %v4569, 0
  %v4668 = vsel %vm4630, %v4572, 0
  %v4671 = vsel %vm4630, %v4575, 0
  %v4674 = vsel %vm4630, %v4578, 0
  %v4677 = vsel %vm4630, %v4581, 0
  %v4680 = vsel %vm4630, %v4584, 0
  %v4683 = vsel %vm4630, %v4587, 0
  %v4686 = vsel %vm4630, %v4590, 0
  %v4689 = vsel %vm4630, %v4593, 0
  %v4692 = vsel %vm4630, %v4596, 0
  %v4695 = vsel %vm4630, %v4599, 0
  %4697 = vmatpush.msra.mxu0 0.0
  %4698 = vmatpush.msra.mxu0 0.0
  %4699 = vmatpush.msra.mxu0 0.0
  %4700 = vmatpush.msra.mxu0 0.0
  %4701 = vmatpush.msra.mxu0 0.0
  %4702 = vmatpush.msra.mxu0 0.0
  %4703 = vmatpush.msra.mxu0 0.0
  %4704 = vmatpush.msra.mxu0 0.0
  %4705 = vmatpush.msra.mxu0 0.0
  %4706 = vmatpush.msra.mxu0 0.0
  %4707 = vmatpush.msra.mxu0 0.0
  %4708 = vmatpush.msra.mxu0 0.0
  %4709 = vmatpush.msra.mxu0 0.0
  %4710 = vmatpush.msra.mxu0 %v4632
  %4711 = vmatpush.msra.mxu0 %v4535
  %4712 = vmatpush.msra.mxu0 %v4534
  %4713 = vmatmul.f32.gmra.mxu0 %v4616
  %v4714 = vpop.f32.mrf.mxu0
  %v4715 = vadd.f32 0.0, %v4714
  %4716 = vmatmul.f32.gmra.mxu0 %v4619
  %v4717 = vpop.f32.mrf.mxu0
  %v4718 = vadd.f32 0.0, %v4717
  %4719 = vmatmul.f32.gmra.mxu0 %v4622
  %v4720 = vpop.f32.mrf.mxu0
  %v4721 = vadd.f32 0.0, %v4720
  %4722 = vmatmul.f32.gmra.mxu0 %v4625
  %v4723 = vpop.f32.mrf.mxu0
  %v4724 = vadd.f32 0.0, %v4723
  %4725 = vmatmul.f32.gmra.mxu0 %v4628
  %v4726 = vpop.f32.mrf.mxu0
  %v4727 = vadd.f32 0.0, %v4726
  %4728 = vdwg.mxu0
  %4729 = vmatpush.msra.mxu0 0.0
  %4730 = vmatpush.msra.mxu0 0.0
  %4731 = vmatpush.msra.mxu0 0.0
  %4732 = vmatpush.msra.mxu0 0.0
  %4733 = vmatpush.msra.mxu0 0.0
  %4734 = vmatpush.msra.mxu0 0.0
  %4735 = vmatpush.msra.mxu0 0.0
  %4736 = vmatpush.msra.mxu0 0.0
  %4737 = vmatpush.msra.mxu0 0.0
  %4738 = vmatpush.msra.mxu0 0.0
  %4739 = vmatpush.msra.mxu0 0.0
  %4740 = vmatpush.msra.mxu0 0.0
  %4741 = vmatpush.msra.mxu0 0.0
  %4742 = vmatpush.msra.mxu0 %v4635
  %4743 = vmatpush.msra.mxu0 %v4538
  %4744 = vmatpush.msra.mxu0 %v4537
  %4745 = vmatmul.f32.gmra.mxu0 %v4616
  %v4746 = vpop.f32.mrf.mxu0
  %v4747 = vadd.f32 0.0, %v4746
  %4748 = vmatmul.f32.gmra.mxu0 %v4619
  %v4749 = vpop.f32.mrf.mxu0
  %v4750 = vadd.f32 0.0, %v4749
  %4751 = vmatmul.f32.gmra.mxu0 %v4622
  %v4752 = vpop.f32.mrf.mxu0
  %v4753 = vadd.f32 0.0, %v4752
  %4754 = vmatmul.f32.gmra.mxu0 %v4625
  %v4755 = vpop.f32.mrf.mxu0
  %v4756 = vadd.f32 0.0, %v4755
  %4757 = vmatmul.f32.gmra.mxu0 %v4628
  %v4758 = vpop.f32.mrf.mxu0
  %v4759 = vadd.f32 0.0, %v4758
  %4760 = vdwg.mxu0
  %4761 = vmatpush.msra.mxu0 0.0
  %4762 = vmatpush.msra.mxu0 0.0
  %4763 = vmatpush.msra.mxu0 0.0
  %4764 = vmatpush.msra.mxu0 0.0
  %4765 = vmatpush.msra.mxu0 0.0
  %4766 = vmatpush.msra.mxu0 0.0
  %4767 = vmatpush.msra.mxu0 0.0
  %4768 = vmatpush.msra.mxu0 0.0
  %4769 = vmatpush.msra.mxu0 0.0
  %4770 = vmatpush.msra.mxu0 0.0
  %4771 = vmatpush.msra.mxu0 0.0
  %4772 = vmatpush.msra.mxu0 0.0
  %4773 = vmatpush.msra.mxu0 0.0
  %4774 = vmatpush.msra.mxu0 %v4638
  %4775 = vmatpush.msra.mxu0 %v4541
  %4776 = vmatpush.msra.mxu0 %v4540
  %4777 = vmatmul.f32.gmra.mxu0 %v4616
  %v4778 = vpop.f32.mrf.mxu0
  %v4779 = vadd.f32 0.0, %v4778
  %4780 = vmatmul.f32.gmra.mxu0 %v4619
  %v4781 = vpop.f32.mrf.mxu0
  %v4782 = vadd.f32 0.0, %v4781
  %4783 = vmatmul.f32.gmra.mxu0 %v4622
  %v4784 = vpop.f32.mrf.mxu0
  %v4785 = vadd.f32 0.0, %v4784
  %4786 = vmatmul.f32.gmra.mxu0 %v4625
  %v4787 = vpop.f32.mrf.mxu0
  %v4788 = vadd.f32 0.0, %v4787
  %4789 = vmatmul.f32.gmra.mxu0 %v4628
  %v4790 = vpop.f32.mrf.mxu0
  %v4791 = vadd.f32 0.0, %v4790
  %4792 = vdwg.mxu0
  %4793 = vmatpush.msra.mxu0 0.0
  %4794 = vmatpush.msra.mxu0 0.0
  %4795 = vmatpush.msra.mxu0 0.0
  %4796 = vmatpush.msra.mxu0 0.0
  %4797 = vmatpush.msra.mxu0 0.0
  %4798 = vmatpush.msra.mxu0 0.0
  %4799 = vmatpush.msra.mxu0 0.0
  %4800 = vmatpush.msra.mxu0 0.0
  %4801 = vmatpush.msra.mxu0 0.0
  %4802 = vmatpush.msra.mxu0 0.0
  %4803 = vmatpush.msra.mxu0 0.0
  %4804 = vmatpush.msra.mxu0 0.0
  %4805 = vmatpush.msra.mxu0 0.0
  %4806 = vmatpush.msra.mxu0 %v4641
  %4807 = vmatpush.msra.mxu0 %v4544
  %4808 = vmatpush.msra.mxu0 %v4543
  %4809 = vmatmul.f32.gmra.mxu0 %v4616
  %v4810 = vpop.f32.mrf.mxu0
  %v4811 = vadd.f32 0.0, %v4810
  %4812 = vmatmul.f32.gmra.mxu0 %v4619
  %v4813 = vpop.f32.mrf.mxu0
  %v4814 = vadd.f32 0.0, %v4813
  %4815 = vmatmul.f32.gmra.mxu0 %v4622
  %v4816 = vpop.f32.mrf.mxu0
  %v4817 = vadd.f32 0.0, %v4816
  %4818 = vmatmul.f32.gmra.mxu0 %v4625
  %v4819 = vpop.f32.mrf.mxu0
  %v4820 = vadd.f32 0.0, %v4819
  %4821 = vmatmul.f32.gmra.mxu0 %v4628
  %v4822 = vpop.f32.mrf.mxu0
  %v4823 = vadd.f32 0.0, %v4822
  %4824 = vdwg.mxu0
  %4825 = vmatpush.msra.mxu0 0.0
  %4826 = vmatpush.msra.mxu0 0.0
  %4827 = vmatpush.msra.mxu0 0.0
  %4828 = vmatpush.msra.mxu0 0.0
  %4829 = vmatpush.msra.mxu0 0.0
  %4830 = vmatpush.msra.mxu0 0.0
  %4831 = vmatpush.msra.mxu0 0.0
  %4832 = vmatpush.msra.mxu0 0.0
  %4833 = vmatpush.msra.mxu0 0.0
  %4834 = vmatpush.msra.mxu0 0.0
  %4835 = vmatpush.msra.mxu0 0.0
  %4836 = vmatpush.msra.mxu0 0.0
  %4837 = vmatpush.msra.mxu0 0.0
  %4838 = vmatpush.msra.mxu0 %v4644
  %4839 = vmatpush.msra.mxu0 %v4547
  %4840 = vmatpush.msra.mxu0 %v4546
  %4841 = vmatmul.f32.gmra.mxu0 %v4616
  %v4842 = vpop.f32.mrf.mxu0
  %v4843 = vadd.f32 0.0, %v4842
  %4844 = vmatmul.f32.gmra.mxu0 %v4619
  %v4845 = vpop.f32.mrf.mxu0
  %v4846 = vadd.f32 0.0, %v4845
  %4847 = vmatmul.f32.gmra.mxu0 %v4622
  %v4848 = vpop.f32.mrf.mxu0
  %v4849 = vadd.f32 0.0, %v4848
  %4850 = vmatmul.f32.gmra.mxu0 %v4625
  %v4851 = vpop.f32.mrf.mxu0
  %v4852 = vadd.f32 0.0, %v4851
  %4853 = vmatmul.f32.gmra.mxu0 %v4628
  %v4854 = vpop.f32.mrf.mxu0
  %v4855 = vadd.f32 0.0, %v4854
  %4856 = vdwg.mxu0
  %4857 = vmatpush.msra.mxu0 0.0
  %4858 = vmatpush.msra.mxu0 0.0
  %4859 = vmatpush.msra.mxu0 0.0
  %4860 = vmatpush.msra.mxu0 0.0
  %4861 = vmatpush.msra.mxu0 0.0
  %4862 = vmatpush.msra.mxu0 0.0
  %4863 = vmatpush.msra.mxu0 0.0
  %4864 = vmatpush.msra.mxu0 0.0
  %4865 = vmatpush.msra.mxu0 0.0
  %4866 = vmatpush.msra.mxu0 0.0
  %4867 = vmatpush.msra.mxu0 0.0
  %4868 = vmatpush.msra.mxu0 0.0
  %4869 = vmatpush.msra.mxu0 0.0
  %4870 = vmatpush.msra.mxu0 %v4647
  %4871 = vmatpush.msra.mxu0 %v4550
  %4872 = vmatpush.msra.mxu0 %v4549
  %4873 = vmatmul.f32.gmra.mxu0 %v4616
  %v4874 = vpop.f32.mrf.mxu0
  %v4875 = vadd.f32 0.0, %v4874
  %4876 = vmatmul.f32.gmra.mxu0 %v4619
  %v4877 = vpop.f32.mrf.mxu0
  %v4878 = vadd.f32 0.0, %v4877
  %4879 = vmatmul.f32.gmra.mxu0 %v4622
  %v4880 = vpop.f32.mrf.mxu0
  %v4881 = vadd.f32 0.0, %v4880
  %4882 = vmatmul.f32.gmra.mxu0 %v4625
  %v4883 = vpop.f32.mrf.mxu0
  %v4884 = vadd.f32 0.0, %v4883
  %4885 = vmatmul.f32.gmra.mxu0 %v4628
  %v4886 = vpop.f32.mrf.mxu0
  %v4887 = vadd.f32 0.0, %v4886
  %4888 = vdwg.mxu0
  %4889 = vmatpush.msra.mxu0 0.0
  %4890 = vmatpush.msra.mxu0 0.0
  %4891 = vmatpush.msra.mxu0 0.0
  %4892 = vmatpush.msra.mxu0 0.0
  %4893 = vmatpush.msra.mxu0 0.0
  %4894 = vmatpush.msra.mxu0 0.0
  %4895 = vmatpush.msra.mxu0 0.0
  %4896 = vmatpush.msra.mxu0 0.0
  %4897 = vmatpush.msra.mxu0 0.0
  %4898 = vmatpush.msra.mxu0 0.0
  %4899 = vmatpush.msra.mxu0 0.0
  %4900 = vmatpush.msra.mxu0 0.0
  %4901 = vmatpush.msra.mxu0 0.0
  %4902 = vmatpush.msra.mxu0 %v4650
  %4903 = vmatpush.msra.mxu0 %v4553
  %4904 = vmatpush.msra.mxu0 %v4552
  %4905 = vmatmul.f32.gmra.mxu0 %v4616
  %v4906 = vpop.f32.mrf.mxu0
  %v4907 = vadd.f32 0.0, %v4906
  %4908 = vmatmul.f32.gmra.mxu0 %v4619
  %v4909 = vpop.f32.mrf.mxu0
  %v4910 = vadd.f32 0.0, %v4909
  %4911 = vmatmul.f32.gmra.mxu0 %v4622
  %v4912 = vpop.f32.mrf.mxu0
  %v4913 = vadd.f32 0.0, %v4912
  %4914 = vmatmul.f32.gmra.mxu0 %v4625
  %v4915 = vpop.f32.mrf.mxu0
  %v4916 = vadd.f32 0.0, %v4915
  %4917 = vmatmul.f32.gmra.mxu0 %v4628
  %v4918 = vpop.f32.mrf.mxu0
  %v4919 = vadd.f32 0.0, %v4918
  %4920 = vdwg.mxu0
  %4921 = vmatpush.msra.mxu0 0.0
  %4922 = vmatpush.msra.mxu0 0.0
  %4923 = vmatpush.msra.mxu0 0.0
  %4924 = vmatpush.msra.mxu0 0.0
  %4925 = vmatpush.msra.mxu0 0.0
  %4926 = vmatpush.msra.mxu0 0.0
  %4927 = vmatpush.msra.mxu0 0.0
  %4928 = vmatpush.msra.mxu0 0.0
  %4929 = vmatpush.msra.mxu0 0.0
  %4930 = vmatpush.msra.mxu0 0.0
  %4931 = vmatpush.msra.mxu0 0.0
  %4932 = vmatpush.msra.mxu0 0.0
  %4933 = vmatpush.msra.mxu0 0.0
  %4934 = vmatpush.msra.mxu0 %v4653
  %4935 = vmatpush.msra.mxu0 %v4556
  %4936 = vmatpush.msra.mxu0 %v4555
  %4937 = vmatmul.f32.gmra.mxu0 %v4616
  %v4938 = vpop.f32.mrf.mxu0
  %v4939 = vadd.f32 0.0, %v4938
  %4940 = vmatmul.f32.gmra.mxu0 %v4619
  %v4941 = vpop.f32.mrf.mxu0
  %v4942 = vadd.f32 0.0, %v4941
  %4943 = vmatmul.f32.gmra.mxu0 %v4622
  %v4944 = vpop.f32.mrf.mxu0
  %v4945 = vadd.f32 0.0, %v4944
  %4946 = vmatmul.f32.gmra.mxu0 %v4625
  %v4947 = vpop.f32.mrf.mxu0
  %v4948 = vadd.f32 0.0, %v4947
  %4949 = vmatmul.f32.gmra.mxu0 %v4628
  %v4950 = vpop.f32.mrf.mxu0
  %v4951 = vadd.f32 0.0, %v4950
  %4952 = vdwg.mxu0
  %4953 = vmatpush.msra.mxu0 0.0
  %4954 = vmatpush.msra.mxu0 0.0
  %4955 = vmatpush.msra.mxu0 0.0
  %4956 = vmatpush.msra.mxu0 0.0
  %4957 = vmatpush.msra.mxu0 0.0
  %4958 = vmatpush.msra.mxu0 0.0
  %4959 = vmatpush.msra.mxu0 0.0
  %4960 = vmatpush.msra.mxu0 0.0
  %4961 = vmatpush.msra.mxu0 0.0
  %4962 = vmatpush.msra.mxu0 0.0
  %4963 = vmatpush.msra.mxu0 0.0
  %4964 = vmatpush.msra.mxu0 0.0
  %4965 = vmatpush.msra.mxu0 0.0
  %4966 = vmatpush.msra.mxu0 %v4656
  %4967 = vmatpush.msra.mxu0 %v4559
  %4968 = vmatpush.msra.mxu0 %v4558
  %4969 = vmatmul.f32.gmra.mxu0 %v4616
  %v4970 = vpop.f32.mrf.mxu0
  %v4971 = vadd.f32 0.0, %v4970
  %4972 = vmatmul.f32.gmra.mxu0 %v4619
  %v4973 = vpop.f32.mrf.mxu0
  %v4974 = vadd.f32 0.0, %v4973
  %4975 = vmatmul.f32.gmra.mxu0 %v4622
  %v4976 = vpop.f32.mrf.mxu0
  %v4977 = vadd.f32 0.0, %v4976
  %4978 = vmatmul.f32.gmra.mxu0 %v4625
  %v4979 = vpop.f32.mrf.mxu0
  %v4980 = vadd.f32 0.0, %v4979
  %4981 = vmatmul.f32.gmra.mxu0 %v4628
  %v4982 = vpop.f32.mrf.mxu0
  %v4983 = vadd.f32 0.0, %v4982
  %4984 = vdwg.mxu0
  %4985 = vmatpush.msra.mxu0 0.0
  %4986 = vmatpush.msra.mxu0 0.0
  %4987 = vmatpush.msra.mxu0 0.0
  %4988 = vmatpush.msra.mxu0 0.0
  %4989 = vmatpush.msra.mxu0 0.0
  %4990 = vmatpush.msra.mxu0 0.0
  %4991 = vmatpush.msra.mxu0 0.0
  %4992 = vmatpush.msra.mxu0 0.0
  %4993 = vmatpush.msra.mxu0 0.0
  %4994 = vmatpush.msra.mxu0 0.0
  %4995 = vmatpush.msra.mxu0 0.0
  %4996 = vmatpush.msra.mxu0 0.0
  %4997 = vmatpush.msra.mxu0 0.0
  %4998 = vmatpush.msra.mxu0 %v4659
  %4999 = vmatpush.msra.mxu0 %v4562
  %5000 = vmatpush.msra.mxu0 %v4561
  %5001 = vmatmul.f32.gmra.mxu0 %v4616
  %v5002 = vpop.f32.mrf.mxu0
  %v5003 = vadd.f32 0.0, %v5002
  %5004 = vmatmul.f32.gmra.mxu0 %v4619
  %v5005 = vpop.f32.mrf.mxu0
  %v5006 = vadd.f32 0.0, %v5005
  %5007 = vmatmul.f32.gmra.mxu0 %v4622
  %v5008 = vpop.f32.mrf.mxu0
  %v5009 = vadd.f32 0.0, %v5008
  %5010 = vmatmul.f32.gmra.mxu0 %v4625
  %v5011 = vpop.f32.mrf.mxu0
  %v5012 = vadd.f32 0.0, %v5011
  %5013 = vmatmul.f32.gmra.mxu0 %v4628
  %v5014 = vpop.f32.mrf.mxu0
  %v5015 = vadd.f32 0.0, %v5014
  %5016 = vdwg.mxu0
  %5017 = vmatpush.msra.mxu0 0.0
  %5018 = vmatpush.msra.mxu0 0.0
  %5019 = vmatpush.msra.mxu0 0.0
  %5020 = vmatpush.msra.mxu0 0.0
  %5021 = vmatpush.msra.mxu0 0.0
  %5022 = vmatpush.msra.mxu0 0.0
  %5023 = vmatpush.msra.mxu0 0.0
  %5024 = vmatpush.msra.mxu0 0.0
  %5025 = vmatpush.msra.mxu0 0.0
  %5026 = vmatpush.msra.mxu0 0.0
  %5027 = vmatpush.msra.mxu0 0.0
  %5028 = vmatpush.msra.mxu0 0.0
  %5029 = vmatpush.msra.mxu0 0.0
  %5030 = vmatpush.msra.mxu0 %v4662
  %5031 = vmatpush.msra.mxu0 %v4565
  %5032 = vmatpush.msra.mxu0 %v4564
  %5033 = vmatmul.f32.gmra.mxu0 %v4616
  %v5034 = vpop.f32.mrf.mxu0
  %v5035 = vadd.f32 0.0, %v5034
  %5036 = vmatmul.f32.gmra.mxu0 %v4619
  %v5037 = vpop.f32.mrf.mxu0
  %v5038 = vadd.f32 0.0, %v5037
  %5039 = vmatmul.f32.gmra.mxu0 %v4622
  %v5040 = vpop.f32.mrf.mxu0
  %v5041 = vadd.f32 0.0, %v5040
  %5042 = vmatmul.f32.gmra.mxu0 %v4625
  %v5043 = vpop.f32.mrf.mxu0
  %v5044 = vadd.f32 0.0, %v5043
  %5045 = vmatmul.f32.gmra.mxu0 %v4628
  %v5046 = vpop.f32.mrf.mxu0
  %v5047 = vadd.f32 0.0, %v5046
  %5048 = vdwg.mxu0
  %5049 = vmatpush.msra.mxu0 0.0
  %5050 = vmatpush.msra.mxu0 0.0
  %5051 = vmatpush.msra.mxu0 0.0
  %5052 = vmatpush.msra.mxu0 0.0
  %5053 = vmatpush.msra.mxu0 0.0
  %5054 = vmatpush.msra.mxu0 0.0
  %5055 = vmatpush.msra.mxu0 0.0
  %5056 = vmatpush.msra.mxu0 0.0
  %5057 = vmatpush.msra.mxu0 0.0
  %5058 = vmatpush.msra.mxu0 0.0
  %5059 = vmatpush.msra.mxu0 0.0
  %5060 = vmatpush.msra.mxu0 0.0
  %5061 = vmatpush.msra.mxu0 0.0
  %5062 = vmatpush.msra.mxu0 %v4665
  %5063 = vmatpush.msra.mxu0 %v4568
  %5064 = vmatpush.msra.mxu0 %v4567
  %5065 = vmatmul.f32.gmra.mxu0 %v4616
  %v5066 = vpop.f32.mrf.mxu0
  %v5067 = vadd.f32 0.0, %v5066
  %5068 = vmatmul.f32.gmra.mxu0 %v4619
  %v5069 = vpop.f32.mrf.mxu0
  %v5070 = vadd.f32 0.0, %v5069
  %5071 = vmatmul.f32.gmra.mxu0 %v4622
  %v5072 = vpop.f32.mrf.mxu0
  %v5073 = vadd.f32 0.0, %v5072
  %5074 = vmatmul.f32.gmra.mxu0 %v4625
  %v5075 = vpop.f32.mrf.mxu0
  %v5076 = vadd.f32 0.0, %v5075
  %5077 = vmatmul.f32.gmra.mxu0 %v4628
  %v5078 = vpop.f32.mrf.mxu0
  %v5079 = vadd.f32 0.0, %v5078
  %5080 = vdwg.mxu0
  %5081 = vmatpush.msra.mxu0 0.0
  %5082 = vmatpush.msra.mxu0 0.0
  %5083 = vmatpush.msra.mxu0 0.0
  %5084 = vmatpush.msra.mxu0 0.0
  %5085 = vmatpush.msra.mxu0 0.0
  %5086 = vmatpush.msra.mxu0 0.0
  %5087 = vmatpush.msra.mxu0 0.0
  %5088 = vmatpush.msra.mxu0 0.0
  %5089 = vmatpush.msra.mxu0 0.0
  %5090 = vmatpush.msra.mxu0 0.0
  %5091 = vmatpush.msra.mxu0 0.0
  %5092 = vmatpush.msra.mxu0 0.0
  %5093 = vmatpush.msra.mxu0 0.0
  %5094 = vmatpush.msra.mxu0 %v4668
  %5095 = vmatpush.msra.mxu0 %v4571
  %5096 = vmatpush.msra.mxu0 %v4570
  %5097 = vmatmul.f32.gmra.mxu0 %v4616
  %v5098 = vpop.f32.mrf.mxu0
  %v5099 = vadd.f32 0.0, %v5098
  %5100 = vmatmul.f32.gmra.mxu0 %v4619
  %v5101 = vpop.f32.mrf.mxu0
  %v5102 = vadd.f32 0.0, %v5101
  %5103 = vmatmul.f32.gmra.mxu0 %v4622
  %v5104 = vpop.f32.mrf.mxu0
  %v5105 = vadd.f32 0.0, %v5104
  %5106 = vmatmul.f32.gmra.mxu0 %v4625
  %v5107 = vpop.f32.mrf.mxu0
  %v5108 = vadd.f32 0.0, %v5107
  %5109 = vmatmul.f32.gmra.mxu0 %v4628
  %v5110 = vpop.f32.mrf.mxu0
  %v5111 = vadd.f32 0.0, %v5110
  %5112 = vdwg.mxu0
  %5113 = vmatpush.msra.mxu0 0.0
  %5114 = vmatpush.msra.mxu0 0.0
  %5115 = vmatpush.msra.mxu0 0.0
  %5116 = vmatpush.msra.mxu0 0.0
  %5117 = vmatpush.msra.mxu0 0.0
  %5118 = vmatpush.msra.mxu0 0.0
  %5119 = vmatpush.msra.mxu0 0.0
  %5120 = vmatpush.msra.mxu0 0.0
  %5121 = vmatpush.msra.mxu0 0.0
  %5122 = vmatpush.msra.mxu0 0.0
  %5123 = vmatpush.msra.mxu0 0.0
  %5124 = vmatpush.msra.mxu0 0.0
  %5125 = vmatpush.msra.mxu0 0.0
  %5126 = vmatpush.msra.mxu0 %v4671
  %5127 = vmatpush.msra.mxu0 %v4574
  %5128 = vmatpush.msra.mxu0 %v4573
  %5129 = vmatmul.f32.gmra.mxu0 %v4616
  %v5130 = vpop.f32.mrf.mxu0
  %v5131 = vadd.f32 0.0, %v5130
  %5132 = vmatmul.f32.gmra.mxu0 %v4619
  %v5133 = vpop.f32.mrf.mxu0
  %v5134 = vadd.f32 0.0, %v5133
  %5135 = vmatmul.f32.gmra.mxu0 %v4622
  %v5136 = vpop.f32.mrf.mxu0
  %v5137 = vadd.f32 0.0, %v5136
  %5138 = vmatmul.f32.gmra.mxu0 %v4625
  %v5139 = vpop.f32.mrf.mxu0
  %v5140 = vadd.f32 0.0, %v5139
  %5141 = vmatmul.f32.gmra.mxu0 %v4628
  %v5142 = vpop.f32.mrf.mxu0
  %v5143 = vadd.f32 0.0, %v5142
  %5144 = vdwg.mxu0
  %5145 = vmatpush.msra.mxu0 0.0
  %5146 = vmatpush.msra.mxu0 0.0
  %5147 = vmatpush.msra.mxu0 0.0
  %5148 = vmatpush.msra.mxu0 0.0
  %5149 = vmatpush.msra.mxu0 0.0
  %5150 = vmatpush.msra.mxu0 0.0
  %5151 = vmatpush.msra.mxu0 0.0
  %5152 = vmatpush.msra.mxu0 0.0
  %5153 = vmatpush.msra.mxu0 0.0
  %5154 = vmatpush.msra.mxu0 0.0
  %5155 = vmatpush.msra.mxu0 0.0
  %5156 = vmatpush.msra.mxu0 0.0
  %5157 = vmatpush.msra.mxu0 0.0
  %5158 = vmatpush.msra.mxu0 %v4674
  %5159 = vmatpush.msra.mxu0 %v4577
  %5160 = vmatpush.msra.mxu0 %v4576
  %5161 = vmatmul.f32.gmra.mxu0 %v4616
  %v5162 = vpop.f32.mrf.mxu0
  %v5163 = vadd.f32 0.0, %v5162
  %5164 = vmatmul.f32.gmra.mxu0 %v4619
  %v5165 = vpop.f32.mrf.mxu0
  %v5166 = vadd.f32 0.0, %v5165
  %5167 = vmatmul.f32.gmra.mxu0 %v4622
  %v5168 = vpop.f32.mrf.mxu0
  %v5169 = vadd.f32 0.0, %v5168
  %5170 = vmatmul.f32.gmra.mxu0 %v4625
  %v5171 = vpop.f32.mrf.mxu0
  %v5172 = vadd.f32 0.0, %v5171
  %5173 = vmatmul.f32.gmra.mxu0 %v4628
  %v5174 = vpop.f32.mrf.mxu0
  %v5175 = vadd.f32 0.0, %v5174
  %5176 = vdwg.mxu0
  %5177 = vmatpush.msra.mxu0 0.0
  %5178 = vmatpush.msra.mxu0 0.0
  %5179 = vmatpush.msra.mxu0 0.0
  %5180 = vmatpush.msra.mxu0 0.0
  %5181 = vmatpush.msra.mxu0 0.0
  %5182 = vmatpush.msra.mxu0 0.0
  %5183 = vmatpush.msra.mxu0 0.0
  %5184 = vmatpush.msra.mxu0 0.0
  %5185 = vmatpush.msra.mxu0 0.0
  %5186 = vmatpush.msra.mxu0 0.0
  %5187 = vmatpush.msra.mxu0 0.0
  %5188 = vmatpush.msra.mxu0 0.0
  %5189 = vmatpush.msra.mxu0 0.0
  %5190 = vmatpush.msra.mxu0 %v4677
  %5191 = vmatpush.msra.mxu0 %v4580
  %5192 = vmatpush.msra.mxu0 %v4579
  %5193 = vmatmul.f32.gmra.mxu0 %v4616
  %v5194 = vpop.f32.mrf.mxu0
  %v5195 = vadd.f32 0.0, %v5194
  %5196 = vmatmul.f32.gmra.mxu0 %v4619
  %v5197 = vpop.f32.mrf.mxu0
  %v5198 = vadd.f32 0.0, %v5197
  %5199 = vmatmul.f32.gmra.mxu0 %v4622
  %v5200 = vpop.f32.mrf.mxu0
  %v5201 = vadd.f32 0.0, %v5200
  %5202 = vmatmul.f32.gmra.mxu0 %v4625
  %v5203 = vpop.f32.mrf.mxu0
  %v5204 = vadd.f32 0.0, %v5203
  %5205 = vmatmul.f32.gmra.mxu0 %v4628
  %v5206 = vpop.f32.mrf.mxu0
  %v5207 = vadd.f32 0.0, %v5206
  %5208 = vdwg.mxu0
  %5209 = vmatpush.msra.mxu0 0.0
  %5210 = vmatpush.msra.mxu0 0.0
  %5211 = vmatpush.msra.mxu0 0.0
  %5212 = vmatpush.msra.mxu0 0.0
  %5213 = vmatpush.msra.mxu0 0.0
  %5214 = vmatpush.msra.mxu0 0.0
  %5215 = vmatpush.msra.mxu0 0.0
  %5216 = vmatpush.msra.mxu0 0.0
  %5217 = vmatpush.msra.mxu0 0.0
  %5218 = vmatpush.msra.mxu0 0.0
  %5219 = vmatpush.msra.mxu0 0.0
  %5220 = vmatpush.msra.mxu0 0.0
  %5221 = vmatpush.msra.mxu0 0.0
  %5222 = vmatpush.msra.mxu0 %v4680
  %5223 = vmatpush.msra.mxu0 %v4583
  %5224 = vmatpush.msra.mxu0 %v4582
  %5225 = vmatmul.f32.gmra.mxu0 %v4616
  %v5226 = vpop.f32.mrf.mxu0
  %v5227 = vadd.f32 0.0, %v5226
  %5228 = vmatmul.f32.gmra.mxu0 %v4619
  %v5229 = vpop.f32.mrf.mxu0
  %v5230 = vadd.f32 0.0, %v5229
  %5231 = vmatmul.f32.gmra.mxu0 %v4622
  %v5232 = vpop.f32.mrf.mxu0
  %v5233 = vadd.f32 0.0, %v5232
  %5234 = vmatmul.f32.gmra.mxu0 %v4625
  %v5235 = vpop.f32.mrf.mxu0
  %v5236 = vadd.f32 0.0, %v5235
  %5237 = vmatmul.f32.gmra.mxu0 %v4628
  %v5238 = vpop.f32.mrf.mxu0
  %v5239 = vadd.f32 0.0, %v5238
  %5240 = vdwg.mxu0
  %5241 = vmatpush.msra.mxu0 0.0
  %5242 = vmatpush.msra.mxu0 0.0
  %5243 = vmatpush.msra.mxu0 0.0
  %5244 = vmatpush.msra.mxu0 0.0
  %5245 = vmatpush.msra.mxu0 0.0
  %5246 = vmatpush.msra.mxu0 0.0
  %5247 = vmatpush.msra.mxu0 0.0
  %5248 = vmatpush.msra.mxu0 0.0
  %5249 = vmatpush.msra.mxu0 0.0
  %5250 = vmatpush.msra.mxu0 0.0
  %5251 = vmatpush.msra.mxu0 0.0
  %5252 = vmatpush.msra.mxu0 0.0
  %5253 = vmatpush.msra.mxu0 0.0
  %5254 = vmatpush.msra.mxu0 %v4683
  %5255 = vmatpush.msra.mxu0 %v4586
  %5256 = vmatpush.msra.mxu0 %v4585
  %5257 = vmatmul.f32.gmra.mxu0 %v4616
  %v5258 = vpop.f32.mrf.mxu0
  %v5259 = vadd.f32 0.0, %v5258
  %5260 = vmatmul.f32.gmra.mxu0 %v4619
  %v5261 = vpop.f32.mrf.mxu0
  %v5262 = vadd.f32 0.0, %v5261
  %5263 = vmatmul.f32.gmra.mxu0 %v4622
  %v5264 = vpop.f32.mrf.mxu0
  %v5265 = vadd.f32 0.0, %v5264
  %5266 = vmatmul.f32.gmra.mxu0 %v4625
  %v5267 = vpop.f32.mrf.mxu0
  %v5268 = vadd.f32 0.0, %v5267
  %5269 = vmatmul.f32.gmra.mxu0 %v4628
  %v5270 = vpop.f32.mrf.mxu0
  %v5271 = vadd.f32 0.0, %v5270
  %5272 = vdwg.mxu0
  %5273 = vmatpush.msra.mxu0 0.0
  %5274 = vmatpush.msra.mxu0 0.0
  %5275 = vmatpush.msra.mxu0 0.0
  %5276 = vmatpush.msra.mxu0 0.0
  %5277 = vmatpush.msra.mxu0 0.0
  %5278 = vmatpush.msra.mxu0 0.0
  %5279 = vmatpush.msra.mxu0 0.0
  %5280 = vmatpush.msra.mxu0 0.0
  %5281 = vmatpush.msra.mxu0 0.0
  %5282 = vmatpush.msra.mxu0 0.0
  %5283 = vmatpush.msra.mxu0 0.0
  %5284 = vmatpush.msra.mxu0 0.0
  %5285 = vmatpush.msra.mxu0 0.0
  %5286 = vmatpush.msra.mxu0 %v4686
  %5287 = vmatpush.msra.mxu0 %v4589
  %5288 = vmatpush.msra.mxu0 %v4588
  %5289 = vmatmul.f32.gmra.mxu0 %v4616
  %v5290 = vpop.f32.mrf.mxu0
  %v5291 = vadd.f32 0.0, %v5290
  %5292 = vmatmul.f32.gmra.mxu0 %v4619
  %v5293 = vpop.f32.mrf.mxu0
  %v5294 = vadd.f32 0.0, %v5293
  %5295 = vmatmul.f32.gmra.mxu0 %v4622
  %v5296 = vpop.f32.mrf.mxu0
  %v5297 = vadd.f32 0.0, %v5296
  %5298 = vmatmul.f32.gmra.mxu0 %v4625
  %v5299 = vpop.f32.mrf.mxu0
  %v5300 = vadd.f32 0.0, %v5299
  %5301 = vmatmul.f32.gmra.mxu0 %v4628
  %v5302 = vpop.f32.mrf.mxu0
  %v5303 = vadd.f32 0.0, %v5302
  %5304 = vdwg.mxu0
  %5305 = vmatpush.msra.mxu0 0.0
  %5306 = vmatpush.msra.mxu0 0.0
  %5307 = vmatpush.msra.mxu0 0.0
  %5308 = vmatpush.msra.mxu0 0.0
  %5309 = vmatpush.msra.mxu0 0.0
  %5310 = vmatpush.msra.mxu0 0.0
  %5311 = vmatpush.msra.mxu0 0.0
  %5312 = vmatpush.msra.mxu0 0.0
  %5313 = vmatpush.msra.mxu0 0.0
  %5314 = vmatpush.msra.mxu0 0.0
  %5315 = vmatpush.msra.mxu0 0.0
  %5316 = vmatpush.msra.mxu0 0.0
  %5317 = vmatpush.msra.mxu0 0.0
  %5318 = vmatpush.msra.mxu0 %v4689
  %5319 = vmatpush.msra.mxu0 %v4592
  %5320 = vmatpush.msra.mxu0 %v4591
  %5321 = vmatmul.f32.gmra.mxu0 %v4616
  %v5322 = vpop.f32.mrf.mxu0
  %v5323 = vadd.f32 0.0, %v5322
  %5324 = vmatmul.f32.gmra.mxu0 %v4619
  %v5325 = vpop.f32.mrf.mxu0
  %v5326 = vadd.f32 0.0, %v5325
  %5327 = vmatmul.f32.gmra.mxu0 %v4622
  %v5328 = vpop.f32.mrf.mxu0
  %v5329 = vadd.f32 0.0, %v5328
  %5330 = vmatmul.f32.gmra.mxu0 %v4625
  %v5331 = vpop.f32.mrf.mxu0
  %v5332 = vadd.f32 0.0, %v5331
  %5333 = vmatmul.f32.gmra.mxu0 %v4628
  %v5334 = vpop.f32.mrf.mxu0
  %v5335 = vadd.f32 0.0, %v5334
  %5336 = vdwg.mxu0
  %5337 = vmatpush.msra.mxu0 0.0
  %5338 = vmatpush.msra.mxu0 0.0
  %5339 = vmatpush.msra.mxu0 0.0
  %5340 = vmatpush.msra.mxu0 0.0
  %5341 = vmatpush.msra.mxu0 0.0
  %5342 = vmatpush.msra.mxu0 0.0
  %5343 = vmatpush.msra.mxu0 0.0
  %5344 = vmatpush.msra.mxu0 0.0
  %5345 = vmatpush.msra.mxu0 0.0
  %5346 = vmatpush.msra.mxu0 0.0
  %5347 = vmatpush.msra.mxu0 0.0
  %5348 = vmatpush.msra.mxu0 0.0
  %5349 = vmatpush.msra.mxu0 0.0
  %5350 = vmatpush.msra.mxu0 %v4692
  %5351 = vmatpush.msra.mxu0 %v4595
  %5352 = vmatpush.msra.mxu0 %v4594
  %5353 = vmatmul.f32.gmra.mxu0 %v4616
  %v5354 = vpop.f32.mrf.mxu0
  %v5355 = vadd.f32 0.0, %v5354
  %5356 = vmatmul.f32.gmra.mxu0 %v4619
  %v5357 = vpop.f32.mrf.mxu0
  %v5358 = vadd.f32 0.0, %v5357
  %5359 = vmatmul.f32.gmra.mxu0 %v4622
  %v5360 = vpop.f32.mrf.mxu0
  %v5361 = vadd.f32 0.0, %v5360
  %5362 = vmatmul.f32.gmra.mxu0 %v4625
  %v5363 = vpop.f32.mrf.mxu0
  %v5364 = vadd.f32 0.0, %v5363
  %5365 = vmatmul.f32.gmra.mxu0 %v4628
  %v5366 = vpop.f32.mrf.mxu0
  %v5367 = vadd.f32 0.0, %v5366
  %5368 = vdwg.mxu0
  %5369 = vmatpush.msra.mxu0 0.0
  %5370 = vmatpush.msra.mxu0 0.0
  %5371 = vmatpush.msra.mxu0 0.0
  %5372 = vmatpush.msra.mxu0 0.0
  %5373 = vmatpush.msra.mxu0 0.0
  %5374 = vmatpush.msra.mxu0 0.0
  %5375 = vmatpush.msra.mxu0 0.0
  %5376 = vmatpush.msra.mxu0 0.0
  %5377 = vmatpush.msra.mxu0 0.0
  %5378 = vmatpush.msra.mxu0 0.0
  %5379 = vmatpush.msra.mxu0 0.0
  %5380 = vmatpush.msra.mxu0 0.0
  %5381 = vmatpush.msra.mxu0 0.0
  %5382 = vmatpush.msra.mxu0 %v4695
  %5383 = vmatpush.msra.mxu0 %v4598
  %5384 = vmatpush.msra.mxu0 %v4597
  %5385 = vmatmul.f32.gmra.mxu0 %v4616
  %v5386 = vpop.f32.mrf.mxu0
  %v5387 = vadd.f32 0.0, %v5386
  %5388 = vmatmul.f32.gmra.mxu0 %v4619
  %v5389 = vpop.f32.mrf.mxu0
  %v5390 = vadd.f32 0.0, %v5389
  %5391 = vmatmul.f32.gmra.mxu0 %v4622
  %v5392 = vpop.f32.mrf.mxu0
  %v5393 = vadd.f32 0.0, %v5392
  %5394 = vmatmul.f32.gmra.mxu0 %v4625
  %v5395 = vpop.f32.mrf.mxu0
  %v5396 = vadd.f32 0.0, %v5395
  %5397 = vmatmul.f32.gmra.mxu0 %v4628
  %v5398 = vpop.f32.mrf.mxu0
  %v5399 = vadd.f32 0.0, %v5398
  %5400 = vdwg.mxu0
  %v5402 = vsel %vm4614, %v4603, 0
  %v5405 = vsel %vm4614, %v4604, 0
  %v5408 = vsel %vm4614, %v4605, 0
  %v5411 = vsel %vm4614, %v4606, 0
  %v5414 = vsel %vm4614, %v4607, 0
  %v5417 = vsel %vm4630, %v4533, 0
  %5419 = vmatpush.msra.mxu0 0.0
  %5420 = vmatpush.msra.mxu0 0.0
  %5421 = vmatpush.msra.mxu0 0.0
  %5422 = vmatpush.msra.mxu0 0.0
  %5423 = vmatpush.msra.mxu0 0.0
  %5424 = vmatpush.msra.mxu0 0.0
  %5425 = vmatpush.msra.mxu0 0.0
  %5426 = vmatpush.msra.mxu0 0.0
  %5427 = vmatpush.msra.mxu0 0.0
  %5428 = vmatpush.msra.mxu0 0.0
  %5429 = vmatpush.msra.mxu0 0.0
  %5430 = vmatpush.msra.mxu0 0.0
  %5431 = vmatpush.msra.mxu0 0.0
  %5432 = vmatpush.msra.mxu0 %v5417
  %5433 = vmatpush.msra.mxu0 %v4532
  %5434 = vmatpush.msra.mxu0 %v4531
  %5435 = vmatmul.f32.gmra.mxu0 %v5402
  %v5436 = vpop.f32.mrf.mxu0
  %v5437 = vadd.f32 %v4715, %v5436
  %5438 = vmatmul.f32.gmra.mxu0 %v5405
  %v5439 = vpop.f32.mrf.mxu0
  %v5440 = vadd.f32 %v4718, %v5439
  %5441 = vmatmul.f32.gmra.mxu0 %v5408
  %v5442 = vpop.f32.mrf.mxu0
  %v5443 = vadd.f32 %v4721, %v5442
  %5444 = vmatmul.f32.gmra.mxu0 %v5411
  %v5445 = vpop.f32.mrf.mxu0
  %v5446 = vadd.f32 %v4724, %v5445
  %5447 = vmatmul.f32.gmra.mxu0 %v5414
  %v5448 = vpop.f32.mrf.mxu0
  %v5449 = vadd.f32 %v4727, %v5448
  %5450 = vdwg.mxu0
  %5451 = vmatpush.msra.mxu0 0.0
  %5452 = vmatpush.msra.mxu0 0.0
  %5453 = vmatpush.msra.mxu0 0.0
  %5454 = vmatpush.msra.mxu0 0.0
  %5455 = vmatpush.msra.mxu0 0.0
  %5456 = vmatpush.msra.mxu0 0.0
  %5457 = vmatpush.msra.mxu0 0.0
  %5458 = vmatpush.msra.mxu0 0.0
  %5459 = vmatpush.msra.mxu0 0.0
  %5460 = vmatpush.msra.mxu0 0.0
  %5461 = vmatpush.msra.mxu0 0.0
  %5462 = vmatpush.msra.mxu0 0.0
  %5463 = vmatpush.msra.mxu0 0.0
  %5464 = vmatpush.msra.mxu0 %v4632
  %5465 = vmatpush.msra.mxu0 %v4535
  %5466 = vmatpush.msra.mxu0 %v4534
  %5467 = vmatmul.f32.gmra.mxu0 %v5402
  %v5468 = vpop.f32.mrf.mxu0
  %v5469 = vadd.f32 %v4747, %v5468
  %5470 = vmatmul.f32.gmra.mxu0 %v5405
  %v5471 = vpop.f32.mrf.mxu0
  %v5472 = vadd.f32 %v4750, %v5471
  %5473 = vmatmul.f32.gmra.mxu0 %v5408
  %v5474 = vpop.f32.mrf.mxu0
  %v5475 = vadd.f32 %v4753, %v5474
  %5476 = vmatmul.f32.gmra.mxu0 %v5411
  %v5477 = vpop.f32.mrf.mxu0
  %v5478 = vadd.f32 %v4756, %v5477
  %5479 = vmatmul.f32.gmra.mxu0 %v5414
  %v5480 = vpop.f32.mrf.mxu0
  %v5481 = vadd.f32 %v4759, %v5480
  %5482 = vdwg.mxu0
  %5483 = vmatpush.msra.mxu0 0.0
  %5484 = vmatpush.msra.mxu0 0.0
  %5485 = vmatpush.msra.mxu0 0.0
  %5486 = vmatpush.msra.mxu0 0.0
  %5487 = vmatpush.msra.mxu0 0.0
  %5488 = vmatpush.msra.mxu0 0.0
  %5489 = vmatpush.msra.mxu0 0.0
  %5490 = vmatpush.msra.mxu0 0.0
  %5491 = vmatpush.msra.mxu0 0.0
  %5492 = vmatpush.msra.mxu0 0.0
  %5493 = vmatpush.msra.mxu0 0.0
  %5494 = vmatpush.msra.mxu0 0.0
  %5495 = vmatpush.msra.mxu0 0.0
  %5496 = vmatpush.msra.mxu0 %v4635
  %5497 = vmatpush.msra.mxu0 %v4538
  %5498 = vmatpush.msra.mxu0 %v4537
  %5499 = vmatmul.f32.gmra.mxu0 %v5402
  %v5500 = vpop.f32.mrf.mxu0
  %v5501 = vadd.f32 %v4779, %v5500
  %5502 = vmatmul.f32.gmra.mxu0 %v5405
  %v5503 = vpop.f32.mrf.mxu0
  %v5504 = vadd.f32 %v4782, %v5503
  %5505 = vmatmul.f32.gmra.mxu0 %v5408
  %v5506 = vpop.f32.mrf.mxu0
  %v5507 = vadd.f32 %v4785, %v5506
  %5508 = vmatmul.f32.gmra.mxu0 %v5411
  %v5509 = vpop.f32.mrf.mxu0
  %v5510 = vadd.f32 %v4788, %v5509
  %5511 = vmatmul.f32.gmra.mxu0 %v5414
  %v5512 = vpop.f32.mrf.mxu0
  %v5513 = vadd.f32 %v4791, %v5512
  %5514 = vdwg.mxu0
  %5515 = vmatpush.msra.mxu0 0.0
  %5516 = vmatpush.msra.mxu0 0.0
  %5517 = vmatpush.msra.mxu0 0.0
  %5518 = vmatpush.msra.mxu0 0.0
  %5519 = vmatpush.msra.mxu0 0.0
  %5520 = vmatpush.msra.mxu0 0.0
  %5521 = vmatpush.msra.mxu0 0.0
  %5522 = vmatpush.msra.mxu0 0.0
  %5523 = vmatpush.msra.mxu0 0.0
  %5524 = vmatpush.msra.mxu0 0.0
  %5525 = vmatpush.msra.mxu0 0.0
  %5526 = vmatpush.msra.mxu0 0.0
  %5527 = vmatpush.msra.mxu0 0.0
  %5528 = vmatpush.msra.mxu0 %v4638
  %5529 = vmatpush.msra.mxu0 %v4541
  %5530 = vmatpush.msra.mxu0 %v4540
  %5531 = vmatmul.f32.gmra.mxu0 %v5402
  %v5532 = vpop.f32.mrf.mxu0
  %v5533 = vadd.f32 %v4811, %v5532
  %5534 = vmatmul.f32.gmra.mxu0 %v5405
  %v5535 = vpop.f32.mrf.mxu0
  %v5536 = vadd.f32 %v4814, %v5535
  %5537 = vmatmul.f32.gmra.mxu0 %v5408
  %v5538 = vpop.f32.mrf.mxu0
  %v5539 = vadd.f32 %v4817, %v5538
  %5540 = vmatmul.f32.gmra.mxu0 %v5411
  %v5541 = vpop.f32.mrf.mxu0
  %v5542 = vadd.f32 %v4820, %v5541
  %5543 = vmatmul.f32.gmra.mxu0 %v5414
  %v5544 = vpop.f32.mrf.mxu0
  %v5545 = vadd.f32 %v4823, %v5544
  %5546 = vdwg.mxu0
  %5547 = vmatpush.msra.mxu0 0.0
  %5548 = vmatpush.msra.mxu0 0.0
  %5549 = vmatpush.msra.mxu0 0.0
  %5550 = vmatpush.msra.mxu0 0.0
  %5551 = vmatpush.msra.mxu0 0.0
  %5552 = vmatpush.msra.mxu0 0.0
  %5553 = vmatpush.msra.mxu0 0.0
  %5554 = vmatpush.msra.mxu0 0.0
  %5555 = vmatpush.msra.mxu0 0.0
  %5556 = vmatpush.msra.mxu0 0.0
  %5557 = vmatpush.msra.mxu0 0.0
  %5558 = vmatpush.msra.mxu0 0.0
  %5559 = vmatpush.msra.mxu0 0.0
  %5560 = vmatpush.msra.mxu0 %v4641
  %5561 = vmatpush.msra.mxu0 %v4544
  %5562 = vmatpush.msra.mxu0 %v4543
  %5563 = vmatmul.f32.gmra.mxu0 %v5402
  %v5564 = vpop.f32.mrf.mxu0
  %v5565 = vadd.f32 %v4843, %v5564
  %5566 = vmatmul.f32.gmra.mxu0 %v5405
  %v5567 = vpop.f32.mrf.mxu0
  %v5568 = vadd.f32 %v4846, %v5567
  %5569 = vmatmul.f32.gmra.mxu0 %v5408
  %v5570 = vpop.f32.mrf.mxu0
  %v5571 = vadd.f32 %v4849, %v5570
  %5572 = vmatmul.f32.gmra.mxu0 %v5411
  %v5573 = vpop.f32.mrf.mxu0
  %v5574 = vadd.f32 %v4852, %v5573
  %5575 = vmatmul.f32.gmra.mxu0 %v5414
  %v5576 = vpop.f32.mrf.mxu0
  %v5577 = vadd.f32 %v4855, %v5576
  %5578 = vdwg.mxu0
  %5579 = vmatpush.msra.mxu0 0.0
  %5580 = vmatpush.msra.mxu0 0.0
  %5581 = vmatpush.msra.mxu0 0.0
  %5582 = vmatpush.msra.mxu0 0.0
  %5583 = vmatpush.msra.mxu0 0.0
  %5584 = vmatpush.msra.mxu0 0.0
  %5585 = vmatpush.msra.mxu0 0.0
  %5586 = vmatpush.msra.mxu0 0.0
  %5587 = vmatpush.msra.mxu0 0.0
  %5588 = vmatpush.msra.mxu0 0.0
  %5589 = vmatpush.msra.mxu0 0.0
  %5590 = vmatpush.msra.mxu0 0.0
  %5591 = vmatpush.msra.mxu0 0.0
  %5592 = vmatpush.msra.mxu0 %v4644
  %5593 = vmatpush.msra.mxu0 %v4547
  %5594 = vmatpush.msra.mxu0 %v4546
  %5595 = vmatmul.f32.gmra.mxu0 %v5402
  %v5596 = vpop.f32.mrf.mxu0
  %v5597 = vadd.f32 %v4875, %v5596
  %5598 = vmatmul.f32.gmra.mxu0 %v5405
  %v5599 = vpop.f32.mrf.mxu0
  %v5600 = vadd.f32 %v4878, %v5599
  %5601 = vmatmul.f32.gmra.mxu0 %v5408
  %v5602 = vpop.f32.mrf.mxu0
  %v5603 = vadd.f32 %v4881, %v5602
  %5604 = vmatmul.f32.gmra.mxu0 %v5411
  %v5605 = vpop.f32.mrf.mxu0
  %v5606 = vadd.f32 %v4884, %v5605
  %5607 = vmatmul.f32.gmra.mxu0 %v5414
  %v5608 = vpop.f32.mrf.mxu0
  %v5609 = vadd.f32 %v4887, %v5608
  %5610 = vdwg.mxu0
  %5611 = vmatpush.msra.mxu0 0.0
  %5612 = vmatpush.msra.mxu0 0.0
  %5613 = vmatpush.msra.mxu0 0.0
  %5614 = vmatpush.msra.mxu0 0.0
  %5615 = vmatpush.msra.mxu0 0.0
  %5616 = vmatpush.msra.mxu0 0.0
  %5617 = vmatpush.msra.mxu0 0.0
  %5618 = vmatpush.msra.mxu0 0.0
  %5619 = vmatpush.msra.mxu0 0.0
  %5620 = vmatpush.msra.mxu0 0.0
  %5621 = vmatpush.msra.mxu0 0.0
  %5622 = vmatpush.msra.mxu0 0.0
  %5623 = vmatpush.msra.mxu0 0.0
  %5624 = vmatpush.msra.mxu0 %v4647
  %5625 = vmatpush.msra.mxu0 %v4550
  %5626 = vmatpush.msra.mxu0 %v4549
  %5627 = vmatmul.f32.gmra.mxu0 %v5402
  %v5628 = vpop.f32.mrf.mxu0
  %v5629 = vadd.f32 %v4907, %v5628
  %5630 = vmatmul.f32.gmra.mxu0 %v5405
  %v5631 = vpop.f32.mrf.mxu0
  %v5632 = vadd.f32 %v4910, %v5631
  %5633 = vmatmul.f32.gmra.mxu0 %v5408
  %v5634 = vpop.f32.mrf.mxu0
  %v5635 = vadd.f32 %v4913, %v5634
  %5636 = vmatmul.f32.gmra.mxu0 %v5411
  %v5637 = vpop.f32.mrf.mxu0
  %v5638 = vadd.f32 %v4916, %v5637
  %5639 = vmatmul.f32.gmra.mxu0 %v5414
  %v5640 = vpop.f32.mrf.mxu0
  %v5641 = vadd.f32 %v4919, %v5640
  %5642 = vdwg.mxu0
  %5643 = vmatpush.msra.mxu0 0.0
  %5644 = vmatpush.msra.mxu0 0.0
  %5645 = vmatpush.msra.mxu0 0.0
  %5646 = vmatpush.msra.mxu0 0.0
  %5647 = vmatpush.msra.mxu0 0.0
  %5648 = vmatpush.msra.mxu0 0.0
  %5649 = vmatpush.msra.mxu0 0.0
  %5650 = vmatpush.msra.mxu0 0.0
  %5651 = vmatpush.msra.mxu0 0.0
  %5652 = vmatpush.msra.mxu0 0.0
  %5653 = vmatpush.msra.mxu0 0.0
  %5654 = vmatpush.msra.mxu0 0.0
  %5655 = vmatpush.msra.mxu0 0.0
  %5656 = vmatpush.msra.mxu0 %v4650
  %5657 = vmatpush.msra.mxu0 %v4553
  %5658 = vmatpush.msra.mxu0 %v4552
  %5659 = vmatmul.f32.gmra.mxu0 %v5402
  %v5660 = vpop.f32.mrf.mxu0
  %v5661 = vadd.f32 %v4939, %v5660
  %5662 = vmatmul.f32.gmra.mxu0 %v5405
  %v5663 = vpop.f32.mrf.mxu0
  %v5664 = vadd.f32 %v4942, %v5663
  %5665 = vmatmul.f32.gmra.mxu0 %v5408
  %v5666 = vpop.f32.mrf.mxu0
  %v5667 = vadd.f32 %v4945, %v5666
  %5668 = vmatmul.f32.gmra.mxu0 %v5411
  %v5669 = vpop.f32.mrf.mxu0
  %v5670 = vadd.f32 %v4948, %v5669
  %5671 = vmatmul.f32.gmra.mxu0 %v5414
  %v5672 = vpop.f32.mrf.mxu0
  %v5673 = vadd.f32 %v4951, %v5672
  %5674 = vdwg.mxu0
  %5675 = vmatpush.msra.mxu0 0.0
  %5676 = vmatpush.msra.mxu0 0.0
  %5677 = vmatpush.msra.mxu0 0.0
  %5678 = vmatpush.msra.mxu0 0.0
  %5679 = vmatpush.msra.mxu0 0.0
  %5680 = vmatpush.msra.mxu0 0.0
  %5681 = vmatpush.msra.mxu0 0.0
  %5682 = vmatpush.msra.mxu0 0.0
  %5683 = vmatpush.msra.mxu0 0.0
  %5684 = vmatpush.msra.mxu0 0.0
  %5685 = vmatpush.msra.mxu0 0.0
  %5686 = vmatpush.msra.mxu0 0.0
  %5687 = vmatpush.msra.mxu0 0.0
  %5688 = vmatpush.msra.mxu0 %v4653
  %5689 = vmatpush.msra.mxu0 %v4556
  %5690 = vmatpush.msra.mxu0 %v4555
  %5691 = vmatmul.f32.gmra.mxu0 %v5402
  %v5692 = vpop.f32.mrf.mxu0
  %v5693 = vadd.f32 %v4971, %v5692
  %5694 = vmatmul.f32.gmra.mxu0 %v5405
  %v5695 = vpop.f32.mrf.mxu0
  %v5696 = vadd.f32 %v4974, %v5695
  %5697 = vmatmul.f32.gmra.mxu0 %v5408
  %v5698 = vpop.f32.mrf.mxu0
  %v5699 = vadd.f32 %v4977, %v5698
  %5700 = vmatmul.f32.gmra.mxu0 %v5411
  %v5701 = vpop.f32.mrf.mxu0
  %v5702 = vadd.f32 %v4980, %v5701
  %5703 = vmatmul.f32.gmra.mxu0 %v5414
  %v5704 = vpop.f32.mrf.mxu0
  %v5705 = vadd.f32 %v4983, %v5704
  %5706 = vdwg.mxu0
  %5707 = vmatpush.msra.mxu0 0.0
  %5708 = vmatpush.msra.mxu0 0.0
  %5709 = vmatpush.msra.mxu0 0.0
  %5710 = vmatpush.msra.mxu0 0.0
  %5711 = vmatpush.msra.mxu0 0.0
  %5712 = vmatpush.msra.mxu0 0.0
  %5713 = vmatpush.msra.mxu0 0.0
  %5714 = vmatpush.msra.mxu0 0.0
  %5715 = vmatpush.msra.mxu0 0.0
  %5716 = vmatpush.msra.mxu0 0.0
  %5717 = vmatpush.msra.mxu0 0.0
  %5718 = vmatpush.msra.mxu0 0.0
  %5719 = vmatpush.msra.mxu0 0.0
  %5720 = vmatpush.msra.mxu0 %v4656
  %5721 = vmatpush.msra.mxu0 %v4559
  %5722 = vmatpush.msra.mxu0 %v4558
  %5723 = vmatmul.f32.gmra.mxu0 %v5402
  %v5724 = vpop.f32.mrf.mxu0
  %v5725 = vadd.f32 %v5003, %v5724
  %5726 = vmatmul.f32.gmra.mxu0 %v5405
  %v5727 = vpop.f32.mrf.mxu0
  %v5728 = vadd.f32 %v5006, %v5727
  %5729 = vmatmul.f32.gmra.mxu0 %v5408
  %v5730 = vpop.f32.mrf.mxu0
  %v5731 = vadd.f32 %v5009, %v5730
  %5732 = vmatmul.f32.gmra.mxu0 %v5411
  %v5733 = vpop.f32.mrf.mxu0
  %v5734 = vadd.f32 %v5012, %v5733
  %5735 = vmatmul.f32.gmra.mxu0 %v5414
  %v5736 = vpop.f32.mrf.mxu0
  %v5737 = vadd.f32 %v5015, %v5736
  %5738 = vdwg.mxu0
  %5739 = vmatpush.msra.mxu0 0.0
  %5740 = vmatpush.msra.mxu0 0.0
  %5741 = vmatpush.msra.mxu0 0.0
  %5742 = vmatpush.msra.mxu0 0.0
  %5743 = vmatpush.msra.mxu0 0.0
  %5744 = vmatpush.msra.mxu0 0.0
  %5745 = vmatpush.msra.mxu0 0.0
  %5746 = vmatpush.msra.mxu0 0.0
  %5747 = vmatpush.msra.mxu0 0.0
  %5748 = vmatpush.msra.mxu0 0.0
  %5749 = vmatpush.msra.mxu0 0.0
  %5750 = vmatpush.msra.mxu0 0.0
  %5751 = vmatpush.msra.mxu0 0.0
  %5752 = vmatpush.msra.mxu0 %v4659
  %5753 = vmatpush.msra.mxu0 %v4562
  %5754 = vmatpush.msra.mxu0 %v4561
  %5755 = vmatmul.f32.gmra.mxu0 %v5402
  %v5756 = vpop.f32.mrf.mxu0
  %v5757 = vadd.f32 %v5035, %v5756
  %5758 = vmatmul.f32.gmra.mxu0 %v5405
  %v5759 = vpop.f32.mrf.mxu0
  %v5760 = vadd.f32 %v5038, %v5759
  %5761 = vmatmul.f32.gmra.mxu0 %v5408
  %v5762 = vpop.f32.mrf.mxu0
  %v5763 = vadd.f32 %v5041, %v5762
  %5764 = vmatmul.f32.gmra.mxu0 %v5411
  %v5765 = vpop.f32.mrf.mxu0
  %v5766 = vadd.f32 %v5044, %v5765
  %5767 = vmatmul.f32.gmra.mxu0 %v5414
  %v5768 = vpop.f32.mrf.mxu0
  %v5769 = vadd.f32 %v5047, %v5768
  %5770 = vdwg.mxu0
  %5771 = vmatpush.msra.mxu0 0.0
  %5772 = vmatpush.msra.mxu0 0.0
  %5773 = vmatpush.msra.mxu0 0.0
  %5774 = vmatpush.msra.mxu0 0.0
  %5775 = vmatpush.msra.mxu0 0.0
  %5776 = vmatpush.msra.mxu0 0.0
  %5777 = vmatpush.msra.mxu0 0.0
  %5778 = vmatpush.msra.mxu0 0.0
  %5779 = vmatpush.msra.mxu0 0.0
  %5780 = vmatpush.msra.mxu0 0.0
  %5781 = vmatpush.msra.mxu0 0.0
  %5782 = vmatpush.msra.mxu0 0.0
  %5783 = vmatpush.msra.mxu0 0.0
  %5784 = vmatpush.msra.mxu0 %v4662
  %5785 = vmatpush.msra.mxu0 %v4565
  %5786 = vmatpush.msra.mxu0 %v4564
  %5787 = vmatmul.f32.gmra.mxu0 %v5402
  %v5788 = vpop.f32.mrf.mxu0
  %v5789 = vadd.f32 %v5067, %v5788
  %5790 = vmatmul.f32.gmra.mxu0 %v5405
  %v5791 = vpop.f32.mrf.mxu0
  %v5792 = vadd.f32 %v5070, %v5791
  %5793 = vmatmul.f32.gmra.mxu0 %v5408
  %v5794 = vpop.f32.mrf.mxu0
  %v5795 = vadd.f32 %v5073, %v5794
  %5796 = vmatmul.f32.gmra.mxu0 %v5411
  %v5797 = vpop.f32.mrf.mxu0
  %v5798 = vadd.f32 %v5076, %v5797
  %5799 = vmatmul.f32.gmra.mxu0 %v5414
  %v5800 = vpop.f32.mrf.mxu0
  %v5801 = vadd.f32 %v5079, %v5800
  %5802 = vdwg.mxu0
  %5803 = vmatpush.msra.mxu0 0.0
  %5804 = vmatpush.msra.mxu0 0.0
  %5805 = vmatpush.msra.mxu0 0.0
  %5806 = vmatpush.msra.mxu0 0.0
  %5807 = vmatpush.msra.mxu0 0.0
  %5808 = vmatpush.msra.mxu0 0.0
  %5809 = vmatpush.msra.mxu0 0.0
  %5810 = vmatpush.msra.mxu0 0.0
  %5811 = vmatpush.msra.mxu0 0.0
  %5812 = vmatpush.msra.mxu0 0.0
  %5813 = vmatpush.msra.mxu0 0.0
  %5814 = vmatpush.msra.mxu0 0.0
  %5815 = vmatpush.msra.mxu0 0.0
  %5816 = vmatpush.msra.mxu0 %v4665
  %5817 = vmatpush.msra.mxu0 %v4568
  %5818 = vmatpush.msra.mxu0 %v4567
  %5819 = vmatmul.f32.gmra.mxu0 %v5402
  %v5820 = vpop.f32.mrf.mxu0
  %v5821 = vadd.f32 %v5099, %v5820
  %5822 = vmatmul.f32.gmra.mxu0 %v5405
  %v5823 = vpop.f32.mrf.mxu0
  %v5824 = vadd.f32 %v5102, %v5823
  %5825 = vmatmul.f32.gmra.mxu0 %v5408
  %v5826 = vpop.f32.mrf.mxu0
  %v5827 = vadd.f32 %v5105, %v5826
  %5828 = vmatmul.f32.gmra.mxu0 %v5411
  %v5829 = vpop.f32.mrf.mxu0
  %v5830 = vadd.f32 %v5108, %v5829
  %5831 = vmatmul.f32.gmra.mxu0 %v5414
  %v5832 = vpop.f32.mrf.mxu0
  %v5833 = vadd.f32 %v5111, %v5832
  %5834 = vdwg.mxu0
  %5835 = vmatpush.msra.mxu0 0.0
  %5836 = vmatpush.msra.mxu0 0.0
  %5837 = vmatpush.msra.mxu0 0.0
  %5838 = vmatpush.msra.mxu0 0.0
  %5839 = vmatpush.msra.mxu0 0.0
  %5840 = vmatpush.msra.mxu0 0.0
  %5841 = vmatpush.msra.mxu0 0.0
  %5842 = vmatpush.msra.mxu0 0.0
  %5843 = vmatpush.msra.mxu0 0.0
  %5844 = vmatpush.msra.mxu0 0.0
  %5845 = vmatpush.msra.mxu0 0.0
  %5846 = vmatpush.msra.mxu0 0.0
  %5847 = vmatpush.msra.mxu0 0.0
  %5848 = vmatpush.msra.mxu0 %v4668
  %5849 = vmatpush.msra.mxu0 %v4571
  %5850 = vmatpush.msra.mxu0 %v4570
  %5851 = vmatmul.f32.gmra.mxu0 %v5402
  %v5852 = vpop.f32.mrf.mxu0
  %v5853 = vadd.f32 %v5131, %v5852
  %5854 = vmatmul.f32.gmra.mxu0 %v5405
  %v5855 = vpop.f32.mrf.mxu0
  %v5856 = vadd.f32 %v5134, %v5855
  %5857 = vmatmul.f32.gmra.mxu0 %v5408
  %v5858 = vpop.f32.mrf.mxu0
  %v5859 = vadd.f32 %v5137, %v5858
  %5860 = vmatmul.f32.gmra.mxu0 %v5411
  %v5861 = vpop.f32.mrf.mxu0
  %v5862 = vadd.f32 %v5140, %v5861
  %5863 = vmatmul.f32.gmra.mxu0 %v5414
  %v5864 = vpop.f32.mrf.mxu0
  %v5865 = vadd.f32 %v5143, %v5864
  %5866 = vdwg.mxu0
  %5867 = vmatpush.msra.mxu0 0.0
  %5868 = vmatpush.msra.mxu0 0.0
  %5869 = vmatpush.msra.mxu0 0.0
  %5870 = vmatpush.msra.mxu0 0.0
  %5871 = vmatpush.msra.mxu0 0.0
  %5872 = vmatpush.msra.mxu0 0.0
  %5873 = vmatpush.msra.mxu0 0.0
  %5874 = vmatpush.msra.mxu0 0.0
  %5875 = vmatpush.msra.mxu0 0.0
  %5876 = vmatpush.msra.mxu0 0.0
  %5877 = vmatpush.msra.mxu0 0.0
  %5878 = vmatpush.msra.mxu0 0.0
  %5879 = vmatpush.msra.mxu0 0.0
  %5880 = vmatpush.msra.mxu0 %v4671
  %5881 = vmatpush.msra.mxu0 %v4574
  %5882 = vmatpush.msra.mxu0 %v4573
  %5883 = vmatmul.f32.gmra.mxu0 %v5402
  %v5884 = vpop.f32.mrf.mxu0
  %v5885 = vadd.f32 %v5163, %v5884
  %5886 = vmatmul.f32.gmra.mxu0 %v5405
  %v5887 = vpop.f32.mrf.mxu0
  %v5888 = vadd.f32 %v5166, %v5887
  %5889 = vmatmul.f32.gmra.mxu0 %v5408
  %v5890 = vpop.f32.mrf.mxu0
  %v5891 = vadd.f32 %v5169, %v5890
  %5892 = vmatmul.f32.gmra.mxu0 %v5411
  %v5893 = vpop.f32.mrf.mxu0
  %v5894 = vadd.f32 %v5172, %v5893
  %5895 = vmatmul.f32.gmra.mxu0 %v5414
  %v5896 = vpop.f32.mrf.mxu0
  %v5897 = vadd.f32 %v5175, %v5896
  %5898 = vdwg.mxu0
  %5899 = vmatpush.msra.mxu0 0.0
  %5900 = vmatpush.msra.mxu0 0.0
  %5901 = vmatpush.msra.mxu0 0.0
  %5902 = vmatpush.msra.mxu0 0.0
  %5903 = vmatpush.msra.mxu0 0.0
  %5904 = vmatpush.msra.mxu0 0.0
  %5905 = vmatpush.msra.mxu0 0.0
  %5906 = vmatpush.msra.mxu0 0.0
  %5907 = vmatpush.msra.mxu0 0.0
  %5908 = vmatpush.msra.mxu0 0.0
  %5909 = vmatpush.msra.mxu0 0.0
  %5910 = vmatpush.msra.mxu0 0.0
  %5911 = vmatpush.msra.mxu0 0.0
  %5912 = vmatpush.msra.mxu0 %v4674
  %5913 = vmatpush.msra.mxu0 %v4577
  %5914 = vmatpush.msra.mxu0 %v4576
  %5915 = vmatmul.f32.gmra.mxu0 %v5402
  %v5916 = vpop.f32.mrf.mxu0
  %v5917 = vadd.f32 %v5195, %v5916
  %5918 = vmatmul.f32.gmra.mxu0 %v5405
  %v5919 = vpop.f32.mrf.mxu0
  %v5920 = vadd.f32 %v5198, %v5919
  %5921 = vmatmul.f32.gmra.mxu0 %v5408
  %v5922 = vpop.f32.mrf.mxu0
  %v5923 = vadd.f32 %v5201, %v5922
  %5924 = vmatmul.f32.gmra.mxu0 %v5411
  %v5925 = vpop.f32.mrf.mxu0
  %v5926 = vadd.f32 %v5204, %v5925
  %5927 = vmatmul.f32.gmra.mxu0 %v5414
  %v5928 = vpop.f32.mrf.mxu0
  %v5929 = vadd.f32 %v5207, %v5928
  %5930 = vdwg.mxu0
  %5931 = vmatpush.msra.mxu0 0.0
  %5932 = vmatpush.msra.mxu0 0.0
  %5933 = vmatpush.msra.mxu0 0.0
  %5934 = vmatpush.msra.mxu0 0.0
  %5935 = vmatpush.msra.mxu0 0.0
  %5936 = vmatpush.msra.mxu0 0.0
  %5937 = vmatpush.msra.mxu0 0.0
  %5938 = vmatpush.msra.mxu0 0.0
  %5939 = vmatpush.msra.mxu0 0.0
  %5940 = vmatpush.msra.mxu0 0.0
  %5941 = vmatpush.msra.mxu0 0.0
  %5942 = vmatpush.msra.mxu0 0.0
  %5943 = vmatpush.msra.mxu0 0.0
  %5944 = vmatpush.msra.mxu0 %v4677
  %5945 = vmatpush.msra.mxu0 %v4580
  %5946 = vmatpush.msra.mxu0 %v4579
  %5947 = vmatmul.f32.gmra.mxu0 %v5402
  %v5948 = vpop.f32.mrf.mxu0
  %v5949 = vadd.f32 %v5227, %v5948
  %5950 = vmatmul.f32.gmra.mxu0 %v5405
  %v5951 = vpop.f32.mrf.mxu0
  %v5952 = vadd.f32 %v5230, %v5951
  %5953 = vmatmul.f32.gmra.mxu0 %v5408
  %v5954 = vpop.f32.mrf.mxu0
  %v5955 = vadd.f32 %v5233, %v5954
  %5956 = vmatmul.f32.gmra.mxu0 %v5411
  %v5957 = vpop.f32.mrf.mxu0
  %v5958 = vadd.f32 %v5236, %v5957
  %5959 = vmatmul.f32.gmra.mxu0 %v5414
  %v5960 = vpop.f32.mrf.mxu0
  %v5961 = vadd.f32 %v5239, %v5960
  %5962 = vdwg.mxu0
  %5963 = vmatpush.msra.mxu0 0.0
  %5964 = vmatpush.msra.mxu0 0.0
  %5965 = vmatpush.msra.mxu0 0.0
  %5966 = vmatpush.msra.mxu0 0.0
  %5967 = vmatpush.msra.mxu0 0.0
  %5968 = vmatpush.msra.mxu0 0.0
  %5969 = vmatpush.msra.mxu0 0.0
  %5970 = vmatpush.msra.mxu0 0.0
  %5971 = vmatpush.msra.mxu0 0.0
  %5972 = vmatpush.msra.mxu0 0.0
  %5973 = vmatpush.msra.mxu0 0.0
  %5974 = vmatpush.msra.mxu0 0.0
  %5975 = vmatpush.msra.mxu0 0.0
  %5976 = vmatpush.msra.mxu0 %v4680
  %5977 = vmatpush.msra.mxu0 %v4583
  %5978 = vmatpush.msra.mxu0 %v4582
  %5979 = vmatmul.f32.gmra.mxu0 %v5402
  %v5980 = vpop.f32.mrf.mxu0
  %v5981 = vadd.f32 %v5259, %v5980
  %5982 = vmatmul.f32.gmra.mxu0 %v5405
  %v5983 = vpop.f32.mrf.mxu0
  %v5984 = vadd.f32 %v5262, %v5983
  %5985 = vmatmul.f32.gmra.mxu0 %v5408
  %v5986 = vpop.f32.mrf.mxu0
  %v5987 = vadd.f32 %v5265, %v5986
  %5988 = vmatmul.f32.gmra.mxu0 %v5411
  %v5989 = vpop.f32.mrf.mxu0
  %v5990 = vadd.f32 %v5268, %v5989
  %5991 = vmatmul.f32.gmra.mxu0 %v5414
  %v5992 = vpop.f32.mrf.mxu0
  %v5993 = vadd.f32 %v5271, %v5992
  %5994 = vdwg.mxu0
  %5995 = vmatpush.msra.mxu0 0.0
  %5996 = vmatpush.msra.mxu0 0.0
  %5997 = vmatpush.msra.mxu0 0.0
  %5998 = vmatpush.msra.mxu0 0.0
  %5999 = vmatpush.msra.mxu0 0.0
  %6000 = vmatpush.msra.mxu0 0.0
  %6001 = vmatpush.msra.mxu0 0.0
  %6002 = vmatpush.msra.mxu0 0.0
  %6003 = vmatpush.msra.mxu0 0.0
  %6004 = vmatpush.msra.mxu0 0.0
  %6005 = vmatpush.msra.mxu0 0.0
  %6006 = vmatpush.msra.mxu0 0.0
  %6007 = vmatpush.msra.mxu0 0.0
  %6008 = vmatpush.msra.mxu0 %v4683
  %6009 = vmatpush.msra.mxu0 %v4586
  %6010 = vmatpush.msra.mxu0 %v4585
  %6011 = vmatmul.f32.gmra.mxu0 %v5402
  %v6012 = vpop.f32.mrf.mxu0
  %v6013 = vadd.f32 %v5291, %v6012
  %6014 = vmatmul.f32.gmra.mxu0 %v5405
  %v6015 = vpop.f32.mrf.mxu0
  %v6016 = vadd.f32 %v5294, %v6015
  %6017 = vmatmul.f32.gmra.mxu0 %v5408
  %v6018 = vpop.f32.mrf.mxu0
  %v6019 = vadd.f32 %v5297, %v6018
  %6020 = vmatmul.f32.gmra.mxu0 %v5411
  %v6021 = vpop.f32.mrf.mxu0
  %v6022 = vadd.f32 %v5300, %v6021
  %6023 = vmatmul.f32.gmra.mxu0 %v5414
  %v6024 = vpop.f32.mrf.mxu0
  %v6025 = vadd.f32 %v5303, %v6024
  %6026 = vdwg.mxu0
  %6027 = vmatpush.msra.mxu0 0.0
  %6028 = vmatpush.msra.mxu0 0.0
  %6029 = vmatpush.msra.mxu0 0.0
  %6030 = vmatpush.msra.mxu0 0.0
  %6031 = vmatpush.msra.mxu0 0.0
  %6032 = vmatpush.msra.mxu0 0.0
  %6033 = vmatpush.msra.mxu0 0.0
  %6034 = vmatpush.msra.mxu0 0.0
  %6035 = vmatpush.msra.mxu0 0.0
  %6036 = vmatpush.msra.mxu0 0.0
  %6037 = vmatpush.msra.mxu0 0.0
  %6038 = vmatpush.msra.mxu0 0.0
  %6039 = vmatpush.msra.mxu0 0.0
  %6040 = vmatpush.msra.mxu0 %v4686
  %6041 = vmatpush.msra.mxu0 %v4589
  %6042 = vmatpush.msra.mxu0 %v4588
  %6043 = vmatmul.f32.gmra.mxu0 %v5402
  %v6044 = vpop.f32.mrf.mxu0
  %v6045 = vadd.f32 %v5323, %v6044
  %6046 = vmatmul.f32.gmra.mxu0 %v5405
  %v6047 = vpop.f32.mrf.mxu0
  %v6048 = vadd.f32 %v5326, %v6047
  %6049 = vmatmul.f32.gmra.mxu0 %v5408
  %v6050 = vpop.f32.mrf.mxu0
  %v6051 = vadd.f32 %v5329, %v6050
  %6052 = vmatmul.f32.gmra.mxu0 %v5411
  %v6053 = vpop.f32.mrf.mxu0
  %v6054 = vadd.f32 %v5332, %v6053
  %6055 = vmatmul.f32.gmra.mxu0 %v5414
  %v6056 = vpop.f32.mrf.mxu0
  %v6057 = vadd.f32 %v5335, %v6056
  %6058 = vdwg.mxu0
  %6059 = vmatpush.msra.mxu0 0.0
  %6060 = vmatpush.msra.mxu0 0.0
  %6061 = vmatpush.msra.mxu0 0.0
  %6062 = vmatpush.msra.mxu0 0.0
  %6063 = vmatpush.msra.mxu0 0.0
  %6064 = vmatpush.msra.mxu0 0.0
  %6065 = vmatpush.msra.mxu0 0.0
  %6066 = vmatpush.msra.mxu0 0.0
  %6067 = vmatpush.msra.mxu0 0.0
  %6068 = vmatpush.msra.mxu0 0.0
  %6069 = vmatpush.msra.mxu0 0.0
  %6070 = vmatpush.msra.mxu0 0.0
  %6071 = vmatpush.msra.mxu0 0.0
  %6072 = vmatpush.msra.mxu0 %v4689
  %6073 = vmatpush.msra.mxu0 %v4592
  %6074 = vmatpush.msra.mxu0 %v4591
  %6075 = vmatmul.f32.gmra.mxu0 %v5402
  %v6076 = vpop.f32.mrf.mxu0
  %v6077 = vadd.f32 %v5355, %v6076
  %6078 = vmatmul.f32.gmra.mxu0 %v5405
  %v6079 = vpop.f32.mrf.mxu0
  %v6080 = vadd.f32 %v5358, %v6079
  %6081 = vmatmul.f32.gmra.mxu0 %v5408
  %v6082 = vpop.f32.mrf.mxu0
  %v6083 = vadd.f32 %v5361, %v6082
  %6084 = vmatmul.f32.gmra.mxu0 %v5411
  %v6085 = vpop.f32.mrf.mxu0
  %v6086 = vadd.f32 %v5364, %v6085
  %6087 = vmatmul.f32.gmra.mxu0 %v5414
  %v6088 = vpop.f32.mrf.mxu0
  %v6089 = vadd.f32 %v5367, %v6088
  %6090 = vdwg.mxu0
  %6091 = vmatpush.msra.mxu0 0.0
  %6092 = vmatpush.msra.mxu0 0.0
  %6093 = vmatpush.msra.mxu0 0.0
  %6094 = vmatpush.msra.mxu0 0.0
  %6095 = vmatpush.msra.mxu0 0.0
  %6096 = vmatpush.msra.mxu0 0.0
  %6097 = vmatpush.msra.mxu0 0.0
  %6098 = vmatpush.msra.mxu0 0.0
  %6099 = vmatpush.msra.mxu0 0.0
  %6100 = vmatpush.msra.mxu0 0.0
  %6101 = vmatpush.msra.mxu0 0.0
  %6102 = vmatpush.msra.mxu0 0.0
  %6103 = vmatpush.msra.mxu0 0.0
  %6104 = vmatpush.msra.mxu0 %v4692
  %6105 = vmatpush.msra.mxu0 %v4595
  %6106 = vmatpush.msra.mxu0 %v4594
  %6107 = vmatmul.f32.gmra.mxu0 %v5402
  %v6108 = vpop.f32.mrf.mxu0
  %v6109 = vadd.f32 %v5387, %v6108
  %6110 = vmatmul.f32.gmra.mxu0 %v5405
  %v6111 = vpop.f32.mrf.mxu0
  %v6112 = vadd.f32 %v5390, %v6111
  %6113 = vmatmul.f32.gmra.mxu0 %v5408
  %v6114 = vpop.f32.mrf.mxu0
  %v6115 = vadd.f32 %v5393, %v6114
  %6116 = vmatmul.f32.gmra.mxu0 %v5411
  %v6117 = vpop.f32.mrf.mxu0
  %v6118 = vadd.f32 %v5396, %v6117
  %6119 = vmatmul.f32.gmra.mxu0 %v5414
  %v6120 = vpop.f32.mrf.mxu0
  %v6121 = vadd.f32 %v5399, %v6120
  %6122 = vdwg.mxu0
  %s6123 = scalar_lea.vmem %s3, 80
  %v6124 = vld [vmem:[%s6123] sm:$0xff]
  %v6125 = vld [vmem:[%s6123 + $0x8] sm:$0xff]
  %v6126 = vld [vmem:[%s6123 + $0x10] sm:$0xff]
  %v6127 = vld [vmem:[%s6123 + $0x18] sm:$0xff]
  %v6128 = vld [vmem:[%s6123 + $0x20] sm:$0xff]
  %v6130 = vsel %vm4614, %v6124, 0
  %v6133 = vsel %vm4614, %v6125, 0
  %v6136 = vsel %vm4614, %v6126, 0
  %v6139 = vsel %vm4614, %v6127, 0
  %v6142 = vsel %vm4614, %v6128, 0
  %v6145 = vsel %vm4630, %v4602, 0
  %6147 = vmatpush.msra.mxu0 0.0
  %6148 = vmatpush.msra.mxu0 0.0
  %6149 = vmatpush.msra.mxu0 0.0
  %6150 = vmatpush.msra.mxu0 0.0
  %6151 = vmatpush.msra.mxu0 0.0
  %6152 = vmatpush.msra.mxu0 0.0
  %6153 = vmatpush.msra.mxu0 0.0
  %6154 = vmatpush.msra.mxu0 0.0
  %6155 = vmatpush.msra.mxu0 0.0
  %6156 = vmatpush.msra.mxu0 0.0
  %6157 = vmatpush.msra.mxu0 0.0
  %6158 = vmatpush.msra.mxu0 0.0
  %6159 = vmatpush.msra.mxu0 0.0
  %6160 = vmatpush.msra.mxu0 %v4635
  %6161 = vmatpush.msra.mxu0 %v4538
  %6162 = vmatpush.msra.mxu0 %v4537
  %6163 = vmatmul.f32.gmra.mxu0 %v6130
  %v6164 = vpop.f32.mrf.mxu0
  %v6165 = vadd.f32 0.0, %v6164
  %6166 = vmatmul.f32.gmra.mxu0 %v6133
  %v6167 = vpop.f32.mrf.mxu0
  %v6168 = vadd.f32 0.0, %v6167
  %6169 = vmatmul.f32.gmra.mxu0 %v6136
  %v6170 = vpop.f32.mrf.mxu0
  %v6171 = vadd.f32 0.0, %v6170
  %6172 = vmatmul.f32.gmra.mxu0 %v6139
  %v6173 = vpop.f32.mrf.mxu0
  %v6174 = vadd.f32 0.0, %v6173
  %6175 = vmatmul.f32.gmra.mxu0 %v6142
  %v6176 = vpop.f32.mrf.mxu0
  %v6177 = vadd.f32 0.0, %v6176
  %6178 = vdwg.mxu0
  %6179 = vmatpush.msra.mxu0 0.0
  %6180 = vmatpush.msra.mxu0 0.0
  %6181 = vmatpush.msra.mxu0 0.0
  %6182 = vmatpush.msra.mxu0 0.0
  %6183 = vmatpush.msra.mxu0 0.0
  %6184 = vmatpush.msra.mxu0 0.0
  %6185 = vmatpush.msra.mxu0 0.0
  %6186 = vmatpush.msra.mxu0 0.0
  %6187 = vmatpush.msra.mxu0 0.0
  %6188 = vmatpush.msra.mxu0 0.0
  %6189 = vmatpush.msra.mxu0 0.0
  %6190 = vmatpush.msra.mxu0 0.0
  %6191 = vmatpush.msra.mxu0 0.0
  %6192 = vmatpush.msra.mxu0 %v4638
  %6193 = vmatpush.msra.mxu0 %v4541
  %6194 = vmatpush.msra.mxu0 %v4540
  %6195 = vmatmul.f32.gmra.mxu0 %v6130
  %v6196 = vpop.f32.mrf.mxu0
  %v6197 = vadd.f32 0.0, %v6196
  %6198 = vmatmul.f32.gmra.mxu0 %v6133
  %v6199 = vpop.f32.mrf.mxu0
  %v6200 = vadd.f32 0.0, %v6199
  %6201 = vmatmul.f32.gmra.mxu0 %v6136
  %v6202 = vpop.f32.mrf.mxu0
  %v6203 = vadd.f32 0.0, %v6202
  %6204 = vmatmul.f32.gmra.mxu0 %v6139
  %v6205 = vpop.f32.mrf.mxu0
  %v6206 = vadd.f32 0.0, %v6205
  %6207 = vmatmul.f32.gmra.mxu0 %v6142
  %v6208 = vpop.f32.mrf.mxu0
  %v6209 = vadd.f32 0.0, %v6208
  %6210 = vdwg.mxu0
  %6211 = vmatpush.msra.mxu0 0.0
  %6212 = vmatpush.msra.mxu0 0.0
  %6213 = vmatpush.msra.mxu0 0.0
  %6214 = vmatpush.msra.mxu0 0.0
  %6215 = vmatpush.msra.mxu0 0.0
  %6216 = vmatpush.msra.mxu0 0.0
  %6217 = vmatpush.msra.mxu0 0.0
  %6218 = vmatpush.msra.mxu0 0.0
  %6219 = vmatpush.msra.mxu0 0.0
  %6220 = vmatpush.msra.mxu0 0.0
  %6221 = vmatpush.msra.mxu0 0.0
  %6222 = vmatpush.msra.mxu0 0.0
  %6223 = vmatpush.msra.mxu0 0.0
  %6224 = vmatpush.msra.mxu0 %v4641
  %6225 = vmatpush.msra.mxu0 %v4544
  %6226 = vmatpush.msra.mxu0 %v4543
  %6227 = vmatmul.f32.gmra.mxu0 %v6130
  %v6228 = vpop.f32.mrf.mxu0
  %v6229 = vadd.f32 0.0, %v6228
  %6230 = vmatmul.f32.gmra.mxu0 %v6133
  %v6231 = vpop.f32.mrf.mxu0
  %v6232 = vadd.f32 0.0, %v6231
  %6233 = vmatmul.f32.gmra.mxu0 %v6136
  %v6234 = vpop.f32.mrf.mxu0
  %v6235 = vadd.f32 0.0, %v6234
  %6236 = vmatmul.f32.gmra.mxu0 %v6139
  %v6237 = vpop.f32.mrf.mxu0
  %v6238 = vadd.f32 0.0, %v6237
  %6239 = vmatmul.f32.gmra.mxu0 %v6142
  %v6240 = vpop.f32.mrf.mxu0
  %v6241 = vadd.f32 0.0, %v6240
  %6242 = vdwg.mxu0
  %6243 = vmatpush.msra.mxu0 0.0
  %6244 = vmatpush.msra.mxu0 0.0
  %6245 = vmatpush.msra.mxu0 0.0
  %6246 = vmatpush.msra.mxu0 0.0
  %6247 = vmatpush.msra.mxu0 0.0
  %6248 = vmatpush.msra.mxu0 0.0
  %6249 = vmatpush.msra.mxu0 0.0
  %6250 = vmatpush.msra.mxu0 0.0
  %6251 = vmatpush.msra.mxu0 0.0
  %6252 = vmatpush.msra.mxu0 0.0
  %6253 = vmatpush.msra.mxu0 0.0
  %6254 = vmatpush.msra.mxu0 0.0
  %6255 = vmatpush.msra.mxu0 0.0
  %6256 = vmatpush.msra.mxu0 %v4644
  %6257 = vmatpush.msra.mxu0 %v4547
  %6258 = vmatpush.msra.mxu0 %v4546
  %6259 = vmatmul.f32.gmra.mxu0 %v6130
  %v6260 = vpop.f32.mrf.mxu0
  %v6261 = vadd.f32 0.0, %v6260
  %6262 = vmatmul.f32.gmra.mxu0 %v6133
  %v6263 = vpop.f32.mrf.mxu0
  %v6264 = vadd.f32 0.0, %v6263
  %6265 = vmatmul.f32.gmra.mxu0 %v6136
  %v6266 = vpop.f32.mrf.mxu0
  %v6267 = vadd.f32 0.0, %v6266
  %6268 = vmatmul.f32.gmra.mxu0 %v6139
  %v6269 = vpop.f32.mrf.mxu0
  %v6270 = vadd.f32 0.0, %v6269
  %6271 = vmatmul.f32.gmra.mxu0 %v6142
  %v6272 = vpop.f32.mrf.mxu0
  %v6273 = vadd.f32 0.0, %v6272
  %6274 = vdwg.mxu0
  %6275 = vmatpush.msra.mxu0 0.0
  %6276 = vmatpush.msra.mxu0 0.0
  %6277 = vmatpush.msra.mxu0 0.0
  %6278 = vmatpush.msra.mxu0 0.0
  %6279 = vmatpush.msra.mxu0 0.0
  %6280 = vmatpush.msra.mxu0 0.0
  %6281 = vmatpush.msra.mxu0 0.0
  %6282 = vmatpush.msra.mxu0 0.0
  %6283 = vmatpush.msra.mxu0 0.0
  %6284 = vmatpush.msra.mxu0 0.0
  %6285 = vmatpush.msra.mxu0 0.0
  %6286 = vmatpush.msra.mxu0 0.0
  %6287 = vmatpush.msra.mxu0 0.0
  %6288 = vmatpush.msra.mxu0 %v4647
  %6289 = vmatpush.msra.mxu0 %v4550
  %6290 = vmatpush.msra.mxu0 %v4549
  %6291 = vmatmul.f32.gmra.mxu0 %v6130
  %v6292 = vpop.f32.mrf.mxu0
  %v6293 = vadd.f32 0.0, %v6292
  %6294 = vmatmul.f32.gmra.mxu0 %v6133
  %v6295 = vpop.f32.mrf.mxu0
  %v6296 = vadd.f32 0.0, %v6295
  %6297 = vmatmul.f32.gmra.mxu0 %v6136
  %v6298 = vpop.f32.mrf.mxu0
  %v6299 = vadd.f32 0.0, %v6298
  %6300 = vmatmul.f32.gmra.mxu0 %v6139
  %v6301 = vpop.f32.mrf.mxu0
  %v6302 = vadd.f32 0.0, %v6301
  %6303 = vmatmul.f32.gmra.mxu0 %v6142
  %v6304 = vpop.f32.mrf.mxu0
  %v6305 = vadd.f32 0.0, %v6304
  %6306 = vdwg.mxu0
  %6307 = vmatpush.msra.mxu0 0.0
  %6308 = vmatpush.msra.mxu0 0.0
  %6309 = vmatpush.msra.mxu0 0.0
  %6310 = vmatpush.msra.mxu0 0.0
  %6311 = vmatpush.msra.mxu0 0.0
  %6312 = vmatpush.msra.mxu0 0.0
  %6313 = vmatpush.msra.mxu0 0.0
  %6314 = vmatpush.msra.mxu0 0.0
  %6315 = vmatpush.msra.mxu0 0.0
  %6316 = vmatpush.msra.mxu0 0.0
  %6317 = vmatpush.msra.mxu0 0.0
  %6318 = vmatpush.msra.mxu0 0.0
  %6319 = vmatpush.msra.mxu0 0.0
  %6320 = vmatpush.msra.mxu0 %v4650
  %6321 = vmatpush.msra.mxu0 %v4553
  %6322 = vmatpush.msra.mxu0 %v4552
  %6323 = vmatmul.f32.gmra.mxu0 %v6130
  %v6324 = vpop.f32.mrf.mxu0
  %v6325 = vadd.f32 0.0, %v6324
  %6326 = vmatmul.f32.gmra.mxu0 %v6133
  %v6327 = vpop.f32.mrf.mxu0
  %v6328 = vadd.f32 0.0, %v6327
  %6329 = vmatmul.f32.gmra.mxu0 %v6136
  %v6330 = vpop.f32.mrf.mxu0
  %v6331 = vadd.f32 0.0, %v6330
  %6332 = vmatmul.f32.gmra.mxu0 %v6139
  %v6333 = vpop.f32.mrf.mxu0
  %v6334 = vadd.f32 0.0, %v6333
  %6335 = vmatmul.f32.gmra.mxu0 %v6142
  %v6336 = vpop.f32.mrf.mxu0
  %v6337 = vadd.f32 0.0, %v6336
  %6338 = vdwg.mxu0
  %6339 = vmatpush.msra.mxu0 0.0
  %6340 = vmatpush.msra.mxu0 0.0
  %6341 = vmatpush.msra.mxu0 0.0
  %6342 = vmatpush.msra.mxu0 0.0
  %6343 = vmatpush.msra.mxu0 0.0
  %6344 = vmatpush.msra.mxu0 0.0
  %6345 = vmatpush.msra.mxu0 0.0
  %6346 = vmatpush.msra.mxu0 0.0
  %6347 = vmatpush.msra.mxu0 0.0
  %6348 = vmatpush.msra.mxu0 0.0
  %6349 = vmatpush.msra.mxu0 0.0
  %6350 = vmatpush.msra.mxu0 0.0
  %6351 = vmatpush.msra.mxu0 0.0
  %6352 = vmatpush.msra.mxu0 %v4653
  %6353 = vmatpush.msra.mxu0 %v4556
  %6354 = vmatpush.msra.mxu0 %v4555
  %6355 = vmatmul.f32.gmra.mxu0 %v6130
  %v6356 = vpop.f32.mrf.mxu0
  %v6357 = vadd.f32 0.0, %v6356
  %6358 = vmatmul.f32.gmra.mxu0 %v6133
  %v6359 = vpop.f32.mrf.mxu0
  %v6360 = vadd.f32 0.0, %v6359
  %6361 = vmatmul.f32.gmra.mxu0 %v6136
  %v6362 = vpop.f32.mrf.mxu0
  %v6363 = vadd.f32 0.0, %v6362
  %6364 = vmatmul.f32.gmra.mxu0 %v6139
  %v6365 = vpop.f32.mrf.mxu0
  %v6366 = vadd.f32 0.0, %v6365
  %6367 = vmatmul.f32.gmra.mxu0 %v6142
  %v6368 = vpop.f32.mrf.mxu0
  %v6369 = vadd.f32 0.0, %v6368
  %6370 = vdwg.mxu0
  %6371 = vmatpush.msra.mxu0 0.0
  %6372 = vmatpush.msra.mxu0 0.0
  %6373 = vmatpush.msra.mxu0 0.0
  %6374 = vmatpush.msra.mxu0 0.0
  %6375 = vmatpush.msra.mxu0 0.0
  %6376 = vmatpush.msra.mxu0 0.0
  %6377 = vmatpush.msra.mxu0 0.0
  %6378 = vmatpush.msra.mxu0 0.0
  %6379 = vmatpush.msra.mxu0 0.0
  %6380 = vmatpush.msra.mxu0 0.0
  %6381 = vmatpush.msra.mxu0 0.0
  %6382 = vmatpush.msra.mxu0 0.0
  %6383 = vmatpush.msra.mxu0 0.0
  %6384 = vmatpush.msra.mxu0 %v4656
  %6385 = vmatpush.msra.mxu0 %v4559
  %6386 = vmatpush.msra.mxu0 %v4558
  %6387 = vmatmul.f32.gmra.mxu0 %v6130
  %v6388 = vpop.f32.mrf.mxu0
  %v6389 = vadd.f32 0.0, %v6388
  %6390 = vmatmul.f32.gmra.mxu0 %v6133
  %v6391 = vpop.f32.mrf.mxu0
  %v6392 = vadd.f32 0.0, %v6391
  %6393 = vmatmul.f32.gmra.mxu0 %v6136
  %v6394 = vpop.f32.mrf.mxu0
  %v6395 = vadd.f32 0.0, %v6394
  %6396 = vmatmul.f32.gmra.mxu0 %v6139
  %v6397 = vpop.f32.mrf.mxu0
  %v6398 = vadd.f32 0.0, %v6397
  %6399 = vmatmul.f32.gmra.mxu0 %v6142
  %v6400 = vpop.f32.mrf.mxu0
  %v6401 = vadd.f32 0.0, %v6400
  %6402 = vdwg.mxu0
  %6403 = vmatpush.msra.mxu0 0.0
  %6404 = vmatpush.msra.mxu0 0.0
  %6405 = vmatpush.msra.mxu0 0.0
  %6406 = vmatpush.msra.mxu0 0.0
  %6407 = vmatpush.msra.mxu0 0.0
  %6408 = vmatpush.msra.mxu0 0.0
  %6409 = vmatpush.msra.mxu0 0.0
  %6410 = vmatpush.msra.mxu0 0.0
  %6411 = vmatpush.msra.mxu0 0.0
  %6412 = vmatpush.msra.mxu0 0.0
  %6413 = vmatpush.msra.mxu0 0.0
  %6414 = vmatpush.msra.mxu0 0.0
  %6415 = vmatpush.msra.mxu0 0.0
  %6416 = vmatpush.msra.mxu0 %v4659
  %6417 = vmatpush.msra.mxu0 %v4562
  %6418 = vmatpush.msra.mxu0 %v4561
  %6419 = vmatmul.f32.gmra.mxu0 %v6130
  %v6420 = vpop.f32.mrf.mxu0
  %v6421 = vadd.f32 0.0, %v6420
  %6422 = vmatmul.f32.gmra.mxu0 %v6133
  %v6423 = vpop.f32.mrf.mxu0
  %v6424 = vadd.f32 0.0, %v6423
  %6425 = vmatmul.f32.gmra.mxu0 %v6136
  %v6426 = vpop.f32.mrf.mxu0
  %v6427 = vadd.f32 0.0, %v6426
  %6428 = vmatmul.f32.gmra.mxu0 %v6139
  %v6429 = vpop.f32.mrf.mxu0
  %v6430 = vadd.f32 0.0, %v6429
  %6431 = vmatmul.f32.gmra.mxu0 %v6142
  %v6432 = vpop.f32.mrf.mxu0
  %v6433 = vadd.f32 0.0, %v6432
  %6434 = vdwg.mxu0
  %6435 = vmatpush.msra.mxu0 0.0
  %6436 = vmatpush.msra.mxu0 0.0
  %6437 = vmatpush.msra.mxu0 0.0
  %6438 = vmatpush.msra.mxu0 0.0
  %6439 = vmatpush.msra.mxu0 0.0
  %6440 = vmatpush.msra.mxu0 0.0
  %6441 = vmatpush.msra.mxu0 0.0
  %6442 = vmatpush.msra.mxu0 0.0
  %6443 = vmatpush.msra.mxu0 0.0
  %6444 = vmatpush.msra.mxu0 0.0
  %6445 = vmatpush.msra.mxu0 0.0
  %6446 = vmatpush.msra.mxu0 0.0
  %6447 = vmatpush.msra.mxu0 0.0
  %6448 = vmatpush.msra.mxu0 %v4662
  %6449 = vmatpush.msra.mxu0 %v4565
  %6450 = vmatpush.msra.mxu0 %v4564
  %6451 = vmatmul.f32.gmra.mxu0 %v6130
  %v6452 = vpop.f32.mrf.mxu0
  %v6453 = vadd.f32 0.0, %v6452
  %6454 = vmatmul.f32.gmra.mxu0 %v6133
  %v6455 = vpop.f32.mrf.mxu0
  %v6456 = vadd.f32 0.0, %v6455
  %6457 = vmatmul.f32.gmra.mxu0 %v6136
  %v6458 = vpop.f32.mrf.mxu0
  %v6459 = vadd.f32 0.0, %v6458
  %6460 = vmatmul.f32.gmra.mxu0 %v6139
  %v6461 = vpop.f32.mrf.mxu0
  %v6462 = vadd.f32 0.0, %v6461
  %6463 = vmatmul.f32.gmra.mxu0 %v6142
  %v6464 = vpop.f32.mrf.mxu0
  %v6465 = vadd.f32 0.0, %v6464
  %6466 = vdwg.mxu0
  %6467 = vmatpush.msra.mxu0 0.0
  %6468 = vmatpush.msra.mxu0 0.0
  %6469 = vmatpush.msra.mxu0 0.0
  %6470 = vmatpush.msra.mxu0 0.0
  %6471 = vmatpush.msra.mxu0 0.0
  %6472 = vmatpush.msra.mxu0 0.0
  %6473 = vmatpush.msra.mxu0 0.0
  %6474 = vmatpush.msra.mxu0 0.0
  %6475 = vmatpush.msra.mxu0 0.0
  %6476 = vmatpush.msra.mxu0 0.0
  %6477 = vmatpush.msra.mxu0 0.0
  %6478 = vmatpush.msra.mxu0 0.0
  %6479 = vmatpush.msra.mxu0 0.0
  %6480 = vmatpush.msra.mxu0 %v4665
  %6481 = vmatpush.msra.mxu0 %v4568
  %6482 = vmatpush.msra.mxu0 %v4567
  %6483 = vmatmul.f32.gmra.mxu0 %v6130
  %v6484 = vpop.f32.mrf.mxu0
  %v6485 = vadd.f32 0.0, %v6484
  %6486 = vmatmul.f32.gmra.mxu0 %v6133
  %v6487 = vpop.f32.mrf.mxu0
  %v6488 = vadd.f32 0.0, %v6487
  %6489 = vmatmul.f32.gmra.mxu0 %v6136
  %v6490 = vpop.f32.mrf.mxu0
  %v6491 = vadd.f32 0.0, %v6490
  %6492 = vmatmul.f32.gmra.mxu0 %v6139
  %v6493 = vpop.f32.mrf.mxu0
  %v6494 = vadd.f32 0.0, %v6493
  %6495 = vmatmul.f32.gmra.mxu0 %v6142
  %v6496 = vpop.f32.mrf.mxu0
  %v6497 = vadd.f32 0.0, %v6496
  %6498 = vdwg.mxu0
  %6499 = vmatpush.msra.mxu0 0.0
  %6500 = vmatpush.msra.mxu0 0.0
  %6501 = vmatpush.msra.mxu0 0.0
  %6502 = vmatpush.msra.mxu0 0.0
  %6503 = vmatpush.msra.mxu0 0.0
  %6504 = vmatpush.msra.mxu0 0.0
  %6505 = vmatpush.msra.mxu0 0.0
  %6506 = vmatpush.msra.mxu0 0.0
  %6507 = vmatpush.msra.mxu0 0.0
  %6508 = vmatpush.msra.mxu0 0.0
  %6509 = vmatpush.msra.mxu0 0.0
  %6510 = vmatpush.msra.mxu0 0.0
  %6511 = vmatpush.msra.mxu0 0.0
  %6512 = vmatpush.msra.mxu0 %v4668
  %6513 = vmatpush.msra.mxu0 %v4571
  %6514 = vmatpush.msra.mxu0 %v4570
  %6515 = vmatmul.f32.gmra.mxu0 %v6130
  %v6516 = vpop.f32.mrf.mxu0
  %v6517 = vadd.f32 0.0, %v6516
  %6518 = vmatmul.f32.gmra.mxu0 %v6133
  %v6519 = vpop.f32.mrf.mxu0
  %v6520 = vadd.f32 0.0, %v6519
  %6521 = vmatmul.f32.gmra.mxu0 %v6136
  %v6522 = vpop.f32.mrf.mxu0
  %v6523 = vadd.f32 0.0, %v6522
  %6524 = vmatmul.f32.gmra.mxu0 %v6139
  %v6525 = vpop.f32.mrf.mxu0
  %v6526 = vadd.f32 0.0, %v6525
  %6527 = vmatmul.f32.gmra.mxu0 %v6142
  %v6528 = vpop.f32.mrf.mxu0
  %v6529 = vadd.f32 0.0, %v6528
  %6530 = vdwg.mxu0
  %6531 = vmatpush.msra.mxu0 0.0
  %6532 = vmatpush.msra.mxu0 0.0
  %6533 = vmatpush.msra.mxu0 0.0
  %6534 = vmatpush.msra.mxu0 0.0
  %6535 = vmatpush.msra.mxu0 0.0
  %6536 = vmatpush.msra.mxu0 0.0
  %6537 = vmatpush.msra.mxu0 0.0
  %6538 = vmatpush.msra.mxu0 0.0
  %6539 = vmatpush.msra.mxu0 0.0
  %6540 = vmatpush.msra.mxu0 0.0
  %6541 = vmatpush.msra.mxu0 0.0
  %6542 = vmatpush.msra.mxu0 0.0
  %6543 = vmatpush.msra.mxu0 0.0
  %6544 = vmatpush.msra.mxu0 %v4671
  %6545 = vmatpush.msra.mxu0 %v4574
  %6546 = vmatpush.msra.mxu0 %v4573
  %6547 = vmatmul.f32.gmra.mxu0 %v6130
  %v6548 = vpop.f32.mrf.mxu0
  %v6549 = vadd.f32 0.0, %v6548
  %6550 = vmatmul.f32.gmra.mxu0 %v6133
  %v6551 = vpop.f32.mrf.mxu0
  %v6552 = vadd.f32 0.0, %v6551
  %6553 = vmatmul.f32.gmra.mxu0 %v6136
  %v6554 = vpop.f32.mrf.mxu0
  %v6555 = vadd.f32 0.0, %v6554
  %6556 = vmatmul.f32.gmra.mxu0 %v6139
  %v6557 = vpop.f32.mrf.mxu0
  %v6558 = vadd.f32 0.0, %v6557
  %6559 = vmatmul.f32.gmra.mxu0 %v6142
  %v6560 = vpop.f32.mrf.mxu0
  %v6561 = vadd.f32 0.0, %v6560
  %6562 = vdwg.mxu0
  %6563 = vmatpush.msra.mxu0 0.0
  %6564 = vmatpush.msra.mxu0 0.0
  %6565 = vmatpush.msra.mxu0 0.0
  %6566 = vmatpush.msra.mxu0 0.0
  %6567 = vmatpush.msra.mxu0 0.0
  %6568 = vmatpush.msra.mxu0 0.0
  %6569 = vmatpush.msra.mxu0 0.0
  %6570 = vmatpush.msra.mxu0 0.0
  %6571 = vmatpush.msra.mxu0 0.0
  %6572 = vmatpush.msra.mxu0 0.0
  %6573 = vmatpush.msra.mxu0 0.0
  %6574 = vmatpush.msra.mxu0 0.0
  %6575 = vmatpush.msra.mxu0 0.0
  %6576 = vmatpush.msra.mxu0 %v4674
  %6577 = vmatpush.msra.mxu0 %v4577
  %6578 = vmatpush.msra.mxu0 %v4576
  %6579 = vmatmul.f32.gmra.mxu0 %v6130
  %v6580 = vpop.f32.mrf.mxu0
  %v6581 = vadd.f32 0.0, %v6580
  %6582 = vmatmul.f32.gmra.mxu0 %v6133
  %v6583 = vpop.f32.mrf.mxu0
  %v6584 = vadd.f32 0.0, %v6583
  %6585 = vmatmul.f32.gmra.mxu0 %v6136
  %v6586 = vpop.f32.mrf.mxu0
  %v6587 = vadd.f32 0.0, %v6586
  %6588 = vmatmul.f32.gmra.mxu0 %v6139
  %v6589 = vpop.f32.mrf.mxu0
  %v6590 = vadd.f32 0.0, %v6589
  %6591 = vmatmul.f32.gmra.mxu0 %v6142
  %v6592 = vpop.f32.mrf.mxu0
  %v6593 = vadd.f32 0.0, %v6592
  %6594 = vdwg.mxu0
  %6595 = vmatpush.msra.mxu0 0.0
  %6596 = vmatpush.msra.mxu0 0.0
  %6597 = vmatpush.msra.mxu0 0.0
  %6598 = vmatpush.msra.mxu0 0.0
  %6599 = vmatpush.msra.mxu0 0.0
  %6600 = vmatpush.msra.mxu0 0.0
  %6601 = vmatpush.msra.mxu0 0.0
  %6602 = vmatpush.msra.mxu0 0.0
  %6603 = vmatpush.msra.mxu0 0.0
  %6604 = vmatpush.msra.mxu0 0.0
  %6605 = vmatpush.msra.mxu0 0.0
  %6606 = vmatpush.msra.mxu0 0.0
  %6607 = vmatpush.msra.mxu0 0.0
  %6608 = vmatpush.msra.mxu0 %v4677
  %6609 = vmatpush.msra.mxu0 %v4580
  %6610 = vmatpush.msra.mxu0 %v4579
  %6611 = vmatmul.f32.gmra.mxu0 %v6130
  %v6612 = vpop.f32.mrf.mxu0
  %v6613 = vadd.f32 0.0, %v6612
  %6614 = vmatmul.f32.gmra.mxu0 %v6133
  %v6615 = vpop.f32.mrf.mxu0
  %v6616 = vadd.f32 0.0, %v6615
  %6617 = vmatmul.f32.gmra.mxu0 %v6136
  %v6618 = vpop.f32.mrf.mxu0
  %v6619 = vadd.f32 0.0, %v6618
  %6620 = vmatmul.f32.gmra.mxu0 %v6139
  %v6621 = vpop.f32.mrf.mxu0
  %v6622 = vadd.f32 0.0, %v6621
  %6623 = vmatmul.f32.gmra.mxu0 %v6142
  %v6624 = vpop.f32.mrf.mxu0
  %v6625 = vadd.f32 0.0, %v6624
  %6626 = vdwg.mxu0
  %6627 = vmatpush.msra.mxu0 0.0
  %6628 = vmatpush.msra.mxu0 0.0
  %6629 = vmatpush.msra.mxu0 0.0
  %6630 = vmatpush.msra.mxu0 0.0
  %6631 = vmatpush.msra.mxu0 0.0
  %6632 = vmatpush.msra.mxu0 0.0
  %6633 = vmatpush.msra.mxu0 0.0
  %6634 = vmatpush.msra.mxu0 0.0
  %6635 = vmatpush.msra.mxu0 0.0
  %6636 = vmatpush.msra.mxu0 0.0
  %6637 = vmatpush.msra.mxu0 0.0
  %6638 = vmatpush.msra.mxu0 0.0
  %6639 = vmatpush.msra.mxu0 0.0
  %6640 = vmatpush.msra.mxu0 %v4680
  %6641 = vmatpush.msra.mxu0 %v4583
  %6642 = vmatpush.msra.mxu0 %v4582
  %6643 = vmatmul.f32.gmra.mxu0 %v6130
  %v6644 = vpop.f32.mrf.mxu0
  %v6645 = vadd.f32 0.0, %v6644
  %6646 = vmatmul.f32.gmra.mxu0 %v6133
  %v6647 = vpop.f32.mrf.mxu0
  %v6648 = vadd.f32 0.0, %v6647
  %6649 = vmatmul.f32.gmra.mxu0 %v6136
  %v6650 = vpop.f32.mrf.mxu0
  %v6651 = vadd.f32 0.0, %v6650
  %6652 = vmatmul.f32.gmra.mxu0 %v6139
  %v6653 = vpop.f32.mrf.mxu0
  %v6654 = vadd.f32 0.0, %v6653
  %6655 = vmatmul.f32.gmra.mxu0 %v6142
  %v6656 = vpop.f32.mrf.mxu0
  %v6657 = vadd.f32 0.0, %v6656
  %6658 = vdwg.mxu0
  %6659 = vmatpush.msra.mxu0 0.0
  %6660 = vmatpush.msra.mxu0 0.0
  %6661 = vmatpush.msra.mxu0 0.0
  %6662 = vmatpush.msra.mxu0 0.0
  %6663 = vmatpush.msra.mxu0 0.0
  %6664 = vmatpush.msra.mxu0 0.0
  %6665 = vmatpush.msra.mxu0 0.0
  %6666 = vmatpush.msra.mxu0 0.0
  %6667 = vmatpush.msra.mxu0 0.0
  %6668 = vmatpush.msra.mxu0 0.0
  %6669 = vmatpush.msra.mxu0 0.0
  %6670 = vmatpush.msra.mxu0 0.0
  %6671 = vmatpush.msra.mxu0 0.0
  %6672 = vmatpush.msra.mxu0 %v4683
  %6673 = vmatpush.msra.mxu0 %v4586
  %6674 = vmatpush.msra.mxu0 %v4585
  %6675 = vmatmul.f32.gmra.mxu0 %v6130
  %v6676 = vpop.f32.mrf.mxu0
  %v6677 = vadd.f32 0.0, %v6676
  %6678 = vmatmul.f32.gmra.mxu0 %v6133
  %v6679 = vpop.f32.mrf.mxu0
  %v6680 = vadd.f32 0.0, %v6679
  %6681 = vmatmul.f32.gmra.mxu0 %v6136
  %v6682 = vpop.f32.mrf.mxu0
  %v6683 = vadd.f32 0.0, %v6682
  %6684 = vmatmul.f32.gmra.mxu0 %v6139
  %v6685 = vpop.f32.mrf.mxu0
  %v6686 = vadd.f32 0.0, %v6685
  %6687 = vmatmul.f32.gmra.mxu0 %v6142
  %v6688 = vpop.f32.mrf.mxu0
  %v6689 = vadd.f32 0.0, %v6688
  %6690 = vdwg.mxu0
  %6691 = vmatpush.msra.mxu0 0.0
  %6692 = vmatpush.msra.mxu0 0.0
  %6693 = vmatpush.msra.mxu0 0.0
  %6694 = vmatpush.msra.mxu0 0.0
  %6695 = vmatpush.msra.mxu0 0.0
  %6696 = vmatpush.msra.mxu0 0.0
  %6697 = vmatpush.msra.mxu0 0.0
  %6698 = vmatpush.msra.mxu0 0.0
  %6699 = vmatpush.msra.mxu0 0.0
  %6700 = vmatpush.msra.mxu0 0.0
  %6701 = vmatpush.msra.mxu0 0.0
  %6702 = vmatpush.msra.mxu0 0.0
  %6703 = vmatpush.msra.mxu0 0.0
  %6704 = vmatpush.msra.mxu0 %v4686
  %6705 = vmatpush.msra.mxu0 %v4589
  %6706 = vmatpush.msra.mxu0 %v4588
  %6707 = vmatmul.f32.gmra.mxu0 %v6130
  %v6708 = vpop.f32.mrf.mxu0
  %v6709 = vadd.f32 0.0, %v6708
  %6710 = vmatmul.f32.gmra.mxu0 %v6133
  %v6711 = vpop.f32.mrf.mxu0
  %v6712 = vadd.f32 0.0, %v6711
  %6713 = vmatmul.f32.gmra.mxu0 %v6136
  %v6714 = vpop.f32.mrf.mxu0
  %v6715 = vadd.f32 0.0, %v6714
  %6716 = vmatmul.f32.gmra.mxu0 %v6139
  %v6717 = vpop.f32.mrf.mxu0
  %v6718 = vadd.f32 0.0, %v6717
  %6719 = vmatmul.f32.gmra.mxu0 %v6142
  %v6720 = vpop.f32.mrf.mxu0
  %v6721 = vadd.f32 0.0, %v6720
  %6722 = vdwg.mxu0
  %6723 = vmatpush.msra.mxu0 0.0
  %6724 = vmatpush.msra.mxu0 0.0
  %6725 = vmatpush.msra.mxu0 0.0
  %6726 = vmatpush.msra.mxu0 0.0
  %6727 = vmatpush.msra.mxu0 0.0
  %6728 = vmatpush.msra.mxu0 0.0
  %6729 = vmatpush.msra.mxu0 0.0
  %6730 = vmatpush.msra.mxu0 0.0
  %6731 = vmatpush.msra.mxu0 0.0
  %6732 = vmatpush.msra.mxu0 0.0
  %6733 = vmatpush.msra.mxu0 0.0
  %6734 = vmatpush.msra.mxu0 0.0
  %6735 = vmatpush.msra.mxu0 0.0
  %6736 = vmatpush.msra.mxu0 %v4689
  %6737 = vmatpush.msra.mxu0 %v4592
  %6738 = vmatpush.msra.mxu0 %v4591
  %6739 = vmatmul.f32.gmra.mxu0 %v6130
  %v6740 = vpop.f32.mrf.mxu0
  %v6741 = vadd.f32 0.0, %v6740
  %6742 = vmatmul.f32.gmra.mxu0 %v6133
  %v6743 = vpop.f32.mrf.mxu0
  %v6744 = vadd.f32 0.0, %v6743
  %6745 = vmatmul.f32.gmra.mxu0 %v6136
  %v6746 = vpop.f32.mrf.mxu0
  %v6747 = vadd.f32 0.0, %v6746
  %6748 = vmatmul.f32.gmra.mxu0 %v6139
  %v6749 = vpop.f32.mrf.mxu0
  %v6750 = vadd.f32 0.0, %v6749
  %6751 = vmatmul.f32.gmra.mxu0 %v6142
  %v6752 = vpop.f32.mrf.mxu0
  %v6753 = vadd.f32 0.0, %v6752
  %6754 = vdwg.mxu0
  %6755 = vmatpush.msra.mxu0 0.0
  %6756 = vmatpush.msra.mxu0 0.0
  %6757 = vmatpush.msra.mxu0 0.0
  %6758 = vmatpush.msra.mxu0 0.0
  %6759 = vmatpush.msra.mxu0 0.0
  %6760 = vmatpush.msra.mxu0 0.0
  %6761 = vmatpush.msra.mxu0 0.0
  %6762 = vmatpush.msra.mxu0 0.0
  %6763 = vmatpush.msra.mxu0 0.0
  %6764 = vmatpush.msra.mxu0 0.0
  %6765 = vmatpush.msra.mxu0 0.0
  %6766 = vmatpush.msra.mxu0 0.0
  %6767 = vmatpush.msra.mxu0 0.0
  %6768 = vmatpush.msra.mxu0 %v4692
  %6769 = vmatpush.msra.mxu0 %v4595
  %6770 = vmatpush.msra.mxu0 %v4594
  %6771 = vmatmul.f32.gmra.mxu0 %v6130
  %v6772 = vpop.f32.mrf.mxu0
  %v6773 = vadd.f32 0.0, %v6772
  %6774 = vmatmul.f32.gmra.mxu0 %v6133
  %v6775 = vpop.f32.mrf.mxu0
  %v6776 = vadd.f32 0.0, %v6775
  %6777 = vmatmul.f32.gmra.mxu0 %v6136
  %v6778 = vpop.f32.mrf.mxu0
  %v6779 = vadd.f32 0.0, %v6778
  %6780 = vmatmul.f32.gmra.mxu0 %v6139
  %v6781 = vpop.f32.mrf.mxu0
  %v6782 = vadd.f32 0.0, %v6781
  %6783 = vmatmul.f32.gmra.mxu0 %v6142
  %v6784 = vpop.f32.mrf.mxu0
  %v6785 = vadd.f32 0.0, %v6784
  %6786 = vdwg.mxu0
  %6787 = vmatpush.msra.mxu0 0.0
  %6788 = vmatpush.msra.mxu0 0.0
  %6789 = vmatpush.msra.mxu0 0.0
  %6790 = vmatpush.msra.mxu0 0.0
  %6791 = vmatpush.msra.mxu0 0.0
  %6792 = vmatpush.msra.mxu0 0.0
  %6793 = vmatpush.msra.mxu0 0.0
  %6794 = vmatpush.msra.mxu0 0.0
  %6795 = vmatpush.msra.mxu0 0.0
  %6796 = vmatpush.msra.mxu0 0.0
  %6797 = vmatpush.msra.mxu0 0.0
  %6798 = vmatpush.msra.mxu0 0.0
  %6799 = vmatpush.msra.mxu0 0.0
  %6800 = vmatpush.msra.mxu0 %v4695
  %6801 = vmatpush.msra.mxu0 %v4598
  %6802 = vmatpush.msra.mxu0 %v4597
  %6803 = vmatmul.f32.gmra.mxu0 %v6130
  %v6804 = vpop.f32.mrf.mxu0
  %v6805 = vadd.f32 0.0, %v6804
  %6806 = vmatmul.f32.gmra.mxu0 %v6133
  %v6807 = vpop.f32.mrf.mxu0
  %v6808 = vadd.f32 0.0, %v6807
  %6809 = vmatmul.f32.gmra.mxu0 %v6136
  %v6810 = vpop.f32.mrf.mxu0
  %v6811 = vadd.f32 0.0, %v6810
  %6812 = vmatmul.f32.gmra.mxu0 %v6139
  %v6813 = vpop.f32.mrf.mxu0
  %v6814 = vadd.f32 0.0, %v6813
  %6815 = vmatmul.f32.gmra.mxu0 %v6142
  %v6816 = vpop.f32.mrf.mxu0
  %v6817 = vadd.f32 0.0, %v6816
  %6818 = vdwg.mxu0
  %6819 = vmatpush.msra.mxu0 0.0
  %6820 = vmatpush.msra.mxu0 0.0
  %6821 = vmatpush.msra.mxu0 0.0
  %6822 = vmatpush.msra.mxu0 0.0
  %6823 = vmatpush.msra.mxu0 0.0
  %6824 = vmatpush.msra.mxu0 0.0
  %6825 = vmatpush.msra.mxu0 0.0
  %6826 = vmatpush.msra.mxu0 0.0
  %6827 = vmatpush.msra.mxu0 0.0
  %6828 = vmatpush.msra.mxu0 0.0
  %6829 = vmatpush.msra.mxu0 0.0
  %6830 = vmatpush.msra.mxu0 0.0
  %6831 = vmatpush.msra.mxu0 0.0
  %6832 = vmatpush.msra.mxu0 %v6145
  %6833 = vmatpush.msra.mxu0 %v4601
  %6834 = vmatpush.msra.mxu0 %v4600
  %6835 = vmatmul.f32.gmra.mxu0 %v6130
  %v6836 = vpop.f32.mrf.mxu0
  %v6837 = vadd.f32 0.0, %v6836
  %6838 = vmatmul.f32.gmra.mxu0 %v6133
  %v6839 = vpop.f32.mrf.mxu0
  %v6840 = vadd.f32 0.0, %v6839
  %6841 = vmatmul.f32.gmra.mxu0 %v6136
  %v6842 = vpop.f32.mrf.mxu0
  %v6843 = vadd.f32 0.0, %v6842
  %6844 = vmatmul.f32.gmra.mxu0 %v6139
  %v6845 = vpop.f32.mrf.mxu0
  %v6846 = vadd.f32 0.0, %v6845
  %6847 = vmatmul.f32.gmra.mxu0 %v6142
  %v6848 = vpop.f32.mrf.mxu0
  %v6849 = vadd.f32 0.0, %v6848
  %6850 = vdwg.mxu0
  %v6851 = vadd.f32 %v5437, %v6165
  %v6852 = vadd.f32 %v5469, %v6197
  %v6853 = vadd.f32 %v5501, %v6229
  %v6854 = vadd.f32 %v5533, %v6261
  %v6855 = vadd.f32 %v5565, %v6293
  %v6856 = vadd.f32 %v5597, %v6325
  %v6857 = vadd.f32 %v5629, %v6357
  %v6858 = vadd.f32 %v5661, %v6389
  %v6859 = vadd.f32 %v5693, %v6421
  %v6860 = vadd.f32 %v5725, %v6453
  %v6861 = vadd.f32 %v5757, %v6485
  %v6862 = vadd.f32 %v5789, %v6517
  %v6863 = vadd.f32 %v5821, %v6549
  %v6864 = vadd.f32 %v5853, %v6581
  %v6865 = vadd.f32 %v5885, %v6613
  %v6866 = vadd.f32 %v5917, %v6645
  %v6867 = vadd.f32 %v5949, %v6677
  %v6868 = vadd.f32 %v5981, %v6709
  %v6869 = vadd.f32 %v6013, %v6741
  %v6870 = vadd.f32 %v6045, %v6773
  %v6871 = vadd.f32 %v6077, %v6805
  %v6872 = vadd.f32 %v6109, %v6837
  %v6873 = vadd.f32 %v5440, %v6168
  %v6874 = vadd.f32 %v5472, %v6200
  %v6875 = vadd.f32 %v5504, %v6232
  %v6876 = vadd.f32 %v5536, %v6264
  %v6877 = vadd.f32 %v5568, %v6296
  %v6878 = vadd.f32 %v5600, %v6328
  %v6879 = vadd.f32 %v5632, %v6360
  %v6880 = vadd.f32 %v5664, %v6392
  %v6881 = vadd.f32 %v5696, %v6424
  %v6882 = vadd.f32 %v5728, %v6456
  %v6883 = vadd.f32 %v5760, %v6488
  %v6884 = vadd.f32 %v5792, %v6520
  %v6885 = vadd.f32 %v5824, %v6552
  %v6886 = vadd.f32 %v5856, %v6584
  %v6887 = vadd.f32 %v5888, %v6616
  %v6888 = vadd.f32 %v5920, %v6648
  %v6889 = vadd.f32 %v5952, %v6680
  %v6890 = vadd.f32 %v5984, %v6712
  %v6891 = vadd.f32 %v6016, %v6744
  %v6892 = vadd.f32 %v6048, %v6776
  %v6893 = vadd.f32 %v6080, %v6808
  %v6894 = vadd.f32 %v6112, %v6840
  %v6895 = vadd.f32 %v5443, %v6171
  %v6896 = vadd.f32 %v5475, %v6203
  %v6897 = vadd.f32 %v5507, %v6235
  %v6898 = vadd.f32 %v5539, %v6267
  %v6899 = vadd.f32 %v5571, %v6299
  %v6900 = vadd.f32 %v5603, %v6331
  %v6901 = vadd.f32 %v5635, %v6363
  %v6902 = vadd.f32 %v5667, %v6395
  %v6903 = vadd.f32 %v5699, %v6427
  %v6904 = vadd.f32 %v5731, %v6459
  %v6905 = vadd.f32 %v5763, %v6491
  %v6906 = vadd.f32 %v5795, %v6523
  %v6907 = vadd.f32 %v5827, %v6555
  %v6908 = vadd.f32 %v5859, %v6587
  %v6909 = vadd.f32 %v5891, %v6619
  %v6910 = vadd.f32 %v5923, %v6651
  %v6911 = vadd.f32 %v5955, %v6683
  %v6912 = vadd.f32 %v5987, %v6715
  %v6913 = vadd.f32 %v6019, %v6747
  %v6914 = vadd.f32 %v6051, %v6779
  %v6915 = vadd.f32 %v6083, %v6811
  %v6916 = vadd.f32 %v6115, %v6843
  %v6917 = vadd.f32 %v5446, %v6174
  %v6918 = vadd.f32 %v5478, %v6206
  %v6919 = vadd.f32 %v5510, %v6238
  %v6920 = vadd.f32 %v5542, %v6270
  %v6921 = vadd.f32 %v5574, %v6302
  %v6922 = vadd.f32 %v5606, %v6334
  %v6923 = vadd.f32 %v5638, %v6366
  %v6924 = vadd.f32 %v5670, %v6398
  %v6925 = vadd.f32 %v5702, %v6430
  %v6926 = vadd.f32 %v5734, %v6462
  %v6927 = vadd.f32 %v5766, %v6494
  %v6928 = vadd.f32 %v5798, %v6526
  %v6929 = vadd.f32 %v5830, %v6558
  %v6930 = vadd.f32 %v5862, %v6590
  %v6931 = vadd.f32 %v5894, %v6622
  %v6932 = vadd.f32 %v5926, %v6654
  %v6933 = vadd.f32 %v5958, %v6686
  %v6934 = vadd.f32 %v5990, %v6718
  %v6935 = vadd.f32 %v6022, %v6750
  %v6936 = vadd.f32 %v6054, %v6782
  %v6937 = vadd.f32 %v6086, %v6814
  %v6938 = vadd.f32 %v6118, %v6846
  %v6939 = vadd.f32 %v5449, %v6177
  %v6940 = vadd.f32 %v5481, %v6209
  %v6941 = vadd.f32 %v5513, %v6241
  %v6942 = vadd.f32 %v5545, %v6273
  %v6943 = vadd.f32 %v5577, %v6305
  %v6944 = vadd.f32 %v5609, %v6337
  %v6945 = vadd.f32 %v5641, %v6369
  %v6946 = vadd.f32 %v5673, %v6401
  %v6947 = vadd.f32 %v5705, %v6433
  %v6948 = vadd.f32 %v5737, %v6465
  %v6949 = vadd.f32 %v5769, %v6497
  %v6950 = vadd.f32 %v5801, %v6529
  %v6951 = vadd.f32 %v5833, %v6561
  %v6952 = vadd.f32 %v5865, %v6593
  %v6953 = vadd.f32 %v5897, %v6625
  %v6954 = vadd.f32 %v5929, %v6657
  %v6955 = vadd.f32 %v5961, %v6689
  %v6956 = vadd.f32 %v5993, %v6721
  %v6957 = vadd.f32 %v6025, %v6753
  %v6958 = vadd.f32 %v6057, %v6785
  %v6959 = vadd.f32 %v6089, %v6817
  %v6960 = vadd.f32 %v6121, %v6849
  %v6961 = vld [vmem:[%s4] sm:$0xff]
  %v6962 = vld [vmem:[%s4 + $0x8] sm:$0xff]
  %v6963 = vld [vmem:[%s4 + $0x10] sm:$0xff]
  %v6964 = vld [vmem:[%s4 + $0x18] sm:$0xff]
  %v6965 = vld [vmem:[%s4 + $0x20] sm:$0xff]
  %6967 = vset.pattern.permute.xlu0 0
  %6968 = vperm.xlu0 %6967, %v6961
  %v6969 = vpop.permute.xlu0 %6968
  %6972 = vset.pattern.permute.xlu0 0
  %6973 = vperm.xlu0 %6972, %v6962
  %v6974 = vpop.permute.xlu0 %6973
  %6977 = vset.pattern.permute.xlu0 0
  %6978 = vperm.xlu0 %6977, %v6963
  %v6979 = vpop.permute.xlu0 %6978
  %6982 = vset.pattern.permute.xlu0 0
  %6983 = vperm.xlu0 %6982, %v6964
  %v6984 = vpop.permute.xlu0 %6983
  %6987 = vset.pattern.permute.xlu0 0
  %6988 = vperm.xlu0 %6987, %v6965
  %v6989 = vpop.permute.xlu0 %6988
  %v6991 = vadd.f32 %v6851, %v6969
  %v6992 = vadd.f32 %v6852, %v6969
  %v6993 = vadd.f32 %v6853, %v6969
  %v6994 = vadd.f32 %v6854, %v6969
  %v6995 = vadd.f32 %v6855, %v6969
  %v6996 = vadd.f32 %v6856, %v6969
  %v6997 = vadd.f32 %v6857, %v6969
  %v6998 = vadd.f32 %v6858, %v6969
  %v6999 = vadd.f32 %v6859, %v6969
  %v7000 = vadd.f32 %v6860, %v6969
  %v7001 = vadd.f32 %v6861, %v6969
  %v7002 = vadd.f32 %v6862, %v6969
  %v7003 = vadd.f32 %v6863, %v6969
  %v7004 = vadd.f32 %v6864, %v6969
  %v7005 = vadd.f32 %v6865, %v6969
  %v7006 = vadd.f32 %v6866, %v6969
  %v7007 = vadd.f32 %v6867, %v6969
  %v7008 = vadd.f32 %v6868, %v6969
  %v7009 = vadd.f32 %v6869, %v6969
  %v7010 = vadd.f32 %v6870, %v6969
  %v7011 = vadd.f32 %v6871, %v6969
  %v7012 = vadd.f32 %v6872, %v6969
  %v7013 = vadd.f32 %v6873, %v6974
  %v7014 = vadd.f32 %v6874, %v6974
  %v7015 = vadd.f32 %v6875, %v6974
  %v7016 = vadd.f32 %v6876, %v6974
  %v7017 = vadd.f32 %v6877, %v6974
  %v7018 = vadd.f32 %v6878, %v6974
  %v7019 = vadd.f32 %v6879, %v6974
  %v7020 = vadd.f32 %v6880, %v6974
  %v7021 = vadd.f32 %v6881, %v6974
  %v7022 = vadd.f32 %v6882, %v6974
  %v7023 = vadd.f32 %v6883, %v6974
  %v7024 = vadd.f32 %v6884, %v6974
  %v7025 = vadd.f32 %v6885, %v6974
  %v7026 = vadd.f32 %v6886, %v6974
  %v7027 = vadd.f32 %v6887, %v6974
  %v7028 = vadd.f32 %v6888, %v6974
  %v7029 = vadd.f32 %v6889, %v6974
  %v7030 = vadd.f32 %v6890, %v6974
  %v7031 = vadd.f32 %v6891, %v6974
  %v7032 = vadd.f32 %v6892, %v6974
  %v7033 = vadd.f32 %v6893, %v6974
  %v7034 = vadd.f32 %v6894, %v6974
  %v7035 = vadd.f32 %v6895, %v6979
  %v7036 = vadd.f32 %v6896, %v6979
  %v7037 = vadd.f32 %v6897, %v6979
  %v7038 = vadd.f32 %v6898, %v6979
  %v7039 = vadd.f32 %v6899, %v6979
  %v7040 = vadd.f32 %v6900, %v6979
  %v7041 = vadd.f32 %v6901, %v6979
  %v7042 = vadd.f32 %v6902, %v6979
  %v7043 = vadd.f32 %v6903, %v6979
  %v7044 = vadd.f32 %v6904, %v6979
  %v7045 = vadd.f32 %v6905, %v6979
  %v7046 = vadd.f32 %v6906, %v6979
  %v7047 = vadd.f32 %v6907, %v6979
  %v7048 = vadd.f32 %v6908, %v6979
  %v7049 = vadd.f32 %v6909, %v6979
  %v7050 = vadd.f32 %v6910, %v6979
  %v7051 = vadd.f32 %v6911, %v6979
  %v7052 = vadd.f32 %v6912, %v6979
  %v7053 = vadd.f32 %v6913, %v6979
  %v7054 = vadd.f32 %v6914, %v6979
  %v7055 = vadd.f32 %v6915, %v6979
  %v7056 = vadd.f32 %v6916, %v6979
  %v7057 = vadd.f32 %v6917, %v6984
  %v7058 = vadd.f32 %v6918, %v6984
  %v7059 = vadd.f32 %v6919, %v6984
  %v7060 = vadd.f32 %v6920, %v6984
  %v7061 = vadd.f32 %v6921, %v6984
  %v7062 = vadd.f32 %v6922, %v6984
  %v7063 = vadd.f32 %v6923, %v6984
  %v7064 = vadd.f32 %v6924, %v6984
  %v7065 = vadd.f32 %v6925, %v6984
  %v7066 = vadd.f32 %v6926, %v6984
  %v7067 = vadd.f32 %v6927, %v6984
  %v7068 = vadd.f32 %v6928, %v6984
  %v7069 = vadd.f32 %v6929, %v6984
  %v7070 = vadd.f32 %v6930, %v6984
  %v7071 = vadd.f32 %v6931, %v6984
  %v7072 = vadd.f32 %v6932, %v6984
  %v7073 = vadd.f32 %v6933, %v6984
  %v7074 = vadd.f32 %v6934, %v6984
  %v7075 = vadd.f32 %v6935, %v6984
  %v7076 = vadd.f32 %v6936, %v6984
  %v7077 = vadd.f32 %v6937, %v6984
  %v7078 = vadd.f32 %v6938, %v6984
  %v7079 = vadd.f32 %v6939, %v6989
  %v7080 = vadd.f32 %v6940, %v6989
  %v7081 = vadd.f32 %v6941, %v6989
  %v7082 = vadd.f32 %v6942, %v6989
  %v7083 = vadd.f32 %v6943, %v6989
  %v7084 = vadd.f32 %v6944, %v6989
  %v7085 = vadd.f32 %v6945, %v6989
  %v7086 = vadd.f32 %v6946, %v6989
  %v7087 = vadd.f32 %v6947, %v6989
  %v7088 = vadd.f32 %v6948, %v6989
  %v7089 = vadd.f32 %v6949, %v6989
  %v7090 = vadd.f32 %v6950, %v6989
  %v7091 = vadd.f32 %v6951, %v6989
  %v7092 = vadd.f32 %v6952, %v6989
  %v7093 = vadd.f32 %v6953, %v6989
  %v7094 = vadd.f32 %v6954, %v6989
  %v7095 = vadd.f32 %v6955, %v6989
  %v7096 = vadd.f32 %v6956, %v6989
  %v7097 = vadd.f32 %v6957, %v6989
  %v7098 = vadd.f32 %v6958, %v6989
  %v7099 = vadd.f32 %v6959, %v6989
  %v7100 = vadd.f32 %v6960, %v6989
  %v7101 = vtanh.pop %v6991
  %v7102 = vtanh.pop %v6992
  %v7103 = vtanh.pop %v6993
  %v7104 = vtanh.pop %v6994
  %v7105 = vtanh.pop %v6995
  %v7106 = vtanh.pop %v6996
  %v7107 = vtanh.pop %v6997
  %v7108 = vtanh.pop %v6998
  %v7109 = vtanh.pop %v6999
  %v7110 = vtanh.pop %v7000
  %v7111 = vtanh.pop %v7001
  %v7112 = vtanh.pop %v7002
  %v7113 = vtanh.pop %v7003
  %v7114 = vtanh.pop %v7004
  %v7115 = vtanh.pop %v7005
  %v7116 = vtanh.pop %v7006
  %v7117 = vtanh.pop %v7007
  %v7118 = vtanh.pop %v7008
  %v7119 = vtanh.pop %v7009
  %v7120 = vtanh.pop %v7010
  %v7121 = vtanh.pop %v7011
  %v7122 = vtanh.pop %v7012
  %v7123 = vtanh.pop %v7013
  %v7124 = vtanh.pop %v7014
  %v7125 = vtanh.pop %v7015
  %v7126 = vtanh.pop %v7016
  %v7127 = vtanh.pop %v7017
  %v7128 = vtanh.pop %v7018
  %v7129 = vtanh.pop %v7019
  %v7130 = vtanh.pop %v7020
  %v7131 = vtanh.pop %v7021
  %v7132 = vtanh.pop %v7022
  %v7133 = vtanh.pop %v7023
  %v7134 = vtanh.pop %v7024
  %v7135 = vtanh.pop %v7025
  %v7136 = vtanh.pop %v7026
  %v7137 = vtanh.pop %v7027
  %v7138 = vtanh.pop %v7028
  %v7139 = vtanh.pop %v7029
  %v7140 = vtanh.pop %v7030
  %v7141 = vtanh.pop %v7031
  %v7142 = vtanh.pop %v7032
  %v7143 = vtanh.pop %v7033
  %v7144 = vtanh.pop %v7034
  %v7145 = vtanh.pop %v7035
  %v7146 = vtanh.pop %v7036
  %v7147 = vtanh.pop %v7037
  %v7148 = vtanh.pop %v7038
  %v7149 = vtanh.pop %v7039
  %v7150 = vtanh.pop %v7040
  %v7151 = vtanh.pop %v7041
  %v7152 = vtanh.pop %v7042
  %v7153 = vtanh.pop %v7043
  %v7154 = vtanh.pop %v7044
  %v7155 = vtanh.pop %v7045
  %v7156 = vtanh.pop %v7046
  %v7157 = vtanh.pop %v7047
  %v7158 = vtanh.pop %v7048
  %v7159 = vtanh.pop %v7049
  %v7160 = vtanh.pop %v7050
  %v7161 = vtanh.pop %v7051
  %v7162 = vtanh.pop %v7052
  %v7163 = vtanh.pop %v7053
  %v7164 = vtanh.pop %v7054
  %v7165 = vtanh.pop %v7055
  %v7166 = vtanh.pop %v7056
  %v7167 = vtanh.pop %v7057
  %v7168 = vtanh.pop %v7058
  %v7169 = vtanh.pop %v7059
  %v7170 = vtanh.pop %v7060
  %v7171 = vtanh.pop %v7061
  %v7172 = vtanh.pop %v7062
  %v7173 = vtanh.pop %v7063
  %v7174 = vtanh.pop %v7064
  %v7175 = vtanh.pop %v7065
  %v7176 = vtanh.pop %v7066
  %v7177 = vtanh.pop %v7067
  %v7178 = vtanh.pop %v7068
  %v7179 = vtanh.pop %v7069
  %v7180 = vtanh.pop %v7070
  %v7181 = vtanh.pop %v7071
  %v7182 = vtanh.pop %v7072
  %v7183 = vtanh.pop %v7073
  %v7184 = vtanh.pop %v7074
  %v7185 = vtanh.pop %v7075
  %v7186 = vtanh.pop %v7076
  %v7187 = vtanh.pop %v7077
  %v7188 = vtanh.pop %v7078
  %v7189 = vtanh.pop %v7079
  %v7190 = vtanh.pop %v7080
  %v7191 = vtanh.pop %v7081
  %v7192 = vtanh.pop %v7082
  %v7193 = vtanh.pop %v7083
  %v7194 = vtanh.pop %v7084
  %v7195 = vtanh.pop %v7085
  %v7196 = vtanh.pop %v7086
  %v7197 = vtanh.pop %v7087
  %v7198 = vtanh.pop %v7088
  %v7199 = vtanh.pop %v7089
  %v7200 = vtanh.pop %v7090
  %v7201 = vtanh.pop %v7091
  %v7202 = vtanh.pop %v7092
  %v7203 = vtanh.pop %v7093
  %v7204 = vtanh.pop %v7094
  %v7205 = vtanh.pop %v7095
  %v7206 = vtanh.pop %v7096
  %v7207 = vtanh.pop %v7097
  %v7208 = vtanh.pop %v7098
  %v7209 = vtanh.pop %v7099
  %v7210 = vtanh.pop %v7100
  %v7211 = vmax.f32 %v7101, %v7102
  %v7212 = vmax.f32 %v7123, %v7124
  %v7213 = vmax.f32 %v7145, %v7146
  %v7214 = vmax.f32 %v7167, %v7168
  %v7215 = vmax.f32 %v7189, %v7190
  %v7216 = vmax.f32 %v7103, %v7104
  %v7217 = vmax.f32 %v7125, %v7126
  %v7218 = vmax.f32 %v7147, %v7148
  %v7219 = vmax.f32 %v7169, %v7170
  %v7220 = vmax.f32 %v7191, %v7192
  %v7221 = vmax.f32 %v7105, %v7106
  %v7222 = vmax.f32 %v7127, %v7128
  %v7223 = vmax.f32 %v7149, %v7150
  %v7224 = vmax.f32 %v7171, %v7172
  %v7225 = vmax.f32 %v7193, %v7194
  %v7226 = vmax.f32 %v7107, %v7108
  %v7227 = vmax.f32 %v7129, %v7130
  %v7228 = vmax.f32 %v7151, %v7152
  %v7229 = vmax.f32 %v7173, %v7174
  %v7230 = vmax.f32 %v7195, %v7196
  %v7231 = vmax.f32 %v7109, %v7110
  %v7232 = vmax.f32 %v7131, %v7132
  %v7233 = vmax.f32 %v7153, %v7154
  %v7234 = vmax.f32 %v7175, %v7176
  %v7235 = vmax.f32 %v7197, %v7198
  %v7236 = vmax.f32 %v7111, %v7112
  %v7237 = vmax.f32 %v7133, %v7134
  %v7238 = vmax.f32 %v7155, %v7156
  %v7239 = vmax.f32 %v7177, %v7178
  %v7240 = vmax.f32 %v7199, %v7200
  %v7241 = vmax.f32 %v7113, %v7114
  %v7242 = vmax.f32 %v7135, %v7136
  %v7243 = vmax.f32 %v7157, %v7158
  %v7244 = vmax.f32 %v7179, %v7180
  %v7245 = vmax.f32 %v7201, %v7202
  %v7246 = vmax.f32 %v7115, %v7116
  %v7247 = vmax.f32 %v7137, %v7138
  %v7248 = vmax.f32 %v7159, %v7160
  %v7249 = vmax.f32 %v7181, %v7182
  %v7250 = vmax.f32 %v7203, %v7204
  %v7251 = vmax.f32 %v7117, %v7118
  %v7252 = vmax.f32 %v7139, %v7140
  %v7253 = vmax.f32 %v7161, %v7162
  %v7254 = vmax.f32 %v7183, %v7184
  %v7255 = vmax.f32 %v7205, %v7206
  %v7256 = vmax.f32 %v7119, %v7120
  %v7257 = vmax.f32 %v7141, %v7142
  %v7258 = vmax.f32 %v7163, %v7164
  %v7259 = vmax.f32 %v7185, %v7186
  %v7260 = vmax.f32 %v7207, %v7208
  %v7261 = vmax.f32 %v7121, %v7122
  %v7262 = vmax.f32 %v7143, %v7144
  %v7263 = vmax.f32 %v7165, %v7166
  %v7264 = vmax.f32 %v7187, %v7188
  %v7265 = vmax.f32 %v7209, %v7210
  %v7266 = vld [vmem:[%s5] sm:$0xff]
  %v7267 = vld [vmem:[%s5 + $0x8] sm:$0xff]
  %v7268 = vld [vmem:[%s5 + $0x10] sm:$0xff]
  %v7269 = vld [vmem:[%s5 + $0x18] sm:$0xff]
  %v7270 = vld [vmem:[%s5 + $0x20] sm:$0xff]
  %v7271 = vld [vmem:[%s5 + $0x28] sm:$0xff]
  %v7272 = vld [vmem:[%s5 + $0x30] sm:$0xff]
  %v7273 = vld [vmem:[%s5 + $0x38] sm:$0xf]
  %s7274 = scalar_lea.vmem %s5, 64
  %v7275 = vld [vmem:[%s7274] sm:$0xff]
  %v7276 = vld [vmem:[%s7274 + $0x8] sm:$0xff]
  %v7277 = vld [vmem:[%s7274 + $0x10] sm:$0xff]
  %v7278 = vld [vmem:[%s7274 + $0x18] sm:$0xff]
  %v7279 = vld [vmem:[%s7274 + $0x20] sm:$0xff]
  %v7280 = vld [vmem:[%s7274 + $0x28] sm:$0xff]
  %v7281 = vld [vmem:[%s7274 + $0x30] sm:$0xff]
  %v7282 = vld [vmem:[%s7274 + $0x38] sm:$0xf]
  %vm7283 = vcmask 326656
  %v7285 = vsel %vm7283, %v7275, 0
  %v7288 = vsel %vm7283, %v7276, 0
  %v7291 = vsel %vm7283, %v7277, 0
  %v7294 = vsel %vm7283, %v7278, 0
  %v7297 = vsel %vm7283, %v7279, 0
  %v7300 = vsel %vm7283, %v7280, 0
  %v7303 = vsel %vm7283, %v7281, 0
  %v7306 = vsel %vm7283, %v7282, 0
  %7308 = vmatpush.msra.mxu0 0.0
  %7309 = vmatpush.msra.mxu0 0.0
  %7310 = vmatpush.msra.mxu0 0.0
  %7311 = vmatpush.msra.mxu0 0.0
  %7312 = vmatpush.msra.mxu0 0.0
  %7313 = vmatpush.msra.mxu0 0.0
  %7314 = vmatpush.msra.mxu0 0.0
  %7315 = vmatpush.msra.mxu0 0.0
  %7316 = vmatpush.msra.mxu0 0.0
  %7317 = vmatpush.msra.mxu0 0.0
  %7318 = vmatpush.msra.mxu0 0.0
  %7319 = vmatpush.msra.mxu0 %v7220
  %7320 = vmatpush.msra.mxu0 %v7219
  %7321 = vmatpush.msra.mxu0 %v7218
  %7322 = vmatpush.msra.mxu0 %v7217
  %7323 = vmatpush.msra.mxu0 %v7216
  %7324 = vmatmul.f32.gmra.mxu0 %v7285
  %v7325 = vpop.f32.mrf.mxu0
  %v7326 = vadd.f32 0.0, %v7325
  %7327 = vmatmul.f32.gmra.mxu0 %v7288
  %v7328 = vpop.f32.mrf.mxu0
  %v7329 = vadd.f32 0.0, %v7328
  %7330 = vmatmul.f32.gmra.mxu0 %v7291
  %v7331 = vpop.f32.mrf.mxu0
  %v7332 = vadd.f32 0.0, %v7331
  %7333 = vmatmul.f32.gmra.mxu0 %v7294
  %v7334 = vpop.f32.mrf.mxu0
  %v7335 = vadd.f32 0.0, %v7334
  %7336 = vmatmul.f32.gmra.mxu0 %v7297
  %v7337 = vpop.f32.mrf.mxu0
  %v7338 = vadd.f32 0.0, %v7337
  %7339 = vmatmul.f32.gmra.mxu0 %v7300
  %v7340 = vpop.f32.mrf.mxu0
  %v7341 = vadd.f32 0.0, %v7340
  %7342 = vmatmul.f32.gmra.mxu0 %v7303
  %v7343 = vpop.f32.mrf.mxu0
  %v7344 = vadd.f32 0.0, %v7343
  %7345 = vmatmul.f32.gmra.mxu0 %v7306
  %v7346 = vpop.f32.mrf.mxu0
  %v7347 = vadd.f32 0.0, %v7346
  %7348 = vdwg.mxu0
  %7349 = vmatpush.msra.mxu0 0.0
  %7350 = vmatpush.msra.mxu0 0.0
  %7351 = vmatpush.msra.mxu0 0.0
  %7352 = vmatpush.msra.mxu0 0.0
  %7353 = vmatpush.msra.mxu0 0.0
  %7354 = vmatpush.msra.mxu0 0.0
  %7355 = vmatpush.msra.mxu0 0.0
  %7356 = vmatpush.msra.mxu0 0.0
  %7357 = vmatpush.msra.mxu0 0.0
  %7358 = vmatpush.msra.mxu0 0.0
  %7359 = vmatpush.msra.mxu0 0.0
  %7360 = vmatpush.msra.mxu0 %v7225
  %7361 = vmatpush.msra.mxu0 %v7224
  %7362 = vmatpush.msra.mxu0 %v7223
  %7363 = vmatpush.msra.mxu0 %v7222
  %7364 = vmatpush.msra.mxu0 %v7221
  %7365 = vmatmul.f32.gmra.mxu0 %v7285
  %v7366 = vpop.f32.mrf.mxu0
  %v7367 = vadd.f32 0.0, %v7366
  %7368 = vmatmul.f32.gmra.mxu0 %v7288
  %v7369 = vpop.f32.mrf.mxu0
  %v7370 = vadd.f32 0.0, %v7369
  %7371 = vmatmul.f32.gmra.mxu0 %v7291
  %v7372 = vpop.f32.mrf.mxu0
  %v7373 = vadd.f32 0.0, %v7372
  %7374 = vmatmul.f32.gmra.mxu0 %v7294
  %v7375 = vpop.f32.mrf.mxu0
  %v7376 = vadd.f32 0.0, %v7375
  %7377 = vmatmul.f32.gmra.mxu0 %v7297
  %v7378 = vpop.f32.mrf.mxu0
  %v7379 = vadd.f32 0.0, %v7378
  %7380 = vmatmul.f32.gmra.mxu0 %v7300
  %v7381 = vpop.f32.mrf.mxu0
  %v7382 = vadd.f32 0.0, %v7381
  %7383 = vmatmul.f32.gmra.mxu0 %v7303
  %v7384 = vpop.f32.mrf.mxu0
  %v7385 = vadd.f32 0.0, %v7384
  %7386 = vmatmul.f32.gmra.mxu0 %v7306
  %v7387 = vpop.f32.mrf.mxu0
  %v7388 = vadd.f32 0.0, %v7387
  %7389 = vdwg.mxu0
  %7390 = vmatpush.msra.mxu0 0.0
  %7391 = vmatpush.msra.mxu0 0.0
  %7392 = vmatpush.msra.mxu0 0.0
  %7393 = vmatpush.msra.mxu0 0.0
  %7394 = vmatpush.msra.mxu0 0.0
  %7395 = vmatpush.msra.mxu0 0.0
  %7396 = vmatpush.msra.mxu0 0.0
  %7397 = vmatpush.msra.mxu0 0.0
  %7398 = vmatpush.msra.mxu0 0.0
  %7399 = vmatpush.msra.mxu0 0.0
  %7400 = vmatpush.msra.mxu0 0.0
  %7401 = vmatpush.msra.mxu0 %v7230
  %7402 = vmatpush.msra.mxu0 %v7229
  %7403 = vmatpush.msra.mxu0 %v7228
  %7404 = vmatpush.msra.mxu0 %v7227
  %7405 = vmatpush.msra.mxu0 %v7226
  %7406 = vmatmul.f32.gmra.mxu0 %v7285
  %v7407 = vpop.f32.mrf.mxu0
  %v7408 = vadd.f32 0.0, %v7407
  %7409 = vmatmul.f32.gmra.mxu0 %v7288
  %v7410 = vpop.f32.mrf.mxu0
  %v7411 = vadd.f32 0.0, %v7410
  %7412 = vmatmul.f32.gmra.mxu0 %v7291
  %v7413 = vpop.f32.mrf.mxu0
  %v7414 = vadd.f32 0.0, %v7413
  %7415 = vmatmul.f32.gmra.mxu0 %v7294
  %v7416 = vpop.f32.mrf.mxu0
  %v7417 = vadd.f32 0.0, %v7416
  %7418 = vmatmul.f32.gmra.mxu0 %v7297
  %v7419 = vpop.f32.mrf.mxu0
  %v7420 = vadd.f32 0.0, %v7419
  %7421 = vmatmul.f32.gmra.mxu0 %v7300
  %v7422 = vpop.f32.mrf.mxu0
  %v7423 = vadd.f32 0.0, %v7422
  %7424 = vmatmul.f32.gmra.mxu0 %v7303
  %v7425 = vpop.f32.mrf.mxu0
  %v7426 = vadd.f32 0.0, %v7425
  %7427 = vmatmul.f32.gmra.mxu0 %v7306
  %v7428 = vpop.f32.mrf.mxu0
  %v7429 = vadd.f32 0.0, %v7428
  %7430 = vdwg.mxu0
  %7431 = vmatpush.msra.mxu0 0.0
  %7432 = vmatpush.msra.mxu0 0.0
  %7433 = vmatpush.msra.mxu0 0.0
  %7434 = vmatpush.msra.mxu0 0.0
  %7435 = vmatpush.msra.mxu0 0.0
  %7436 = vmatpush.msra.mxu0 0.0
  %7437 = vmatpush.msra.mxu0 0.0
  %7438 = vmatpush.msra.mxu0 0.0
  %7439 = vmatpush.msra.mxu0 0.0
  %7440 = vmatpush.msra.mxu0 0.0
  %7441 = vmatpush.msra.mxu0 0.0
  %7442 = vmatpush.msra.mxu0 %v7235
  %7443 = vmatpush.msra.mxu0 %v7234
  %7444 = vmatpush.msra.mxu0 %v7233
  %7445 = vmatpush.msra.mxu0 %v7232
  %7446 = vmatpush.msra.mxu0 %v7231
  %7447 = vmatmul.f32.gmra.mxu0 %v7285
  %v7448 = vpop.f32.mrf.mxu0
  %v7449 = vadd.f32 0.0, %v7448
  %7450 = vmatmul.f32.gmra.mxu0 %v7288
  %v7451 = vpop.f32.mrf.mxu0
  %v7452 = vadd.f32 0.0, %v7451
  %7453 = vmatmul.f32.gmra.mxu0 %v7291
  %v7454 = vpop.f32.mrf.mxu0
  %v7455 = vadd.f32 0.0, %v7454
  %7456 = vmatmul.f32.gmra.mxu0 %v7294
  %v7457 = vpop.f32.mrf.mxu0
  %v7458 = vadd.f32 0.0, %v7457
  %7459 = vmatmul.f32.gmra.mxu0 %v7297
  %v7460 = vpop.f32.mrf.mxu0
  %v7461 = vadd.f32 0.0, %v7460
  %7462 = vmatmul.f32.gmra.mxu0 %v7300
  %v7463 = vpop.f32.mrf.mxu0
  %v7464 = vadd.f32 0.0, %v7463
  %7465 = vmatmul.f32.gmra.mxu0 %v7303
  %v7466 = vpop.f32.mrf.mxu0
  %v7467 = vadd.f32 0.0, %v7466
  %7468 = vmatmul.f32.gmra.mxu0 %v7306
  %v7469 = vpop.f32.mrf.mxu0
  %v7470 = vadd.f32 0.0, %v7469
  %7471 = vdwg.mxu0
  %7472 = vmatpush.msra.mxu0 0.0
  %7473 = vmatpush.msra.mxu0 0.0
  %7474 = vmatpush.msra.mxu0 0.0
  %7475 = vmatpush.msra.mxu0 0.0
  %7476 = vmatpush.msra.mxu0 0.0
  %7477 = vmatpush.msra.mxu0 0.0
  %7478 = vmatpush.msra.mxu0 0.0
  %7479 = vmatpush.msra.mxu0 0.0
  %7480 = vmatpush.msra.mxu0 0.0
  %7481 = vmatpush.msra.mxu0 0.0
  %7482 = vmatpush.msra.mxu0 0.0
  %7483 = vmatpush.msra.mxu0 %v7240
  %7484 = vmatpush.msra.mxu0 %v7239
  %7485 = vmatpush.msra.mxu0 %v7238
  %7486 = vmatpush.msra.mxu0 %v7237
  %7487 = vmatpush.msra.mxu0 %v7236
  %7488 = vmatmul.f32.gmra.mxu0 %v7285
  %v7489 = vpop.f32.mrf.mxu0
  %v7490 = vadd.f32 0.0, %v7489
  %7491 = vmatmul.f32.gmra.mxu0 %v7288
  %v7492 = vpop.f32.mrf.mxu0
  %v7493 = vadd.f32 0.0, %v7492
  %7494 = vmatmul.f32.gmra.mxu0 %v7291
  %v7495 = vpop.f32.mrf.mxu0
  %v7496 = vadd.f32 0.0, %v7495
  %7497 = vmatmul.f32.gmra.mxu0 %v7294
  %v7498 = vpop.f32.mrf.mxu0
  %v7499 = vadd.f32 0.0, %v7498
  %7500 = vmatmul.f32.gmra.mxu0 %v7297
  %v7501 = vpop.f32.mrf.mxu0
  %v7502 = vadd.f32 0.0, %v7501
  %7503 = vmatmul.f32.gmra.mxu0 %v7300
  %v7504 = vpop.f32.mrf.mxu0
  %v7505 = vadd.f32 0.0, %v7504
  %7506 = vmatmul.f32.gmra.mxu0 %v7303
  %v7507 = vpop.f32.mrf.mxu0
  %v7508 = vadd.f32 0.0, %v7507
  %7509 = vmatmul.f32.gmra.mxu0 %v7306
  %v7510 = vpop.f32.mrf.mxu0
  %v7511 = vadd.f32 0.0, %v7510
  %7512 = vdwg.mxu0
  %7513 = vmatpush.msra.mxu0 0.0
  %7514 = vmatpush.msra.mxu0 0.0
  %7515 = vmatpush.msra.mxu0 0.0
  %7516 = vmatpush.msra.mxu0 0.0
  %7517 = vmatpush.msra.mxu0 0.0
  %7518 = vmatpush.msra.mxu0 0.0
  %7519 = vmatpush.msra.mxu0 0.0
  %7520 = vmatpush.msra.mxu0 0.0
  %7521 = vmatpush.msra.mxu0 0.0
  %7522 = vmatpush.msra.mxu0 0.0
  %7523 = vmatpush.msra.mxu0 0.0
  %7524 = vmatpush.msra.mxu0 %v7245
  %7525 = vmatpush.msra.mxu0 %v7244
  %7526 = vmatpush.msra.mxu0 %v7243
  %7527 = vmatpush.msra.mxu0 %v7242
  %7528 = vmatpush.msra.mxu0 %v7241
  %7529 = vmatmul.f32.gmra.mxu0 %v7285
  %v7530 = vpop.f32.mrf.mxu0
  %v7531 = vadd.f32 0.0, %v7530
  %7532 = vmatmul.f32.gmra.mxu0 %v7288
  %v7533 = vpop.f32.mrf.mxu0
  %v7534 = vadd.f32 0.0, %v7533
  %7535 = vmatmul.f32.gmra.mxu0 %v7291
  %v7536 = vpop.f32.mrf.mxu0
  %v7537 = vadd.f32 0.0, %v7536
  %7538 = vmatmul.f32.gmra.mxu0 %v7294
  %v7539 = vpop.f32.mrf.mxu0
  %v7540 = vadd.f32 0.0, %v7539
  %7541 = vmatmul.f32.gmra.mxu0 %v7297
  %v7542 = vpop.f32.mrf.mxu0
  %v7543 = vadd.f32 0.0, %v7542
  %7544 = vmatmul.f32.gmra.mxu0 %v7300
  %v7545 = vpop.f32.mrf.mxu0
  %v7546 = vadd.f32 0.0, %v7545
  %7547 = vmatmul.f32.gmra.mxu0 %v7303
  %v7548 = vpop.f32.mrf.mxu0
  %v7549 = vadd.f32 0.0, %v7548
  %7550 = vmatmul.f32.gmra.mxu0 %v7306
  %v7551 = vpop.f32.mrf.mxu0
  %v7552 = vadd.f32 0.0, %v7551
  %7553 = vdwg.mxu0
  %7554 = vmatpush.msra.mxu0 0.0
  %7555 = vmatpush.msra.mxu0 0.0
  %7556 = vmatpush.msra.mxu0 0.0
  %7557 = vmatpush.msra.mxu0 0.0
  %7558 = vmatpush.msra.mxu0 0.0
  %7559 = vmatpush.msra.mxu0 0.0
  %7560 = vmatpush.msra.mxu0 0.0
  %7561 = vmatpush.msra.mxu0 0.0
  %7562 = vmatpush.msra.mxu0 0.0
  %7563 = vmatpush.msra.mxu0 0.0
  %7564 = vmatpush.msra.mxu0 0.0
  %7565 = vmatpush.msra.mxu0 %v7250
  %7566 = vmatpush.msra.mxu0 %v7249
  %7567 = vmatpush.msra.mxu0 %v7248
  %7568 = vmatpush.msra.mxu0 %v7247
  %7569 = vmatpush.msra.mxu0 %v7246
  %7570 = vmatmul.f32.gmra.mxu0 %v7285
  %v7571 = vpop.f32.mrf.mxu0
  %v7572 = vadd.f32 0.0, %v7571
  %7573 = vmatmul.f32.gmra.mxu0 %v7288
  %v7574 = vpop.f32.mrf.mxu0
  %v7575 = vadd.f32 0.0, %v7574
  %7576 = vmatmul.f32.gmra.mxu0 %v7291
  %v7577 = vpop.f32.mrf.mxu0
  %v7578 = vadd.f32 0.0, %v7577
  %7579 = vmatmul.f32.gmra.mxu0 %v7294
  %v7580 = vpop.f32.mrf.mxu0
  %v7581 = vadd.f32 0.0, %v7580
  %7582 = vmatmul.f32.gmra.mxu0 %v7297
  %v7583 = vpop.f32.mrf.mxu0
  %v7584 = vadd.f32 0.0, %v7583
  %7585 = vmatmul.f32.gmra.mxu0 %v7300
  %v7586 = vpop.f32.mrf.mxu0
  %v7587 = vadd.f32 0.0, %v7586
  %7588 = vmatmul.f32.gmra.mxu0 %v7303
  %v7589 = vpop.f32.mrf.mxu0
  %v7590 = vadd.f32 0.0, %v7589
  %7591 = vmatmul.f32.gmra.mxu0 %v7306
  %v7592 = vpop.f32.mrf.mxu0
  %v7593 = vadd.f32 0.0, %v7592
  %7594 = vdwg.mxu0
  %7595 = vmatpush.msra.mxu0 0.0
  %7596 = vmatpush.msra.mxu0 0.0
  %7597 = vmatpush.msra.mxu0 0.0
  %7598 = vmatpush.msra.mxu0 0.0
  %7599 = vmatpush.msra.mxu0 0.0
  %7600 = vmatpush.msra.mxu0 0.0
  %7601 = vmatpush.msra.mxu0 0.0
  %7602 = vmatpush.msra.mxu0 0.0
  %7603 = vmatpush.msra.mxu0 0.0
  %7604 = vmatpush.msra.mxu0 0.0
  %7605 = vmatpush.msra.mxu0 0.0
  %7606 = vmatpush.msra.mxu0 %v7255
  %7607 = vmatpush.msra.mxu0 %v7254
  %7608 = vmatpush.msra.mxu0 %v7253
  %7609 = vmatpush.msra.mxu0 %v7252
  %7610 = vmatpush.msra.mxu0 %v7251
  %7611 = vmatmul.f32.gmra.mxu0 %v7285
  %v7612 = vpop.f32.mrf.mxu0
  %v7613 = vadd.f32 0.0, %v7612
  %7614 = vmatmul.f32.gmra.mxu0 %v7288
  %v7615 = vpop.f32.mrf.mxu0
  %v7616 = vadd.f32 0.0, %v7615
  %7617 = vmatmul.f32.gmra.mxu0 %v7291
  %v7618 = vpop.f32.mrf.mxu0
  %v7619 = vadd.f32 0.0, %v7618
  %7620 = vmatmul.f32.gmra.mxu0 %v7294
  %v7621 = vpop.f32.mrf.mxu0
  %v7622 = vadd.f32 0.0, %v7621
  %7623 = vmatmul.f32.gmra.mxu0 %v7297
  %v7624 = vpop.f32.mrf.mxu0
  %v7625 = vadd.f32 0.0, %v7624
  %7626 = vmatmul.f32.gmra.mxu0 %v7300
  %v7627 = vpop.f32.mrf.mxu0
  %v7628 = vadd.f32 0.0, %v7627
  %7629 = vmatmul.f32.gmra.mxu0 %v7303
  %v7630 = vpop.f32.mrf.mxu0
  %v7631 = vadd.f32 0.0, %v7630
  %7632 = vmatmul.f32.gmra.mxu0 %v7306
  %v7633 = vpop.f32.mrf.mxu0
  %v7634 = vadd.f32 0.0, %v7633
  %7635 = vdwg.mxu0
  %7636 = vmatpush.msra.mxu0 0.0
  %7637 = vmatpush.msra.mxu0 0.0
  %7638 = vmatpush.msra.mxu0 0.0
  %7639 = vmatpush.msra.mxu0 0.0
  %7640 = vmatpush.msra.mxu0 0.0
  %7641 = vmatpush.msra.mxu0 0.0
  %7642 = vmatpush.msra.mxu0 0.0
  %7643 = vmatpush.msra.mxu0 0.0
  %7644 = vmatpush.msra.mxu0 0.0
  %7645 = vmatpush.msra.mxu0 0.0
  %7646 = vmatpush.msra.mxu0 0.0
  %7647 = vmatpush.msra.mxu0 %v7260
  %7648 = vmatpush.msra.mxu0 %v7259
  %7649 = vmatpush.msra.mxu0 %v7258
  %7650 = vmatpush.msra.mxu0 %v7257
  %7651 = vmatpush.msra.mxu0 %v7256
  %7652 = vmatmul.f32.gmra.mxu0 %v7285
  %v7653 = vpop.f32.mrf.mxu0
  %v7654 = vadd.f32 0.0, %v7653
  %7655 = vmatmul.f32.gmra.mxu0 %v7288
  %v7656 = vpop.f32.mrf.mxu0
  %v7657 = vadd.f32 0.0, %v7656
  %7658 = vmatmul.f32.gmra.mxu0 %v7291
  %v7659 = vpop.f32.mrf.mxu0
  %v7660 = vadd.f32 0.0, %v7659
  %7661 = vmatmul.f32.gmra.mxu0 %v7294
  %v7662 = vpop.f32.mrf.mxu0
  %v7663 = vadd.f32 0.0, %v7662
  %7664 = vmatmul.f32.gmra.mxu0 %v7297
  %v7665 = vpop.f32.mrf.mxu0
  %v7666 = vadd.f32 0.0, %v7665
  %7667 = vmatmul.f32.gmra.mxu0 %v7300
  %v7668 = vpop.f32.mrf.mxu0
  %v7669 = vadd.f32 0.0, %v7668
  %7670 = vmatmul.f32.gmra.mxu0 %v7303
  %v7671 = vpop.f32.mrf.mxu0
  %v7672 = vadd.f32 0.0, %v7671
  %7673 = vmatmul.f32.gmra.mxu0 %v7306
  %v7674 = vpop.f32.mrf.mxu0
  %v7675 = vadd.f32 0.0, %v7674
  %7676 = vdwg.mxu0
  %v7678 = vsel %vm7283, %v7266, 0
  %v7681 = vsel %vm7283, %v7267, 0
  %v7684 = vsel %vm7283, %v7268, 0
  %v7687 = vsel %vm7283, %v7269, 0
  %v7690 = vsel %vm7283, %v7270, 0
  %v7693 = vsel %vm7283, %v7271, 0
  %v7696 = vsel %vm7283, %v7272, 0
  %v7699 = vsel %vm7283, %v7273, 0
  %7701 = vmatpush.msra.mxu0 0.0
  %7702 = vmatpush.msra.mxu0 0.0
  %7703 = vmatpush.msra.mxu0 0.0
  %7704 = vmatpush.msra.mxu0 0.0
  %7705 = vmatpush.msra.mxu0 0.0
  %7706 = vmatpush.msra.mxu0 0.0
  %7707 = vmatpush.msra.mxu0 0.0
  %7708 = vmatpush.msra.mxu0 0.0
  %7709 = vmatpush.msra.mxu0 0.0
  %7710 = vmatpush.msra.mxu0 0.0
  %7711 = vmatpush.msra.mxu0 0.0
  %7712 = vmatpush.msra.mxu0 %v7215
  %7713 = vmatpush.msra.mxu0 %v7214
  %7714 = vmatpush.msra.mxu0 %v7213
  %7715 = vmatpush.msra.mxu0 %v7212
  %7716 = vmatpush.msra.mxu0 %v7211
  %7717 = vmatmul.f32.gmra.mxu0 %v7678
  %v7718 = vpop.f32.mrf.mxu0
  %v7719 = vadd.f32 %v7326, %v7718
  %7720 = vmatmul.f32.gmra.mxu0 %v7681
  %v7721 = vpop.f32.mrf.mxu0
  %v7722 = vadd.f32 %v7329, %v7721
  %7723 = vmatmul.f32.gmra.mxu0 %v7684
  %v7724 = vpop.f32.mrf.mxu0
  %v7725 = vadd.f32 %v7332, %v7724
  %7726 = vmatmul.f32.gmra.mxu0 %v7687
  %v7727 = vpop.f32.mrf.mxu0
  %v7728 = vadd.f32 %v7335, %v7727
  %7729 = vmatmul.f32.gmra.mxu0 %v7690
  %v7730 = vpop.f32.mrf.mxu0
  %v7731 = vadd.f32 %v7338, %v7730
  %7732 = vmatmul.f32.gmra.mxu0 %v7693
  %v7733 = vpop.f32.mrf.mxu0
  %v7734 = vadd.f32 %v7341, %v7733
  %7735 = vmatmul.f32.gmra.mxu0 %v7696
  %v7736 = vpop.f32.mrf.mxu0
  %v7737 = vadd.f32 %v7344, %v7736
  %7738 = vmatmul.f32.gmra.mxu0 %v7699
  %v7739 = vpop.f32.mrf.mxu0
  %v7740 = vadd.f32 %v7347, %v7739
  %7741 = vdwg.mxu0
  %7742 = vmatpush.msra.mxu0 0.0
  %7743 = vmatpush.msra.mxu0 0.0
  %7744 = vmatpush.msra.mxu0 0.0
  %7745 = vmatpush.msra.mxu0 0.0
  %7746 = vmatpush.msra.mxu0 0.0
  %7747 = vmatpush.msra.mxu0 0.0
  %7748 = vmatpush.msra.mxu0 0.0
  %7749 = vmatpush.msra.mxu0 0.0
  %7750 = vmatpush.msra.mxu0 0.0
  %7751 = vmatpush.msra.mxu0 0.0
  %7752 = vmatpush.msra.mxu0 0.0
  %7753 = vmatpush.msra.mxu0 %v7220
  %7754 = vmatpush.msra.mxu0 %v7219
  %7755 = vmatpush.msra.mxu0 %v7218
  %7756 = vmatpush.msra.mxu0 %v7217
  %7757 = vmatpush.msra.mxu0 %v7216
  %7758 = vmatmul.f32.gmra.mxu0 %v7678
  %v7759 = vpop.f32.mrf.mxu0
  %v7760 = vadd.f32 %v7367, %v7759
  %7761 = vmatmul.f32.gmra.mxu0 %v7681
  %v7762 = vpop.f32.mrf.mxu0
  %v7763 = vadd.f32 %v7370, %v7762
  %7764 = vmatmul.f32.gmra.mxu0 %v7684
  %v7765 = vpop.f32.mrf.mxu0
  %v7766 = vadd.f32 %v7373, %v7765
  %7767 = vmatmul.f32.gmra.mxu0 %v7687
  %v7768 = vpop.f32.mrf.mxu0
  %v7769 = vadd.f32 %v7376, %v7768
  %7770 = vmatmul.f32.gmra.mxu0 %v7690
  %v7771 = vpop.f32.mrf.mxu0
  %v7772 = vadd.f32 %v7379, %v7771
  %7773 = vmatmul.f32.gmra.mxu0 %v7693
  %v7774 = vpop.f32.mrf.mxu0
  %v7775 = vadd.f32 %v7382, %v7774
  %7776 = vmatmul.f32.gmra.mxu0 %v7696
  %v7777 = vpop.f32.mrf.mxu0
  %v7778 = vadd.f32 %v7385, %v7777
  %7779 = vmatmul.f32.gmra.mxu0 %v7699
  %v7780 = vpop.f32.mrf.mxu0
  %v7781 = vadd.f32 %v7388, %v7780
  %7782 = vdwg.mxu0
  %7783 = vmatpush.msra.mxu0 0.0
  %7784 = vmatpush.msra.mxu0 0.0
  %7785 = vmatpush.msra.mxu0 0.0
  %7786 = vmatpush.msra.mxu0 0.0
  %7787 = vmatpush.msra.mxu0 0.0
  %7788 = vmatpush.msra.mxu0 0.0
  %7789 = vmatpush.msra.mxu0 0.0
  %7790 = vmatpush.msra.mxu0 0.0
  %7791 = vmatpush.msra.mxu0 0.0
  %7792 = vmatpush.msra.mxu0 0.0
  %7793 = vmatpush.msra.mxu0 0.0
  %7794 = vmatpush.msra.mxu0 %v7225
  %7795 = vmatpush.msra.mxu0 %v7224
  %7796 = vmatpush.msra.mxu0 %v7223
  %7797 = vmatpush.msra.mxu0 %v7222
  %7798 = vmatpush.msra.mxu0 %v7221
  %7799 = vmatmul.f32.gmra.mxu0 %v7678
  %v7800 = vpop.f32.mrf.mxu0
  %v7801 = vadd.f32 %v7408, %v7800
  %7802 = vmatmul.f32.gmra.mxu0 %v7681
  %v7803 = vpop.f32.mrf.mxu0
  %v7804 = vadd.f32 %v7411, %v7803
  %7805 = vmatmul.f32.gmra.mxu0 %v7684
  %v7806 = vpop.f32.mrf.mxu0
  %v7807 = vadd.f32 %v7414, %v7806
  %7808 = vmatmul.f32.gmra.mxu0 %v7687
  %v7809 = vpop.f32.mrf.mxu0
  %v7810 = vadd.f32 %v7417, %v7809
  %7811 = vmatmul.f32.gmra.mxu0 %v7690
  %v7812 = vpop.f32.mrf.mxu0
  %v7813 = vadd.f32 %v7420, %v7812
  %7814 = vmatmul.f32.gmra.mxu0 %v7693
  %v7815 = vpop.f32.mrf.mxu0
  %v7816 = vadd.f32 %v7423, %v7815
  %7817 = vmatmul.f32.gmra.mxu0 %v7696
  %v7818 = vpop.f32.mrf.mxu0
  %v7819 = vadd.f32 %v7426, %v7818
  %7820 = vmatmul.f32.gmra.mxu0 %v7699
  %v7821 = vpop.f32.mrf.mxu0
  %v7822 = vadd.f32 %v7429, %v7821
  %7823 = vdwg.mxu0
  %7824 = vmatpush.msra.mxu0 0.0
  %7825 = vmatpush.msra.mxu0 0.0
  %7826 = vmatpush.msra.mxu0 0.0
  %7827 = vmatpush.msra.mxu0 0.0
  %7828 = vmatpush.msra.mxu0 0.0
  %7829 = vmatpush.msra.mxu0 0.0
  %7830 = vmatpush.msra.mxu0 0.0
  %7831 = vmatpush.msra.mxu0 0.0
  %7832 = vmatpush.msra.mxu0 0.0
  %7833 = vmatpush.msra.mxu0 0.0
  %7834 = vmatpush.msra.mxu0 0.0
  %7835 = vmatpush.msra.mxu0 %v7230
  %7836 = vmatpush.msra.mxu0 %v7229
  %7837 = vmatpush.msra.mxu0 %v7228
  %7838 = vmatpush.msra.mxu0 %v7227
  %7839 = vmatpush.msra.mxu0 %v7226
  %7840 = vmatmul.f32.gmra.mxu0 %v7678
  %v7841 = vpop.f32.mrf.mxu0
  %v7842 = vadd.f32 %v7449, %v7841
  %7843 = vmatmul.f32.gmra.mxu0 %v7681
  %v7844 = vpop.f32.mrf.mxu0
  %v7845 = vadd.f32 %v7452, %v7844
  %7846 = vmatmul.f32.gmra.mxu0 %v7684
  %v7847 = vpop.f32.mrf.mxu0
  %v7848 = vadd.f32 %v7455, %v7847
  %7849 = vmatmul.f32.gmra.mxu0 %v7687
  %v7850 = vpop.f32.mrf.mxu0
  %v7851 = vadd.f32 %v7458, %v7850
  %7852 = vmatmul.f32.gmra.mxu0 %v7690
  %v7853 = vpop.f32.mrf.mxu0
  %v7854 = vadd.f32 %v7461, %v7853
  %7855 = vmatmul.f32.gmra.mxu0 %v7693
  %v7856 = vpop.f32.mrf.mxu0
  %v7857 = vadd.f32 %v7464, %v7856
  %7858 = vmatmul.f32.gmra.mxu0 %v7696
  %v7859 = vpop.f32.mrf.mxu0
  %v7860 = vadd.f32 %v7467, %v7859
  %7861 = vmatmul.f32.gmra.mxu0 %v7699
  %v7862 = vpop.f32.mrf.mxu0
  %v7863 = vadd.f32 %v7470, %v7862
  %7864 = vdwg.mxu0
  %7865 = vmatpush.msra.mxu0 0.0
  %7866 = vmatpush.msra.mxu0 0.0
  %7867 = vmatpush.msra.mxu0 0.0
  %7868 = vmatpush.msra.mxu0 0.0
  %7869 = vmatpush.msra.mxu0 0.0
  %7870 = vmatpush.msra.mxu0 0.0
  %7871 = vmatpush.msra.mxu0 0.0
  %7872 = vmatpush.msra.mxu0 0.0
  %7873 = vmatpush.msra.mxu0 0.0
  %7874 = vmatpush.msra.mxu0 0.0
  %7875 = vmatpush.msra.mxu0 0.0
  %7876 = vmatpush.msra.mxu0 %v7235
  %7877 = vmatpush.msra.mxu0 %v7234
  %7878 = vmatpush.msra.mxu0 %v7233
  %7879 = vmatpush.msra.mxu0 %v7232
  %7880 = vmatpush.msra.mxu0 %v7231
  %7881 = vmatmul.f32.gmra.mxu0 %v7678
  %v7882 = vpop.f32.mrf.mxu0
  %v7883 = vadd.f32 %v7490, %v7882
  %7884 = vmatmul.f32.gmra.mxu0 %v7681
  %v7885 = vpop.f32.mrf.mxu0
  %v7886 = vadd.f32 %v7493, %v7885
  %7887 = vmatmul.f32.gmra.mxu0 %v7684
  %v7888 = vpop.f32.mrf.mxu0
  %v7889 = vadd.f32 %v7496, %v7888
  %7890 = vmatmul.f32.gmra.mxu0 %v7687
  %v7891 = vpop.f32.mrf.mxu0
  %v7892 = vadd.f32 %v7499, %v7891
  %7893 = vmatmul.f32.gmra.mxu0 %v7690
  %v7894 = vpop.f32.mrf.mxu0
  %v7895 = vadd.f32 %v7502, %v7894
  %7896 = vmatmul.f32.gmra.mxu0 %v7693
  %v7897 = vpop.f32.mrf.mxu0
  %v7898 = vadd.f32 %v7505, %v7897
  %7899 = vmatmul.f32.gmra.mxu0 %v7696
  %v7900 = vpop.f32.mrf.mxu0
  %v7901 = vadd.f32 %v7508, %v7900
  %7902 = vmatmul.f32.gmra.mxu0 %v7699
  %v7903 = vpop.f32.mrf.mxu0
  %v7904 = vadd.f32 %v7511, %v7903
  %7905 = vdwg.mxu0
  %7906 = vmatpush.msra.mxu0 0.0
  %7907 = vmatpush.msra.mxu0 0.0
  %7908 = vmatpush.msra.mxu0 0.0
  %7909 = vmatpush.msra.mxu0 0.0
  %7910 = vmatpush.msra.mxu0 0.0
  %7911 = vmatpush.msra.mxu0 0.0
  %7912 = vmatpush.msra.mxu0 0.0
  %7913 = vmatpush.msra.mxu0 0.0
  %7914 = vmatpush.msra.mxu0 0.0
  %7915 = vmatpush.msra.mxu0 0.0
  %7916 = vmatpush.msra.mxu0 0.0
  %7917 = vmatpush.msra.mxu0 %v7240
  %7918 = vmatpush.msra.mxu0 %v7239
  %7919 = vmatpush.msra.mxu0 %v7238
  %7920 = vmatpush.msra.mxu0 %v7237
  %7921 = vmatpush.msra.mxu0 %v7236
  %7922 = vmatmul.f32.gmra.mxu0 %v7678
  %v7923 = vpop.f32.mrf.mxu0
  %v7924 = vadd.f32 %v7531, %v7923
  %7925 = vmatmul.f32.gmra.mxu0 %v7681
  %v7926 = vpop.f32.mrf.mxu0
  %v7927 = vadd.f32 %v7534, %v7926
  %7928 = vmatmul.f32.gmra.mxu0 %v7684
  %v7929 = vpop.f32.mrf.mxu0
  %v7930 = vadd.f32 %v7537, %v7929
  %7931 = vmatmul.f32.gmra.mxu0 %v7687
  %v7932 = vpop.f32.mrf.mxu0
  %v7933 = vadd.f32 %v7540, %v7932
  %7934 = vmatmul.f32.gmra.mxu0 %v7690
  %v7935 = vpop.f32.mrf.mxu0
  %v7936 = vadd.f32 %v7543, %v7935
  %7937 = vmatmul.f32.gmra.mxu0 %v7693
  %v7938 = vpop.f32.mrf.mxu0
  %v7939 = vadd.f32 %v7546, %v7938
  %7940 = vmatmul.f32.gmra.mxu0 %v7696
  %v7941 = vpop.f32.mrf.mxu0
  %v7942 = vadd.f32 %v7549, %v7941
  %7943 = vmatmul.f32.gmra.mxu0 %v7699
  %v7944 = vpop.f32.mrf.mxu0
  %v7945 = vadd.f32 %v7552, %v7944
  %7946 = vdwg.mxu0
  %7947 = vmatpush.msra.mxu0 0.0
  %7948 = vmatpush.msra.mxu0 0.0
  %7949 = vmatpush.msra.mxu0 0.0
  %7950 = vmatpush.msra.mxu0 0.0
  %7951 = vmatpush.msra.mxu0 0.0
  %7952 = vmatpush.msra.mxu0 0.0
  %7953 = vmatpush.msra.mxu0 0.0
  %7954 = vmatpush.msra.mxu0 0.0
  %7955 = vmatpush.msra.mxu0 0.0
  %7956 = vmatpush.msra.mxu0 0.0
  %7957 = vmatpush.msra.mxu0 0.0
  %7958 = vmatpush.msra.mxu0 %v7245
  %7959 = vmatpush.msra.mxu0 %v7244
  %7960 = vmatpush.msra.mxu0 %v7243
  %7961 = vmatpush.msra.mxu0 %v7242
  %7962 = vmatpush.msra.mxu0 %v7241
  %7963 = vmatmul.f32.gmra.mxu0 %v7678
  %v7964 = vpop.f32.mrf.mxu0
  %v7965 = vadd.f32 %v7572, %v7964
  %7966 = vmatmul.f32.gmra.mxu0 %v7681
  %v7967 = vpop.f32.mrf.mxu0
  %v7968 = vadd.f32 %v7575, %v7967
  %7969 = vmatmul.f32.gmra.mxu0 %v7684
  %v7970 = vpop.f32.mrf.mxu0
  %v7971 = vadd.f32 %v7578, %v7970
  %7972 = vmatmul.f32.gmra.mxu0 %v7687
  %v7973 = vpop.f32.mrf.mxu0
  %v7974 = vadd.f32 %v7581, %v7973
  %7975 = vmatmul.f32.gmra.mxu0 %v7690
  %v7976 = vpop.f32.mrf.mxu0
  %v7977 = vadd.f32 %v7584, %v7976
  %7978 = vmatmul.f32.gmra.mxu0 %v7693
  %v7979 = vpop.f32.mrf.mxu0
  %v7980 = vadd.f32 %v7587, %v7979
  %7981 = vmatmul.f32.gmra.mxu0 %v7696
  %v7982 = vpop.f32.mrf.mxu0
  %v7983 = vadd.f32 %v7590, %v7982
  %7984 = vmatmul.f32.gmra.mxu0 %v7699
  %v7985 = vpop.f32.mrf.mxu0
  %v7986 = vadd.f32 %v7593, %v7985
  %7987 = vdwg.mxu0
  %7988 = vmatpush.msra.mxu0 0.0
  %7989 = vmatpush.msra.mxu0 0.0
  %7990 = vmatpush.msra.mxu0 0.0
  %7991 = vmatpush.msra.mxu0 0.0
  %7992 = vmatpush.msra.mxu0 0.0
  %7993 = vmatpush.msra.mxu0 0.0
  %7994 = vmatpush.msra.mxu0 0.0
  %7995 = vmatpush.msra.mxu0 0.0
  %7996 = vmatpush.msra.mxu0 0.0
  %7997 = vmatpush.msra.mxu0 0.0
  %7998 = vmatpush.msra.mxu0 0.0
  %7999 = vmatpush.msra.mxu0 %v7250
  %8000 = vmatpush.msra.mxu0 %v7249
  %8001 = vmatpush.msra.mxu0 %v7248
  %8002 = vmatpush.msra.mxu0 %v7247
  %8003 = vmatpush.msra.mxu0 %v7246
  %8004 = vmatmul.f32.gmra.mxu0 %v7678
  %v8005 = vpop.f32.mrf.mxu0
  %v8006 = vadd.f32 %v7613, %v8005
  %8007 = vmatmul.f32.gmra.mxu0 %v7681
  %v8008 = vpop.f32.mrf.mxu0
  %v8009 = vadd.f32 %v7616, %v8008
  %8010 = vmatmul.f32.gmra.mxu0 %v7684
  %v8011 = vpop.f32.mrf.mxu0
  %v8012 = vadd.f32 %v7619, %v8011
  %8013 = vmatmul.f32.gmra.mxu0 %v7687
  %v8014 = vpop.f32.mrf.mxu0
  %v8015 = vadd.f32 %v7622, %v8014
  %8016 = vmatmul.f32.gmra.mxu0 %v7690
  %v8017 = vpop.f32.mrf.mxu0
  %v8018 = vadd.f32 %v7625, %v8017
  %8019 = vmatmul.f32.gmra.mxu0 %v7693
  %v8020 = vpop.f32.mrf.mxu0
  %v8021 = vadd.f32 %v7628, %v8020
  %8022 = vmatmul.f32.gmra.mxu0 %v7696
  %v8023 = vpop.f32.mrf.mxu0
  %v8024 = vadd.f32 %v7631, %v8023
  %8025 = vmatmul.f32.gmra.mxu0 %v7699
  %v8026 = vpop.f32.mrf.mxu0
  %v8027 = vadd.f32 %v7634, %v8026
  %8028 = vdwg.mxu0
  %8029 = vmatpush.msra.mxu0 0.0
  %8030 = vmatpush.msra.mxu0 0.0
  %8031 = vmatpush.msra.mxu0 0.0
  %8032 = vmatpush.msra.mxu0 0.0
  %8033 = vmatpush.msra.mxu0 0.0
  %8034 = vmatpush.msra.mxu0 0.0
  %8035 = vmatpush.msra.mxu0 0.0
  %8036 = vmatpush.msra.mxu0 0.0
  %8037 = vmatpush.msra.mxu0 0.0
  %8038 = vmatpush.msra.mxu0 0.0
  %8039 = vmatpush.msra.mxu0 0.0
  %8040 = vmatpush.msra.mxu0 %v7255
  %8041 = vmatpush.msra.mxu0 %v7254
  %8042 = vmatpush.msra.mxu0 %v7253
  %8043 = vmatpush.msra.mxu0 %v7252
  %8044 = vmatpush.msra.mxu0 %v7251
  %8045 = vmatmul.f32.gmra.mxu0 %v7678
  %v8046 = vpop.f32.mrf.mxu0
  %v8047 = vadd.f32 %v7654, %v8046
  %8048 = vmatmul.f32.gmra.mxu0 %v7681
  %v8049 = vpop.f32.mrf.mxu0
  %v8050 = vadd.f32 %v7657, %v8049
  %8051 = vmatmul.f32.gmra.mxu0 %v7684
  %v8052 = vpop.f32.mrf.mxu0
  %v8053 = vadd.f32 %v7660, %v8052
  %8054 = vmatmul.f32.gmra.mxu0 %v7687
  %v8055 = vpop.f32.mrf.mxu0
  %v8056 = vadd.f32 %v7663, %v8055
  %8057 = vmatmul.f32.gmra.mxu0 %v7690
  %v8058 = vpop.f32.mrf.mxu0
  %v8059 = vadd.f32 %v7666, %v8058
  %8060 = vmatmul.f32.gmra.mxu0 %v7693
  %v8061 = vpop.f32.mrf.mxu0
  %v8062 = vadd.f32 %v7669, %v8061
  %8063 = vmatmul.f32.gmra.mxu0 %v7696
  %v8064 = vpop.f32.mrf.mxu0
  %v8065 = vadd.f32 %v7672, %v8064
  %8066 = vmatmul.f32.gmra.mxu0 %v7699
  %v8067 = vpop.f32.mrf.mxu0
  %v8068 = vadd.f32 %v7675, %v8067
  %8069 = vdwg.mxu0
  %s8070 = scalar_lea.vmem %s5, 128
  %v8071 = vld [vmem:[%s8070] sm:$0xff]
  %v8072 = vld [vmem:[%s8070 + $0x8] sm:$0xff]
  %v8073 = vld [vmem:[%s8070 + $0x10] sm:$0xff]
  %v8074 = vld [vmem:[%s8070 + $0x18] sm:$0xff]
  %v8075 = vld [vmem:[%s8070 + $0x20] sm:$0xff]
  %v8076 = vld [vmem:[%s8070 + $0x28] sm:$0xff]
  %v8077 = vld [vmem:[%s8070 + $0x30] sm:$0xff]
  %v8078 = vld [vmem:[%s8070 + $0x38] sm:$0xf]
  %v8080 = vsel %vm7283, %v8071, 0
  %v8083 = vsel %vm7283, %v8072, 0
  %v8086 = vsel %vm7283, %v8073, 0
  %v8089 = vsel %vm7283, %v8074, 0
  %v8092 = vsel %vm7283, %v8075, 0
  %v8095 = vsel %vm7283, %v8076, 0
  %v8098 = vsel %vm7283, %v8077, 0
  %v8101 = vsel %vm7283, %v8078, 0
  %8103 = vmatpush.msra.mxu0 0.0
  %8104 = vmatpush.msra.mxu0 0.0
  %8105 = vmatpush.msra.mxu0 0.0
  %8106 = vmatpush.msra.mxu0 0.0
  %8107 = vmatpush.msra.mxu0 0.0
  %8108 = vmatpush.msra.mxu0 0.0
  %8109 = vmatpush.msra.mxu0 0.0
  %8110 = vmatpush.msra.mxu0 0.0
  %8111 = vmatpush.msra.mxu0 0.0
  %8112 = vmatpush.msra.mxu0 0.0
  %8113 = vmatpush.msra.mxu0 0.0
  %8114 = vmatpush.msra.mxu0 %v7225
  %8115 = vmatpush.msra.mxu0 %v7224
  %8116 = vmatpush.msra.mxu0 %v7223
  %8117 = vmatpush.msra.mxu0 %v7222
  %8118 = vmatpush.msra.mxu0 %v7221
  %8119 = vmatmul.f32.gmra.mxu0 %v8080
  %v8120 = vpop.f32.mrf.mxu0
  %v8121 = vadd.f32 0.0, %v8120
  %8122 = vmatmul.f32.gmra.mxu0 %v8083
  %v8123 = vpop.f32.mrf.mxu0
  %v8124 = vadd.f32 0.0, %v8123
  %8125 = vmatmul.f32.gmra.mxu0 %v8086
  %v8126 = vpop.f32.mrf.mxu0
  %v8127 = vadd.f32 0.0, %v8126
  %8128 = vmatmul.f32.gmra.mxu0 %v8089
  %v8129 = vpop.f32.mrf.mxu0
  %v8130 = vadd.f32 0.0, %v8129
  %8131 = vmatmul.f32.gmra.mxu0 %v8092
  %v8132 = vpop.f32.mrf.mxu0
  %v8133 = vadd.f32 0.0, %v8132
  %8134 = vmatmul.f32.gmra.mxu0 %v8095
  %v8135 = vpop.f32.mrf.mxu0
  %v8136 = vadd.f32 0.0, %v8135
  %8137 = vmatmul.f32.gmra.mxu0 %v8098
  %v8138 = vpop.f32.mrf.mxu0
  %v8139 = vadd.f32 0.0, %v8138
  %8140 = vmatmul.f32.gmra.mxu0 %v8101
  %v8141 = vpop.f32.mrf.mxu0
  %v8142 = vadd.f32 0.0, %v8141
  %8143 = vdwg.mxu0
  %8144 = vmatpush.msra.mxu0 0.0
  %8145 = vmatpush.msra.mxu0 0.0
  %8146 = vmatpush.msra.mxu0 0.0
  %8147 = vmatpush.msra.mxu0 0.0
  %8148 = vmatpush.msra.mxu0 0.0
  %8149 = vmatpush.msra.mxu0 0.0
  %8150 = vmatpush.msra.mxu0 0.0
  %8151 = vmatpush.msra.mxu0 0.0
  %8152 = vmatpush.msra.mxu0 0.0
  %8153 = vmatpush.msra.mxu0 0.0
  %8154 = vmatpush.msra.mxu0 0.0
  %8155 = vmatpush.msra.mxu0 %v7230
  %8156 = vmatpush.msra.mxu0 %v7229
  %8157 = vmatpush.msra.mxu0 %v7228
  %8158 = vmatpush.msra.mxu0 %v7227
  %8159 = vmatpush.msra.mxu0 %v7226
  %8160 = vmatmul.f32.gmra.mxu0 %v8080
  %v8161 = vpop.f32.mrf.mxu0
  %v8162 = vadd.f32 0.0, %v8161
  %8163 = vmatmul.f32.gmra.mxu0 %v8083
  %v8164 = vpop.f32.mrf.mxu0
  %v8165 = vadd.f32 0.0, %v8164
  %8166 = vmatmul.f32.gmra.mxu0 %v8086
  %v8167 = vpop.f32.mrf.mxu0
  %v8168 = vadd.f32 0.0, %v8167
  %8169 = vmatmul.f32.gmra.mxu0 %v8089
  %v8170 = vpop.f32.mrf.mxu0
  %v8171 = vadd.f32 0.0, %v8170
  %8172 = vmatmul.f32.gmra.mxu0 %v8092
  %v8173 = vpop.f32.mrf.mxu0
  %v8174 = vadd.f32 0.0, %v8173
  %8175 = vmatmul.f32.gmra.mxu0 %v8095
  %v8176 = vpop.f32.mrf.mxu0
  %v8177 = vadd.f32 0.0, %v8176
  %8178 = vmatmul.f32.gmra.mxu0 %v8098
  %v8179 = vpop.f32.mrf.mxu0
  %v8180 = vadd.f32 0.0, %v8179
  %8181 = vmatmul.f32.gmra.mxu0 %v8101
  %v8182 = vpop.f32.mrf.mxu0
  %v8183 = vadd.f32 0.0, %v8182
  %8184 = vdwg.mxu0
  %8185 = vmatpush.msra.mxu0 0.0
  %8186 = vmatpush.msra.mxu0 0.0
  %8187 = vmatpush.msra.mxu0 0.0
  %8188 = vmatpush.msra.mxu0 0.0
  %8189 = vmatpush.msra.mxu0 0.0
  %8190 = vmatpush.msra.mxu0 0.0
  %8191 = vmatpush.msra.mxu0 0.0
  %8192 = vmatpush.msra.mxu0 0.0
  %8193 = vmatpush.msra.mxu0 0.0
  %8194 = vmatpush.msra.mxu0 0.0
  %8195 = vmatpush.msra.mxu0 0.0
  %8196 = vmatpush.msra.mxu0 %v7235
  %8197 = vmatpush.msra.mxu0 %v7234
  %8198 = vmatpush.msra.mxu0 %v7233
  %8199 = vmatpush.msra.mxu0 %v7232
  %8200 = vmatpush.msra.mxu0 %v7231
  %8201 = vmatmul.f32.gmra.mxu0 %v8080
  %v8202 = vpop.f32.mrf.mxu0
  %v8203 = vadd.f32 0.0, %v8202
  %8204 = vmatmul.f32.gmra.mxu0 %v8083
  %v8205 = vpop.f32.mrf.mxu0
  %v8206 = vadd.f32 0.0, %v8205
  %8207 = vmatmul.f32.gmra.mxu0 %v8086
  %v8208 = vpop.f32.mrf.mxu0
  %v8209 = vadd.f32 0.0, %v8208
  %8210 = vmatmul.f32.gmra.mxu0 %v8089
  %v8211 = vpop.f32.mrf.mxu0
  %v8212 = vadd.f32 0.0, %v8211
  %8213 = vmatmul.f32.gmra.mxu0 %v8092
  %v8214 = vpop.f32.mrf.mxu0
  %v8215 = vadd.f32 0.0, %v8214
  %8216 = vmatmul.f32.gmra.mxu0 %v8095
  %v8217 = vpop.f32.mrf.mxu0
  %v8218 = vadd.f32 0.0, %v8217
  %8219 = vmatmul.f32.gmra.mxu0 %v8098
  %v8220 = vpop.f32.mrf.mxu0
  %v8221 = vadd.f32 0.0, %v8220
  %8222 = vmatmul.f32.gmra.mxu0 %v8101
  %v8223 = vpop.f32.mrf.mxu0
  %v8224 = vadd.f32 0.0, %v8223
  %8225 = vdwg.mxu0
  %8226 = vmatpush.msra.mxu0 0.0
  %8227 = vmatpush.msra.mxu0 0.0
  %8228 = vmatpush.msra.mxu0 0.0
  %8229 = vmatpush.msra.mxu0 0.0
  %8230 = vmatpush.msra.mxu0 0.0
  %8231 = vmatpush.msra.mxu0 0.0
  %8232 = vmatpush.msra.mxu0 0.0
  %8233 = vmatpush.msra.mxu0 0.0
  %8234 = vmatpush.msra.mxu0 0.0
  %8235 = vmatpush.msra.mxu0 0.0
  %8236 = vmatpush.msra.mxu0 0.0
  %8237 = vmatpush.msra.mxu0 %v7240
  %8238 = vmatpush.msra.mxu0 %v7239
  %8239 = vmatpush.msra.mxu0 %v7238
  %8240 = vmatpush.msra.mxu0 %v7237
  %8241 = vmatpush.msra.mxu0 %v7236
  %8242 = vmatmul.f32.gmra.mxu0 %v8080
  %v8243 = vpop.f32.mrf.mxu0
  %v8244 = vadd.f32 0.0, %v8243
  %8245 = vmatmul.f32.gmra.mxu0 %v8083
  %v8246 = vpop.f32.mrf.mxu0
  %v8247 = vadd.f32 0.0, %v8246
  %8248 = vmatmul.f32.gmra.mxu0 %v8086
  %v8249 = vpop.f32.mrf.mxu0
  %v8250 = vadd.f32 0.0, %v8249
  %8251 = vmatmul.f32.gmra.mxu0 %v8089
  %v8252 = vpop.f32.mrf.mxu0
  %v8253 = vadd.f32 0.0, %v8252
  %8254 = vmatmul.f32.gmra.mxu0 %v8092
  %v8255 = vpop.f32.mrf.mxu0
  %v8256 = vadd.f32 0.0, %v8255
  %8257 = vmatmul.f32.gmra.mxu0 %v8095
  %v8258 = vpop.f32.mrf.mxu0
  %v8259 = vadd.f32 0.0, %v8258
  %8260 = vmatmul.f32.gmra.mxu0 %v8098
  %v8261 = vpop.f32.mrf.mxu0
  %v8262 = vadd.f32 0.0, %v8261
  %8263 = vmatmul.f32.gmra.mxu0 %v8101
  %v8264 = vpop.f32.mrf.mxu0
  %v8265 = vadd.f32 0.0, %v8264
  %8266 = vdwg.mxu0
  %8267 = vmatpush.msra.mxu0 0.0
  %8268 = vmatpush.msra.mxu0 0.0
  %8269 = vmatpush.msra.mxu0 0.0
  %8270 = vmatpush.msra.mxu0 0.0
  %8271 = vmatpush.msra.mxu0 0.0
  %8272 = vmatpush.msra.mxu0 0.0
  %8273 = vmatpush.msra.mxu0 0.0
  %8274 = vmatpush.msra.mxu0 0.0
  %8275 = vmatpush.msra.mxu0 0.0
  %8276 = vmatpush.msra.mxu0 0.0
  %8277 = vmatpush.msra.mxu0 0.0
  %8278 = vmatpush.msra.mxu0 %v7245
  %8279 = vmatpush.msra.mxu0 %v7244
  %8280 = vmatpush.msra.mxu0 %v7243
  %8281 = vmatpush.msra.mxu0 %v7242
  %8282 = vmatpush.msra.mxu0 %v7241
  %8283 = vmatmul.f32.gmra.mxu0 %v8080
  %v8284 = vpop.f32.mrf.mxu0
  %v8285 = vadd.f32 0.0, %v8284
  %8286 = vmatmul.f32.gmra.mxu0 %v8083
  %v8287 = vpop.f32.mrf.mxu0
  %v8288 = vadd.f32 0.0, %v8287
  %8289 = vmatmul.f32.gmra.mxu0 %v8086
  %v8290 = vpop.f32.mrf.mxu0
  %v8291 = vadd.f32 0.0, %v8290
  %8292 = vmatmul.f32.gmra.mxu0 %v8089
  %v8293 = vpop.f32.mrf.mxu0
  %v8294 = vadd.f32 0.0, %v8293
  %8295 = vmatmul.f32.gmra.mxu0 %v8092
  %v8296 = vpop.f32.mrf.mxu0
  %v8297 = vadd.f32 0.0, %v8296
  %8298 = vmatmul.f32.gmra.mxu0 %v8095
  %v8299 = vpop.f32.mrf.mxu0
  %v8300 = vadd.f32 0.0, %v8299
  %8301 = vmatmul.f32.gmra.mxu0 %v8098
  %v8302 = vpop.f32.mrf.mxu0
  %v8303 = vadd.f32 0.0, %v8302
  %8304 = vmatmul.f32.gmra.mxu0 %v8101
  %v8305 = vpop.f32.mrf.mxu0
  %v8306 = vadd.f32 0.0, %v8305
  %8307 = vdwg.mxu0
  %8308 = vmatpush.msra.mxu0 0.0
  %8309 = vmatpush.msra.mxu0 0.0
  %8310 = vmatpush.msra.mxu0 0.0
  %8311 = vmatpush.msra.mxu0 0.0
  %8312 = vmatpush.msra.mxu0 0.0
  %8313 = vmatpush.msra.mxu0 0.0
  %8314 = vmatpush.msra.mxu0 0.0
  %8315 = vmatpush.msra.mxu0 0.0
  %8316 = vmatpush.msra.mxu0 0.0
  %8317 = vmatpush.msra.mxu0 0.0
  %8318 = vmatpush.msra.mxu0 0.0
  %8319 = vmatpush.msra.mxu0 %v7250
  %8320 = vmatpush.msra.mxu0 %v7249
  %8321 = vmatpush.msra.mxu0 %v7248
  %8322 = vmatpush.msra.mxu0 %v7247
  %8323 = vmatpush.msra.mxu0 %v7246
  %8324 = vmatmul.f32.gmra.mxu0 %v8080
  %v8325 = vpop.f32.mrf.mxu0
  %v8326 = vadd.f32 0.0, %v8325
  %8327 = vmatmul.f32.gmra.mxu0 %v8083
  %v8328 = vpop.f32.mrf.mxu0
  %v8329 = vadd.f32 0.0, %v8328
  %8330 = vmatmul.f32.gmra.mxu0 %v8086
  %v8331 = vpop.f32.mrf.mxu0
  %v8332 = vadd.f32 0.0, %v8331
  %8333 = vmatmul.f32.gmra.mxu0 %v8089
  %v8334 = vpop.f32.mrf.mxu0
  %v8335 = vadd.f32 0.0, %v8334
  %8336 = vmatmul.f32.gmra.mxu0 %v8092
  %v8337 = vpop.f32.mrf.mxu0
  %v8338 = vadd.f32 0.0, %v8337
  %8339 = vmatmul.f32.gmra.mxu0 %v8095
  %v8340 = vpop.f32.mrf.mxu0
  %v8341 = vadd.f32 0.0, %v8340
  %8342 = vmatmul.f32.gmra.mxu0 %v8098
  %v8343 = vpop.f32.mrf.mxu0
  %v8344 = vadd.f32 0.0, %v8343
  %8345 = vmatmul.f32.gmra.mxu0 %v8101
  %v8346 = vpop.f32.mrf.mxu0
  %v8347 = vadd.f32 0.0, %v8346
  %8348 = vdwg.mxu0
  %8349 = vmatpush.msra.mxu0 0.0
  %8350 = vmatpush.msra.mxu0 0.0
  %8351 = vmatpush.msra.mxu0 0.0
  %8352 = vmatpush.msra.mxu0 0.0
  %8353 = vmatpush.msra.mxu0 0.0
  %8354 = vmatpush.msra.mxu0 0.0
  %8355 = vmatpush.msra.mxu0 0.0
  %8356 = vmatpush.msra.mxu0 0.0
  %8357 = vmatpush.msra.mxu0 0.0
  %8358 = vmatpush.msra.mxu0 0.0
  %8359 = vmatpush.msra.mxu0 0.0
  %8360 = vmatpush.msra.mxu0 %v7255
  %8361 = vmatpush.msra.mxu0 %v7254
  %8362 = vmatpush.msra.mxu0 %v7253
  %8363 = vmatpush.msra.mxu0 %v7252
  %8364 = vmatpush.msra.mxu0 %v7251
  %8365 = vmatmul.f32.gmra.mxu0 %v8080
  %v8366 = vpop.f32.mrf.mxu0
  %v8367 = vadd.f32 0.0, %v8366
  %8368 = vmatmul.f32.gmra.mxu0 %v8083
  %v8369 = vpop.f32.mrf.mxu0
  %v8370 = vadd.f32 0.0, %v8369
  %8371 = vmatmul.f32.gmra.mxu0 %v8086
  %v8372 = vpop.f32.mrf.mxu0
  %v8373 = vadd.f32 0.0, %v8372
  %8374 = vmatmul.f32.gmra.mxu0 %v8089
  %v8375 = vpop.f32.mrf.mxu0
  %v8376 = vadd.f32 0.0, %v8375
  %8377 = vmatmul.f32.gmra.mxu0 %v8092
  %v8378 = vpop.f32.mrf.mxu0
  %v8379 = vadd.f32 0.0, %v8378
  %8380 = vmatmul.f32.gmra.mxu0 %v8095
  %v8381 = vpop.f32.mrf.mxu0
  %v8382 = vadd.f32 0.0, %v8381
  %8383 = vmatmul.f32.gmra.mxu0 %v8098
  %v8384 = vpop.f32.mrf.mxu0
  %v8385 = vadd.f32 0.0, %v8384
  %8386 = vmatmul.f32.gmra.mxu0 %v8101
  %v8387 = vpop.f32.mrf.mxu0
  %v8388 = vadd.f32 0.0, %v8387
  %8389 = vdwg.mxu0
  %8390 = vmatpush.msra.mxu0 0.0
  %8391 = vmatpush.msra.mxu0 0.0
  %8392 = vmatpush.msra.mxu0 0.0
  %8393 = vmatpush.msra.mxu0 0.0
  %8394 = vmatpush.msra.mxu0 0.0
  %8395 = vmatpush.msra.mxu0 0.0
  %8396 = vmatpush.msra.mxu0 0.0
  %8397 = vmatpush.msra.mxu0 0.0
  %8398 = vmatpush.msra.mxu0 0.0
  %8399 = vmatpush.msra.mxu0 0.0
  %8400 = vmatpush.msra.mxu0 0.0
  %8401 = vmatpush.msra.mxu0 %v7260
  %8402 = vmatpush.msra.mxu0 %v7259
  %8403 = vmatpush.msra.mxu0 %v7258
  %8404 = vmatpush.msra.mxu0 %v7257
  %8405 = vmatpush.msra.mxu0 %v7256
  %8406 = vmatmul.f32.gmra.mxu0 %v8080
  %v8407 = vpop.f32.mrf.mxu0
  %v8408 = vadd.f32 0.0, %v8407
  %8409 = vmatmul.f32.gmra.mxu0 %v8083
  %v8410 = vpop.f32.mrf.mxu0
  %v8411 = vadd.f32 0.0, %v8410
  %8412 = vmatmul.f32.gmra.mxu0 %v8086
  %v8413 = vpop.f32.mrf.mxu0
  %v8414 = vadd.f32 0.0, %v8413
  %8415 = vmatmul.f32.gmra.mxu0 %v8089
  %v8416 = vpop.f32.mrf.mxu0
  %v8417 = vadd.f32 0.0, %v8416
  %8418 = vmatmul.f32.gmra.mxu0 %v8092
  %v8419 = vpop.f32.mrf.mxu0
  %v8420 = vadd.f32 0.0, %v8419
  %8421 = vmatmul.f32.gmra.mxu0 %v8095
  %v8422 = vpop.f32.mrf.mxu0
  %v8423 = vadd.f32 0.0, %v8422
  %8424 = vmatmul.f32.gmra.mxu0 %v8098
  %v8425 = vpop.f32.mrf.mxu0
  %v8426 = vadd.f32 0.0, %v8425
  %8427 = vmatmul.f32.gmra.mxu0 %v8101
  %v8428 = vpop.f32.mrf.mxu0
  %v8429 = vadd.f32 0.0, %v8428
  %8430 = vdwg.mxu0
  %8431 = vmatpush.msra.mxu0 0.0
  %8432 = vmatpush.msra.mxu0 0.0
  %8433 = vmatpush.msra.mxu0 0.0
  %8434 = vmatpush.msra.mxu0 0.0
  %8435 = vmatpush.msra.mxu0 0.0
  %8436 = vmatpush.msra.mxu0 0.0
  %8437 = vmatpush.msra.mxu0 0.0
  %8438 = vmatpush.msra.mxu0 0.0
  %8439 = vmatpush.msra.mxu0 0.0
  %8440 = vmatpush.msra.mxu0 0.0
  %8441 = vmatpush.msra.mxu0 0.0
  %8442 = vmatpush.msra.mxu0 %v7265
  %8443 = vmatpush.msra.mxu0 %v7264
  %8444 = vmatpush.msra.mxu0 %v7263
  %8445 = vmatpush.msra.mxu0 %v7262
  %8446 = vmatpush.msra.mxu0 %v7261
  %8447 = vmatmul.f32.gmra.mxu0 %v8080
  %v8448 = vpop.f32.mrf.mxu0
  %v8449 = vadd.f32 0.0, %v8448
  %8450 = vmatmul.f32.gmra.mxu0 %v8083
  %v8451 = vpop.f32.mrf.mxu0
  %v8452 = vadd.f32 0.0, %v8451
  %8453 = vmatmul.f32.gmra.mxu0 %v8086
  %v8454 = vpop.f32.mrf.mxu0
  %v8455 = vadd.f32 0.0, %v8454
  %8456 = vmatmul.f32.gmra.mxu0 %v8089
  %v8457 = vpop.f32.mrf.mxu0
  %v8458 = vadd.f32 0.0, %v8457
  %8459 = vmatmul.f32.gmra.mxu0 %v8092
  %v8460 = vpop.f32.mrf.mxu0
  %v8461 = vadd.f32 0.0, %v8460
  %8462 = vmatmul.f32.gmra.mxu0 %v8095
  %v8463 = vpop.f32.mrf.mxu0
  %v8464 = vadd.f32 0.0, %v8463
  %8465 = vmatmul.f32.gmra.mxu0 %v8098
  %v8466 = vpop.f32.mrf.mxu0
  %v8467 = vadd.f32 0.0, %v8466
  %8468 = vmatmul.f32.gmra.mxu0 %v8101
  %v8469 = vpop.f32.mrf.mxu0
  %v8470 = vadd.f32 0.0, %v8469
  %8471 = vdwg.mxu0
  %v8472 = vadd.f32 %v7719, %v8121
  %v8473 = vadd.f32 %v7760, %v8162
  %v8474 = vadd.f32 %v7801, %v8203
  %v8475 = vadd.f32 %v7842, %v8244
  %v8476 = vadd.f32 %v7883, %v8285
  %v8477 = vadd.f32 %v7924, %v8326
  %v8478 = vadd.f32 %v7965, %v8367
  %v8479 = vadd.f32 %v8006, %v8408
  %v8480 = vadd.f32 %v8047, %v8449
  %v8481 = vadd.f32 %v7722, %v8124
  %v8482 = vadd.f32 %v7763, %v8165
  %v8483 = vadd.f32 %v7804, %v8206
  %v8484 = vadd.f32 %v7845, %v8247
  %v8485 = vadd.f32 %v7886, %v8288
  %v8486 = vadd.f32 %v7927, %v8329
  %v8487 = vadd.f32 %v7968, %v8370
  %v8488 = vadd.f32 %v8009, %v8411
  %v8489 = vadd.f32 %v8050, %v8452
  %v8490 = vadd.f32 %v7725, %v8127
  %v8491 = vadd.f32 %v7766, %v8168
  %v8492 = vadd.f32 %v7807, %v8209
  %v8493 = vadd.f32 %v7848, %v8250
  %v8494 = vadd.f32 %v7889, %v8291
  %v8495 = vadd.f32 %v7930, %v8332
  %v8496 = vadd.f32 %v7971, %v8373
  %v8497 = vadd.f32 %v8012, %v8414
  %v8498 = vadd.f32 %v8053, %v8455
  %v8499 = vadd.f32 %v7728, %v8130
  %v8500 = vadd.f32 %v7769, %v8171
  %v8501 = vadd.f32 %v7810, %v8212
  %v8502 = vadd.f32 %v7851, %v8253
  %v8503 = vadd.f32 %v7892, %v8294
  %v8504 = vadd.f32 %v7933, %v8335
  %v8505 = vadd.f32 %v7974, %v8376
  %v8506 = vadd.f32 %v8015, %v8417
  %v8507 = vadd.f32 %v8056, %v8458
  %v8508 = vadd.f32 %v7731, %v8133
  %v8509 = vadd.f32 %v7772, %v8174
  %v8510 = vadd.f32 %v7813, %v8215
  %v8511 = vadd.f32 %v7854, %v8256
  %v8512 = vadd.f32 %v7895, %v8297
  %v8513 = vadd.f32 %v7936, %v8338
  %v8514 = vadd.f32 %v7977, %v8379
  %v8515 = vadd.f32 %v8018, %v8420
  %v8516 = vadd.f32 %v8059, %v8461
  %v8517 = vadd.f32 %v7734, %v8136
  %v8518 = vadd.f32 %v7775, %v8177
  %v8519 = vadd.f32 %v7816, %v8218
  %v8520 = vadd.f32 %v7857, %v8259
  %v8521 = vadd.f32 %v7898, %v8300
  %v8522 = vadd.f32 %v7939, %v8341
  %v8523 = vadd.f32 %v7980, %v8382
  %v8524 = vadd.f32 %v8021, %v8423
  %v8525 = vadd.f32 %v8062, %v8464
  %v8526 = vadd.f32 %v7737, %v8139
  %v8527 = vadd.f32 %v7778, %v8180
  %v8528 = vadd.f32 %v7819, %v8221
  %v8529 = vadd.f32 %v7860, %v8262
  %v8530 = vadd.f32 %v7901, %v8303
  %v8531 = vadd.f32 %v7942, %v8344
  %v8532 = vadd.f32 %v7983, %v8385
  %v8533 = vadd.f32 %v8024, %v8426
  %v8534 = vadd.f32 %v8065, %v8467
  %v8535 = vadd.f32 %v7740, %v8142
  %v8536 = vadd.f32 %v7781, %v8183
  %v8537 = vadd.f32 %v7822, %v8224
  %v8538 = vadd.f32 %v7863, %v8265
  %v8539 = vadd.f32 %v7904, %v8306
  %v8540 = vadd.f32 %v7945, %v8347
  %v8541 = vadd.f32 %v7986, %v8388
  %v8542 = vadd.f32 %v8027, %v8429
  %v8543 = vadd.f32 %v8068, %v8470
  %v8544 = vld [vmem:[%s6] sm:$0xff]
  %v8545 = vld [vmem:[%s6 + $0x8] sm:$0xff]
  %v8546 = vld [vmem:[%s6 + $0x10] sm:$0xff]
  %v8547 = vld [vmem:[%s6 + $0x18] sm:$0xff]
  %v8548 = vld [vmem:[%s6 + $0x20] sm:$0xff]
  %v8549 = vld [vmem:[%s6 + $0x28] sm:$0xff]
  %v8550 = vld [vmem:[%s6 + $0x30] sm:$0xff]
  %v8551 = vld [vmem:[%s6 + $0x38] sm:$0xf]
  %8553 = vset.pattern.permute.xlu0 0
  %8554 = vperm.xlu0 %8553, %v8544
  %v8555 = vpop.permute.xlu0 %8554
  %8558 = vset.pattern.permute.xlu0 0
  %8559 = vperm.xlu0 %8558, %v8545
  %v8560 = vpop.permute.xlu0 %8559
  %8563 = vset.pattern.permute.xlu0 0
  %8564 = vperm.xlu0 %8563, %v8546
  %v8565 = vpop.permute.xlu0 %8564
  %8568 = vset.pattern.permute.xlu0 0
  %8569 = vperm.xlu0 %8568, %v8547
  %v8570 = vpop.permute.xlu0 %8569
  %8573 = vset.pattern.permute.xlu0 0
  %8574 = vperm.xlu0 %8573, %v8548
  %v8575 = vpop.permute.xlu0 %8574
  %8578 = vset.pattern.permute.xlu0 0
  %8579 = vperm.xlu0 %8578, %v8549
  %v8580 = vpop.permute.xlu0 %8579
  %8583 = vset.pattern.permute.xlu0 0
  %8584 = vperm.xlu0 %8583, %v8550
  %v8585 = vpop.permute.xlu0 %8584
  %8588 = vset.pattern.permute.xlu0 0
  %8589 = vperm.xlu0 %8588, %v8551
  %v8590 = vpop.permute.xlu0 %8589
  %v8592 = vadd.f32 %v8472, %v8555
  %v8593 = vadd.f32 %v8473, %v8555
  %v8594 = vadd.f32 %v8474, %v8555
  %v8595 = vadd.f32 %v8475, %v8555
  %v8596 = vadd.f32 %v8476, %v8555
  %v8597 = vadd.f32 %v8477, %v8555
  %v8598 = vadd.f32 %v8478, %v8555
  %v8599 = vadd.f32 %v8479, %v8555
  %v8600 = vadd.f32 %v8480, %v8555
  %v8601 = vadd.f32 %v8481, %v8560
  %v8602 = vadd.f32 %v8482, %v8560
  %v8603 = vadd.f32 %v8483, %v8560
  %v8604 = vadd.f32 %v8484, %v8560
  %v8605 = vadd.f32 %v8485, %v8560
  %v8606 = vadd.f32 %v8486, %v8560
  %v8607 = vadd.f32 %v8487, %v8560
  %v8608 = vadd.f32 %v8488, %v8560
  %v8609 = vadd.f32 %v8489, %v8560
  %v8610 = vadd.f32 %v8490, %v8565
  %v8611 = vadd.f32 %v8491, %v8565
  %v8612 = vadd.f32 %v8492, %v8565
  %v8613 = vadd.f32 %v8493, %v8565
  %v8614 = vadd.f32 %v8494, %v8565
  %v8615 = vadd.f32 %v8495, %v8565
  %v8616 = vadd.f32 %v8496, %v8565
  %v8617 = vadd.f32 %v8497, %v8565
  %v8618 = vadd.f32 %v8498, %v8565
  %v8619 = vadd.f32 %v8499, %v8570
  %v8620 = vadd.f32 %v8500, %v8570
  %v8621 = vadd.f32 %v8501, %v8570
  %v8622 = vadd.f32 %v8502, %v8570
  %v8623 = vadd.f32 %v8503, %v8570
  %v8624 = vadd.f32 %v8504, %v8570
  %v8625 = vadd.f32 %v8505, %v8570
  %v8626 = vadd.f32 %v8506, %v8570
  %v8627 = vadd.f32 %v8507, %v8570
  %v8628 = vadd.f32 %v8508, %v8575
  %v8629 = vadd.f32 %v8509, %v8575
  %v8630 = vadd.f32 %v8510, %v8575
  %v8631 = vadd.f32 %v8511, %v8575
  %v8632 = vadd.f32 %v8512, %v8575
  %v8633 = vadd.f32 %v8513, %v8575
  %v8634 = vadd.f32 %v8514, %v8575
  %v8635 = vadd.f32 %v8515, %v8575
  %v8636 = vadd.f32 %v8516, %v8575
  %v8637 = vadd.f32 %v8517, %v8580
  %v8638 = vadd.f32 %v8518, %v8580
  %v8639 = vadd.f32 %v8519, %v8580
  %v8640 = vadd.f32 %v8520, %v8580
  %v8641 = vadd.f32 %v8521, %v8580
  %v8642 = vadd.f32 %v8522, %v8580
  %v8643 = vadd.f32 %v8523, %v8580
  %v8644 = vadd.f32 %v8524, %v8580
  %v8645 = vadd.f32 %v8525, %v8580
  %v8646 = vadd.f32 %v8526, %v8585
  %v8647 = vadd.f32 %v8527, %v8585
  %v8648 = vadd.f32 %v8528, %v8585
  %v8649 = vadd.f32 %v8529, %v8585
  %v8650 = vadd.f32 %v8530, %v8585
  %v8651 = vadd.f32 %v8531, %v8585
  %v8652 = vadd.f32 %v8532, %v8585
  %v8653 = vadd.f32 %v8533, %v8585
  %v8654 = vadd.f32 %v8534, %v8585
  %v8655 = vadd.f32 %v8535, %v8590
  %v8656 = vadd.f32 %v8536, %v8590
  %v8657 = vadd.f32 %v8537, %v8590
  %v8658 = vadd.f32 %v8538, %v8590
  %v8659 = vadd.f32 %v8539, %v8590
  %v8660 = vadd.f32 %v8540, %v8590
  %v8661 = vadd.f32 %v8541, %v8590
  %v8662 = vadd.f32 %v8542, %v8590
  %v8663 = vadd.f32 %v8543, %v8590
  %v8664 = vmax.f32 %v8592, 0.0
  %v8665 = vmax.f32 %v8593, 0.0
  %v8666 = vmax.f32 %v8594, 0.0
  %v8667 = vmax.f32 %v8595, 0.0
  %v8668 = vmax.f32 %v8596, 0.0
  %v8669 = vmax.f32 %v8597, 0.0
  %v8670 = vmax.f32 %v8598, 0.0
  %v8671 = vmax.f32 %v8599, 0.0
  %v8672 = vmax.f32 %v8600, 0.0
  %v8673 = vmax.f32 %v8601, 0.0
  %v8674 = vmax.f32 %v8602, 0.0
  %v8675 = vmax.f32 %v8603, 0.0
  %v8676 = vmax.f32 %v8604, 0.0
  %v8677 = vmax.f32 %v8605, 0.0
  %v8678 = vmax.f32 %v8606, 0.0
  %v8679 = vmax.f32 %v8607, 0.0
  %v8680 = vmax.f32 %v8608, 0.0
  %v8681 = vmax.f32 %v8609, 0.0
  %v8682 = vmax.f32 %v8610, 0.0
  %v8683 = vmax.f32 %v8611, 0.0
  %v8684 = vmax.f32 %v8612, 0.0
  %v8685 = vmax.f32 %v8613, 0.0
  %v8686 = vmax.f32 %v8614, 0.0
  %v8687 = vmax.f32 %v8615, 0.0
  %v8688 = vmax.f32 %v8616, 0.0
  %v8689 = vmax.f32 %v8617, 0.0
  %v8690 = vmax.f32 %v8618, 0.0
  %v8691 = vmax.f32 %v8619, 0.0
  %v8692 = vmax.f32 %v8620, 0.0
  %v8693 = vmax.f32 %v8621, 0.0
  %v8694 = vmax.f32 %v8622, 0.0
  %v8695 = vmax.f32 %v8623, 0.0
  %v8696 = vmax.f32 %v8624, 0.0
  %v8697 = vmax.f32 %v8625, 0.0
  %v8698 = vmax.f32 %v8626, 0.0
  %v8699 = vmax.f32 %v8627, 0.0
  %v8700 = vmax.f32 %v8628, 0.0
  %v8701 = vmax.f32 %v8629, 0.0
  %v8702 = vmax.f32 %v8630, 0.0
  %v8703 = vmax.f32 %v8631, 0.0
  %v8704 = vmax.f32 %v8632, 0.0
  %v8705 = vmax.f32 %v8633, 0.0
  %v8706 = vmax.f32 %v8634, 0.0
  %v8707 = vmax.f32 %v8635, 0.0
  %v8708 = vmax.f32 %v8636, 0.0
  %v8709 = vmax.f32 %v8637, 0.0
  %v8710 = vmax.f32 %v8638, 0.0
  %v8711 = vmax.f32 %v8639, 0.0
  %v8712 = vmax.f32 %v8640, 0.0
  %v8713 = vmax.f32 %v8641, 0.0
  %v8714 = vmax.f32 %v8642, 0.0
  %v8715 = vmax.f32 %v8643, 0.0
  %v8716 = vmax.f32 %v8644, 0.0
  %v8717 = vmax.f32 %v8645, 0.0
  %v8718 = vmax.f32 %v8646, 0.0
  %v8719 = vmax.f32 %v8647, 0.0
  %v8720 = vmax.f32 %v8648, 0.0
  %v8721 = vmax.f32 %v8649, 0.0
  %v8722 = vmax.f32 %v8650, 0.0
  %v8723 = vmax.f32 %v8651, 0.0
  %v8724 = vmax.f32 %v8652, 0.0
  %v8725 = vmax.f32 %v8653, 0.0
  %v8726 = vmax.f32 %v8654, 0.0
  %v8727 = vmax.f32 %v8655, 0.0
  %v8728 = vmax.f32 %v8656, 0.0
  %v8729 = vmax.f32 %v8657, 0.0
  %v8730 = vmax.f32 %v8658, 0.0
  %v8731 = vmax.f32 %v8659, 0.0
  %v8732 = vmax.f32 %v8660, 0.0
  %v8733 = vmax.f32 %v8661, 0.0
  %v8734 = vmax.f32 %v8662, 0.0
  %v8735 = vmax.f32 %v8663, 0.0
  %v8736 = vmax.f32 %v8664, %v8665
  %v8737 = vmax.f32 %v8673, %v8674
  %v8738 = vmax.f32 %v8682, %v8683
  %v8739 = vmax.f32 %v8691, %v8692
  %v8740 = vmax.f32 %v8700, %v8701
  %v8741 = vmax.f32 %v8709, %v8710
  %v8742 = vmax.f32 %v8718, %v8719
  %v8743 = vmax.f32 %v8727, %v8728
  %v8744 = vmax.f32 %v8736, %v8666
  %v8745 = vmax.f32 %v8737, %v8675
  %v8746 = vmax.f32 %v8738, %v8684
  %v8747 = vmax.f32 %v8739, %v8693
  %v8748 = vmax.f32 %v8740, %v8702
  %v8749 = vmax.f32 %v8741, %v8711
  %v8750 = vmax.f32 %v8742, %v8720
  %v8751 = vmax.f32 %v8743, %v8729
  %v8752 = vmax.f32 %v8667, %v8668
  %v8753 = vmax.f32 %v8676, %v8677
  %v8754 = vmax.f32 %v8685, %v8686
  %v8755 = vmax.f32 %v8694, %v8695
  %v8756 = vmax.f32 %v8703, %v8704
  %v8757 = vmax.f32 %v8712, %v8713
  %v8758 = vmax.f32 %v8721, %v8722
  %v8759 = vmax.f32 %v8730, %v8731
  %v8760 = vmax.f32 %v8752, %v8669
  %v8761 = vmax.f32 %v8753, %v8678
  %v8762 = vmax.f32 %v8754, %v8687
  %v8763 = vmax.f32 %v8755, %v8696
  %v8764 = vmax.f32 %v8756, %v8705
  %v8765 = vmax.f32 %v8757, %v8714
  %v8766 = vmax.f32 %v8758, %v8723
  %v8767 = vmax.f32 %v8759, %v8732
  %v8768 = vmax.f32 %v8670, %v8671
  %v8769 = vmax.f32 %v8679, %v8680
  %v8770 = vmax.f32 %v8688, %v8689
  %v8771 = vmax.f32 %v8697, %v8698
  %v8772 = vmax.f32 %v8706, %v8707
  %v8773 = vmax.f32 %v8715, %v8716
  %v8774 = vmax.f32 %v8724, %v8725
  %v8775 = vmax.f32 %v8733, %v8734
  %v8776 = vmax.f32 %v8768, %v8672
  %v8777 = vmax.f32 %v8769, %v8681
  %v8778 = vmax.f32 %v8770, %v8690
  %v8779 = vmax.f32 %v8771, %v8699
  %v8780 = vmax.f32 %v8772, %v8708
  %v8781 = vmax.f32 %v8773, %v8717
  %v8782 = vmax.f32 %v8774, %v8726
  %v8783 = vmax.f32 %v8775, %v8735
  %v8784 = vld [vmem:[%s7] sm:$0xff]
  %v8785 = vld [vmem:[%s7 + $0x8] sm:$0xff]
  %v8786 = vld [vmem:[%s7 + $0x10] sm:$0xff]
  %v8787 = vld [vmem:[%s7 + $0x18] sm:$0xff]
  %v8788 = vld [vmem:[%s7 + $0x20] sm:$0xff]
  %v8789 = vld [vmem:[%s7 + $0x28] sm:$0xff]
  %v8790 = vld [vmem:[%s7 + $0x30] sm:$0xff]
  %v8791 = vld [vmem:[%s7 + $0x38] sm:$0xff]
  %v8792 = vld [vmem:[%s7 + $0x40] sm:$0xff]
  %v8793 = vld [vmem:[%s7 + $0x48] sm:$0xff]
  %s8794 = scalar_lea.vmem %s7, 80
  %v8795 = vld [vmem:[%s8794] sm:$0xff]
  %v8796 = vld [vmem:[%s8794 + $0x8] sm:$0xff]
  %v8797 = vld [vmem:[%s8794 + $0x10] sm:$0xff]
  %v8798 = vld [vmem:[%s8794 + $0x18] sm:$0xff]
  %v8799 = vld [vmem:[%s8794 + $0x20] sm:$0xff]
  %v8800 = vld [vmem:[%s8794 + $0x28] sm:$0xff]
  %v8801 = vld [vmem:[%s8794 + $0x30] sm:$0xff]
  %v8802 = vld [vmem:[%s8794 + $0x38] sm:$0xff]
  %v8803 = vld [vmem:[%s8794 + $0x40] sm:$0xff]
  %v8804 = vld [vmem:[%s8794 + $0x48] sm:$0xff]
  %vm8805 = vcmask 490496
  %v8807 = vsel %vm8805, %v8795, 0
  %v8810 = vsel %vm8805, %v8796, 0
  %v8813 = vsel %vm8805, %v8797, 0
  %v8816 = vsel %vm8805, %v8798, 0
  %v8819 = vsel %vm8805, %v8799, 0
  %v8822 = vsel %vm8805, %v8800, 0
  %v8825 = vsel %vm8805, %v8801, 0
  %v8828 = vsel %vm8805, %v8802, 0
  %v8831 = vsel %vm8805, %v8803, 0
  %v8834 = vsel %vm8805, %v8804, 0
  %v8837 = vsel %vm4630, %v8767, 0
  %8839 = vmatpush.msra.mxu0 0.0
  %8840 = vmatpush.msra.mxu0 0.0
  %8841 = vmatpush.msra.mxu0 0.0
  %8842 = vmatpush.msra.mxu0 0.0
  %8843 = vmatpush.msra.mxu0 0.0
  %8844 = vmatpush.msra.mxu0 0.0
  %8845 = vmatpush.msra.mxu0 0.0
  %8846 = vmatpush.msra.mxu0 0.0
  %8847 = vmatpush.msra.mxu0 %v8837
  %8848 = vmatpush.msra.mxu0 %v8766
  %8849 = vmatpush.msra.mxu0 %v8765
  %8850 = vmatpush.msra.mxu0 %v8764
  %8851 = vmatpush.msra.mxu0 %v8763
  %8852 = vmatpush.msra.mxu0 %v8762
  %8853 = vmatpush.msra.mxu0 %v8761
  %8854 = vmatpush.msra.mxu0 %v8760
  %8855 = vmatmul.f32.gmra.mxu0 %v8807
  %v8856 = vpop.f32.mrf.mxu0
  %v8857 = vadd.f32 0.0, %v8856
  %8858 = vmatmul.f32.gmra.mxu0 %v8810
  %v8859 = vpop.f32.mrf.mxu0
  %v8860 = vadd.f32 0.0, %v8859
  %8861 = vmatmul.f32.gmra.mxu0 %v8813
  %v8862 = vpop.f32.mrf.mxu0
  %v8863 = vadd.f32 0.0, %v8862
  %8864 = vmatmul.f32.gmra.mxu0 %v8816
  %v8865 = vpop.f32.mrf.mxu0
  %v8866 = vadd.f32 0.0, %v8865
  %8867 = vmatmul.f32.gmra.mxu0 %v8819
  %v8868 = vpop.f32.mrf.mxu0
  %v8869 = vadd.f32 0.0, %v8868
  %8870 = vmatmul.f32.gmra.mxu0 %v8822
  %v8871 = vpop.f32.mrf.mxu0
  %v8872 = vadd.f32 0.0, %v8871
  %8873 = vmatmul.f32.gmra.mxu0 %v8825
  %v8874 = vpop.f32.mrf.mxu0
  %v8875 = vadd.f32 0.0, %v8874
  %8876 = vmatmul.f32.gmra.mxu0 %v8828
  %v8877 = vpop.f32.mrf.mxu0
  %v8878 = vadd.f32 0.0, %v8877
  %8879 = vmatmul.f32.gmra.mxu0 %v8831
  %v8880 = vpop.f32.mrf.mxu0
  %v8881 = vadd.f32 0.0, %v8880
  %8882 = vmatmul.f32.gmra.mxu0 %v8834
  %v8883 = vpop.f32.mrf.mxu0
  %v8884 = vadd.f32 0.0, %v8883
  %8885 = vdwg.mxu0
  %v8887 = vsel %vm8805, %v8784, 0
  %v8890 = vsel %vm8805, %v8785, 0
  %v8893 = vsel %vm8805, %v8786, 0
  %v8896 = vsel %vm8805, %v8787, 0
  %v8899 = vsel %vm8805, %v8788, 0
  %v8902 = vsel %vm8805, %v8789, 0
  %v8905 = vsel %vm8805, %v8790, 0
  %v8908 = vsel %vm8805, %v8791, 0
  %v8911 = vsel %vm8805, %v8792, 0
  %v8914 = vsel %vm8805, %v8793, 0
  %v8917 = vsel %vm4630, %v8751, 0
  %8919 = vmatpush.msra.mxu0 0.0
  %8920 = vmatpush.msra.mxu0 0.0
  %8921 = vmatpush.msra.mxu0 0.0
  %8922 = vmatpush.msra.mxu0 0.0
  %8923 = vmatpush.msra.mxu0 0.0
  %8924 = vmatpush.msra.mxu0 0.0
  %8925 = vmatpush.msra.mxu0 0.0
  %8926 = vmatpush.msra.mxu0 0.0
  %8927 = vmatpush.msra.mxu0 %v8917
  %8928 = vmatpush.msra.mxu0 %v8750
  %8929 = vmatpush.msra.mxu0 %v8749
  %8930 = vmatpush.msra.mxu0 %v8748
  %8931 = vmatpush.msra.mxu0 %v8747
  %8932 = vmatpush.msra.mxu0 %v8746
  %8933 = vmatpush.msra.mxu0 %v8745
  %8934 = vmatpush.msra.mxu0 %v8744
  %8935 = vmatmul.f32.gmra.mxu0 %v8887
  %v8936 = vpop.f32.mrf.mxu0
  %v8937 = vadd.f32 %v8857, %v8936
  %8938 = vmatmul.f32.gmra.mxu0 %v8890
  %v8939 = vpop.f32.mrf.mxu0
  %v8940 = vadd.f32 %v8860, %v8939
  %8941 = vmatmul.f32.gmra.mxu0 %v8893
  %v8942 = vpop.f32.mrf.mxu0
  %v8943 = vadd.f32 %v8863, %v8942
  %8944 = vmatmul.f32.gmra.mxu0 %v8896
  %v8945 = vpop.f32.mrf.mxu0
  %v8946 = vadd.f32 %v8866, %v8945
  %8947 = vmatmul.f32.gmra.mxu0 %v8899
  %v8948 = vpop.f32.mrf.mxu0
  %v8949 = vadd.f32 %v8869, %v8948
  %8950 = vmatmul.f32.gmra.mxu0 %v8902
  %v8951 = vpop.f32.mrf.mxu0
  %v8952 = vadd.f32 %v8872, %v8951
  %8953 = vmatmul.f32.gmra.mxu0 %v8905
  %v8954 = vpop.f32.mrf.mxu0
  %v8955 = vadd.f32 %v8875, %v8954
  %8956 = vmatmul.f32.gmra.mxu0 %v8908
  %v8957 = vpop.f32.mrf.mxu0
  %v8958 = vadd.f32 %v8878, %v8957
  %8959 = vmatmul.f32.gmra.mxu0 %v8911
  %v8960 = vpop.f32.mrf.mxu0
  %v8961 = vadd.f32 %v8881, %v8960
  %8962 = vmatmul.f32.gmra.mxu0 %v8914
  %v8963 = vpop.f32.mrf.mxu0
  %v8964 = vadd.f32 %v8884, %v8963
  %8965 = vdwg.mxu0
  %s8966 = scalar_lea.vmem %s7, 160
  %v8967 = vld [vmem:[%s8966] sm:$0xff]
  %v8968 = vld [vmem:[%s8966 + $0x8] sm:$0xff]
  %v8969 = vld [vmem:[%s8966 + $0x10] sm:$0xff]
  %v8970 = vld [vmem:[%s8966 + $0x18] sm:$0xff]
  %v8971 = vld [vmem:[%s8966 + $0x20] sm:$0xff]
  %v8972 = vld [vmem:[%s8966 + $0x28] sm:$0xff]
  %v8973 = vld [vmem:[%s8966 + $0x30] sm:$0xff]
  %v8974 = vld [vmem:[%s8966 + $0x38] sm:$0xff]
  %v8975 = vld [vmem:[%s8966 + $0x40] sm:$0xff]
  %v8976 = vld [vmem:[%s8966 + $0x48] sm:$0xff]
  %v8978 = vsel %vm8805, %v8967, 0
  %v8981 = vsel %vm8805, %v8968, 0
  %v8984 = vsel %vm8805, %v8969, 0
  %v8987 = vsel %vm8805, %v8970, 0
  %v8990 = vsel %vm8805, %v8971, 0
  %v8993 = vsel %vm8805, %v8972, 0
  %v8996 = vsel %vm8805, %v8973, 0
  %v8999 = vsel %vm8805, %v8974, 0
  %v9002 = vsel %vm8805, %v8975, 0
  %v9005 = vsel %vm8805, %v8976, 0
  %v9008 = vsel %vm4630, %v8783, 0
  %9010 = vmatpush.msra.mxu0 0.0
  %9011 = vmatpush.msra.mxu0 0.0
  %9012 = vmatpush.msra.mxu0 0.0
  %9013 = vmatpush.msra.mxu0 0.0
  %9014 = vmatpush.msra.mxu0 0.0
  %9015 = vmatpush.msra.mxu0 0.0
  %9016 = vmatpush.msra.mxu0 0.0
  %9017 = vmatpush.msra.mxu0 0.0
  %9018 = vmatpush.msra.mxu0 %v9008
  %9019 = vmatpush.msra.mxu0 %v8782
  %9020 = vmatpush.msra.mxu0 %v8781
  %9021 = vmatpush.msra.mxu0 %v8780
  %9022 = vmatpush.msra.mxu0 %v8779
  %9023 = vmatpush.msra.mxu0 %v8778
  %9024 = vmatpush.msra.mxu0 %v8777
  %9025 = vmatpush.msra.mxu0 %v8776
  %9026 = vmatmul.f32.gmra.mxu0 %v8978
  %v9027 = vpop.f32.mrf.mxu0
  %v9028 = vadd.f32 0.0, %v9027
  %9029 = vmatmul.f32.gmra.mxu0 %v8981
  %v9030 = vpop.f32.mrf.mxu0
  %v9031 = vadd.f32 0.0, %v9030
  %9032 = vmatmul.f32.gmra.mxu0 %v8984
  %v9033 = vpop.f32.mrf.mxu0
  %v9034 = vadd.f32 0.0, %v9033
  %9035 = vmatmul.f32.gmra.mxu0 %v8987
  %v9036 = vpop.f32.mrf.mxu0
  %v9037 = vadd.f32 0.0, %v9036
  %9038 = vmatmul.f32.gmra.mxu0 %v8990
  %v9039 = vpop.f32.mrf.mxu0
  %v9040 = vadd.f32 0.0, %v9039
  %9041 = vmatmul.f32.gmra.mxu0 %v8993
  %v9042 = vpop.f32.mrf.mxu0
  %v9043 = vadd.f32 0.0, %v9042
  %9044 = vmatmul.f32.gmra.mxu0 %v8996
  %v9045 = vpop.f32.mrf.mxu0
  %v9046 = vadd.f32 0.0, %v9045
  %9047 = vmatmul.f32.gmra.mxu0 %v8999
  %v9048 = vpop.f32.mrf.mxu0
  %v9049 = vadd.f32 0.0, %v9048
  %9050 = vmatmul.f32.gmra.mxu0 %v9002
  %v9051 = vpop.f32.mrf.mxu0
  %v9052 = vadd.f32 0.0, %v9051
  %9053 = vmatmul.f32.gmra.mxu0 %v9005
  %v9054 = vpop.f32.mrf.mxu0
  %v9055 = vadd.f32 0.0, %v9054
  %9056 = vdwg.mxu0
  %v9057 = vadd.f32 %v8937, %v9028
  %v9058 = vadd.f32 %v8940, %v9031
  %v9059 = vadd.f32 %v8943, %v9034
  %v9060 = vadd.f32 %v8946, %v9037
  %v9061 = vadd.f32 %v8949, %v9040
  %v9062 = vadd.f32 %v8952, %v9043
  %v9063 = vadd.f32 %v8955, %v9046
  %v9064 = vadd.f32 %v8958, %v9049
  %v9065 = vadd.f32 %v8961, %v9052
  %v9066 = vadd.f32 %v8964, %v9055
  %v9067 = vld [vmem:[%s8] sm:$0xff]
  %v9068 = vld [vmem:[%s8 + $0x8] sm:$0xff]
  %v9069 = vld [vmem:[%s8 + $0x10] sm:$0xff]
  %v9070 = vld [vmem:[%s8 + $0x18] sm:$0xff]
  %v9071 = vld [vmem:[%s8 + $0x20] sm:$0xff]
  %v9072 = vld [vmem:[%s8 + $0x28] sm:$0xff]
  %v9073 = vld [vmem:[%s8 + $0x30] sm:$0xff]
  %v9074 = vld [vmem:[%s8 + $0x38] sm:$0xff]
  %v9075 = vld [vmem:[%s8 + $0x40] sm:$0xff]
  %v9076 = vld [vmem:[%s8 + $0x48] sm:$0xff]
  %9078 = vset.pattern.permute.xlu0 0
  %9079 = vperm.xlu0 %9078, %v9067
  %v9080 = vpop.permute.xlu0 %9079
  %9083 = vset.pattern.permute.xlu0 0
  %9084 = vperm.xlu0 %9083, %v9068
  %v9085 = vpop.permute.xlu0 %9084
  %9088 = vset.pattern.permute.xlu0 0
  %9089 = vperm.xlu0 %9088, %v9069
  %v9090 = vpop.permute.xlu0 %9089
  %9093 = vset.pattern.permute.xlu0 0
  %9094 = vperm.xlu0 %9093, %v9070
  %v9095 = vpop.permute.xlu0 %9094
  %9098 = vset.pattern.permute.xlu0 0
  %9099 = vperm.xlu0 %9098, %v9071
  %v9100 = vpop.permute.xlu0 %9099
  %9103 = vset.pattern.permute.xlu0 0
  %9104 = vperm.xlu0 %9103, %v9072
  %v9105 = vpop.permute.xlu0 %9104
  %9108 = vset.pattern.permute.xlu0 0
  %9109 = vperm.xlu0 %9108, %v9073
  %v9110 = vpop.permute.xlu0 %9109
  %9113 = vset.pattern.permute.xlu0 0
  %9114 = vperm.xlu0 %9113, %v9074
  %v9115 = vpop.permute.xlu0 %9114
  %9118 = vset.pattern.permute.xlu0 0
  %9119 = vperm.xlu0 %9118, %v9075
  %v9120 = vpop.permute.xlu0 %9119
  %9123 = vset.pattern.permute.xlu0 0
  %9124 = vperm.xlu0 %9123, %v9076
  %v9125 = vpop.permute.xlu0 %9124
  %v9127 = vadd.f32 %v9057, %v9080
  %v9128 = vadd.f32 %v9058, %v9085
  %v9129 = vadd.f32 %v9059, %v9090
  %v9130 = vadd.f32 %v9060, %v9095
  %v9131 = vadd.f32 %v9061, %v9100
  %v9132 = vadd.f32 %v9062, %v9105
  %v9133 = vadd.f32 %v9063, %v9110
  %v9134 = vadd.f32 %v9064, %v9115
  %v9135 = vadd.f32 %v9065, %v9120
  %v9136 = vadd.f32 %v9066, %v9125
  %v9137 = vtanh.pop %v9127
  %v9138 = vtanh.pop %v9128
  %v9139 = vtanh.pop %v9129
  %v9140 = vtanh.pop %v9130
  %v9141 = vtanh.pop %v9131
  %v9142 = vtanh.pop %v9132
  %v9143 = vtanh.pop %v9133
  %v9144 = vtanh.pop %v9134
  %v9145 = vtanh.pop %v9135
  %v9146 = vtanh.pop %v9136
  %v9147 = vld [vmem:[%s10] sm:$0xff]
  %v9148 = vld [vmem:[%s10 + $0x8] sm:$0xff]
  %v9149 = vld [vmem:[%s10 + $0x10] sm:$0xff]
  %v9150 = vld [vmem:[%s10 + $0x18] sm:$0xff]
  %v9151 = vld [vmem:[%s10 + $0x20] sm:$0xff]
  %v9152 = vld [vmem:[%s10 + $0x28] sm:$0xff]
  %v9153 = vld [vmem:[%s10 + $0x30] sm:$0xff]
  %v9154 = vld [vmem:[%s10 + $0x38] sm:$0xff]
  %v9155 = vld [vmem:[%s10 + $0x40] sm:$0xff]
  %v9156 = vld [vmem:[%s10 + $0x48] sm:$0xff]
  %v9157 = vld [vmem:[%s10 + $0x50] sm:$0xff]
  %v9158 = vld [vmem:[%s10 + $0x58] sm:$0xff]
  %v9159 = vld [vmem:[%s10 + $0x60] sm:$0xf]
  %v9160 = vld [vmem:[%s11] sm:$0xff]
  %v9161 = vld [vmem:[%s11 + $0x8] sm:$0xff]
  %v9162 = vld [vmem:[%s11 + $0x10] sm:$0xff]
  %v9163 = vld [vmem:[%s11 + $0x18] sm:$0xff]
  %v9164 = vld [vmem:[%s11 + $0x20] sm:$0xff]
  %v9165 = vld [vmem:[%s11 + $0x28] sm:$0xff]
  %v9166 = vld [vmem:[%s11 + $0x30] sm:$0xff]
  %v9167 = vld [vmem:[%s11 + $0x38] sm:$0xff]
  %v9168 = vld [vmem:[%s11 + $0x40] sm:$0xff]
  %v9169 = vld [vmem:[%s11 + $0x48] sm:$0xff]
  %v9170 = vld [vmem:[%s11 + $0x50] sm:$0xff]
  %v9171 = vld [vmem:[%s11 + $0x58] sm:$0xff]
  %v9172 = vld [vmem:[%s11 + $0x60] sm:$0xf]
  %9174 = vset.pattern.permute.xlu0 0
  %9175 = vperm.xlu0 %9174, %v9160
  %v9176 = vpop.permute.xlu0 %9175
  %9179 = vset.pattern.permute.xlu0 0
  %9180 = vperm.xlu0 %9179, %v9161
  %v9181 = vpop.permute.xlu0 %9180
  %9184 = vset.pattern.permute.xlu0 0
  %9185 = vperm.xlu0 %9184, %v9162
  %v9186 = vpop.permute.xlu0 %9185
  %9189 = vset.pattern.permute.xlu0 0
  %9190 = vperm.xlu0 %9189, %v9163
  %v9191 = vpop.permute.xlu0 %9190
  %9194 = vset.pattern.permute.xlu0 0
  %9195 = vperm.xlu0 %9194, %v9164
  %v9196 = vpop.permute.xlu0 %9195
  %9199 = vset.pattern.permute.xlu0 0
  %9200 = vperm.xlu0 %9199, %v9165
  %v9201 = vpop.permute.xlu0 %9200
  %9204 = vset.pattern.permute.xlu0 0
  %9205 = vperm.xlu0 %9204, %v9166
  %v9206 = vpop.permute.xlu0 %9205
  %9209 = vset.pattern.permute.xlu0 0
  %9210 = vperm.xlu0 %9209, %v9167
  %v9211 = vpop.permute.xlu0 %9210
  %9214 = vset.pattern.permute.xlu0 0
  %9215 = vperm.xlu0 %9214, %v9168
  %v9216 = vpop.permute.xlu0 %9215
  %9219 = vset.pattern.permute.xlu0 0
  %9220 = vperm.xlu0 %9219, %v9169
  %v9221 = vpop.permute.xlu0 %9220
  %9224 = vset.pattern.permute.xlu0 0
  %9225 = vperm.xlu0 %9224, %v9170
  %v9226 = vpop.permute.xlu0 %9225
  %9229 = vset.pattern.permute.xlu0 0
  %9230 = vperm.xlu0 %9229, %v9171
  %v9231 = vpop.permute.xlu0 %9230
  %9234 = vset.pattern.permute.xlu0 0
  %9235 = vperm.xlu0 %9234, %v9172
  %v9236 = vpop.permute.xlu0 %9235
  %vm9238 = vcmask 654336
  %v9240 = vsel %vm9238, %v9147, 0
  %v9243 = vsel %vm9238, %v9148, 0
  %v9246 = vsel %vm9238, %v9149, 0
  %v9249 = vsel %vm9238, %v9150, 0
  %v9252 = vsel %vm9238, %v9151, 0
  %v9255 = vsel %vm9238, %v9152, 0
  %v9258 = vsel %vm9238, %v9153, 0
  %v9261 = vsel %vm9238, %v9154, 0
  %v9264 = vsel %vm9238, %v9155, 0
  %v9267 = vsel %vm9238, %v9156, 0
  %v9270 = vsel %vm9238, %v9157, 0
  %v9273 = vsel %vm9238, %v9158, 0
  %v9276 = vsel %vm9238, %v9159, 0
  %9278 = vmatpush.msra.mxu0 0.0
  %9279 = vmatpush.msra.mxu0 0.0
  %9280 = vmatpush.msra.mxu0 0.0
  %9281 = vmatpush.msra.mxu0 0.0
  %9282 = vmatpush.msra.mxu0 0.0
  %9283 = vmatpush.msra.mxu0 0.0
  %9284 = vmatpush.msra.mxu0 %v9146
  %9285 = vmatpush.msra.mxu0 %v9145
  %9286 = vmatpush.msra.mxu0 %v9144
  %9287 = vmatpush.msra.mxu0 %v9143
  %9288 = vmatpush.msra.mxu0 %v9142
  %9289 = vmatpush.msra.mxu0 %v9141
  %9290 = vmatpush.msra.mxu0 %v9140
  %9291 = vmatpush.msra.mxu0 %v9139
  %9292 = vmatpush.msra.mxu0 %v9138
  %9293 = vmatpush.msra.mxu0 %v9137
  %9294 = vmatmul.f32.gmra.mxu0 %v9240
  %v9295 = vpop.f32.mrf.mxu0
  %v9296 = vadd.f32 %v9176, %v9295
  %9297 = vmatmul.f32.gmra.mxu0 %v9243
  %v9298 = vpop.f32.mrf.mxu0
  %v9299 = vadd.f32 %v9181, %v9298
  %9300 = vmatmul.f32.gmra.mxu0 %v9246
  %v9301 = vpop.f32.mrf.mxu0
  %v9302 = vadd.f32 %v9186, %v9301
  %9303 = vmatmul.f32.gmra.mxu0 %v9249
  %v9304 = vpop.f32.mrf.mxu0
  %v9305 = vadd.f32 %v9191, %v9304
  %9306 = vmatmul.f32.gmra.mxu0 %v9252
  %v9307 = vpop.f32.mrf.mxu0
  %v9308 = vadd.f32 %v9196, %v9307
  %9309 = vmatmul.f32.gmra.mxu0 %v9255
  %v9310 = vpop.f32.mrf.mxu0
  %v9311 = vadd.f32 %v9201, %v9310
  %9312 = vmatmul.f32.gmra.mxu0 %v9258
  %v9313 = vpop.f32.mrf.mxu0
  %v9314 = vadd.f32 %v9206, %v9313
  %9315 = vmatmul.f32.gmra.mxu0 %v9261
  %v9316 = vpop.f32.mrf.mxu0
  %v9317 = vadd.f32 %v9211, %v9316
  %9318 = vmatmul.f32.gmra.mxu0 %v9264
  %v9319 = vpop.f32.mrf.mxu0
  %v9320 = vadd.f32 %v9216, %v9319
  %9321 = vmatmul.f32.gmra.mxu0 %v9267
  %v9322 = vpop.f32.mrf.mxu0
  %v9323 = vadd.f32 %v9221, %v9322
  %9324 = vmatmul.f32.gmra.mxu0 %v9270
  %v9325 = vpop.f32.mrf.mxu0
  %v9326 = vadd.f32 %v9226, %v9325
  %9327 = vmatmul.f32.gmra.mxu0 %v9273
  %v9328 = vpop.f32.mrf.mxu0
  %v9329 = vadd.f32 %v9231, %v9328
  %9330 = vmatmul.f32.gmra.mxu0 %v9276
  %v9331 = vpop.f32.mrf.mxu0
  %v9332 = vadd.f32 %v9236, %v9331
  %9333 = vdwg.mxu0
  %v9334 = vld [vmem:[%s9] sm:$0xff]
  %v9335 = vld [vmem:[%s9 + $0x8] sm:$0xff]
  %v9336 = vld [vmem:[%s9 + $0x10] sm:$0xff]
  %v9337 = vld [vmem:[%s9 + $0x18] sm:$0xff]
  %v9338 = vld [vmem:[%s9 + $0x20] sm:$0xff]
  %v9339 = vld [vmem:[%s9 + $0x28] sm:$0xff]
  %v9340 = vld [vmem:[%s9 + $0x30] sm:$0xff]
  %v9341 = vld [vmem:[%s9 + $0x38] sm:$0xff]
  %v9342 = vld [vmem:[%s9 + $0x40] sm:$0xff]
  %v9343 = vld [vmem:[%s9 + $0x48] sm:$0xff]
  %v9344 = vld [vmem:[%s9 + $0x50] sm:$0xff]
  %v9345 = vld [vmem:[%s9 + $0x58] sm:$0xff]
  %v9346 = vld [vmem:[%s9 + $0x60] sm:$0xf]
  %v9348 = vsel %vm8805, %v9334, 0
  %v9351 = vsel %vm8805, %v9335, 0
  %v9354 = vsel %vm8805, %v9336, 0
  %v9357 = vsel %vm8805, %v9337, 0
  %v9360 = vsel %vm8805, %v9338, 0
  %v9363 = vsel %vm8805, %v9339, 0
  %v9366 = vsel %vm8805, %v9340, 0
  %v9369 = vsel %vm8805, %v9341, 0
  %v9372 = vsel %vm8805, %v9342, 0
  %v9375 = vsel %vm8805, %v9343, 0
  %v9378 = vsel %vm8805, %v9344, 0
  %v9381 = vsel %vm8805, %v9345, 0
  %v9384 = vsel %vm8805, %v9346, 0
  %9386 = vmatpush.msra.mxu0 0.0
  %9387 = vmatpush.msra.mxu0 0.0
  %9388 = vmatpush.msra.mxu0 0.0
  %9389 = vmatpush.msra.mxu0 0.0
  %9390 = vmatpush.msra.mxu0 0.0
  %9391 = vmatpush.msra.mxu0 0.0
  %9392 = vmatpush.msra.mxu0 0.0
  %9393 = vmatpush.msra.mxu0 0.0
  %9394 = vmatpush.msra.mxu0 %v8917
  %9395 = vmatpush.msra.mxu0 %v8750
  %9396 = vmatpush.msra.mxu0 %v8749
  %9397 = vmatpush.msra.mxu0 %v8748
  %9398 = vmatpush.msra.mxu0 %v8747
  %9399 = vmatpush.msra.mxu0 %v8746
  %9400 = vmatpush.msra.mxu0 %v8745
  %9401 = vmatpush.msra.mxu0 %v8744
  %9402 = vmatmul.f32.gmra.mxu0 %v9348
  %v9403 = vpop.f32.mrf.mxu0
  %v9404 = vadd.f32 0.0, %v9403
  %9405 = vmatmul.f32.gmra.mxu0 %v9351
  %v9406 = vpop.f32.mrf.mxu0
  %v9407 = vadd.f32 0.0, %v9406
  %9408 = vmatmul.f32.gmra.mxu0 %v9354
  %v9409 = vpop.f32.mrf.mxu0
  %v9410 = vadd.f32 0.0, %v9409
  %9411 = vmatmul.f32.gmra.mxu0 %v9357
  %v9412 = vpop.f32.mrf.mxu0
  %v9413 = vadd.f32 0.0, %v9412
  %9414 = vmatmul.f32.gmra.mxu0 %v9360
  %v9415 = vpop.f32.mrf.mxu0
  %v9416 = vadd.f32 0.0, %v9415
  %9417 = vmatmul.f32.gmra.mxu0 %v9363
  %v9418 = vpop.f32.mrf.mxu0
  %v9419 = vadd.f32 0.0, %v9418
  %9420 = vmatmul.f32.gmra.mxu0 %v9366
  %v9421 = vpop.f32.mrf.mxu0
  %v9422 = vadd.f32 0.0, %v9421
  %9423 = vmatmul.f32.gmra.mxu0 %v9369
  %v9424 = vpop.f32.mrf.mxu0
  %v9425 = vadd.f32 0.0, %v9424
  %9426 = vmatmul.f32.gmra.mxu0 %v9372
  %v9427 = vpop.f32.mrf.mxu0
  %v9428 = vadd.f32 0.0, %v9427
  %9429 = vmatmul.f32.gmra.mxu0 %v9375
  %v9430 = vpop.f32.mrf.mxu0
  %v9431 = vadd.f32 0.0, %v9430
  %9432 = vmatmul.f32.gmra.mxu0 %v9378
  %v9433 = vpop.f32.mrf.mxu0
  %v9434 = vadd.f32 0.0, %v9433
  %9435 = vmatmul.f32.gmra.mxu0 %v9381
  %v9436 = vpop.f32.mrf.mxu0
  %v9437 = vadd.f32 0.0, %v9436
  %9438 = vmatmul.f32.gmra.mxu0 %v9384
  %v9439 = vpop.f32.mrf.mxu0
  %v9440 = vadd.f32 0.0, %v9439
  %9441 = vdwg.mxu0
  %v9442 = vadd.f32 %v9296, %v9404
  %v9443 = vadd.f32 %v9299, %v9407
  %v9444 = vadd.f32 %v9302, %v9410
  %v9445 = vadd.f32 %v9305, %v9413
  %v9446 = vadd.f32 %v9308, %v9416
  %v9447 = vadd.f32 %v9311, %v9419
  %v9448 = vadd.f32 %v9314, %v9422
  %v9449 = vadd.f32 %v9317, %v9425
  %v9450 = vadd.f32 %v9320, %v9428
  %v9451 = vadd.f32 %v9323, %v9431
  %v9452 = vadd.f32 %v9326, %v9434
  %v9453 = vadd.f32 %v9329, %v9437
  %v9454 = vadd.f32 %v9332, %v9440
  %s9455 = scalar_lea.vmem %s9, 104
  %v9456 = vld [vmem:[%s9455] sm:$0xff]
  %v9457 = vld [vmem:[%s9455 + $0x8] sm:$0xff]
  %v9458 = vld [vmem:[%s9455 + $0x10] sm:$0xff]
  %v9459 = vld [vmem:[%s9455 + $0x18] sm:$0xff]
  %v9460 = vld [vmem:[%s9455 + $0x20] sm:$0xff]
  %v9461 = vld [vmem:[%s9455 + $0x28] sm:$0xff]
  %v9462 = vld [vmem:[%s9455 + $0x30] sm:$0xff]
  %v9463 = vld [vmem:[%s9455 + $0x38] sm:$0xff]
  %v9464 = vld [vmem:[%s9455 + $0x40] sm:$0xff]
  %v9465 = vld [vmem:[%s9455 + $0x48] sm:$0xff]
  %v9466 = vld [vmem:[%s9455 + $0x50] sm:$0xff]
  %v9467 = vld [vmem:[%s9455 + $0x58] sm:$0xff]
  %v9468 = vld [vmem:[%s9455 + $0x60] sm:$0xf]
  %v9470 = vsel %vm8805, %v9456, 0
  %v9473 = vsel %vm8805, %v9457, 0
  %v9476 = vsel %vm8805, %v9458, 0
  %v9479 = vsel %vm8805, %v9459, 0
  %v9482 = vsel %vm8805, %v9460, 0
  %v9485 = vsel %vm8805, %v9461, 0
  %v9488 = vsel %vm8805, %v9462, 0
  %v9491 = vsel %vm8805, %v9463, 0
  %v9494 = vsel %vm8805, %v9464, 0
  %v9497 = vsel %vm8805, %v9465, 0
  %v9500 = vsel %vm8805, %v9466, 0
  %v9503 = vsel %vm8805, %v9467, 0
  %v9506 = vsel %vm8805, %v9468, 0
  %9508 = vmatpush.msra.mxu0 0.0
  %9509 = vmatpush.msra.mxu0 0.0
  %9510 = vmatpush.msra.mxu0 0.0
  %9511 = vmatpush.msra.mxu0 0.0
  %9512 = vmatpush.msra.mxu0 0.0
  %9513 = vmatpush.msra.mxu0 0.0
  %9514 = vmatpush.msra.mxu0 0.0
  %9515 = vmatpush.msra.mxu0 0.0
  %9516 = vmatpush.msra.mxu0 %v8837
  %9517 = vmatpush.msra.mxu0 %v8766
  %9518 = vmatpush.msra.mxu0 %v8765
  %9519 = vmatpush.msra.mxu0 %v8764
  %9520 = vmatpush.msra.mxu0 %v8763
  %9521 = vmatpush.msra.mxu0 %v8762
  %9522 = vmatpush.msra.mxu0 %v8761
  %9523 = vmatpush.msra.mxu0 %v8760
  %9524 = vmatmul.f32.gmra.mxu0 %v9470
  %v9525 = vpop.f32.mrf.mxu0
  %v9526 = vadd.f32 0.0, %v9525
  %9527 = vmatmul.f32.gmra.mxu0 %v9473
  %v9528 = vpop.f32.mrf.mxu0
  %v9529 = vadd.f32 0.0, %v9528
  %9530 = vmatmul.f32.gmra.mxu0 %v9476
  %v9531 = vpop.f32.mrf.mxu0
  %v9532 = vadd.f32 0.0, %v9531
  %9533 = vmatmul.f32.gmra.mxu0 %v9479
  %v9534 = vpop.f32.mrf.mxu0
  %v9535 = vadd.f32 0.0, %v9534
  %9536 = vmatmul.f32.gmra.mxu0 %v9482
  %v9537 = vpop.f32.mrf.mxu0
  %v9538 = vadd.f32 0.0, %v9537
  %9539 = vmatmul.f32.gmra.mxu0 %v9485
  %v9540 = vpop.f32.mrf.mxu0
  %v9541 = vadd.f32 0.0, %v9540
  %9542 = vmatmul.f32.gmra.mxu0 %v9488
  %v9543 = vpop.f32.mrf.mxu0
  %v9544 = vadd.f32 0.0, %v9543
  %9545 = vmatmul.f32.gmra.mxu0 %v9491
  %v9546 = vpop.f32.mrf.mxu0
  %v9547 = vadd.f32 0.0, %v9546
  %9548 = vmatmul.f32.gmra.mxu0 %v9494
  %v9549 = vpop.f32.mrf.mxu0
  %v9550 = vadd.f32 0.0, %v9549
  %9551 = vmatmul.f32.gmra.mxu0 %v9497
  %v9552 = vpop.f32.mrf.mxu0
  %v9553 = vadd.f32 0.0, %v9552
  %9554 = vmatmul.f32.gmra.mxu0 %v9500
  %v9555 = vpop.f32.mrf.mxu0
  %v9556 = vadd.f32 0.0, %v9555
  %9557 = vmatmul.f32.gmra.mxu0 %v9503
  %v9558 = vpop.f32.mrf.mxu0
  %v9559 = vadd.f32 0.0, %v9558
  %9560 = vmatmul.f32.gmra.mxu0 %v9506
  %v9561 = vpop.f32.mrf.mxu0
  %v9562 = vadd.f32 0.0, %v9561
  %9563 = vdwg.mxu0
  %v9564 = vadd.f32 %v9442, %v9526
  %v9565 = vadd.f32 %v9443, %v9529
  %v9566 = vadd.f32 %v9444, %v9532
  %v9567 = vadd.f32 %v9445, %v9535
  %v9568 = vadd.f32 %v9446, %v9538
  %v9569 = vadd.f32 %v9447, %v9541
  %v9570 = vadd.f32 %v9448, %v9544
  %v9571 = vadd.f32 %v9449, %v9547
  %v9572 = vadd.f32 %v9450, %v9550
  %v9573 = vadd.f32 %v9451, %v9553
  %v9574 = vadd.f32 %v9452, %v9556
  %v9575 = vadd.f32 %v9453, %v9559
  %v9576 = vadd.f32 %v9454, %v9562
  %s9577 = scalar_lea.vmem %s9, 208
  %v9578 = vld [vmem:[%s9577] sm:$0xff]
  %v9579 = vld [vmem:[%s9577 + $0x8] sm:$0xff]
  %v9580 = vld [vmem:[%s9577 + $0x10] sm:$0xff]
  %v9581 = vld [vmem:[%s9577 + $0x18] sm:$0xff]
  %v9582 = vld [vmem:[%s9577 + $0x20] sm:$0xff]
  %v9583 = vld [vmem:[%s9577 + $0x28] sm:$0xff]
  %v9584 = vld [vmem:[%s9577 + $0x30] sm:$0xff]
  %v9585 = vld [vmem:[%s9577 + $0x38] sm:$0xff]
  %v9586 = vld [vmem:[%s9577 + $0x40] sm:$0xff]
  %v9587 = vld [vmem:[%s9577 + $0x48] sm:$0xff]
  %v9588 = vld [vmem:[%s9577 + $0x50] sm:$0xff]
  %v9589 = vld [vmem:[%s9577 + $0x58] sm:$0xff]
  %v9590 = vld [vmem:[%s9577 + $0x60] sm:$0xf]
  %v9592 = vsel %vm8805, %v9578, 0
  %v9595 = vsel %vm8805, %v9579, 0
  %v9598 = vsel %vm8805, %v9580, 0
  %v9601 = vsel %vm8805, %v9581, 0
  %v9604 = vsel %vm8805, %v9582, 0
  %v9607 = vsel %vm8805, %v9583, 0
  %v9610 = vsel %vm8805, %v9584, 0
  %v9613 = vsel %vm8805, %v9585, 0
  %v9616 = vsel %vm8805, %v9586, 0
  %v9619 = vsel %vm8805, %v9587, 0
  %v9622 = vsel %vm8805, %v9588, 0
  %v9625 = vsel %vm8805, %v9589, 0
  %v9628 = vsel %vm8805, %v9590, 0
  %9630 = vmatpush.msra.mxu0 0.0
  %9631 = vmatpush.msra.mxu0 0.0
  %9632 = vmatpush.msra.mxu0 0.0
  %9633 = vmatpush.msra.mxu0 0.0
  %9634 = vmatpush.msra.mxu0 0.0
  %9635 = vmatpush.msra.mxu0 0.0
  %9636 = vmatpush.msra.mxu0 0.0
  %9637 = vmatpush.msra.mxu0 0.0
  %9638 = vmatpush.msra.mxu0 %v9008
  %9639 = vmatpush.msra.mxu0 %v8782
  %9640 = vmatpush.msra.mxu0 %v8781
  %9641 = vmatpush.msra.mxu0 %v8780
  %9642 = vmatpush.msra.mxu0 %v8779
  %9643 = vmatpush.msra.mxu0 %v8778
  %9644 = vmatpush.msra.mxu0 %v8777
  %9645 = vmatpush.msra.mxu0 %v8776
  %9646 = vmatmul.f32.gmra.mxu0 %v9592
  %v9647 = vpop.f32.mrf.mxu0
  %v9648 = vadd.f32 0.0, %v9647
  %9649 = vmatmul.f32.gmra.mxu0 %v9595
  %v9650 = vpop.f32.mrf.mxu0
  %v9651 = vadd.f32 0.0, %v9650
  %9652 = vmatmul.f32.gmra.mxu0 %v9598
  %v9653 = vpop.f32.mrf.mxu0
  %v9654 = vadd.f32 0.0, %v9653
  %9655 = vmatmul.f32.gmra.mxu0 %v9601
  %v9656 = vpop.f32.mrf.mxu0
  %v9657 = vadd.f32 0.0, %v9656
  %9658 = vmatmul.f32.gmra.mxu0 %v9604
  %v9659 = vpop.f32.mrf.mxu0
  %v9660 = vadd.f32 0.0, %v9659
  %9661 = vmatmul.f32.gmra.mxu0 %v9607
  %v9662 = vpop.f32.mrf.mxu0
  %v9663 = vadd.f32 0.0, %v9662
  %9664 = vmatmul.f32.gmra.mxu0 %v9610
  %v9665 = vpop.f32.mrf.mxu0
  %v9666 = vadd.f32 0.0, %v9665
  %9667 = vmatmul.f32.gmra.mxu0 %v9613
  %v9668 = vpop.f32.mrf.mxu0
  %v9669 = vadd.f32 0.0, %v9668
  %9670 = vmatmul.f32.gmra.mxu0 %v9616
  %v9671 = vpop.f32.mrf.mxu0
  %v9672 = vadd.f32 0.0, %v9671
  %9673 = vmatmul.f32.gmra.mxu0 %v9619
  %v9674 = vpop.f32.mrf.mxu0
  %v9675 = vadd.f32 0.0, %v9674
  %9676 = vmatmul.f32.gmra.mxu0 %v9622
  %v9677 = vpop.f32.mrf.mxu0
  %v9678 = vadd.f32 0.0, %v9677
  %9679 = vmatmul.f32.gmra.mxu0 %v9625
  %v9680 = vpop.f32.mrf.mxu0
  %v9681 = vadd.f32 0.0, %v9680
  %9682 = vmatmul.f32.gmra.mxu0 %v9628
  %v9683 = vpop.f32.mrf.mxu0
  %v9684 = vadd.f32 0.0, %v9683
  %9685 = vdwg.mxu0
  %v9686 = vadd.f32 %v9564, %v9648
  %v9687 = vadd.f32 %v9565, %v9651
  %v9688 = vadd.f32 %v9566, %v9654
  %v9689 = vadd.f32 %v9567, %v9657
  %v9690 = vadd.f32 %v9568, %v9660
  %v9691 = vadd.f32 %v9569, %v9663
  %v9692 = vadd.f32 %v9570, %v9666
  %v9693 = vadd.f32 %v9571, %v9669
  %v9694 = vadd.f32 %v9572, %v9672
  %v9695 = vadd.f32 %v9573, %v9675
  %v9696 = vadd.f32 %v9574, %v9678
  %v9697 = vadd.f32 %v9575, %v9681
  %v9698 = vadd.f32 %v9576, %v9684
  %v9699 = vld [vmem:[%s12] sm:$0x3]
  %v9700 = vld [vmem:[%s13] sm:$0x3]
  %9702 = vset.pattern.permute.xlu0 0
  %9703 = vperm.xlu0 %9702, %v9700
  %v9704 = vpop.permute.xlu0 %9703
  %vm9706 = vcmask 818176
  %v9708 = vsel %vm9706, %v9699, 0
  %v9711 = vsel %vm4630, %v9698, 0
  %9713 = vmatpush.msra.mxu0 0.0
  %9714 = vmatpush.msra.mxu0 0.0
  %9715 = vmatpush.msra.mxu0 0.0
  %9716 = vmatpush.msra.mxu0 %v9711
  %9717 = vmatpush.msra.mxu0 %v9697
  %9718 = vmatpush.msra.mxu0 %v9696
  %9719 = vmatpush.msra.mxu0 %v9695
  %9720 = vmatpush.msra.mxu0 %v9694
  %9721 = vmatpush.msra.mxu0 %v9693
  %9722 = vmatpush.msra.mxu0 %v9692
  %9723 = vmatpush.msra.mxu0 %v9691
  %9724 = vmatpush.msra.mxu0 %v9690
  %9725 = vmatpush.msra.mxu0 %v9689
  %9726 = vmatpush.msra.mxu0 %v9688
  %9727 = vmatpush.msra.mxu0 %v9687
  %9728 = vmatpush.msra.mxu0 %v9686
  %9729 = vmatmul.f32.gmra.mxu0 %v9708
  %v9730 = vpop.f32.mrf.mxu0
  %v9731 = vadd.f32 %v9704, %v9730
  %9732 = vdwg.mxu0
  %v9734 = vrot.slane %v9731, 1
  %v9736 = vsub.f32 %v9731, %v9734
  %v9737 = vmul.f32 %v9736, 1.442695
  %v9738 = vpow.pop %v9737
  %v9739 = vadd.f32 %v9738, 1.0
  %v9740 = vrcp.pop %v9739
  %v9741 = vmul.f32 %v9739, %v9740
  %v9742 = vsub.f32 1.0, %v9741
  %v9743 = vmul.f32 %v9740, %v9742
  %v9744 = vadd.f32 %v9740, %v9743
  %vm9745 = vweird.f32 %v9739
  %vm9746 = vweird.f32 %v9740
  %vm9747 = vmor %vm9745, %vm9746
  %v9748 = vsel %vm9747, %v9740, %v9744
  %v9749 = vand.u32 2147483647, %v9739
  %vm9750 = vcmp.eq.f32.partialorder %v9749, 8.507059e+37
  %v9751 = vand.u32 %v9739, 2147483648
  %v9752 = vor.u32 1.1754944e-38, %v9751
  %v9753 = vsel %vm9750, %v9752, %v9748
  %v9754 = vmul.f32 1.0, %v9753
  %v9755 = vsub.f32 1.0, %v9754
  %v9757 = vrot.slane %v9754, 7
  %vm9759 = vcmask 1040384
  %v9760 = vsel %vm9759, %v9755, %v9757
  %9761 = vst [vmem:[%s14] sm:$0x3] %v9760
  // Predicated region
  $region58: #{forward.1} parent=0 // pred_check
    _
  $region59: #{forward.1} parent=0 // pred_check_branch
    %9763 = sbr.rel (0) target = $region61
  $region60: #{forward.1} parent=0 // pred_region
    _
  $region61: #{forward.1} parent=0 // pred_fallthru
    _
  // Predicated region
  $region62: #{forward.1} parent=0 // pred_check
    _
  $region63: #{forward.1} parent=0 // pred_check_branch
    %9765 = sbr.rel (0) target = $region65
  $region64: #{forward.1} parent=0 // pred_region
    _
  $region65: #{forward.1} parent=0 // pred_fallthru
    _

</llo_original>
